<compile_context>
chip_gen: v7x
topology: tpu7x:2x2x1
jax: 0.10.0
libtpu: 0.0.40
codegen_flags: <defaults>
</compile_context>

<pallas_src>
import math

import jax
import jax.numpy as jnp
import numpy as np
from jax.experimental import pallas as pl
from jax.experimental.pallas import tpu as pltpu


# ---------------------------------------------------------------------------
# Constant 0/1 "gather" matrices implementing im2col for a 4x4/stride-2/pad-1
# conv.  Row t*Ho*Wo + oh*Wo + ow is one-hot at input position
# (2*oh + i - 1, 2*ow + j - 1) of tap t = i*4 + j, or all-zero when that
# position falls into the conv's zero padding.
# ---------------------------------------------------------------------------
def _selection_matrix(h_in, w_in):
    ho, wo = h_in // 2, w_in // 2
    m = np.zeros((16 * ho * wo, h_in * w_in), np.float32)
    for i in range(4):
        for j in range(4):
            t = i * 4 + j
            for oh in range(ho):
                for ow in range(wo):
                    ih, iw = 2 * oh + i - 1, 2 * ow + j - 1
                    if 0 <= ih < h_in and 0 <= iw < w_in:
                        m[t * ho * wo + oh * wo + ow, ih * w_in + iw] = 1.0
    return m


_SEL2_NP = _selection_matrix(16, 16)   # (1024, 256): gathers down2 patches
_SEL3_NP = _selection_matrix(8, 8)     # (256, 64):   gathers down3 patches


# ---------------------------------------------------------------------------
# Fused Pallas kernel: down1 -> down2 -> down3 -> classifier for one batch
# element per grid step.  Feature-map matrices have rows = spatial positions
# (row-major) and columns = channels.
# ---------------------------------------------------------------------------
def _ssanet_d_kernel(p1_ref, w1_ref, b1_ref, sel2_ref, w2_ref, b2_ref,
                     sel3_ref, w3_ref, b3_ref, wc_ref, feat_ref, cls_ref):
    f32 = jnp.float32
    bf16 = jnp.bfloat16

    def leaky(v):  # LeakyReLU(0.2)
        return jnp.where(v >= 0, v, 0.2 * v)

    def inorm(v):  # InstanceNorm2d: biased var, eps=1e-5, no affine; rows = HW
        m = jnp.mean(v, axis=0, keepdims=True)
        var = jnp.mean(jnp.square(v - m), axis=0, keepdims=True)
        return (v - m) * jax.lax.rsqrt(var + 1e-5)

    # ---- down1: LeakyReLU -> Conv(nc->64, 4,2,1) + bias (no norm) ----------
    # LeakyReLU(0) == 0, so applying it to zero-padded patches is exact.
    x1 = leaky(p1_ref[0]).astype(bf16)                               # (256, 16*nc)
    y1 = jnp.dot(x1, w1_ref[...], preferred_element_type=f32) + b1_ref[...]

    # ---- down2: LeakyReLU -> Conv(64->128, 4,2,1) + bias -> InstanceNorm ---
    a1 = leaky(y1).astype(bf16)                                      # (256, 64)
    # One MXU dot gathers all 16 tap-blocks (zero rows encode the padding).
    g1 = jnp.dot(sel2_ref[...], a1, preferred_element_type=f32)      # (1024, 64)
    acc2 = jnp.zeros((64, 128), f32)
    for t in range(16):
        blk = g1[t * 64:(t + 1) * 64, :].astype(bf16)                # (64, 64)
        acc2 = acc2 + jnp.dot(blk, w2_ref[t], preferred_element_type=f32)
    y2 = inorm(acc2 + b2_ref[...])                                   # (64, 128)

    # ---- down3: LeakyReLU -> Conv(128->256, 4,2,1) + bias -> InstanceNorm --
    a2 = leaky(y2).astype(bf16)                                      # (64, 128)
    g2 = jnp.dot(sel3_ref[...], a2, preferred_element_type=f32)      # (256, 128)
    acc3 = jnp.zeros((16, 256), f32)
    for t in range(16):
        blk = g2[t * 16:(t + 1) * 16, :].astype(bf16)                # (16, 128)
        acc3 = acc3 + jnp.dot(blk, w3_ref[t], preferred_element_type=f32)
    y3 = inorm(acc3 + b3_ref[...])                                   # (16, 256)

    feat_ref[0] = y3                                                 # features

    # ---- classifier: Conv(256->1, 4,1,0, bias=False) + Sigmoid -------------
    # A 4x4 valid conv over a 4x4 map is a full multiply-reduce against wc.
    prod = y3 * wc_ref[...]                                          # (16, 256)
    logit = jnp.sum(jnp.sum(prod, axis=1, keepdims=True),
                    axis=0, keepdims=True)                           # (1, 1)
    cls_ref[0] = 1.0 / (1.0 + jnp.exp(-logit))


# ---------------------------------------------------------------------------
# Plain-JAX glue: im2col patches for down1 only (nc is tiny, so this tensor is
# ~48 KB/sample).  Patch columns are flattened as (kh*4 + kw)*nc + cin.
# ---------------------------------------------------------------------------
def _im2col_4s2p1(x_nhwc):
    x = jnp.pad(x_nhwc, ((0, 0), (1, 1), (1, 1), (0, 0)))
    n, hp, wp, c = x.shape
    ho, wo = (hp - 4) // 2 + 1, (wp - 4) // 2 + 1
    cols = []
    for i in range(4):
        for j in range(4):
            cols.append(x[:, i:i + 2 * ho - 1:2, j:j + 2 * wo - 1:2, :])
    pat = jnp.stack(cols, axis=3)                    # (N, Ho, Wo, 16, C)
    return pat.reshape(n, ho * wo, 16 * c)


# ---------------------------------------------------------------------------
# SSANetD forward (isize=32 path: features = down1..down3, classifier = conv+σ)
# ---------------------------------------------------------------------------
def ssanet_d_forward(params, x_nchw, attention_nchw):
    fusion = jnp.concatenate([x_nchw, attention_nchw], axis=1)   # NCHW cat dim=1
    h = jnp.transpose(fusion, (0, 2, 3, 1))                      # -> NHWC
    patches = _im2col_4s2p1(h)                                   # (N, 256, 16*nc)
    N, P1, K1 = patches.shape

    sel2 = jnp.asarray(_SEL2_NP, dtype=jnp.bfloat16)
    sel3 = jnp.asarray(_SEL3_NP, dtype=jnp.bfloat16)
    w1 = params["w1"].astype(jnp.bfloat16)
    w2 = params["w2"].astype(jnp.bfloat16)
    w3 = params["w3"].astype(jnp.bfloat16)
    b1 = params["b1"].reshape(1, -1)
    b2 = params["b2"].reshape(1, -1)
    b3 = params["b3"].reshape(1, -1)
    wc = params["wc"]

    feat, cls = pl.pallas_call(
        _ssanet_d_kernel,
        out_shape=(jax.ShapeDtypeStruct((N, 16, 256), jnp.float32),
                   jax.ShapeDtypeStruct((N, 1, 1), jnp.float32)),
        grid=(N,),
        in_specs=[
            pl.BlockSpec((1, P1, K1), lambda n: (n, 0, 0)),      # down1 patches
            pl.BlockSpec((K1, 64), lambda n: (0, 0)),            # w1 (bf16)
            pl.BlockSpec((1, 64), lambda n: (0, 0)),             # b1
            pl.BlockSpec((1024, 256), lambda n: (0, 0)),         # sel2 (bf16)
            pl.BlockSpec((16, 64, 128), lambda n: (0, 0, 0)),    # w2 (bf16)
            pl.BlockSpec((1, 128), lambda n: (0, 0)),            # b2
            pl.BlockSpec((256, 64), lambda n: (0, 0)),           # sel3 (bf16)
            pl.BlockSpec((16, 128, 256), lambda n: (0, 0, 0)),   # w3 (bf16)
            pl.BlockSpec((1, 256), lambda n: (0, 0)),            # b3
            pl.BlockSpec((16, 256), lambda n: (0, 0)),           # wc
        ],
        out_specs=(pl.BlockSpec((1, 16, 256), lambda n: (n, 0, 0)),
                   pl.BlockSpec((1, 1, 1), lambda n: (n, 0, 0))),
        compiler_params=pltpu.CompilerParams(
            dimension_semantics=("parallel",)),
    )(patches, w1, b1, sel2, w2, b2, sel3, w3, b3, wc)

    features_nchw = jnp.transpose(feat.reshape(N, 4, 4, 256), (0, 3, 1, 2))
    classifier = cls.reshape(-1)                 # view(-1, 1).squeeze(1)
    return classifier, features_nchw


# ---------------------------------------------------------------------------
# Deterministic synthetic parameters (kernel-friendly layouts).
# A PyTorch checkpoint (Cout, Cin, kh, kw) would map to these layouts via
# transpose to (kh, kw, Cin, Cout) and reshaping to the shapes below.
# ---------------------------------------------------------------------------
def make_params(nc):
    key = jax.random.PRNGKey(0)
    ks = jax.random.split(key, 7)

    def conv_w(k, shape, fan_in):
        return jax.random.normal(k, shape, jnp.float32) / math.sqrt(fan_in)

    return {
        # down1: Conv(nc, 64, 4, 2, 1); rows flattened as (kh*4+kw)*nc + cin
        "w1": conv_w(ks[0], (16 * nc, 64), 16 * nc),
        "b1": 0.01 * jax.random.normal(ks[1], (64,), jnp.float32),
        # down2 / down3: (16 taps, Cin, Cout), tap t = kh*4 + kw
        "w2": conv_w(ks[2], (16, 64, 128), 16 * 64),
        "b2": 0.01 * jax.random.normal(ks[3], (128,), jnp.float32),
        "w3": conv_w(ks[4], (16, 128, 256), 16 * 128),
        "b3": 0.01 * jax.random.normal(ks[5], (256,), jnp.float32),
        # classifier: Conv(256, 1, 4, 1, 0, bias=False); (kh*4+kw, cin)
        "wc": conv_w(ks[6], (16, 256), 16 * 256),
    }


if __name__ == "__main__":
    key = jax.random.PRNGKey(0)
    kx, ka = jax.random.split(key)

    # isize=32; x has 2 channels, attention has 1 channel -> nc = 3
    x = jax.random.normal(kx, (2, 2, 32, 32), jnp.float32)
    attention = jax.random.normal(ka, (2, 1, 32, 32), jnp.float32)
    params = make_params(nc=3)

    fwd = jax.jit(ssanet_d_forward)
    classifier, features = fwd(params, x, attention)
    jax.block_until_ready((classifier, features))

    assert classifier.shape == (2,)
    assert features.shape == (2, 256, 4, 4)
    assert bool(jnp.all(jnp.isfinite(classifier)))
    assert bool(jnp.all(jnp.isfinite(features)))
    assert bool(jnp.all((classifier >= 0.0) & (classifier <= 1.0)))
    print("KERNEL_OK")
</pallas_src>

<mosaic_0001>
module attributes {stable_mosaic.version = 11 : i64} {
  func.func @_ssanet_d_kernel(%arg0: i32, %arg1: memref<1x256x48xf32, #tpu.memory_space<vmem>>, %arg2: memref<48x64xbf16, #tpu.memory_space<vmem>>, %arg3: memref<1x64xf32, #tpu.memory_space<vmem>>, %arg4: memref<1024x256xbf16, #tpu.memory_space<vmem>>, %arg5: memref<16x64x128xbf16, #tpu.memory_space<vmem>>, %arg6: memref<1x128xf32, #tpu.memory_space<vmem>>, %arg7: memref<256x64xbf16, #tpu.memory_space<vmem>>, %arg8: memref<16x128x256xbf16, #tpu.memory_space<vmem>>, %arg9: memref<1x256xf32, #tpu.memory_space<vmem>>, %arg10: memref<16x256xf32, #tpu.memory_space<vmem>>, %arg11: memref<1x16x256xf32, #tpu.memory_space<vmem>>, %arg12: memref<1x1x1xf32, #tpu.memory_space<vmem>>) attributes {dimension_semantics = [#tpu.dimension_semantics<parallel>], iteration_bounds = array<i64: 2>, scalar_prefetch = 0 : i64, scratch_operands = 0 : i64, tpu.core_type = #tpu.core_type<tc>, window_params = [{transform_indices = @transform_0, window_bounds = array<i64: 1, 256, 48>}, {pipeline_mode = #tpu.pipeline_mode<synchronous>, transform_indices = @transform_1, window_bounds = array<i64: 48, 64>}, {pipeline_mode = #tpu.pipeline_mode<synchronous>, transform_indices = @transform_2, window_bounds = array<i64: 1, 64>}, {pipeline_mode = #tpu.pipeline_mode<synchronous>, transform_indices = @transform_3, window_bounds = array<i64: 1024, 256>}, {pipeline_mode = #tpu.pipeline_mode<synchronous>, transform_indices = @transform_4, window_bounds = array<i64: 16, 64, 128>}, {pipeline_mode = #tpu.pipeline_mode<synchronous>, transform_indices = @transform_5, window_bounds = array<i64: 1, 128>}, {pipeline_mode = #tpu.pipeline_mode<synchronous>, transform_indices = @transform_6, window_bounds = array<i64: 256, 64>}, {pipeline_mode = #tpu.pipeline_mode<synchronous>, transform_indices = @transform_7, window_bounds = array<i64: 16, 128, 256>}, {pipeline_mode = #tpu.pipeline_mode<synchronous>, transform_indices = @transform_8, window_bounds = array<i64: 1, 256>}, {pipeline_mode = #tpu.pipeline_mode<synchronous>, transform_indices = @transform_9, window_bounds = array<i64: 16, 256>}, {transform_indices = @transform_10, window_bounds = array<i64: 1, 16, 256>}, {transform_indices = @transform_11, window_bounds = array<i64: 1, 1, 1>}]} {
    %c0 = arith.constant 0 : index
    %c0_0 = arith.constant 0 : index
    %c0_1 = arith.constant 0 : index
    %0 = vector.load %arg1[%c0, %c0_0, %c0_1] : memref<1x256x48xf32, #tpu.memory_space<vmem>>, vector<1x256x48xf32>
    %1 = vector.shape_cast %0 : vector<1x256x48xf32> to vector<256x48xf32>
    %cst = arith.constant 0.000000e+00 : f32
    %2 = vector.broadcast %cst : f32 to vector<256x48xf32>
    %3 = arith.cmpf oge, %1, %2 : vector<256x48xf32>
    %cst_2 = arith.constant 2.000000e-01 : f32
    %4 = vector.broadcast %cst_2 : f32 to vector<256x48xf32>
    %5 = arith.mulf %4, %1 : vector<256x48xf32>
    %6 = arith.select %3, %1, %5 : vector<256x48xi1>, vector<256x48xf32>
    %7 = arith.truncf %6 : vector<256x48xf32> to vector<256x48xbf16>
    %c0_3 = arith.constant 0 : index
    %c0_4 = arith.constant 0 : index
    %8 = vector.load %arg2[%c0_3, %c0_4] : memref<48x64xbf16, #tpu.memory_space<vmem>>, vector<48x64xbf16>
    %cst_5 = arith.constant dense<0.000000e+00> : vector<256x64xf32>
    %9 = tpu.matmul %7, %8, %cst_5 {dimension_numbers = #tpu.dot_dimension_numbers<[1], [0], [0], [1], [0, 0, 1, 1], [], []>} : vector<256x48xbf16>, vector<48x64xbf16>, vector<256x64xf32> -> vector<256x64xf32>
    %c0_6 = arith.constant 0 : index
    %c0_7 = arith.constant 0 : index
    %10 = vector.load %arg3[%c0_6, %c0_7] : memref<1x64xf32, #tpu.memory_space<vmem>>, vector<1x64xf32>
    %11 = vector.broadcast %10 : vector<1x64xf32> to vector<256x64xf32>
    %12 = arith.addf %9, %11 : vector<256x64xf32>
    %cst_8 = arith.constant 0.000000e+00 : f32
    %13 = vector.broadcast %cst_8 : f32 to vector<256x64xf32>
    %14 = arith.cmpf oge, %12, %13 : vector<256x64xf32>
    %cst_9 = arith.constant 2.000000e-01 : f32
    %15 = vector.broadcast %cst_9 : f32 to vector<256x64xf32>
    %16 = arith.mulf %15, %12 : vector<256x64xf32>
    %17 = arith.select %14, %12, %16 : vector<256x64xi1>, vector<256x64xf32>
    %18 = arith.truncf %17 : vector<256x64xf32> to vector<256x64xbf16>
    %c0_10 = arith.constant 0 : index
    %c0_11 = arith.constant 0 : index
    %19 = vector.load %arg4[%c0_10, %c0_11] : memref<1024x256xbf16, #tpu.memory_space<vmem>>, vector<1024x256xbf16>
    %cst_12 = arith.constant dense<0.000000e+00> : vector<1024x64xf32>
    %20 = tpu.matmul %19, %18, %cst_12 {dimension_numbers = #tpu.dot_dimension_numbers<[1], [0], [0], [1], [0, 0, 1, 1], [], []>} : vector<1024x256xbf16>, vector<256x64xbf16>, vector<1024x64xf32> -> vector<1024x64xf32>
    %cst_13 = arith.constant 0.000000e+00 : f32
    %21 = vector.broadcast %cst_13 : f32 to vector<64x128xf32>
    %22 = vector.extract_strided_slice %20 {offsets = [0, 0], sizes = [64, 64], strides = [1, 1]} : vector<1024x64xf32> to vector<64x64xf32>
    %23 = arith.truncf %22 : vector<64x64xf32> to vector<64x64xbf16>
    %c0_14 = arith.constant 0 : index
    %c0_15 = arith.constant 0 : index
    %c0_16 = arith.constant 0 : index
    %24 = vector.load %arg5[%c0_14, %c0_15, %c0_16] : memref<16x64x128xbf16, #tpu.memory_space<vmem>>, vector<1x64x128xbf16>
    %25 = vector.shape_cast %24 : vector<1x64x128xbf16> to vector<64x128xbf16>
    %cst_17 = arith.constant dense<0.000000e+00> : vector<64x128xf32>
    %26 = tpu.matmul %23, %25, %cst_17 {dimension_numbers = #tpu.dot_dimension_numbers<[1], [0], [0], [1], [0, 0, 1, 1], [], []>} : vector<64x64xbf16>, vector<64x128xbf16>, vector<64x128xf32> -> vector<64x128xf32>
    %27 = arith.addf %21, %26 : vector<64x128xf32>
    %28 = vector.extract_strided_slice %20 {offsets = [64, 0], sizes = [64, 64], strides = [1, 1]} : vector<1024x64xf32> to vector<64x64xf32>
    %29 = arith.truncf %28 : vector<64x64xf32> to vector<64x64xbf16>
    %c1 = arith.constant 1 : index
    %c0_18 = arith.constant 0 : index
    %c0_19 = arith.constant 0 : index
    %30 = vector.load %arg5[%c1, %c0_18, %c0_19] : memref<16x64x128xbf16, #tpu.memory_space<vmem>>, vector<1x64x128xbf16>
    %31 = vector.shape_cast %30 : vector<1x64x128xbf16> to vector<64x128xbf16>
    %cst_20 = arith.constant dense<0.000000e+00> : vector<64x128xf32>
    %32 = tpu.matmul %29, %31, %cst_20 {dimension_numbers = #tpu.dot_dimension_numbers<[1], [0], [0], [1], [0, 0, 1, 1], [], []>} : vector<64x64xbf16>, vector<64x128xbf16>, vector<64x128xf32> -> vector<64x128xf32>
    %33 = arith.addf %27, %32 : vector<64x128xf32>
    %34 = vector.extract_strided_slice %20 {offsets = [128, 0], sizes = [64, 64], strides = [1, 1]} : vector<1024x64xf32> to vector<64x64xf32>
    %35 = arith.truncf %34 : vector<64x64xf32> to vector<64x64xbf16>
    %c2 = arith.constant 2 : index
    %c0_21 = arith.constant 0 : index
    %c0_22 = arith.constant 0 : index
    %36 = vector.load %arg5[%c2, %c0_21, %c0_22] : memref<16x64x128xbf16, #tpu.memory_space<vmem>>, vector<1x64x128xbf16>
    %37 = vector.shape_cast %36 : vector<1x64x128xbf16> to vector<64x128xbf16>
    %cst_23 = arith.constant dense<0.000000e+00> : vector<64x128xf32>
    %38 = tpu.matmul %35, %37, %cst_23 {dimension_numbers = #tpu.dot_dimension_numbers<[1], [0], [0], [1], [0, 0, 1, 1], [], []>} : vector<64x64xbf16>, vector<64x128xbf16>, vector<64x128xf32> -> vector<64x128xf32>
    %39 = arith.addf %33, %38 : vector<64x128xf32>
    %40 = vector.extract_strided_slice %20 {offsets = [192, 0], sizes = [64, 64], strides = [1, 1]} : vector<1024x64xf32> to vector<64x64xf32>
    %41 = arith.truncf %40 : vector<64x64xf32> to vector<64x64xbf16>
    %c3 = arith.constant 3 : index
    %c0_24 = arith.constant 0 : index
    %c0_25 = arith.constant 0 : index
    %42 = vector.load %arg5[%c3, %c0_24, %c0_25] : memref<16x64x128xbf16, #tpu.memory_space<vmem>>, vector<1x64x128xbf16>
    %43 = vector.shape_cast %42 : vector<1x64x128xbf16> to vector<64x128xbf16>
    %cst_26 = arith.constant dense<0.000000e+00> : vector<64x128xf32>
    %44 = tpu.matmul %41, %43, %cst_26 {dimension_numbers = #tpu.dot_dimension_numbers<[1], [0], [0], [1], [0, 0, 1, 1], [], []>} : vector<64x64xbf16>, vector<64x128xbf16>, vector<64x128xf32> -> vector<64x128xf32>
    %45 = arith.addf %39, %44 : vector<64x128xf32>
    %46 = vector.extract_strided_slice %20 {offsets = [256, 0], sizes = [64, 64], strides = [1, 1]} : vector<1024x64xf32> to vector<64x64xf32>
    %47 = arith.truncf %46 : vector<64x64xf32> to vector<64x64xbf16>
    %c4 = arith.constant 4 : index
    %c0_27 = arith.constant 0 : index
    %c0_28 = arith.constant 0 : index
    %48 = vector.load %arg5[%c4, %c0_27, %c0_28] : memref<16x64x128xbf16, #tpu.memory_space<vmem>>, vector<1x64x128xbf16>
    %49 = vector.shape_cast %48 : vector<1x64x128xbf16> to vector<64x128xbf16>
    %cst_29 = arith.constant dense<0.000000e+00> : vector<64x128xf32>
    %50 = tpu.matmul %47, %49, %cst_29 {dimension_numbers = #tpu.dot_dimension_numbers<[1], [0], [0], [1], [0, 0, 1, 1], [], []>} : vector<64x64xbf16>, vector<64x128xbf16>, vector<64x128xf32> -> vector<64x128xf32>
    %51 = arith.addf %45, %50 : vector<64x128xf32>
    %52 = vector.extract_strided_slice %20 {offsets = [320, 0], sizes = [64, 64], strides = [1, 1]} : vector<1024x64xf32> to vector<64x64xf32>
    %53 = arith.truncf %52 : vector<64x64xf32> to vector<64x64xbf16>
    %c5 = arith.constant 5 : index
    %c0_30 = arith.constant 0 : index
    %c0_31 = arith.constant 0 : index
    %54 = vector.load %arg5[%c5, %c0_30, %c0_31] : memref<16x64x128xbf16, #tpu.memory_space<vmem>>, vector<1x64x128xbf16>
    %55 = vector.shape_cast %54 : vector<1x64x128xbf16> to vector<64x128xbf16>
    %cst_32 = arith.constant dense<0.000000e+00> : vector<64x128xf32>
    %56 = tpu.matmul %53, %55, %cst_32 {dimension_numbers = #tpu.dot_dimension_numbers<[1], [0], [0], [1], [0, 0, 1, 1], [], []>} : vector<64x64xbf16>, vector<64x128xbf16>, vector<64x128xf32> -> vector<64x128xf32>
    %57 = arith.addf %51, %56 : vector<64x128xf32>
    %58 = vector.extract_strided_slice %20 {offsets = [384, 0], sizes = [64, 64], strides = [1, 1]} : vector<1024x64xf32> to vector<64x64xf32>
    %59 = arith.truncf %58 : vector<64x64xf32> to vector<64x64xbf16>
    %c6 = arith.constant 6 : index
    %c0_33 = arith.constant 0 : index
    %c0_34 = arith.constant 0 : index
    %60 = vector.load %arg5[%c6, %c0_33, %c0_34] : memref<16x64x128xbf16, #tpu.memory_space<vmem>>, vector<1x64x128xbf16>
    %61 = vector.shape_cast %60 : vector<1x64x128xbf16> to vector<64x128xbf16>
    %cst_35 = arith.constant dense<0.000000e+00> : vector<64x128xf32>
    %62 = tpu.matmul %59, %61, %cst_35 {dimension_numbers = #tpu.dot_dimension_numbers<[1], [0], [0], [1], [0, 0, 1, 1], [], []>} : vector<64x64xbf16>, vector<64x128xbf16>, vector<64x128xf32> -> vector<64x128xf32>
    %63 = arith.addf %57, %62 : vector<64x128xf32>
    %64 = vector.extract_strided_slice %20 {offsets = [448, 0], sizes = [64, 64], strides = [1, 1]} : vector<1024x64xf32> to vector<64x64xf32>
    %65 = arith.truncf %64 : vector<64x64xf32> to vector<64x64xbf16>
    %c7 = arith.constant 7 : index
    %c0_36 = arith.constant 0 : index
    %c0_37 = arith.constant 0 : index
    %66 = vector.load %arg5[%c7, %c0_36, %c0_37] : memref<16x64x128xbf16, #tpu.memory_space<vmem>>, vector<1x64x128xbf16>
    %67 = vector.shape_cast %66 : vector<1x64x128xbf16> to vector<64x128xbf16>
    %cst_38 = arith.constant dense<0.000000e+00> : vector<64x128xf32>
    %68 = tpu.matmul %65, %67, %cst_38 {dimension_numbers = #tpu.dot_dimension_numbers<[1], [0], [0], [1], [0, 0, 1, 1], [], []>} : vector<64x64xbf16>, vector<64x128xbf16>, vector<64x128xf32> -> vector<64x128xf32>
    %69 = arith.addf %63, %68 : vector<64x128xf32>
    %70 = vector.extract_strided_slice %20 {offsets = [512, 0], sizes = [64, 64], strides = [1, 1]} : vector<1024x64xf32> to vector<64x64xf32>
    %71 = arith.truncf %70 : vector<64x64xf32> to vector<64x64xbf16>
    %c8 = arith.constant 8 : index
    %c0_39 = arith.constant 0 : index
    %c0_40 = arith.constant 0 : index
    %72 = vector.load %arg5[%c8, %c0_39, %c0_40] : memref<16x64x128xbf16, #tpu.memory_space<vmem>>, vector<1x64x128xbf16>
    %73 = vector.shape_cast %72 : vector<1x64x128xbf16> to vector<64x128xbf16>
    %cst_41 = arith.constant dense<0.000000e+00> : vector<64x128xf32>
    %74 = tpu.matmul %71, %73, %cst_41 {dimension_numbers = #tpu.dot_dimension_numbers<[1], [0], [0], [1], [0, 0, 1, 1], [], []>} : vector<64x64xbf16>, vector<64x128xbf16>, vector<64x128xf32> -> vector<64x128xf32>
    %75 = arith.addf %69, %74 : vector<64x128xf32>
    %76 = vector.extract_strided_slice %20 {offsets = [576, 0], sizes = [64, 64], strides = [1, 1]} : vector<1024x64xf32> to vector<64x64xf32>
    %77 = arith.truncf %76 : vector<64x64xf32> to vector<64x64xbf16>
    %c9 = arith.constant 9 : index
    %c0_42 = arith.constant 0 : index
    %c0_43 = arith.constant 0 : index
    %78 = vector.load %arg5[%c9, %c0_42, %c0_43] : memref<16x64x128xbf16, #tpu.memory_space<vmem>>, vector<1x64x128xbf16>
    %79 = vector.shape_cast %78 : vector<1x64x128xbf16> to vector<64x128xbf16>
    %cst_44 = arith.constant dense<0.000000e+00> : vector<64x128xf32>
    %80 = tpu.matmul %77, %79, %cst_44 {dimension_numbers = #tpu.dot_dimension_numbers<[1], [0], [0], [1], [0, 0, 1, 1], [], []>} : vector<64x64xbf16>, vector<64x128xbf16>, vector<64x128xf32> -> vector<64x128xf32>
    %81 = arith.addf %75, %80 : vector<64x128xf32>
    %82 = vector.extract_strided_slice %20 {offsets = [640, 0], sizes = [64, 64], strides = [1, 1]} : vector<1024x64xf32> to vector<64x64xf32>
    %83 = arith.truncf %82 : vector<64x64xf32> to vector<64x64xbf16>
    %c10 = arith.constant 10 : index
    %c0_45 = arith.constant 0 : index
    %c0_46 = arith.constant 0 : index
    %84 = vector.load %arg5[%c10, %c0_45, %c0_46] : memref<16x64x128xbf16, #tpu.memory_space<vmem>>, vector<1x64x128xbf16>
    %85 = vector.shape_cast %84 : vector<1x64x128xbf16> to vector<64x128xbf16>
    %cst_47 = arith.constant dense<0.000000e+00> : vector<64x128xf32>
    %86 = tpu.matmul %83, %85, %cst_47 {dimension_numbers = #tpu.dot_dimension_numbers<[1], [0], [0], [1], [0, 0, 1, 1], [], []>} : vector<64x64xbf16>, vector<64x128xbf16>, vector<64x128xf32> -> vector<64x128xf32>
    %87 = arith.addf %81, %86 : vector<64x128xf32>
    %88 = vector.extract_strided_slice %20 {offsets = [704, 0], sizes = [64, 64], strides = [1, 1]} : vector<1024x64xf32> to vector<64x64xf32>
    %89 = arith.truncf %88 : vector<64x64xf32> to vector<64x64xbf16>
    %c11 = arith.constant 11 : index
    %c0_48 = arith.constant 0 : index
    %c0_49 = arith.constant 0 : index
    %90 = vector.load %arg5[%c11, %c0_48, %c0_49] : memref<16x64x128xbf16, #tpu.memory_space<vmem>>, vector<1x64x128xbf16>
    %91 = vector.shape_cast %90 : vector<1x64x128xbf16> to vector<64x128xbf16>
    %cst_50 = arith.constant dense<0.000000e+00> : vector<64x128xf32>
    %92 = tpu.matmul %89, %91, %cst_50 {dimension_numbers = #tpu.dot_dimension_numbers<[1], [0], [0], [1], [0, 0, 1, 1], [], []>} : vector<64x64xbf16>, vector<64x128xbf16>, vector<64x128xf32> -> vector<64x128xf32>
    %93 = arith.addf %87, %92 : vector<64x128xf32>
    %94 = vector.extract_strided_slice %20 {offsets = [768, 0], sizes = [64, 64], strides = [1, 1]} : vector<1024x64xf32> to vector<64x64xf32>
    %95 = arith.truncf %94 : vector<64x64xf32> to vector<64x64xbf16>
    %c12 = arith.constant 12 : index
    %c0_51 = arith.constant 0 : index
    %c0_52 = arith.constant 0 : index
    %96 = vector.load %arg5[%c12, %c0_51, %c0_52] : memref<16x64x128xbf16, #tpu.memory_space<vmem>>, vector<1x64x128xbf16>
    %97 = vector.shape_cast %96 : vector<1x64x128xbf16> to vector<64x128xbf16>
    %cst_53 = arith.constant dense<0.000000e+00> : vector<64x128xf32>
    %98 = tpu.matmul %95, %97, %cst_53 {dimension_numbers = #tpu.dot_dimension_numbers<[1], [0], [0], [1], [0, 0, 1, 1], [], []>} : vector<64x64xbf16>, vector<64x128xbf16>, vector<64x128xf32> -> vector<64x128xf32>
    %99 = arith.addf %93, %98 : vector<64x128xf32>
    %100 = vector.extract_strided_slice %20 {offsets = [832, 0], sizes = [64, 64], strides = [1, 1]} : vector<1024x64xf32> to vector<64x64xf32>
    %101 = arith.truncf %100 : vector<64x64xf32> to vector<64x64xbf16>
    %c13 = arith.constant 13 : index
    %c0_54 = arith.constant 0 : index
    %c0_55 = arith.constant 0 : index
    %102 = vector.load %arg5[%c13, %c0_54, %c0_55] : memref<16x64x128xbf16, #tpu.memory_space<vmem>>, vector<1x64x128xbf16>
    %103 = vector.shape_cast %102 : vector<1x64x128xbf16> to vector<64x128xbf16>
    %cst_56 = arith.constant dense<0.000000e+00> : vector<64x128xf32>
    %104 = tpu.matmul %101, %103, %cst_56 {dimension_numbers = #tpu.dot_dimension_numbers<[1], [0], [0], [1], [0, 0, 1, 1], [], []>} : vector<64x64xbf16>, vector<64x128xbf16>, vector<64x128xf32> -> vector<64x128xf32>
    %105 = arith.addf %99, %104 : vector<64x128xf32>
    %106 = vector.extract_strided_slice %20 {offsets = [896, 0], sizes = [64, 64], strides = [1, 1]} : vector<1024x64xf32> to vector<64x64xf32>
    %107 = arith.truncf %106 : vector<64x64xf32> to vector<64x64xbf16>
    %c14 = arith.constant 14 : index
    %c0_57 = arith.constant 0 : index
    %c0_58 = arith.constant 0 : index
    %108 = vector.load %arg5[%c14, %c0_57, %c0_58] : memref<16x64x128xbf16, #tpu.memory_space<vmem>>, vector<1x64x128xbf16>
    %109 = vector.shape_cast %108 : vector<1x64x128xbf16> to vector<64x128xbf16>
    %cst_59 = arith.constant dense<0.000000e+00> : vector<64x128xf32>
    %110 = tpu.matmul %107, %109, %cst_59 {dimension_numbers = #tpu.dot_dimension_numbers<[1], [0], [0], [1], [0, 0, 1, 1], [], []>} : vector<64x64xbf16>, vector<64x128xbf16>, vector<64x128xf32> -> vector<64x128xf32>
    %111 = arith.addf %105, %110 : vector<64x128xf32>
    %112 = vector.extract_strided_slice %20 {offsets = [960, 0], sizes = [64, 64], strides = [1, 1]} : vector<1024x64xf32> to vector<64x64xf32>
    %113 = arith.truncf %112 : vector<64x64xf32> to vector<64x64xbf16>
    %c15 = arith.constant 15 : index
    %c0_60 = arith.constant 0 : index
    %c0_61 = arith.constant 0 : index
    %114 = vector.load %arg5[%c15, %c0_60, %c0_61] : memref<16x64x128xbf16, #tpu.memory_space<vmem>>, vector<1x64x128xbf16>
    %115 = vector.shape_cast %114 : vector<1x64x128xbf16> to vector<64x128xbf16>
    %cst_62 = arith.constant dense<0.000000e+00> : vector<64x128xf32>
    %116 = tpu.matmul %113, %115, %cst_62 {dimension_numbers = #tpu.dot_dimension_numbers<[1], [0], [0], [1], [0, 0, 1, 1], [], []>} : vector<64x64xbf16>, vector<64x128xbf16>, vector<64x128xf32> -> vector<64x128xf32>
    %117 = arith.addf %111, %116 : vector<64x128xf32>
    %c0_63 = arith.constant 0 : index
    %c0_64 = arith.constant 0 : index
    %118 = vector.load %arg6[%c0_63, %c0_64] : memref<1x128xf32, #tpu.memory_space<vmem>>, vector<1x128xf32>
    %119 = vector.broadcast %118 : vector<1x128xf32> to vector<64x128xf32>
    %120 = arith.addf %117, %119 : vector<64x128xf32>
    %cst_65 = arith.constant dense<0.000000e+00> : vector<128xf32>
    %121 = vector.multi_reduction <add>, %120, %cst_65 [0] : vector<64x128xf32> to vector<128xf32>
    %122 = vector.shape_cast %121 : vector<128xf32> to vector<1x128xf32>
    %cst_66 = arith.constant 6.400000e+01 : f32
    %123 = vector.broadcast %cst_66 : f32 to vector<1x128xf32>
    %124 = arith.divf %122, %123 : vector<1x128xf32>
    %125 = vector.broadcast %124 : vector<1x128xf32> to vector<64x128xf32>
    %126 = arith.subf %120, %125 : vector<64x128xf32>
    %127 = arith.mulf %126, %126 : vector<64x128xf32>
    %cst_67 = arith.constant dense<0.000000e+00> : vector<128xf32>
    %128 = vector.multi_reduction <add>, %127, %cst_67 [0] : vector<64x128xf32> to vector<128xf32>
    %129 = vector.shape_cast %128 : vector<128xf32> to vector<1x128xf32>
    %cst_68 = arith.constant 6.400000e+01 : f32
    %130 = vector.broadcast %cst_68 : f32 to vector<1x128xf32>
    %131 = arith.divf %129, %130 : vector<1x128xf32>
    %132 = vector.broadcast %124 : vector<1x128xf32> to vector<64x128xf32>
    %133 = arith.subf %120, %132 : vector<64x128xf32>
    %cst_69 = arith.constant 9.99999974E-6 : f32
    %134 = vector.broadcast %cst_69 : f32 to vector<1x128xf32>
    %135 = arith.addf %131, %134 : vector<1x128xf32>
    %136 = math.rsqrt %135 : vector<1x128xf32>
    %137 = vector.broadcast %136 : vector<1x128xf32> to vector<64x128xf32>
    %138 = arith.mulf %133, %137 : vector<64x128xf32>
    %cst_70 = arith.constant 0.000000e+00 : f32
    %139 = vector.broadcast %cst_70 : f32 to vector<64x128xf32>
    %140 = arith.cmpf oge, %138, %139 : vector<64x128xf32>
    %cst_71 = arith.constant 2.000000e-01 : f32
    %141 = vector.broadcast %cst_71 : f32 to vector<64x128xf32>
    %142 = arith.mulf %141, %138 : vector<64x128xf32>
    %143 = arith.select %140, %138, %142 : vector<64x128xi1>, vector<64x128xf32>
    %144 = arith.truncf %143 : vector<64x128xf32> to vector<64x128xbf16>
    %c0_72 = arith.constant 0 : index
    %c0_73 = arith.constant 0 : index
    %145 = vector.load %arg7[%c0_72, %c0_73] : memref<256x64xbf16, #tpu.memory_space<vmem>>, vector<256x64xbf16>
    %cst_74 = arith.constant dense<0.000000e+00> : vector<256x128xf32>
    %146 = tpu.matmul %145, %144, %cst_74 {dimension_numbers = #tpu.dot_dimension_numbers<[1], [0], [0], [1], [0, 0, 1, 1], [], []>} : vector<256x64xbf16>, vector<64x128xbf16>, vector<256x128xf32> -> vector<256x128xf32>
    %cst_75 = arith.constant 0.000000e+00 : f32
    %147 = vector.broadcast %cst_75 : f32 to vector<16x256xf32>
    %148 = vector.extract_strided_slice %146 {offsets = [0, 0], sizes = [16, 128], strides = [1, 1]} : vector<256x128xf32> to vector<16x128xf32>
    %149 = arith.truncf %148 : vector<16x128xf32> to vector<16x128xbf16>
    %c0_76 = arith.constant 0 : index
    %c0_77 = arith.constant 0 : index
    %c0_78 = arith.constant 0 : index
    %150 = vector.load %arg8[%c0_76, %c0_77, %c0_78] : memref<16x128x256xbf16, #tpu.memory_space<vmem>>, vector<1x128x256xbf16>
    %151 = vector.shape_cast %150 : vector<1x128x256xbf16> to vector<128x256xbf16>
    %cst_79 = arith.constant dense<0.000000e+00> : vector<16x256xf32>
    %152 = tpu.matmul %149, %151, %cst_79 {dimension_numbers = #tpu.dot_dimension_numbers<[1], [0], [0], [1], [0, 0, 1, 1], [], []>} : vector<16x128xbf16>, vector<128x256xbf16>, vector<16x256xf32> -> vector<16x256xf32>
    %153 = arith.addf %147, %152 : vector<16x256xf32>
    %154 = vector.extract_strided_slice %146 {offsets = [16, 0], sizes = [16, 128], strides = [1, 1]} : vector<256x128xf32> to vector<16x128xf32>
    %155 = arith.truncf %154 : vector<16x128xf32> to vector<16x128xbf16>
    %c1_80 = arith.constant 1 : index
    %c0_81 = arith.constant 0 : index
    %c0_82 = arith.constant 0 : index
    %156 = vector.load %arg8[%c1_80, %c0_81, %c0_82] : memref<16x128x256xbf16, #tpu.memory_space<vmem>>, vector<1x128x256xbf16>
    %157 = vector.shape_cast %156 : vector<1x128x256xbf16> to vector<128x256xbf16>
    %cst_83 = arith.constant dense<0.000000e+00> : vector<16x256xf32>
    %158 = tpu.matmul %155, %157, %cst_83 {dimension_numbers = #tpu.dot_dimension_numbers<[1], [0], [0], [1], [0, 0, 1, 1], [], []>} : vector<16x128xbf16>, vector<128x256xbf16>, vector<16x256xf32> -> vector<16x256xf32>
    %159 = arith.addf %153, %158 : vector<16x256xf32>
    %160 = vector.extract_strided_slice %146 {offsets = [32, 0], sizes = [16, 128], strides = [1, 1]} : vector<256x128xf32> to vector<16x128xf32>
    %161 = arith.truncf %160 : vector<16x128xf32> to vector<16x128xbf16>
    %c2_84 = arith.constant 2 : index
    %c0_85 = arith.constant 0 : index
    %c0_86 = arith.constant 0 : index
    %162 = vector.load %arg8[%c2_84, %c0_85, %c0_86] : memref<16x128x256xbf16, #tpu.memory_space<vmem>>, vector<1x128x256xbf16>
    %163 = vector.shape_cast %162 : vector<1x128x256xbf16> to vector<128x256xbf16>
    %cst_87 = arith.constant dense<0.000000e+00> : vector<16x256xf32>
    %164 = tpu.matmul %161, %163, %cst_87 {dimension_numbers = #tpu.dot_dimension_numbers<[1], [0], [0], [1], [0, 0, 1, 1], [], []>} : vector<16x128xbf16>, vector<128x256xbf16>, vector<16x256xf32> -> vector<16x256xf32>
    %165 = arith.addf %159, %164 : vector<16x256xf32>
    %166 = vector.extract_strided_slice %146 {offsets = [48, 0], sizes = [16, 128], strides = [1, 1]} : vector<256x128xf32> to vector<16x128xf32>
    %167 = arith.truncf %166 : vector<16x128xf32> to vector<16x128xbf16>
    %c3_88 = arith.constant 3 : index
    %c0_89 = arith.constant 0 : index
    %c0_90 = arith.constant 0 : index
    %168 = vector.load %arg8[%c3_88, %c0_89, %c0_90] : memref<16x128x256xbf16, #tpu.memory_space<vmem>>, vector<1x128x256xbf16>
    %169 = vector.shape_cast %168 : vector<1x128x256xbf16> to vector<128x256xbf16>
    %cst_91 = arith.constant dense<0.000000e+00> : vector<16x256xf32>
    %170 = tpu.matmul %167, %169, %cst_91 {dimension_numbers = #tpu.dot_dimension_numbers<[1], [0], [0], [1], [0, 0, 1, 1], [], []>} : vector<16x128xbf16>, vector<128x256xbf16>, vector<16x256xf32> -> vector<16x256xf32>
    %171 = arith.addf %165, %170 : vector<16x256xf32>
    %172 = vector.extract_strided_slice %146 {offsets = [64, 0], sizes = [16, 128], strides = [1, 1]} : vector<256x128xf32> to vector<16x128xf32>
    %173 = arith.truncf %172 : vector<16x128xf32> to vector<16x128xbf16>
    %c4_92 = arith.constant 4 : index
    %c0_93 = arith.constant 0 : index
    %c0_94 = arith.constant 0 : index
    %174 = vector.load %arg8[%c4_92, %c0_93, %c0_94] : memref<16x128x256xbf16, #tpu.memory_space<vmem>>, vector<1x128x256xbf16>
    %175 = vector.shape_cast %174 : vector<1x128x256xbf16> to vector<128x256xbf16>
    %cst_95 = arith.constant dense<0.000000e+00> : vector<16x256xf32>
    %176 = tpu.matmul %173, %175, %cst_95 {dimension_numbers = #tpu.dot_dimension_numbers<[1], [0], [0], [1], [0, 0, 1, 1], [], []>} : vector<16x128xbf16>, vector<128x256xbf16>, vector<16x256xf32> -> vector<16x256xf32>
    %177 = arith.addf %171, %176 : vector<16x256xf32>
    %178 = vector.extract_strided_slice %146 {offsets = [80, 0], sizes = [16, 128], strides = [1, 1]} : vector<256x128xf32> to vector<16x128xf32>
    %179 = arith.truncf %178 : vector<16x128xf32> to vector<16x128xbf16>
    %c5_96 = arith.constant 5 : index
    %c0_97 = arith.constant 0 : index
    %c0_98 = arith.constant 0 : index
    %180 = vector.load %arg8[%c5_96, %c0_97, %c0_98] : memref<16x128x256xbf16, #tpu.memory_space<vmem>>, vector<1x128x256xbf16>
    %181 = vector.shape_cast %180 : vector<1x128x256xbf16> to vector<128x256xbf16>
    %cst_99 = arith.constant dense<0.000000e+00> : vector<16x256xf32>
    %182 = tpu.matmul %179, %181, %cst_99 {dimension_numbers = #tpu.dot_dimension_numbers<[1], [0], [0], [1], [0, 0, 1, 1], [], []>} : vector<16x128xbf16>, vector<128x256xbf16>, vector<16x256xf32> -> vector<16x256xf32>
    %183 = arith.addf %177, %182 : vector<16x256xf32>
    %184 = vector.extract_strided_slice %146 {offsets = [96, 0], sizes = [16, 128], strides = [1, 1]} : vector<256x128xf32> to vector<16x128xf32>
    %185 = arith.truncf %184 : vector<16x128xf32> to vector<16x128xbf16>
    %c6_100 = arith.constant 6 : index
    %c0_101 = arith.constant 0 : index
    %c0_102 = arith.constant 0 : index
    %186 = vector.load %arg8[%c6_100, %c0_101, %c0_102] : memref<16x128x256xbf16, #tpu.memory_space<vmem>>, vector<1x128x256xbf16>
    %187 = vector.shape_cast %186 : vector<1x128x256xbf16> to vector<128x256xbf16>
    %cst_103 = arith.constant dense<0.000000e+00> : vector<16x256xf32>
    %188 = tpu.matmul %185, %187, %cst_103 {dimension_numbers = #tpu.dot_dimension_numbers<[1], [0], [0], [1], [0, 0, 1, 1], [], []>} : vector<16x128xbf16>, vector<128x256xbf16>, vector<16x256xf32> -> vector<16x256xf32>
    %189 = arith.addf %183, %188 : vector<16x256xf32>
    %190 = vector.extract_strided_slice %146 {offsets = [112, 0], sizes = [16, 128], strides = [1, 1]} : vector<256x128xf32> to vector<16x128xf32>
    %191 = arith.truncf %190 : vector<16x128xf32> to vector<16x128xbf16>
    %c7_104 = arith.constant 7 : index
    %c0_105 = arith.constant 0 : index
    %c0_106 = arith.constant 0 : index
    %192 = vector.load %arg8[%c7_104, %c0_105, %c0_106] : memref<16x128x256xbf16, #tpu.memory_space<vmem>>, vector<1x128x256xbf16>
    %193 = vector.shape_cast %192 : vector<1x128x256xbf16> to vector<128x256xbf16>
    %cst_107 = arith.constant dense<0.000000e+00> : vector<16x256xf32>
    %194 = tpu.matmul %191, %193, %cst_107 {dimension_numbers = #tpu.dot_dimension_numbers<[1], [0], [0], [1], [0, 0, 1, 1], [], []>} : vector<16x128xbf16>, vector<128x256xbf16>, vector<16x256xf32> -> vector<16x256xf32>
    %195 = arith.addf %189, %194 : vector<16x256xf32>
    %196 = vector.extract_strided_slice %146 {offsets = [128, 0], sizes = [16, 128], strides = [1, 1]} : vector<256x128xf32> to vector<16x128xf32>
    %197 = arith.truncf %196 : vector<16x128xf32> to vector<16x128xbf16>
    %c8_108 = arith.constant 8 : index
    %c0_109 = arith.constant 0 : index
    %c0_110 = arith.constant 0 : index
    %198 = vector.load %arg8[%c8_108, %c0_109, %c0_110] : memref<16x128x256xbf16, #tpu.memory_space<vmem>>, vector<1x128x256xbf16>
    %199 = vector.shape_cast %198 : vector<1x128x256xbf16> to vector<128x256xbf16>
    %cst_111 = arith.constant dense<0.000000e+00> : vector<16x256xf32>
    %200 = tpu.matmul %197, %199, %cst_111 {dimension_numbers = #tpu.dot_dimension_numbers<[1], [0], [0], [1], [0, 0, 1, 1], [], []>} : vector<16x128xbf16>, vector<128x256xbf16>, vector<16x256xf32> -> vector<16x256xf32>
    %201 = arith.addf %195, %200 : vector<16x256xf32>
    %202 = vector.extract_strided_slice %146 {offsets = [144, 0], sizes = [16, 128], strides = [1, 1]} : vector<256x128xf32> to vector<16x128xf32>
    %203 = arith.truncf %202 : vector<16x128xf32> to vector<16x128xbf16>
    %c9_112 = arith.constant 9 : index
    %c0_113 = arith.constant 0 : index
    %c0_114 = arith.constant 0 : index
    %204 = vector.load %arg8[%c9_112, %c0_113, %c0_114] : memref<16x128x256xbf16, #tpu.memory_space<vmem>>, vector<1x128x256xbf16>
    %205 = vector.shape_cast %204 : vector<1x128x256xbf16> to vector<128x256xbf16>
    %cst_115 = arith.constant dense<0.000000e+00> : vector<16x256xf32>
    %206 = tpu.matmul %203, %205, %cst_115 {dimension_numbers = #tpu.dot_dimension_numbers<[1], [0], [0], [1], [0, 0, 1, 1], [], []>} : vector<16x128xbf16>, vector<128x256xbf16>, vector<16x256xf32> -> vector<16x256xf32>
    %207 = arith.addf %201, %206 : vector<16x256xf32>
    %208 = vector.extract_strided_slice %146 {offsets = [160, 0], sizes = [16, 128], strides = [1, 1]} : vector<256x128xf32> to vector<16x128xf32>
    %209 = arith.truncf %208 : vector<16x128xf32> to vector<16x128xbf16>
    %c10_116 = arith.constant 10 : index
    %c0_117 = arith.constant 0 : index
    %c0_118 = arith.constant 0 : index
    %210 = vector.load %arg8[%c10_116, %c0_117, %c0_118] : memref<16x128x256xbf16, #tpu.memory_space<vmem>>, vector<1x128x256xbf16>
    %211 = vector.shape_cast %210 : vector<1x128x256xbf16> to vector<128x256xbf16>
    %cst_119 = arith.constant dense<0.000000e+00> : vector<16x256xf32>
    %212 = tpu.matmul %209, %211, %cst_119 {dimension_numbers = #tpu.dot_dimension_numbers<[1], [0], [0], [1], [0, 0, 1, 1], [], []>} : vector<16x128xbf16>, vector<128x256xbf16>, vector<16x256xf32> -> vector<16x256xf32>
    %213 = arith.addf %207, %212 : vector<16x256xf32>
    %214 = vector.extract_strided_slice %146 {offsets = [176, 0], sizes = [16, 128], strides = [1, 1]} : vector<256x128xf32> to vector<16x128xf32>
    %215 = arith.truncf %214 : vector<16x128xf32> to vector<16x128xbf16>
    %c11_120 = arith.constant 11 : index
    %c0_121 = arith.constant 0 : index
    %c0_122 = arith.constant 0 : index
    %216 = vector.load %arg8[%c11_120, %c0_121, %c0_122] : memref<16x128x256xbf16, #tpu.memory_space<vmem>>, vector<1x128x256xbf16>
    %217 = vector.shape_cast %216 : vector<1x128x256xbf16> to vector<128x256xbf16>
    %cst_123 = arith.constant dense<0.000000e+00> : vector<16x256xf32>
    %218 = tpu.matmul %215, %217, %cst_123 {dimension_numbers = #tpu.dot_dimension_numbers<[1], [0], [0], [1], [0, 0, 1, 1], [], []>} : vector<16x128xbf16>, vector<128x256xbf16>, vector<16x256xf32> -> vector<16x256xf32>
    %219 = arith.addf %213, %218 : vector<16x256xf32>
    %220 = vector.extract_strided_slice %146 {offsets = [192, 0], sizes = [16, 128], strides = [1, 1]} : vector<256x128xf32> to vector<16x128xf32>
    %221 = arith.truncf %220 : vector<16x128xf32> to vector<16x128xbf16>
    %c12_124 = arith.constant 12 : index
    %c0_125 = arith.constant 0 : index
    %c0_126 = arith.constant 0 : index
    %222 = vector.load %arg8[%c12_124, %c0_125, %c0_126] : memref<16x128x256xbf16, #tpu.memory_space<vmem>>, vector<1x128x256xbf16>
    %223 = vector.shape_cast %222 : vector<1x128x256xbf16> to vector<128x256xbf16>
    %cst_127 = arith.constant dense<0.000000e+00> : vector<16x256xf32>
    %224 = tpu.matmul %221, %223, %cst_127 {dimension_numbers = #tpu.dot_dimension_numbers<[1], [0], [0], [1], [0, 0, 1, 1], [], []>} : vector<16x128xbf16>, vector<128x256xbf16>, vector<16x256xf32> -> vector<16x256xf32>
    %225 = arith.addf %219, %224 : vector<16x256xf32>
    %226 = vector.extract_strided_slice %146 {offsets = [208, 0], sizes = [16, 128], strides = [1, 1]} : vector<256x128xf32> to vector<16x128xf32>
    %227 = arith.truncf %226 : vector<16x128xf32> to vector<16x128xbf16>
    %c13_128 = arith.constant 13 : index
    %c0_129 = arith.constant 0 : index
    %c0_130 = arith.constant 0 : index
    %228 = vector.load %arg8[%c13_128, %c0_129, %c0_130] : memref<16x128x256xbf16, #tpu.memory_space<vmem>>, vector<1x128x256xbf16>
    %229 = vector.shape_cast %228 : vector<1x128x256xbf16> to vector<128x256xbf16>
    %cst_131 = arith.constant dense<0.000000e+00> : vector<16x256xf32>
    %230 = tpu.matmul %227, %229, %cst_131 {dimension_numbers = #tpu.dot_dimension_numbers<[1], [0], [0], [1], [0, 0, 1, 1], [], []>} : vector<16x128xbf16>, vector<128x256xbf16>, vector<16x256xf32> -> vector<16x256xf32>
    %231 = arith.addf %225, %230 : vector<16x256xf32>
    %232 = vector.extract_strided_slice %146 {offsets = [224, 0], sizes = [16, 128], strides = [1, 1]} : vector<256x128xf32> to vector<16x128xf32>
    %233 = arith.truncf %232 : vector<16x128xf32> to vector<16x128xbf16>
    %c14_132 = arith.constant 14 : index
    %c0_133 = arith.constant 0 : index
    %c0_134 = arith.constant 0 : index
    %234 = vector.load %arg8[%c14_132, %c0_133, %c0_134] : memref<16x128x256xbf16, #tpu.memory_space<vmem>>, vector<1x128x256xbf16>
    %235 = vector.shape_cast %234 : vector<1x128x256xbf16> to vector<128x256xbf16>
    %cst_135 = arith.constant dense<0.000000e+00> : vector<16x256xf32>
    %236 = tpu.matmul %233, %235, %cst_135 {dimension_numbers = #tpu.dot_dimension_numbers<[1], [0], [0], [1], [0, 0, 1, 1], [], []>} : vector<16x128xbf16>, vector<128x256xbf16>, vector<16x256xf32> -> vector<16x256xf32>
    %237 = arith.addf %231, %236 : vector<16x256xf32>
    %238 = vector.extract_strided_slice %146 {offsets = [240, 0], sizes = [16, 128], strides = [1, 1]} : vector<256x128xf32> to vector<16x128xf32>
    %239 = arith.truncf %238 : vector<16x128xf32> to vector<16x128xbf16>
    %c15_136 = arith.constant 15 : index
    %c0_137 = arith.constant 0 : index
    %c0_138 = arith.constant 0 : index
    %240 = vector.load %arg8[%c15_136, %c0_137, %c0_138] : memref<16x128x256xbf16, #tpu.memory_space<vmem>>, vector<1x128x256xbf16>
    %241 = vector.shape_cast %240 : vector<1x128x256xbf16> to vector<128x256xbf16>
    %cst_139 = arith.constant dense<0.000000e+00> : vector<16x256xf32>
    %242 = tpu.matmul %239, %241, %cst_139 {dimension_numbers = #tpu.dot_dimension_numbers<[1], [0], [0], [1], [0, 0, 1, 1], [], []>} : vector<16x128xbf16>, vector<128x256xbf16>, vector<16x256xf32> -> vector<16x256xf32>
    %243 = arith.addf %237, %242 : vector<16x256xf32>
    %c0_140 = arith.constant 0 : index
    %c0_141 = arith.constant 0 : index
    %244 = vector.load %arg9[%c0_140, %c0_141] : memref<1x256xf32, #tpu.memory_space<vmem>>, vector<1x256xf32>
    %245 = vector.broadcast %244 : vector<1x256xf32> to vector<16x256xf32>
    %246 = arith.addf %243, %245 : vector<16x256xf32>
    %cst_142 = arith.constant dense<0.000000e+00> : vector<256xf32>
    %247 = vector.multi_reduction <add>, %246, %cst_142 [0] : vector<16x256xf32> to vector<256xf32>
    %248 = vector.shape_cast %247 : vector<256xf32> to vector<1x256xf32>
    %cst_143 = arith.constant 1.600000e+01 : f32
    %249 = vector.broadcast %cst_143 : f32 to vector<1x256xf32>
    %250 = arith.divf %248, %249 : vector<1x256xf32>
    %251 = vector.broadcast %250 : vector<1x256xf32> to vector<16x256xf32>
    %252 = arith.subf %246, %251 : vector<16x256xf32>
    %253 = arith.mulf %252, %252 : vector<16x256xf32>
    %cst_144 = arith.constant dense<0.000000e+00> : vector<256xf32>
    %254 = vector.multi_reduction <add>, %253, %cst_144 [0] : vector<16x256xf32> to vector<256xf32>
    %255 = vector.shape_cast %254 : vector<256xf32> to vector<1x256xf32>
    %cst_145 = arith.constant 1.600000e+01 : f32
    %256 = vector.broadcast %cst_145 : f32 to vector<1x256xf32>
    %257 = arith.divf %255, %256 : vector<1x256xf32>
    %258 = vector.broadcast %250 : vector<1x256xf32> to vector<16x256xf32>
    %259 = arith.subf %246, %258 : vector<16x256xf32>
    %cst_146 = arith.constant 9.99999974E-6 : f32
    %260 = vector.broadcast %cst_146 : f32 to vector<1x256xf32>
    %261 = arith.addf %257, %260 : vector<1x256xf32>
    %262 = math.rsqrt %261 : vector<1x256xf32>
    %263 = vector.broadcast %262 : vector<1x256xf32> to vector<16x256xf32>
    %264 = arith.mulf %259, %263 : vector<16x256xf32>
    %c0_147 = arith.constant 0 : index
    %c0_148 = arith.constant 0 : index
    %c0_149 = arith.constant 0 : index
    %265 = vector.load %arg11[%c0_147, %c0_148, %c0_149] : memref<1x16x256xf32, #tpu.memory_space<vmem>>, vector<1x16x256xf32>
    %266 = vector.shape_cast %265 : vector<1x16x256xf32> to vector<16x256xf32>
    %267 = vector.shape_cast %264 : vector<16x256xf32> to vector<1x16x256xf32>
    tpu.vector_store %arg11[%c0_147, %c0_148, %c0_149], %267 {strides = array<i32>} : memref<1x16x256xf32, #tpu.memory_space<vmem>>, vector<1x16x256xf32>,
    %c0_150 = arith.constant 0 : index
    %c0_151 = arith.constant 0 : index
    %268 = vector.load %arg10[%c0_150, %c0_151] : memref<16x256xf32, #tpu.memory_space<vmem>>, vector<16x256xf32>
    %269 = arith.mulf %264, %268 : vector<16x256xf32>
    %cst_152 = arith.constant dense<0.000000e+00> : vector<16xf32>
    %270 = vector.multi_reduction <add>, %269, %cst_152 [1] : vector<16x256xf32> to vector<16xf32>
    %271 = vector.shape_cast %270 : vector<16xf32> to vector<16x1xf32>
    %cst_153 = arith.constant dense<0.000000e+00> : vector<1xf32>
    %272 = vector.multi_reduction <add>, %271, %cst_153 [0] : vector<16x1xf32> to vector<1xf32>
    %273 = vector.shape_cast %272 : vector<1xf32> to vector<1x1xf32>
    %cst_154 = arith.constant 0.000000e+00 : f32
    %274 = vector.broadcast %cst_154 : f32 to vector<1x1xf32>
    %275 = arith.subf %274, %273 : vector<1x1xf32>
    %276 = math.exp %275 : vector<1x1xf32>
    %cst_155 = arith.constant 1.000000e+00 : f32
    %277 = vector.broadcast %cst_155 : f32 to vector<1x1xf32>
    %278 = arith.addf %277, %276 : vector<1x1xf32>
    %cst_156 = arith.constant 1.000000e+00 : f32
    %279 = vector.broadcast %cst_156 : f32 to vector<1x1xf32>
    %280 = arith.divf %279, %278 : vector<1x1xf32>
    %c0_157 = arith.constant 0 : index
    %c0_158 = arith.constant 0 : index
    %c0_159 = arith.constant 0 : index
    %281 = vector.load %arg12[%c0_157, %c0_158, %c0_159] : memref<1x1x1xf32, #tpu.memory_space<vmem>>, vector<1x1x1xf32>
    %282 = vector.shape_cast %281 : vector<1x1x1xf32> to vector<1x1xf32>
    %283 = vector.shape_cast %280 : vector<1x1xf32> to vector<1x1x1xf32>
    tpu.vector_store %arg12[%c0_157, %c0_158, %c0_159], %283 {strides = array<i32>} : memref<1x1x1xf32, #tpu.memory_space<vmem>>, vector<1x1x1xf32>,
    return
  }
  func.func @transform_0(%arg0: i32) -> (i32, i32, i32) {
    %c0_i32 = arith.constant 0 : i32
    %c0_i32_0 = arith.constant 0 : i32
    %c0_i32_1 = arith.constant 0 : i32
    return %arg0, %c0_i32, %c0_i32_0 : i32, i32, i32
  }
  func.func @transform_1(%arg0: i32) -> (i32, i32) {
    %c0_i32 = arith.constant 0 : i32
    %c0_i32_0 = arith.constant 0 : i32
    %c0_i32_1 = arith.constant 0 : i32
    return %c0_i32, %c0_i32_0 : i32, i32
  }
  func.func @transform_2(%arg0: i32) -> (i32, i32) {
    %c0_i32 = arith.constant 0 : i32
    %c0_i32_0 = arith.constant 0 : i32
    %c0_i32_1 = arith.constant 0 : i32
    return %c0_i32, %c0_i32_0 : i32, i32
  }
  func.func @transform_3(%arg0: i32) -> (i32, i32) {
    %c0_i32 = arith.constant 0 : i32
    %c0_i32_0 = arith.constant 0 : i32
    %c0_i32_1 = arith.constant 0 : i32
    return %c0_i32, %c0_i32_0 : i32, i32
  }
  func.func @transform_4(%arg0: i32) -> (i32, i32, i32) {
    %c0_i32 = arith.constant 0 : i32
    %c0_i32_0 = arith.constant 0 : i32
    %c0_i32_1 = arith.constant 0 : i32
    %c0_i32_2 = arith.constant 0 : i32
    return %c0_i32, %c0_i32_0, %c0_i32_1 : i32, i32, i32
  }
  func.func @transform_5(%arg0: i32) -> (i32, i32) {
    %c0_i32 = arith.constant 0 : i32
    %c0_i32_0 = arith.constant 0 : i32
    %c0_i32_1 = arith.constant 0 : i32
    return %c0_i32, %c0_i32_0 : i32, i32
  }
  func.func @transform_6(%arg0: i32) -> (i32, i32) {
    %c0_i32 = arith.constant 0 : i32
    %c0_i32_0 = arith.constant 0 : i32
    %c0_i32_1 = arith.constant 0 : i32
    return %c0_i32, %c0_i32_0 : i32, i32
  }
  func.func @transform_7(%arg0: i32) -> (i32, i32, i32) {
    %c0_i32 = arith.constant 0 : i32
    %c0_i32_0 = arith.constant 0 : i32
    %c0_i32_1 = arith.constant 0 : i32
    %c0_i32_2 = arith.constant 0 : i32
    return %c0_i32, %c0_i32_0, %c0_i32_1 : i32, i32, i32
  }
  func.func @transform_8(%arg0: i32) -> (i32, i32) {
    %c0_i32 = arith.constant 0 : i32
    %c0_i32_0 = arith.constant 0 : i32
    %c0_i32_1 = arith.constant 0 : i32
    return %c0_i32, %c0_i32_0 : i32, i32
  }
  func.func @transform_9(%arg0: i32) -> (i32, i32) {
    %c0_i32 = arith.constant 0 : i32
    %c0_i32_0 = arith.constant 0 : i32
    %c0_i32_1 = arith.constant 0 : i32
    return %c0_i32, %c0_i32_0 : i32, i32
  }
  func.func @transform_10(%arg0: i32) -> (i32, i32, i32) {
    %c0_i32 = arith.constant 0 : i32
    %c0_i32_0 = arith.constant 0 : i32
    %c0_i32_1 = arith.constant 0 : i32
    return %arg0, %c0_i32, %c0_i32_0 : i32, i32, i32
  }
  func.func @transform_11(%arg0: i32) -> (i32, i32, i32) {
    %c0_i32 = arith.constant 0 : i32
    %c0_i32_0 = arith.constant 0 : i32
    %c0_i32_1 = arith.constant 0 : i32
    return %arg0, %c0_i32, %c0_i32_0 : i32, i32, i32
  }
}

</mosaic_0001>

<llo_original>
// kernel: ssanet_d_forward.1
$region0: #{ssanet_d_forward.1}
  #allocation0 [shape = 'u32[]', space=smem, size = 0x4, offset = 0x4, fixed_abs, tag = 'smem constant byte address 0x4 - core index']
  #allocation1 [shape = 'u32[144,128]{1,0:T(1,128)}', space=vmem, size = 0x12000, scoped, tag = 'internal scratch']
  %s0 = inlined_call_operand.vmem [shape: f32[2,256,48], index: 0, kind: input, shape index: {}]
  %s1 = inlined_call_operand.vmem [shape: bf16[48,64], index: 1, kind: input, shape index: {}]
  %s2 = inlined_call_operand.vmem [shape: f32[1,64], index: 2, kind: input, shape index: {}]
  %s3 = inlined_call_operand.vmem [shape: bf16[1024,256], index: 3, kind: input, shape index: {}]
  %s4 = inlined_call_operand.vmem [shape: bf16[16,64,128], index: 4, kind: input, shape index: {}]
  %s5 = inlined_call_operand.vmem [shape: f32[1,128], index: 5, kind: input, shape index: {}]
  %s6 = inlined_call_operand.vmem [shape: bf16[256,64], index: 6, kind: input, shape index: {}]
  %s7 = inlined_call_operand.vmem [shape: bf16[16,128,256], index: 7, kind: input, shape index: {}]
  %s8 = inlined_call_operand.vmem [shape: f32[1,256], index: 8, kind: input, shape index: {}]
  %s9 = inlined_call_operand.vmem [shape: f32[16,256], index: 9, kind: input, shape index: {}]
  %s10 = inlined_call_operand.vmem [shape: f32[2,16,256], index: 10, kind: output, shape index: {0}]
  %s11 = inlined_call_operand.vmem [shape: f32[2,1,1], index: 11, kind: output, shape index: {1}]
  %12 = xla_tuple %s10, %s11
  %s13 = sld [smem:[#allocation0]]
  $region81: #{ssanet_d_forward.1} parent=0
    _
  %s15 = ssub.s32 1, %s13
  %s16 = scalar_select 0, %s15, %s13
  loop: start=0, step=1, limit=4
  $region2: #{ssanet_d_forward.1} parent=0 // loop_pre_header
    _
  $region3: #{ssanet_d_forward.1} parent=0 // loop_header
    %s18 = sphi 0, %s22
    %p19 = scmp.ge.s32.totalorder %s18, 4
    %s28 = sphi 0, %s30
    %s31 = sphi 0, %s28
    %s32 = sphi 0, %s31
    %s48 = sphi 0, %s32
    %s52 = sphi 0, %s52
    %s54 = sphi 0, %s52
    %s55 = sphi 0, %s54
    %s69 = sphi 0, %s55
    %s73 = sphi 0, %s73
    %s75 = sphi 0, %s73
    %s76 = sphi 0, %s75
    %s90 = sphi 0, %s76
    %s94 = sphi 0, %s94
    %s96 = sphi 0, %s94
    %s97 = sphi 0, %s96
    %s111 = sphi 0, %s97
    %s115 = sphi 0, %s115
    %s117 = sphi 0, %s115
    %s118 = sphi 0, %s117
    %s132 = sphi 0, %s118
    %s136 = sphi 0, %s136
    %s138 = sphi 0, %s136
    %s139 = sphi 0, %s138
    %s153 = sphi 0, %s139
    %s157 = sphi 0, %s157
    %s159 = sphi 0, %s157
    %s160 = sphi 0, %s159
    %s174 = sphi 0, %s160
    %s178 = sphi 0, %s178
    %s180 = sphi 0, %s178
    %s181 = sphi 0, %s180
    %s195 = sphi 0, %s181
    %s199 = sphi 0, %s199
    %s201 = sphi 0, %s199
    %s202 = sphi 0, %s201
    %s216 = sphi 0, %s202
    %s220 = sphi 0, %s220
    %s222 = sphi 0, %s220
    %s223 = sphi 0, %s222
    %s237 = sphi 0, %s223
    %s243 = sphi 0, %s245
    %s246 = sphi 0, %s243
    %s247 = sphi 0, %s246
    %s263 = sphi 0, %s247
    %s269 = sphi 0, %s271
    %s272 = sphi 0, %s269
    %s273 = sphi 0, %s272
    %s289 = sphi 0, %s273
  $region4: #{ssanet_d_forward.1} parent=0 // loop_header_branch
    %21 = sbr.rel (%p19) target = $region8
  $region5: #{ssanet_d_forward.1} parent=0 // loop_body
    %s23 = ssub.s32 %s18, 1
    %s24 = ssub.s32 %s18, 2
    %s25 = sadd.s32 %s18, 1
    %s26 = ssub.s32 %s18, %s25
    %p27 = scmp.eq.s32.totalorder %s26, 0
    %s29 = sadd.s32 %s28, 1
    %s30 = scalar_select %p27, %s28, %s29
    %p33 = pneg %p27
    %p34 = scmp.eq.s32.totalorder %s18, 1
    %p35 = por %p33, %p34
    %p36 = scmp.ne.s32.totalorder %s28, %s31
    %p37 = scmp.eq.s32.totalorder %s18, 0
    %p38 = por %p36, %p37
    %p39 = scmp.ne.s32.totalorder %s28, %s31
    %p40 = scmp.eq.s32.totalorder %s23, 1
    %p41 = por %p39, %p40
    %p42 = scmp.ne.s32.totalorder %s31, %s32
    %p43 = scmp.eq.s32.totalorder %s23, 0
    %p44 = por %p42, %p43
    %p45 = scmp.ne.s32.totalorder %s31, %s32
    %p46 = scmp.eq.s32.totalorder %s24, 1
    %p47 = por %p45, %p46
    %p49 = scmp.ne.s32.totalorder %s32, %s48
    %p50 = scmp.eq.s32.totalorder %s24, 0
    %p51 = por %p49, %p50
    %s53 = sadd.s32 %s52, 1
    %p56 = scmp.eq.s32.totalorder %s18, 1
    %p57 = scmp.ne.s32.totalorder %s52, %s54
    %p58 = scmp.eq.s32.totalorder %s18, 0
    %p59 = por %p57, %p58
    %p60 = scmp.ne.s32.totalorder %s52, %s54
    %p61 = scmp.eq.s32.totalorder %s23, 1
    %p62 = por %p60, %p61
    %p63 = scmp.ne.s32.totalorder %s54, %s55
    %p64 = scmp.eq.s32.totalorder %s23, 0
    %p65 = por %p63, %p64
    %p66 = scmp.ne.s32.totalorder %s54, %s55
    %p67 = scmp.eq.s32.totalorder %s24, 1
    %p68 = por %p66, %p67
    %p70 = scmp.ne.s32.totalorder %s55, %s69
    %p71 = scmp.eq.s32.totalorder %s24, 0
    %p72 = por %p70, %p71
    %s74 = sadd.s32 %s73, 1
    %p77 = scmp.eq.s32.totalorder %s18, 1
    %p78 = scmp.ne.s32.totalorder %s73, %s75
    %p79 = scmp.eq.s32.totalorder %s18, 0
    %p80 = por %p78, %p79
    %p81 = scmp.ne.s32.totalorder %s73, %s75
    %p82 = scmp.eq.s32.totalorder %s23, 1
    %p83 = por %p81, %p82
    %p84 = scmp.ne.s32.totalorder %s75, %s76
    %p85 = scmp.eq.s32.totalorder %s23, 0
    %p86 = por %p84, %p85
    %p87 = scmp.ne.s32.totalorder %s75, %s76
    %p88 = scmp.eq.s32.totalorder %s24, 1
    %p89 = por %p87, %p88
    %p91 = scmp.ne.s32.totalorder %s76, %s90
    %p92 = scmp.eq.s32.totalorder %s24, 0
    %p93 = por %p91, %p92
    %s95 = sadd.s32 %s94, 1
    %p98 = scmp.eq.s32.totalorder %s18, 1
    %p99 = scmp.ne.s32.totalorder %s94, %s96
    %p100 = scmp.eq.s32.totalorder %s18, 0
    %p101 = por %p99, %p100
    %p102 = scmp.ne.s32.totalorder %s94, %s96
    %p103 = scmp.eq.s32.totalorder %s23, 1
    %p104 = por %p102, %p103
    %p105 = scmp.ne.s32.totalorder %s96, %s97
    %p106 = scmp.eq.s32.totalorder %s23, 0
    %p107 = por %p105, %p106
    %p108 = scmp.ne.s32.totalorder %s96, %s97
    %p109 = scmp.eq.s32.totalorder %s24, 1
    %p110 = por %p108, %p109
    %p112 = scmp.ne.s32.totalorder %s97, %s111
    %p113 = scmp.eq.s32.totalorder %s24, 0
    %p114 = por %p112, %p113
    %s116 = sadd.s32 %s115, 1
    %p119 = scmp.eq.s32.totalorder %s18, 1
    %p120 = scmp.ne.s32.totalorder %s115, %s117
    %p121 = scmp.eq.s32.totalorder %s18, 0
    %p122 = por %p120, %p121
    %p123 = scmp.ne.s32.totalorder %s115, %s117
    %p124 = scmp.eq.s32.totalorder %s23, 1
    %p125 = por %p123, %p124
    %p126 = scmp.ne.s32.totalorder %s117, %s118
    %p127 = scmp.eq.s32.totalorder %s23, 0
    %p128 = por %p126, %p127
    %p129 = scmp.ne.s32.totalorder %s117, %s118
    %p130 = scmp.eq.s32.totalorder %s24, 1
    %p131 = por %p129, %p130
    %p133 = scmp.ne.s32.totalorder %s118, %s132
    %p134 = scmp.eq.s32.totalorder %s24, 0
    %p135 = por %p133, %p134
    %s137 = sadd.s32 %s136, 1
    %p140 = scmp.eq.s32.totalorder %s18, 1
    %p141 = scmp.ne.s32.totalorder %s136, %s138
    %p142 = scmp.eq.s32.totalorder %s18, 0
    %p143 = por %p141, %p142
    %p144 = scmp.ne.s32.totalorder %s136, %s138
    %p145 = scmp.eq.s32.totalorder %s23, 1
    %p146 = por %p144, %p145
    %p147 = scmp.ne.s32.totalorder %s138, %s139
    %p148 = scmp.eq.s32.totalorder %s23, 0
    %p149 = por %p147, %p148
    %p150 = scmp.ne.s32.totalorder %s138, %s139
    %p151 = scmp.eq.s32.totalorder %s24, 1
    %p152 = por %p150, %p151
    %p154 = scmp.ne.s32.totalorder %s139, %s153
    %p155 = scmp.eq.s32.totalorder %s24, 0
    %p156 = por %p154, %p155
    %s158 = sadd.s32 %s157, 1
    %p161 = scmp.eq.s32.totalorder %s18, 1
    %p162 = scmp.ne.s32.totalorder %s157, %s159
    %p163 = scmp.eq.s32.totalorder %s18, 0
    %p164 = por %p162, %p163
    %p165 = scmp.ne.s32.totalorder %s157, %s159
    %p166 = scmp.eq.s32.totalorder %s23, 1
    %p167 = por %p165, %p166
    %p168 = scmp.ne.s32.totalorder %s159, %s160
    %p169 = scmp.eq.s32.totalorder %s23, 0
    %p170 = por %p168, %p169
    %p171 = scmp.ne.s32.totalorder %s159, %s160
    %p172 = scmp.eq.s32.totalorder %s24, 1
    %p173 = por %p171, %p172
    %p175 = scmp.ne.s32.totalorder %s160, %s174
    %p176 = scmp.eq.s32.totalorder %s24, 0
    %p177 = por %p175, %p176
    %s179 = sadd.s32 %s178, 1
    %p182 = scmp.eq.s32.totalorder %s18, 1
    %p183 = scmp.ne.s32.totalorder %s178, %s180
    %p184 = scmp.eq.s32.totalorder %s18, 0
    %p185 = por %p183, %p184
    %p186 = scmp.ne.s32.totalorder %s178, %s180
    %p187 = scmp.eq.s32.totalorder %s23, 1
    %p188 = por %p186, %p187
    %p189 = scmp.ne.s32.totalorder %s180, %s181
    %p190 = scmp.eq.s32.totalorder %s23, 0
    %p191 = por %p189, %p190
    %p192 = scmp.ne.s32.totalorder %s180, %s181
    %p193 = scmp.eq.s32.totalorder %s24, 1
    %p194 = por %p192, %p193
    %p196 = scmp.ne.s32.totalorder %s181, %s195
    %p197 = scmp.eq.s32.totalorder %s24, 0
    %p198 = por %p196, %p197
    %s200 = sadd.s32 %s199, 1
    %p203 = scmp.eq.s32.totalorder %s18, 1
    %p204 = scmp.ne.s32.totalorder %s199, %s201
    %p205 = scmp.eq.s32.totalorder %s18, 0
    %p206 = por %p204, %p205
    %p207 = scmp.ne.s32.totalorder %s199, %s201
    %p208 = scmp.eq.s32.totalorder %s23, 1
    %p209 = por %p207, %p208
    %p210 = scmp.ne.s32.totalorder %s201, %s202
    %p211 = scmp.eq.s32.totalorder %s23, 0
    %p212 = por %p210, %p211
    %p213 = scmp.ne.s32.totalorder %s201, %s202
    %p214 = scmp.eq.s32.totalorder %s24, 1
    %p215 = por %p213, %p214
    %p217 = scmp.ne.s32.totalorder %s202, %s216
    %p218 = scmp.eq.s32.totalorder %s24, 0
    %p219 = por %p217, %p218
    %s221 = sadd.s32 %s220, 1
    %p224 = scmp.eq.s32.totalorder %s18, 1
    %p225 = scmp.ne.s32.totalorder %s220, %s222
    %p226 = scmp.eq.s32.totalorder %s18, 0
    %p227 = por %p225, %p226
    %p228 = scmp.ne.s32.totalorder %s220, %s222
    %p229 = scmp.eq.s32.totalorder %s23, 1
    %p230 = por %p228, %p229
    %p231 = scmp.ne.s32.totalorder %s222, %s223
    %p232 = scmp.eq.s32.totalorder %s23, 0
    %p233 = por %p231, %p232
    %p234 = scmp.ne.s32.totalorder %s222, %s223
    %p235 = scmp.eq.s32.totalorder %s24, 1
    %p236 = por %p234, %p235
    %p238 = scmp.ne.s32.totalorder %s223, %s237
    %p239 = scmp.eq.s32.totalorder %s24, 0
    %p240 = por %p238, %p239
    %s241 = ssub.s32 %s18, %s25
    %p242 = scmp.eq.s32.totalorder %s241, 0
    %s244 = sadd.s32 %s243, 1
    %s245 = scalar_select %p242, %s243, %s244
    %p248 = pneg %p242
    %p249 = scmp.eq.s32.totalorder %s18, 1
    %p250 = por %p248, %p249
    %p251 = scmp.ne.s32.totalorder %s243, %s246
    %p252 = scmp.eq.s32.totalorder %s18, 0
    %p253 = por %p251, %p252
    %p254 = scmp.ne.s32.totalorder %s243, %s246
    %p255 = scmp.eq.s32.totalorder %s23, 1
    %p256 = por %p254, %p255
    %p257 = scmp.ne.s32.totalorder %s246, %s247
    %p258 = scmp.eq.s32.totalorder %s23, 0
    %p259 = por %p257, %p258
    %p260 = scmp.ne.s32.totalorder %s246, %s247
    %p261 = scmp.eq.s32.totalorder %s24, 1
    %p262 = por %p260, %p261
    %p264 = scmp.ne.s32.totalorder %s247, %s263
    %p265 = scmp.eq.s32.totalorder %s24, 0
    %p266 = por %p264, %p265
    %s267 = ssub.s32 %s18, %s25
    %p268 = scmp.eq.s32.totalorder %s267, 0
    %s270 = sadd.s32 %s269, 1
    %s271 = scalar_select %p268, %s269, %s270
    %p274 = pneg %p268
    %p275 = scmp.eq.s32.totalorder %s18, 1
    %p276 = por %p274, %p275
    %p277 = scmp.ne.s32.totalorder %s269, %s272
    %p278 = scmp.eq.s32.totalorder %s18, 0
    %p279 = por %p277, %p278
    %p280 = scmp.ne.s32.totalorder %s269, %s272
    %p281 = scmp.eq.s32.totalorder %s23, 1
    %p282 = por %p280, %p281
    %p283 = scmp.ne.s32.totalorder %s272, %s273
    %p284 = scmp.eq.s32.totalorder %s23, 0
    %p285 = por %p283, %p284
    %p286 = scmp.ne.s32.totalorder %s272, %s273
    %p287 = scmp.eq.s32.totalorder %s24, 1
    %p288 = por %p286, %p287
    %p290 = scmp.ne.s32.totalorder %s273, %s289
    %p291 = scmp.eq.s32.totalorder %s24, 0
    %p292 = por %p290, %p291
    %p293 = scmp.le.s32.totalorder 1, %s18
    %p294 = scmp.lt.s32.totalorder %s18, 3
    %p295 = pnand %p293, %p294
    %p296 = pneg %p295
    // Predicated region
    $region9: #{ssanet_d_forward.1} parent=5 // pred_check
      _
    $region10: #{ssanet_d_forward.1} parent=5 // pred_check_branch
      %298 = sbr.rel (%p295) target = $region12
    $region11: #{ssanet_d_forward.1} parent=5 // pred_region
      %s299 = ssub.s32 %s18, 1
      // Predicated region
      $region13: #{ssanet_d_forward.1} parent=11 // pred_check
        %p300 = pneg %p65
      $region14: #{ssanet_d_forward.1} parent=11 // pred_check_branch
        %302 = sbr.rel (%p300) target = $region16
      $region15: #{ssanet_d_forward.1} parent=11 // pred_region
        _
      $region16: #{ssanet_d_forward.1} parent=11 // pred_fallthru
        _
      // Predicated region
      $region17: #{ssanet_d_forward.1} parent=11 // pred_check
        %p303 = pneg %p86
      $region18: #{ssanet_d_forward.1} parent=11 // pred_check_branch
        %305 = sbr.rel (%p303) target = $region20
      $region19: #{ssanet_d_forward.1} parent=11 // pred_region
        _
      $region20: #{ssanet_d_forward.1} parent=11 // pred_fallthru
        _
      // Predicated region
      $region21: #{ssanet_d_forward.1} parent=11 // pred_check
        %p306 = pneg %p107
      $region22: #{ssanet_d_forward.1} parent=11 // pred_check_branch
        %308 = sbr.rel (%p306) target = $region24
      $region23: #{ssanet_d_forward.1} parent=11 // pred_region
        _
      $region24: #{ssanet_d_forward.1} parent=11 // pred_fallthru
        _
      // Predicated region
      $region25: #{ssanet_d_forward.1} parent=11 // pred_check
        %p309 = pneg %p128
      $region26: #{ssanet_d_forward.1} parent=11 // pred_check_branch
        %311 = sbr.rel (%p309) target = $region28
      $region27: #{ssanet_d_forward.1} parent=11 // pred_region
        _
      $region28: #{ssanet_d_forward.1} parent=11 // pred_fallthru
        _
      // Predicated region
      $region29: #{ssanet_d_forward.1} parent=11 // pred_check
        %p312 = pneg %p149
      $region30: #{ssanet_d_forward.1} parent=11 // pred_check_branch
        %314 = sbr.rel (%p312) target = $region32
      $region31: #{ssanet_d_forward.1} parent=11 // pred_region
        _
      $region32: #{ssanet_d_forward.1} parent=11 // pred_fallthru
        _
      // Predicated region
      $region33: #{ssanet_d_forward.1} parent=11 // pred_check
        %p315 = pneg %p170
      $region34: #{ssanet_d_forward.1} parent=11 // pred_check_branch
        %317 = sbr.rel (%p315) target = $region36
      $region35: #{ssanet_d_forward.1} parent=11 // pred_region
        _
      $region36: #{ssanet_d_forward.1} parent=11 // pred_fallthru
        _
      // Predicated region
      $region37: #{ssanet_d_forward.1} parent=11 // pred_check
        %p318 = pneg %p191
      $region38: #{ssanet_d_forward.1} parent=11 // pred_check_branch
        %320 = sbr.rel (%p318) target = $region40
      $region39: #{ssanet_d_forward.1} parent=11 // pred_region
        _
      $region40: #{ssanet_d_forward.1} parent=11 // pred_fallthru
        _
      // Predicated region
      $region41: #{ssanet_d_forward.1} parent=11 // pred_check
        %p321 = pneg %p212
      $region42: #{ssanet_d_forward.1} parent=11 // pred_check_branch
        %323 = sbr.rel (%p321) target = $region44
      $region43: #{ssanet_d_forward.1} parent=11 // pred_region
        _
      $region44: #{ssanet_d_forward.1} parent=11 // pred_fallthru
        _
      // Predicated region
      $region45: #{ssanet_d_forward.1} parent=11 // pred_check
        %p324 = pneg %p233
      $region46: #{ssanet_d_forward.1} parent=11 // pred_check_branch
        %326 = sbr.rel (%p324) target = $region48
      $region47: #{ssanet_d_forward.1} parent=11 // pred_region
        _
      $region48: #{ssanet_d_forward.1} parent=11 // pred_fallthru
        _
    $region12: #{ssanet_d_forward.1} parent=5 // pred_fallthru
      _
    %p327 = scmp.lt.s32.totalorder %s18, 2
    // Predicated region
    $region49: #{ssanet_d_forward.1} parent=5 // pred_check
      %p328 = pneg %p327
    $region50: #{ssanet_d_forward.1} parent=5 // pred_check_branch
      %330 = sbr.rel (%p328) target = $region52
    $region51: #{ssanet_d_forward.1} parent=5 // pred_region
      // Predicated region
      $region53: #{ssanet_d_forward.1} parent=51 // pred_check
        %p331 = pneg %p38
      $region54: #{ssanet_d_forward.1} parent=51 // pred_check_branch
        %333 = sbr.rel (%p331) target = $region56
      $region55: #{ssanet_d_forward.1} parent=51 // pred_region
        %p334 = scmp.lt.s32.totalorder %s18, 1
        %s335 = scalar_select %p334, %s18, 1
        %s336 = smul.addr %s335, 32
        %s337 = smul.addr %s336, 8
        %s338 = scalar_lea.vmem %s0, %s337
      $region56: #{ssanet_d_forward.1} parent=51 // pred_fallthru
        _
    $region52: #{ssanet_d_forward.1} parent=5 // pred_fallthru
      _
    %p339 = scmp.le.s32.totalorder 1, %s18
    %p340 = scmp.lt.s32.totalorder %s18, 3
    %p341 = pnand %p339, %p340
    %p342 = pneg %p341
    // Predicated region
    $region57: #{ssanet_d_forward.1} parent=5 // pred_check
      _
    $region58: #{ssanet_d_forward.1} parent=5 // pred_check_branch
      %344 = sbr.rel (%p341) target = $region60
    $region59: #{ssanet_d_forward.1} parent=5 // pred_region
      %s345 = ssub.s32 %s18, 1
      %p346 = scmp.lt.s32.totalorder %s23, 1
      %s347 = scalar_select %p346, %s23, 1
      %s348 = smul.addr %s347, 32
      %s349 = smul.addr %s348, 8
      %s350 = scalar_lea.vmem %s0, %s349
      %p351 = pneg %p44
      %p352 = pneg %p41
      %p353 = pneg %p65
      %p354 = pneg %p62
      %p355 = pneg %p86
      %p356 = pneg %p83
      %p357 = pneg %p107
      %p358 = pneg %p104
      %p359 = pneg %p128
      %p360 = pneg %p125
      %p361 = pneg %p149
      %p362 = pneg %p146
      %p363 = pneg %p170
      %p364 = pneg %p167
      %p365 = pneg %p191
      %p366 = pneg %p188
      %p367 = pneg %p212
      %p368 = pneg %p209
      %p369 = pneg %p233
      %p370 = pneg %p230
      %p371 = pneg %p259
      %p372 = pneg %p256
      %p373 = scmp.lt.s32.totalorder %s23, 1
      %s374 = scalar_select %p373, %s23, 1
      %s375 = smul.addr %s374, 4
      %s376 = smul.addr %s375, 8
      %s377 = scalar_lea.vmem %s10, %s376
      %p378 = pneg %p285
      %p379 = pneg %p282
      %p380 = scmp.lt.s32.totalorder %s23, 1
      %s381 = scalar_select %p380, %s23, 1
      %s382 = scalar_lea.vmem %s11, %s381
      %p383 = scmp.lt.s32.totalorder %s23, 1
      %s384 = scalar_select %p383, %s23, 1
      %s385 = smul.addr %s384, 32
      %s386 = smul.addr %s385, 8
      %s387 = scalar_lea.vmem %s0, %s386
      %p388 = scmp.lt.s32.totalorder %s23, 1
      %s389 = scalar_select %p388, %s23, 1
      %s390 = smul.addr %s389, 4
      %s391 = smul.addr %s390, 8
      %s392 = scalar_lea.vmem %s10, %s391
      %p393 = scmp.lt.s32.totalorder %s23, 1
      %s394 = scalar_select %p393, %s23, 1
      %s395 = scalar_lea.vmem %s11, %s394
      %v397 = vld [vmem:[%s387] sm:$0xff]
      %v398 = vld [vmem:[%s387 + $0x8] sm:$0xff]
      %v399 = vld [vmem:[%s387 + $0x10] sm:$0xff]
      %v400 = vld [vmem:[%s387 + $0x18] sm:$0xff]
      %v401 = vld [vmem:[%s387 + $0x20] sm:$0xff]
      %v402 = vld [vmem:[%s387 + $0x28] sm:$0xff]
      %v403 = vld [vmem:[%s387 + $0x30] sm:$0xff]
      %v404 = vld [vmem:[%s387 + $0x38] sm:$0xff]
      %v405 = vld [vmem:[%s387 + $0x40] sm:$0xff]
      %v406 = vld [vmem:[%s387 + $0x48] sm:$0xff]
      %v407 = vld [vmem:[%s387 + $0x50] sm:$0xff]
      %v408 = vld [vmem:[%s387 + $0x58] sm:$0xff]
      %v409 = vld [vmem:[%s387 + $0x60] sm:$0xff]
      %v410 = vld [vmem:[%s387 + $0x68] sm:$0xff]
      %v411 = vld [vmem:[%s387 + $0x70] sm:$0xff]
      %v412 = vld [vmem:[%s387 + $0x78] sm:$0xff]
      %v413 = vld [vmem:[%s387 + $0x80] sm:$0xff]
      %v414 = vld [vmem:[%s387 + $0x88] sm:$0xff]
      %v415 = vld [vmem:[%s387 + $0x90] sm:$0xff]
      %v416 = vld [vmem:[%s387 + $0x98] sm:$0xff]
      %v417 = vld [vmem:[%s387 + $0xa0] sm:$0xff]
      %v418 = vld [vmem:[%s387 + $0xa8] sm:$0xff]
      %v419 = vld [vmem:[%s387 + $0xb0] sm:$0xff]
      %v420 = vld [vmem:[%s387 + $0xb8] sm:$0xff]
      %v421 = vld [vmem:[%s387 + $0xc0] sm:$0xff]
      %v422 = vld [vmem:[%s387 + $0xc8] sm:$0xff]
      %v423 = vld [vmem:[%s387 + $0xd0] sm:$0xff]
      %v424 = vld [vmem:[%s387 + $0xd8] sm:$0xff]
      %v425 = vld [vmem:[%s387 + $0xe0] sm:$0xff]
      %v426 = vld [vmem:[%s387 + $0xe8] sm:$0xff]
      %v427 = vld [vmem:[%s387 + $0xf0] sm:$0xff]
      %v428 = vld [vmem:[%s387 + $0xf8] sm:$0xff]
      %vm429 = vcmp.ge.f32.partialorder %v397, 0.0
      %vm430 = vcmp.ge.f32.partialorder %v398, 0.0
      %vm431 = vcmp.ge.f32.partialorder %v399, 0.0
      %vm432 = vcmp.ge.f32.partialorder %v400, 0.0
      %vm433 = vcmp.ge.f32.partialorder %v401, 0.0
      %vm434 = vcmp.ge.f32.partialorder %v402, 0.0
      %vm435 = vcmp.ge.f32.partialorder %v403, 0.0
      %vm436 = vcmp.ge.f32.partialorder %v404, 0.0
      %vm437 = vcmp.ge.f32.partialorder %v405, 0.0
      %vm438 = vcmp.ge.f32.partialorder %v406, 0.0
      %vm439 = vcmp.ge.f32.partialorder %v407, 0.0
      %vm440 = vcmp.ge.f32.partialorder %v408, 0.0
      %vm441 = vcmp.ge.f32.partialorder %v409, 0.0
      %vm442 = vcmp.ge.f32.partialorder %v410, 0.0
      %vm443 = vcmp.ge.f32.partialorder %v411, 0.0
      %vm444 = vcmp.ge.f32.partialorder %v412, 0.0
      %vm445 = vcmp.ge.f32.partialorder %v413, 0.0
      %vm446 = vcmp.ge.f32.partialorder %v414, 0.0
      %vm447 = vcmp.ge.f32.partialorder %v415, 0.0
      %vm448 = vcmp.ge.f32.partialorder %v416, 0.0
      %vm449 = vcmp.ge.f32.partialorder %v417, 0.0
      %vm450 = vcmp.ge.f32.partialorder %v418, 0.0
      %vm451 = vcmp.ge.f32.partialorder %v419, 0.0
      %vm452 = vcmp.ge.f32.partialorder %v420, 0.0
      %vm453 = vcmp.ge.f32.partialorder %v421, 0.0
      %vm454 = vcmp.ge.f32.partialorder %v422, 0.0
      %vm455 = vcmp.ge.f32.partialorder %v423, 0.0
      %vm456 = vcmp.ge.f32.partialorder %v424, 0.0
      %vm457 = vcmp.ge.f32.partialorder %v425, 0.0
      %vm458 = vcmp.ge.f32.partialorder %v426, 0.0
      %vm459 = vcmp.ge.f32.partialorder %v427, 0.0
      %vm460 = vcmp.ge.f32.partialorder %v428, 0.0
      %v461 = vmul.f32 %v397, 0.2
      %v462 = vmul.f32 %v398, 0.2
      %v463 = vmul.f32 %v399, 0.2
      %v464 = vmul.f32 %v400, 0.2
      %v465 = vmul.f32 %v401, 0.2
      %v466 = vmul.f32 %v402, 0.2
      %v467 = vmul.f32 %v403, 0.2
      %v468 = vmul.f32 %v404, 0.2
      %v469 = vmul.f32 %v405, 0.2
      %v470 = vmul.f32 %v406, 0.2
      %v471 = vmul.f32 %v407, 0.2
      %v472 = vmul.f32 %v408, 0.2
      %v473 = vmul.f32 %v409, 0.2
      %v474 = vmul.f32 %v410, 0.2
      %v475 = vmul.f32 %v411, 0.2
      %v476 = vmul.f32 %v412, 0.2
      %v477 = vmul.f32 %v413, 0.2
      %v478 = vmul.f32 %v414, 0.2
      %v479 = vmul.f32 %v415, 0.2
      %v480 = vmul.f32 %v416, 0.2
      %v481 = vmul.f32 %v417, 0.2
      %v482 = vmul.f32 %v418, 0.2
      %v483 = vmul.f32 %v419, 0.2
      %v484 = vmul.f32 %v420, 0.2
      %v485 = vmul.f32 %v421, 0.2
      %v486 = vmul.f32 %v422, 0.2
      %v487 = vmul.f32 %v423, 0.2
      %v488 = vmul.f32 %v424, 0.2
      %v489 = vmul.f32 %v425, 0.2
      %v490 = vmul.f32 %v426, 0.2
      %v491 = vmul.f32 %v427, 0.2
      %v492 = vmul.f32 %v428, 0.2
      %v493 = vsel %vm429, %v397, %v461
      %v494 = vsel %vm430, %v398, %v462
      %v495 = vsel %vm431, %v399, %v463
      %v496 = vsel %vm432, %v400, %v464
      %v497 = vsel %vm433, %v401, %v465
      %v498 = vsel %vm434, %v402, %v466
      %v499 = vsel %vm435, %v403, %v467
      %v500 = vsel %vm436, %v404, %v468
      %v501 = vsel %vm437, %v405, %v469
      %v502 = vsel %vm438, %v406, %v470
      %v503 = vsel %vm439, %v407, %v471
      %v504 = vsel %vm440, %v408, %v472
      %v505 = vsel %vm441, %v409, %v473
      %v506 = vsel %vm442, %v410, %v474
      %v507 = vsel %vm443, %v411, %v475
      %v508 = vsel %vm444, %v412, %v476
      %v509 = vsel %vm445, %v413, %v477
      %v510 = vsel %vm446, %v414, %v478
      %v511 = vsel %vm447, %v415, %v479
      %v512 = vsel %vm448, %v416, %v480
      %v513 = vsel %vm449, %v417, %v481
      %v514 = vsel %vm450, %v418, %v482
      %v515 = vsel %vm451, %v419, %v483
      %v516 = vsel %vm452, %v420, %v484
      %v517 = vsel %vm453, %v421, %v485
      %v518 = vsel %vm454, %v422, %v486
      %v519 = vsel %vm455, %v423, %v487
      %v520 = vsel %vm456, %v424, %v488
      %v521 = vsel %vm457, %v425, %v489
      %v522 = vsel %vm458, %v426, %v490
      %v523 = vsel %vm459, %v427, %v491
      %v524 = vsel %vm460, %v428, %v492
      %v525 = vpack.c.bf16 %v494, %v493
      %v526 = vpack.c.bf16 %v496, %v495
      %v527 = vpack.c.bf16 %v498, %v497
      %v528 = vpack.c.bf16 %v500, %v499
      %v529 = vpack.c.bf16 %v502, %v501
      %v530 = vpack.c.bf16 %v504, %v503
      %v531 = vpack.c.bf16 %v506, %v505
      %v532 = vpack.c.bf16 %v508, %v507
      %v533 = vpack.c.bf16 %v510, %v509
      %v534 = vpack.c.bf16 %v512, %v511
      %v535 = vpack.c.bf16 %v514, %v513
      %v536 = vpack.c.bf16 %v516, %v515
      %v537 = vpack.c.bf16 %v518, %v517
      %v538 = vpack.c.bf16 %v520, %v519
      %v539 = vpack.c.bf16 %v522, %v521
      %v540 = vpack.c.bf16 %v524, %v523
      %v541 = vld [vmem:[%s1] sm:$0xf]
      %v542 = vld [vmem:[%s1 + $0x4] sm:$0xf]
      %v543 = vld [vmem:[%s1 + $0x8] sm:$0xf]
      %v544 = vld [vmem:[%s1 + $0xc] sm:$0xf]
      %v545 = vld [vmem:[%s1 + $0x10] sm:$0xf]
      %v546 = vld [vmem:[%s1 + $0x14] sm:$0xf]
      %v547 = vld [vmem:[%s2] sm:$0x1]
      %v549 = vlaneseq
      %v550 = vshrl.u32 %v549, 7
      %v551 = vsub.s32 0, %v550
      %v552 = vrot.slane %v547, %v551
      %v560 = vunpack.c.l.b16 %v541
      %v561 = vunpack.c.l.b16 %v542
      %v562 = vunpack.c.l.b16 %v543
      %v563 = vunpack.c.l.b16 %v544
      %v564 = vunpack.c.l.b16 %v545
      %v565 = vunpack.c.l.b16 %v546
      %v566 = vpack.c.b16 %v561, %v560
      %v567 = vpack.c.b16 %v563, %v562
      %v568 = vpack.c.b16 %v565, %v564
      %vm572 = vcmask 392192
      %v574 = vsel %vm572, %v525, 0
      %v577 = vsel %vm572, %v526, 0
      %v580 = vsel %vm572, %v527, 0
      %v583 = vsel %vm572, %v528, 0
      %v586 = vsel %vm572, %v529, 0
      %v589 = vsel %vm572, %v530, 0
      %v592 = vsel %vm572, %v531, 0
      %v595 = vsel %vm572, %v532, 0
      %v598 = vsel %vm572, %v533, 0
      %v601 = vsel %vm572, %v534, 0
      %v604 = vsel %vm572, %v535, 0
      %v607 = vsel %vm572, %v536, 0
      %v610 = vsel %vm572, %v537, 0
      %v613 = vsel %vm572, %v538, 0
      %v616 = vsel %vm572, %v539, 0
      %v619 = vsel %vm572, %v540, 0
      %621 = vmatprep.subr.bf16.mxu0 0
      %622 = vmatpush1.bf16.msra.mxu0 %v566
      %623 = vmatprep.subr.bf16.mxu0 0
      %624 = vmatpush1.bf16.msra.mxu0 %v567
      %625 = vmatprep.subr.bf16.mxu0 0
      %626 = vmatpush1.bf16.msra.mxu0 %v568
      %627 = vmatprep.subr.bf16.mxu0 0
      %628 = vmatpush1.bf16.msra.mxu0 0
      %629 = vmatprep.subr.bf16.mxu0 0
      %630 = vmatpush1.bf16.msra.mxu0 0
      %631 = vmatprep.subr.bf16.mxu0 0
      %632 = vmatpush1.bf16.msra.mxu0 0
      %633 = vmatprep.subr.bf16.mxu0 0
      %634 = vmatpush1.bf16.msra.mxu0 0
      %635 = vmatprep.subr.bf16.mxu0 0
      %636 = vmatpush1.bf16.msra.mxu0 0
      %637 = vmatprep.subr.bf16.mxu0 0
      %638 = vmatpush1.bf16.msra.mxu0 0
      %639 = vmatprep.subr.bf16.mxu0 0
      %640 = vmatpush1.bf16.msra.mxu0 0
      %641 = vmatprep.subr.bf16.mxu0 0
      %642 = vmatpush1.bf16.msra.mxu0 0
      %643 = vmatprep.subr.bf16.mxu0 0
      %644 = vmatpush1.bf16.msra.mxu0 0
      %645 = vmatprep.subr.bf16.mxu0 0
      %646 = vmatpush1.bf16.msra.mxu0 0
      %647 = vmatprep.subr.bf16.mxu0 0
      %648 = vmatpush1.bf16.msra.mxu0 0
      %649 = vmatprep.subr.bf16.mxu0 0
      %650 = vmatpush1.bf16.msra.mxu0 0
      %651 = vmatprep.subr.bf16.mxu0 0
      %652 = vmatpush1.bf16.msra.mxu0 0
      %653 = vmatprep.mubr.bf16.mxu0 0
      %654 = vmatmul.mubr.bf16.gmra.mrb[0].mxu0 %v574
      %v655 = vpop.f32.mrb[0].mxu0
      %v656 = vadd.f32 %v552, %v655
      %v657 = vpop.f32.mrb[0].mxu0
      %v658 = vpop.f32.mrb[0].mxu0
      %v659 = vadd.f32 %v552, %v658
      %v660 = vpop.f32.mrb[0].mxu0
      %661 = vmatprep.mubr.bf16.mxu0 0
      %662 = vmatmul.mubr.bf16.gmra.mrb[0].mxu0 %v577
      %v663 = vpop.f32.mrb[0].mxu0
      %v664 = vadd.f32 %v552, %v663
      %v665 = vpop.f32.mrb[0].mxu0
      %v666 = vpop.f32.mrb[0].mxu0
      %v667 = vadd.f32 %v552, %v666
      %v668 = vpop.f32.mrb[0].mxu0
      %669 = vmatprep.mubr.bf16.mxu0 0
      %670 = vmatmul.mubr.bf16.gmra.mrb[0].mxu0 %v580
      %v671 = vpop.f32.mrb[0].mxu0
      %v672 = vadd.f32 %v552, %v671
      %v673 = vpop.f32.mrb[0].mxu0
      %v674 = vpop.f32.mrb[0].mxu0
      %v675 = vadd.f32 %v552, %v674
      %v676 = vpop.f32.mrb[0].mxu0
      %677 = vmatprep.mubr.bf16.mxu0 0
      %678 = vmatmul.mubr.bf16.gmra.mrb[0].mxu0 %v583
      %v679 = vpop.f32.mrb[0].mxu0
      %v680 = vadd.f32 %v552, %v679
      %v681 = vpop.f32.mrb[0].mxu0
      %v682 = vpop.f32.mrb[0].mxu0
      %v683 = vadd.f32 %v552, %v682
      %v684 = vpop.f32.mrb[0].mxu0
      %685 = vmatprep.mubr.bf16.mxu0 0
      %686 = vmatmul.mubr.bf16.gmra.mrb[0].mxu0 %v586
      %v687 = vpop.f32.mrb[0].mxu0
      %v688 = vadd.f32 %v552, %v687
      %v689 = vpop.f32.mrb[0].mxu0
      %v690 = vpop.f32.mrb[0].mxu0
      %v691 = vadd.f32 %v552, %v690
      %v692 = vpop.f32.mrb[0].mxu0
      %693 = vmatprep.mubr.bf16.mxu0 0
      %694 = vmatmul.mubr.bf16.gmra.mrb[0].mxu0 %v589
      %v695 = vpop.f32.mrb[0].mxu0
      %v696 = vadd.f32 %v552, %v695
      %v697 = vpop.f32.mrb[0].mxu0
      %v698 = vpop.f32.mrb[0].mxu0
      %v699 = vadd.f32 %v552, %v698
      %v700 = vpop.f32.mrb[0].mxu0
      %701 = vmatprep.mubr.bf16.mxu0 0
      %702 = vmatmul.mubr.bf16.gmra.mrb[0].mxu0 %v592
      %v703 = vpop.f32.mrb[0].mxu0
      %v704 = vadd.f32 %v552, %v703
      %v705 = vpop.f32.mrb[0].mxu0
      %v706 = vpop.f32.mrb[0].mxu0
      %v707 = vadd.f32 %v552, %v706
      %v708 = vpop.f32.mrb[0].mxu0
      %709 = vmatprep.mubr.bf16.mxu0 0
      %710 = vmatmul.mubr.bf16.gmra.mrb[0].mxu0 %v595
      %v711 = vpop.f32.mrb[0].mxu0
      %v712 = vadd.f32 %v552, %v711
      %v713 = vpop.f32.mrb[0].mxu0
      %v714 = vpop.f32.mrb[0].mxu0
      %v715 = vadd.f32 %v552, %v714
      %v716 = vpop.f32.mrb[0].mxu0
      %717 = vmatprep.mubr.bf16.mxu0 0
      %718 = vmatmul.mubr.bf16.gmra.mrb[0].mxu0 %v598
      %v719 = vpop.f32.mrb[0].mxu0
      %v720 = vadd.f32 %v552, %v719
      %v721 = vpop.f32.mrb[0].mxu0
      %v722 = vpop.f32.mrb[0].mxu0
      %v723 = vadd.f32 %v552, %v722
      %v724 = vpop.f32.mrb[0].mxu0
      %725 = vmatprep.mubr.bf16.mxu0 0
      %726 = vmatmul.mubr.bf16.gmra.mrb[0].mxu0 %v601
      %v727 = vpop.f32.mrb[0].mxu0
      %v728 = vadd.f32 %v552, %v727
      %v729 = vpop.f32.mrb[0].mxu0
      %v730 = vpop.f32.mrb[0].mxu0
      %v731 = vadd.f32 %v552, %v730
      %v732 = vpop.f32.mrb[0].mxu0
      %733 = vmatprep.mubr.bf16.mxu0 0
      %734 = vmatmul.mubr.bf16.gmra.mrb[0].mxu0 %v604
      %v735 = vpop.f32.mrb[0].mxu0
      %v736 = vadd.f32 %v552, %v735
      %v737 = vpop.f32.mrb[0].mxu0
      %v738 = vpop.f32.mrb[0].mxu0
      %v739 = vadd.f32 %v552, %v738
      %v740 = vpop.f32.mrb[0].mxu0
      %741 = vmatprep.mubr.bf16.mxu0 0
      %742 = vmatmul.mubr.bf16.gmra.mrb[0].mxu0 %v607
      %v743 = vpop.f32.mrb[0].mxu0
      %v744 = vadd.f32 %v552, %v743
      %v745 = vpop.f32.mrb[0].mxu0
      %v746 = vpop.f32.mrb[0].mxu0
      %v747 = vadd.f32 %v552, %v746
      %v748 = vpop.f32.mrb[0].mxu0
      %749 = vmatprep.mubr.bf16.mxu0 0
      %750 = vmatmul.mubr.bf16.gmra.mrb[0].mxu0 %v610
      %v751 = vpop.f32.mrb[0].mxu0
      %v752 = vadd.f32 %v552, %v751
      %v753 = vpop.f32.mrb[0].mxu0
      %v754 = vpop.f32.mrb[0].mxu0
      %v755 = vadd.f32 %v552, %v754
      %v756 = vpop.f32.mrb[0].mxu0
      %757 = vmatprep.mubr.bf16.mxu0 0
      %758 = vmatmul.mubr.bf16.gmra.mrb[0].mxu0 %v613
      %v759 = vpop.f32.mrb[0].mxu0
      %v760 = vadd.f32 %v552, %v759
      %v761 = vpop.f32.mrb[0].mxu0
      %v762 = vpop.f32.mrb[0].mxu0
      %v763 = vadd.f32 %v552, %v762
      %v764 = vpop.f32.mrb[0].mxu0
      %765 = vmatprep.mubr.bf16.mxu0 0
      %766 = vmatmul.mubr.bf16.gmra.mrb[0].mxu0 %v616
      %v767 = vpop.f32.mrb[0].mxu0
      %v768 = vadd.f32 %v552, %v767
      %v769 = vpop.f32.mrb[0].mxu0
      %v770 = vpop.f32.mrb[0].mxu0
      %v771 = vadd.f32 %v552, %v770
      %v772 = vpop.f32.mrb[0].mxu0
      %773 = vmatprep.mubr.bf16.mxu0 0
      %774 = vmatmul.mubr.bf16.gmra.mrb[0].mxu0 %v619
      %v775 = vpop.f32.mrb[0].mxu0
      %v776 = vadd.f32 %v552, %v775
      %v777 = vpop.f32.mrb[0].mxu0
      %v778 = vpop.f32.mrb[0].mxu0
      %v779 = vadd.f32 %v552, %v778
      %v780 = vpop.f32.mrb[0].mxu0
      %781 = vdwg.mxu0
      %vm782 = vcmp.ge.f32.partialorder %v656, 0.0
      %vm783 = vcmp.ge.f32.partialorder %v659, 0.0
      %vm784 = vcmp.ge.f32.partialorder %v664, 0.0
      %vm785 = vcmp.ge.f32.partialorder %v667, 0.0
      %vm786 = vcmp.ge.f32.partialorder %v672, 0.0
      %vm787 = vcmp.ge.f32.partialorder %v675, 0.0
      %vm788 = vcmp.ge.f32.partialorder %v680, 0.0
      %vm789 = vcmp.ge.f32.partialorder %v683, 0.0
      %vm790 = vcmp.ge.f32.partialorder %v688, 0.0
      %vm791 = vcmp.ge.f32.partialorder %v691, 0.0
      %vm792 = vcmp.ge.f32.partialorder %v696, 0.0
      %vm793 = vcmp.ge.f32.partialorder %v699, 0.0
      %vm794 = vcmp.ge.f32.partialorder %v704, 0.0
      %vm795 = vcmp.ge.f32.partialorder %v707, 0.0
      %vm796 = vcmp.ge.f32.partialorder %v712, 0.0
      %vm797 = vcmp.ge.f32.partialorder %v715, 0.0
      %vm798 = vcmp.ge.f32.partialorder %v720, 0.0
      %vm799 = vcmp.ge.f32.partialorder %v723, 0.0
      %vm800 = vcmp.ge.f32.partialorder %v728, 0.0
      %vm801 = vcmp.ge.f32.partialorder %v731, 0.0
      %vm802 = vcmp.ge.f32.partialorder %v736, 0.0
      %vm803 = vcmp.ge.f32.partialorder %v739, 0.0
      %vm804 = vcmp.ge.f32.partialorder %v744, 0.0
      %vm805 = vcmp.ge.f32.partialorder %v747, 0.0
      %vm806 = vcmp.ge.f32.partialorder %v752, 0.0
      %vm807 = vcmp.ge.f32.partialorder %v755, 0.0
      %vm808 = vcmp.ge.f32.partialorder %v760, 0.0
      %vm809 = vcmp.ge.f32.partialorder %v763, 0.0
      %vm810 = vcmp.ge.f32.partialorder %v768, 0.0
      %vm811 = vcmp.ge.f32.partialorder %v771, 0.0
      %vm812 = vcmp.ge.f32.partialorder %v776, 0.0
      %vm813 = vcmp.ge.f32.partialorder %v779, 0.0
      %v814 = vmul.f32 %v656, 0.2
      %v815 = vmul.f32 %v659, 0.2
      %v816 = vmul.f32 %v664, 0.2
      %v817 = vmul.f32 %v667, 0.2
      %v818 = vmul.f32 %v672, 0.2
      %v819 = vmul.f32 %v675, 0.2
      %v820 = vmul.f32 %v680, 0.2
      %v821 = vmul.f32 %v683, 0.2
      %v822 = vmul.f32 %v688, 0.2
      %v823 = vmul.f32 %v691, 0.2
      %v824 = vmul.f32 %v696, 0.2
      %v825 = vmul.f32 %v699, 0.2
      %v826 = vmul.f32 %v704, 0.2
      %v827 = vmul.f32 %v707, 0.2
      %v828 = vmul.f32 %v712, 0.2
      %v829 = vmul.f32 %v715, 0.2
      %v830 = vmul.f32 %v720, 0.2
      %v831 = vmul.f32 %v723, 0.2
      %v832 = vmul.f32 %v728, 0.2
      %v833 = vmul.f32 %v731, 0.2
      %v834 = vmul.f32 %v736, 0.2
      %v835 = vmul.f32 %v739, 0.2
      %v836 = vmul.f32 %v744, 0.2
      %v837 = vmul.f32 %v747, 0.2
      %v838 = vmul.f32 %v752, 0.2
      %v839 = vmul.f32 %v755, 0.2
      %v840 = vmul.f32 %v760, 0.2
      %v841 = vmul.f32 %v763, 0.2
      %v842 = vmul.f32 %v768, 0.2
      %v843 = vmul.f32 %v771, 0.2
      %v844 = vmul.f32 %v776, 0.2
      %v845 = vmul.f32 %v779, 0.2
      %v846 = vsel %vm782, %v656, %v814
      %v847 = vsel %vm783, %v659, %v815
      %v848 = vsel %vm784, %v664, %v816
      %v849 = vsel %vm785, %v667, %v817
      %v850 = vsel %vm786, %v672, %v818
      %v851 = vsel %vm787, %v675, %v819
      %v852 = vsel %vm788, %v680, %v820
      %v853 = vsel %vm789, %v683, %v821
      %v854 = vsel %vm790, %v688, %v822
      %v855 = vsel %vm791, %v691, %v823
      %v856 = vsel %vm792, %v696, %v824
      %v857 = vsel %vm793, %v699, %v825
      %v858 = vsel %vm794, %v704, %v826
      %v859 = vsel %vm795, %v707, %v827
      %v860 = vsel %vm796, %v712, %v828
      %v861 = vsel %vm797, %v715, %v829
      %v862 = vsel %vm798, %v720, %v830
      %v863 = vsel %vm799, %v723, %v831
      %v864 = vsel %vm800, %v728, %v832
      %v865 = vsel %vm801, %v731, %v833
      %v866 = vsel %vm802, %v736, %v834
      %v867 = vsel %vm803, %v739, %v835
      %v868 = vsel %vm804, %v744, %v836
      %v869 = vsel %vm805, %v747, %v837
      %v870 = vsel %vm806, %v752, %v838
      %v871 = vsel %vm807, %v755, %v839
      %v872 = vsel %vm808, %v760, %v840
      %v873 = vsel %vm809, %v763, %v841
      %v874 = vsel %vm810, %v768, %v842
      %v875 = vsel %vm811, %v771, %v843
      %v876 = vsel %vm812, %v776, %v844
      %v877 = vsel %vm813, %v779, %v845
      %v878 = vpack.c.bf16 %v847, %v846
      %v879 = vpack.c.bf16 %v849, %v848
      %v880 = vpack.c.bf16 %v851, %v850
      %v881 = vpack.c.bf16 %v853, %v852
      %v882 = vpack.c.bf16 %v855, %v854
      %v883 = vpack.c.bf16 %v857, %v856
      %v884 = vpack.c.bf16 %v859, %v858
      %v885 = vpack.c.bf16 %v861, %v860
      %v886 = vpack.c.bf16 %v863, %v862
      %v887 = vpack.c.bf16 %v865, %v864
      %v888 = vpack.c.bf16 %v867, %v866
      %v889 = vpack.c.bf16 %v869, %v868
      %v890 = vpack.c.bf16 %v871, %v870
      %v891 = vpack.c.bf16 %v873, %v872
      %v892 = vpack.c.bf16 %v875, %v874
      %v893 = vpack.c.bf16 %v877, %v876
      %v894 = vld [vmem:[%s3] sm:$0xff]
      %v895 = vld [vmem:[%s3 + $0x8] sm:$0xff]
      %v896 = vld [vmem:[%s3 + $0x10] sm:$0xff]
      %v897 = vld [vmem:[%s3 + $0x18] sm:$0xff]
      %v898 = vld [vmem:[%s3 + $0x20] sm:$0xff]
      %v899 = vld [vmem:[%s3 + $0x28] sm:$0xff]
      %v900 = vld [vmem:[%s3 + $0x30] sm:$0xff]
      %v901 = vld [vmem:[%s3 + $0x38] sm:$0xff]
      %v902 = vld [vmem:[%s3 + $0x40] sm:$0xff]
      %v903 = vld [vmem:[%s3 + $0x48] sm:$0xff]
      %v904 = vld [vmem:[%s3 + $0x50] sm:$0xff]
      %v905 = vld [vmem:[%s3 + $0x58] sm:$0xff]
      %v906 = vld [vmem:[%s3 + $0x60] sm:$0xff]
      %v907 = vld [vmem:[%s3 + $0x68] sm:$0xff]
      %v908 = vld [vmem:[%s3 + $0x70] sm:$0xff]
      %v909 = vld [vmem:[%s3 + $0x78] sm:$0xff]
      %v910 = vld [vmem:[%s3 + $0x80] sm:$0xff]
      %v911 = vld [vmem:[%s3 + $0x88] sm:$0xff]
      %v912 = vld [vmem:[%s3 + $0x90] sm:$0xff]
      %v913 = vld [vmem:[%s3 + $0x98] sm:$0xff]
      %v914 = vld [vmem:[%s3 + $0xa0] sm:$0xff]
      %v915 = vld [vmem:[%s3 + $0xa8] sm:$0xff]
      %v916 = vld [vmem:[%s3 + $0xb0] sm:$0xff]
      %v917 = vld [vmem:[%s3 + $0xb8] sm:$0xff]
      %v918 = vld [vmem:[%s3 + $0xc0] sm:$0xff]
      %v919 = vld [vmem:[%s3 + $0xc8] sm:$0xff]
      %v920 = vld [vmem:[%s3 + $0xd0] sm:$0xff]
      %v921 = vld [vmem:[%s3 + $0xd8] sm:$0xff]
      %v922 = vld [vmem:[%s3 + $0xe0] sm:$0xff]
      %v923 = vld [vmem:[%s3 + $0xe8] sm:$0xff]
      %v924 = vld [vmem:[%s3 + $0xf0] sm:$0xff]
      %v925 = vld [vmem:[%s3 + $0xf8] sm:$0xff]
      %v926 = vld [vmem:[%s3 + $0x100] sm:$0xff]
      %v927 = vld [vmem:[%s3 + $0x108] sm:$0xff]
      %v928 = vld [vmem:[%s3 + $0x110] sm:$0xff]
      %v929 = vld [vmem:[%s3 + $0x118] sm:$0xff]
      %v930 = vld [vmem:[%s3 + $0x120] sm:$0xff]
      %v931 = vld [vmem:[%s3 + $0x128] sm:$0xff]
      %v932 = vld [vmem:[%s3 + $0x130] sm:$0xff]
      %v933 = vld [vmem:[%s3 + $0x138] sm:$0xff]
      %v934 = vld [vmem:[%s3 + $0x140] sm:$0xff]
      %v935 = vld [vmem:[%s3 + $0x148] sm:$0xff]
      %v936 = vld [vmem:[%s3 + $0x150] sm:$0xff]
      %v937 = vld [vmem:[%s3 + $0x158] sm:$0xff]
      %v938 = vld [vmem:[%s3 + $0x160] sm:$0xff]
      %v939 = vld [vmem:[%s3 + $0x168] sm:$0xff]
      %v940 = vld [vmem:[%s3 + $0x170] sm:$0xff]
      %v941 = vld [vmem:[%s3 + $0x178] sm:$0xff]
      %v942 = vld [vmem:[%s3 + $0x180] sm:$0xff]
      %v943 = vld [vmem:[%s3 + $0x188] sm:$0xff]
      %v944 = vld [vmem:[%s3 + $0x190] sm:$0xff]
      %v945 = vld [vmem:[%s3 + $0x198] sm:$0xff]
      %v946 = vld [vmem:[%s3 + $0x1a0] sm:$0xff]
      %v947 = vld [vmem:[%s3 + $0x1a8] sm:$0xff]
      %v948 = vld [vmem:[%s3 + $0x1b0] sm:$0xff]
      %v949 = vld [vmem:[%s3 + $0x1b8] sm:$0xff]
      %v950 = vld [vmem:[%s3 + $0x1c0] sm:$0xff]
      %v951 = vld [vmem:[%s3 + $0x1c8] sm:$0xff]
      %v952 = vld [vmem:[%s3 + $0x1d0] sm:$0xff]
      %v953 = vld [vmem:[%s3 + $0x1d8] sm:$0xff]
      %v954 = vld [vmem:[%s3 + $0x1e0] sm:$0xff]
      %v955 = vld [vmem:[%s3 + $0x1e8] sm:$0xff]
      %v956 = vld [vmem:[%s3 + $0x1f0] sm:$0xff]
      %v957 = vld [vmem:[%s3 + $0x1f8] sm:$0xff]
      %v958 = vld [vmem:[%s3 + $0x200] sm:$0xff]
      %v959 = vld [vmem:[%s3 + $0x208] sm:$0xff]
      %v960 = vld [vmem:[%s3 + $0x210] sm:$0xff]
      %v961 = vld [vmem:[%s3 + $0x218] sm:$0xff]
      %v962 = vld [vmem:[%s3 + $0x220] sm:$0xff]
      %v963 = vld [vmem:[%s3 + $0x228] sm:$0xff]
      %v964 = vld [vmem:[%s3 + $0x230] sm:$0xff]
      %v965 = vld [vmem:[%s3 + $0x238] sm:$0xff]
      %v966 = vld [vmem:[%s3 + $0x240] sm:$0xff]
      %v967 = vld [vmem:[%s3 + $0x248] sm:$0xff]
      %v968 = vld [vmem:[%s3 + $0x250] sm:$0xff]
      %v969 = vld [vmem:[%s3 + $0x258] sm:$0xff]
      %v970 = vld [vmem:[%s3 + $0x260] sm:$0xff]
      %v971 = vld [vmem:[%s3 + $0x268] sm:$0xff]
      %v972 = vld [vmem:[%s3 + $0x270] sm:$0xff]
      %v973 = vld [vmem:[%s3 + $0x278] sm:$0xff]
      %v974 = vld [vmem:[%s3 + $0x280] sm:$0xff]
      %v975 = vld [vmem:[%s3 + $0x288] sm:$0xff]
      %v976 = vld [vmem:[%s3 + $0x290] sm:$0xff]
      %v977 = vld [vmem:[%s3 + $0x298] sm:$0xff]
      %v978 = vld [vmem:[%s3 + $0x2a0] sm:$0xff]
      %v979 = vld [vmem:[%s3 + $0x2a8] sm:$0xff]
      %v980 = vld [vmem:[%s3 + $0x2b0] sm:$0xff]
      %v981 = vld [vmem:[%s3 + $0x2b8] sm:$0xff]
      %v982 = vld [vmem:[%s3 + $0x2c0] sm:$0xff]
      %v983 = vld [vmem:[%s3 + $0x2c8] sm:$0xff]
      %v984 = vld [vmem:[%s3 + $0x2d0] sm:$0xff]
      %v985 = vld [vmem:[%s3 + $0x2d8] sm:$0xff]
      %v986 = vld [vmem:[%s3 + $0x2e0] sm:$0xff]
      %v987 = vld [vmem:[%s3 + $0x2e8] sm:$0xff]
      %v988 = vld [vmem:[%s3 + $0x2f0] sm:$0xff]
      %v989 = vld [vmem:[%s3 + $0x2f8] sm:$0xff]
      %v990 = vld [vmem:[%s3 + $0x300] sm:$0xff]
      %v991 = vld [vmem:[%s3 + $0x308] sm:$0xff]
      %v992 = vld [vmem:[%s3 + $0x310] sm:$0xff]
      %v993 = vld [vmem:[%s3 + $0x318] sm:$0xff]
      %v994 = vld [vmem:[%s3 + $0x320] sm:$0xff]
      %v995 = vld [vmem:[%s3 + $0x328] sm:$0xff]
      %v996 = vld [vmem:[%s3 + $0x330] sm:$0xff]
      %v997 = vld [vmem:[%s3 + $0x338] sm:$0xff]
      %v998 = vld [vmem:[%s3 + $0x340] sm:$0xff]
      %v999 = vld [vmem:[%s3 + $0x348] sm:$0xff]
      %v1000 = vld [vmem:[%s3 + $0x350] sm:$0xff]
      %v1001 = vld [vmem:[%s3 + $0x358] sm:$0xff]
      %v1002 = vld [vmem:[%s3 + $0x360] sm:$0xff]
      %v1003 = vld [vmem:[%s3 + $0x368] sm:$0xff]
      %v1004 = vld [vmem:[%s3 + $0x370] sm:$0xff]
      %v1005 = vld [vmem:[%s3 + $0x378] sm:$0xff]
      %v1006 = vld [vmem:[%s3 + $0x380] sm:$0xff]
      %v1007 = vld [vmem:[%s3 + $0x388] sm:$0xff]
      %v1008 = vld [vmem:[%s3 + $0x390] sm:$0xff]
      %v1009 = vld [vmem:[%s3 + $0x398] sm:$0xff]
      %v1010 = vld [vmem:[%s3 + $0x3a0] sm:$0xff]
      %v1011 = vld [vmem:[%s3 + $0x3a8] sm:$0xff]
      %v1012 = vld [vmem:[%s3 + $0x3b0] sm:$0xff]
      %v1013 = vld [vmem:[%s3 + $0x3b8] sm:$0xff]
      %v1014 = vld [vmem:[%s3 + $0x3c0] sm:$0xff]
      %v1015 = vld [vmem:[%s3 + $0x3c8] sm:$0xff]
      %v1016 = vld [vmem:[%s3 + $0x3d0] sm:$0xff]
      %v1017 = vld [vmem:[%s3 + $0x3d8] sm:$0xff]
      %v1018 = vld [vmem:[%s3 + $0x3e0] sm:$0xff]
      %v1019 = vld [vmem:[%s3 + $0x3e8] sm:$0xff]
      %v1020 = vld [vmem:[%s3 + $0x3f0] sm:$0xff]
      %v1021 = vld [vmem:[%s3 + $0x3f8] sm:$0xff]
      %v1150 = vunpack.c.l.b16 %v894
      %v1151 = vunpack.c.h.b16 %v894
      %v1152 = vunpack.c.l.b16 %v895
      %v1153 = vunpack.c.h.b16 %v895
      %v1154 = vunpack.c.l.b16 %v896
      %v1155 = vunpack.c.h.b16 %v896
      %v1156 = vunpack.c.l.b16 %v897
      %v1157 = vunpack.c.h.b16 %v897
      %v1158 = vunpack.c.l.b16 %v898
      %v1159 = vunpack.c.h.b16 %v898
      %v1160 = vunpack.c.l.b16 %v899
      %v1161 = vunpack.c.h.b16 %v899
      %v1162 = vunpack.c.l.b16 %v900
      %v1163 = vunpack.c.h.b16 %v900
      %v1164 = vunpack.c.l.b16 %v901
      %v1165 = vunpack.c.h.b16 %v901
      %v1166 = vunpack.c.l.b16 %v902
      %v1167 = vunpack.c.h.b16 %v902
      %v1168 = vunpack.c.l.b16 %v903
      %v1169 = vunpack.c.h.b16 %v903
      %v1170 = vunpack.c.l.b16 %v904
      %v1171 = vunpack.c.h.b16 %v904
      %v1172 = vunpack.c.l.b16 %v905
      %v1173 = vunpack.c.h.b16 %v905
      %v1174 = vunpack.c.l.b16 %v906
      %v1175 = vunpack.c.h.b16 %v906
      %v1176 = vunpack.c.l.b16 %v907
      %v1177 = vunpack.c.h.b16 %v907
      %v1178 = vunpack.c.l.b16 %v908
      %v1179 = vunpack.c.h.b16 %v908
      %v1180 = vunpack.c.l.b16 %v909
      %v1181 = vunpack.c.h.b16 %v909
      %v1182 = vunpack.c.l.b16 %v910
      %v1183 = vunpack.c.h.b16 %v910
      %v1184 = vunpack.c.l.b16 %v911
      %v1185 = vunpack.c.h.b16 %v911
      %v1186 = vunpack.c.l.b16 %v912
      %v1187 = vunpack.c.h.b16 %v912
      %v1188 = vunpack.c.l.b16 %v913
      %v1189 = vunpack.c.h.b16 %v913
      %v1190 = vunpack.c.l.b16 %v914
      %v1191 = vunpack.c.h.b16 %v914
      %v1192 = vunpack.c.l.b16 %v915
      %v1193 = vunpack.c.h.b16 %v915
      %v1194 = vunpack.c.l.b16 %v916
      %v1195 = vunpack.c.h.b16 %v916
      %v1196 = vunpack.c.l.b16 %v917
      %v1197 = vunpack.c.h.b16 %v917
      %v1198 = vunpack.c.l.b16 %v918
      %v1199 = vunpack.c.h.b16 %v918
      %v1200 = vunpack.c.l.b16 %v919
      %v1201 = vunpack.c.h.b16 %v919
      %v1202 = vunpack.c.l.b16 %v920
      %v1203 = vunpack.c.h.b16 %v920
      %v1204 = vunpack.c.l.b16 %v921
      %v1205 = vunpack.c.h.b16 %v921
      %v1206 = vunpack.c.l.b16 %v922
      %v1207 = vunpack.c.h.b16 %v922
      %v1208 = vunpack.c.l.b16 %v923
      %v1209 = vunpack.c.h.b16 %v923
      %v1210 = vunpack.c.l.b16 %v924
      %v1211 = vunpack.c.h.b16 %v924
      %v1212 = vunpack.c.l.b16 %v925
      %v1213 = vunpack.c.h.b16 %v925
      %v1214 = vunpack.c.l.b16 %v926
      %v1215 = vunpack.c.h.b16 %v926
      %v1216 = vunpack.c.l.b16 %v927
      %v1217 = vunpack.c.h.b16 %v927
      %v1218 = vunpack.c.l.b16 %v928
      %v1219 = vunpack.c.h.b16 %v928
      %v1220 = vunpack.c.l.b16 %v929
      %v1221 = vunpack.c.h.b16 %v929
      %v1222 = vunpack.c.l.b16 %v930
      %v1223 = vunpack.c.h.b16 %v930
      %v1224 = vunpack.c.l.b16 %v931
      %v1225 = vunpack.c.h.b16 %v931
      %v1226 = vunpack.c.l.b16 %v932
      %v1227 = vunpack.c.h.b16 %v932
      %v1228 = vunpack.c.l.b16 %v933
      %v1229 = vunpack.c.h.b16 %v933
      %v1230 = vunpack.c.l.b16 %v934
      %v1231 = vunpack.c.h.b16 %v934
      %v1232 = vunpack.c.l.b16 %v935
      %v1233 = vunpack.c.h.b16 %v935
      %v1234 = vunpack.c.l.b16 %v936
      %v1235 = vunpack.c.h.b16 %v936
      %v1236 = vunpack.c.l.b16 %v937
      %v1237 = vunpack.c.h.b16 %v937
      %v1238 = vunpack.c.l.b16 %v938
      %v1239 = vunpack.c.h.b16 %v938
      %v1240 = vunpack.c.l.b16 %v939
      %v1241 = vunpack.c.h.b16 %v939
      %v1242 = vunpack.c.l.b16 %v940
      %v1243 = vunpack.c.h.b16 %v940
      %v1244 = vunpack.c.l.b16 %v941
      %v1245 = vunpack.c.h.b16 %v941
      %v1246 = vunpack.c.l.b16 %v942
      %v1247 = vunpack.c.h.b16 %v942
      %v1248 = vunpack.c.l.b16 %v943
      %v1249 = vunpack.c.h.b16 %v943
      %v1250 = vunpack.c.l.b16 %v944
      %v1251 = vunpack.c.h.b16 %v944
      %v1252 = vunpack.c.l.b16 %v945
      %v1253 = vunpack.c.h.b16 %v945
      %v1254 = vunpack.c.l.b16 %v946
      %v1255 = vunpack.c.h.b16 %v946
      %v1256 = vunpack.c.l.b16 %v947
      %v1257 = vunpack.c.h.b16 %v947
      %v1258 = vunpack.c.l.b16 %v948
      %v1259 = vunpack.c.h.b16 %v948
      %v1260 = vunpack.c.l.b16 %v949
      %v1261 = vunpack.c.h.b16 %v949
      %v1262 = vunpack.c.l.b16 %v950
      %v1263 = vunpack.c.h.b16 %v950
      %v1264 = vunpack.c.l.b16 %v951
      %v1265 = vunpack.c.h.b16 %v951
      %v1266 = vunpack.c.l.b16 %v952
      %v1267 = vunpack.c.h.b16 %v952
      %v1268 = vunpack.c.l.b16 %v953
      %v1269 = vunpack.c.h.b16 %v953
      %v1270 = vunpack.c.l.b16 %v954
      %v1271 = vunpack.c.h.b16 %v954
      %v1272 = vunpack.c.l.b16 %v955
      %v1273 = vunpack.c.h.b16 %v955
      %v1274 = vunpack.c.l.b16 %v956
      %v1275 = vunpack.c.h.b16 %v956
      %v1276 = vunpack.c.l.b16 %v957
      %v1277 = vunpack.c.h.b16 %v957
      %v1278 = vunpack.c.l.b16 %v958
      %v1279 = vunpack.c.h.b16 %v958
      %v1280 = vunpack.c.l.b16 %v959
      %v1281 = vunpack.c.h.b16 %v959
      %v1282 = vunpack.c.l.b16 %v960
      %v1283 = vunpack.c.h.b16 %v960
      %v1284 = vunpack.c.l.b16 %v961
      %v1285 = vunpack.c.h.b16 %v961
      %v1286 = vunpack.c.l.b16 %v962
      %v1287 = vunpack.c.h.b16 %v962
      %v1288 = vunpack.c.l.b16 %v963
      %v1289 = vunpack.c.h.b16 %v963
      %v1290 = vunpack.c.l.b16 %v964
      %v1291 = vunpack.c.h.b16 %v964
      %v1292 = vunpack.c.l.b16 %v965
      %v1293 = vunpack.c.h.b16 %v965
      %v1294 = vunpack.c.l.b16 %v966
      %v1295 = vunpack.c.h.b16 %v966
      %v1296 = vunpack.c.l.b16 %v967
      %v1297 = vunpack.c.h.b16 %v967
      %v1298 = vunpack.c.l.b16 %v968
      %v1299 = vunpack.c.h.b16 %v968
      %v1300 = vunpack.c.l.b16 %v969
      %v1301 = vunpack.c.h.b16 %v969
      %v1302 = vunpack.c.l.b16 %v970
      %v1303 = vunpack.c.h.b16 %v970
      %v1304 = vunpack.c.l.b16 %v971
      %v1305 = vunpack.c.h.b16 %v971
      %v1306 = vunpack.c.l.b16 %v972
      %v1307 = vunpack.c.h.b16 %v972
      %v1308 = vunpack.c.l.b16 %v973
      %v1309 = vunpack.c.h.b16 %v973
      %v1310 = vunpack.c.l.b16 %v974
      %v1311 = vunpack.c.h.b16 %v974
      %v1312 = vunpack.c.l.b16 %v975
      %v1313 = vunpack.c.h.b16 %v975
      %v1314 = vunpack.c.l.b16 %v976
      %v1315 = vunpack.c.h.b16 %v976
      %v1316 = vunpack.c.l.b16 %v977
      %v1317 = vunpack.c.h.b16 %v977
      %v1318 = vunpack.c.l.b16 %v978
      %v1319 = vunpack.c.h.b16 %v978
      %v1320 = vunpack.c.l.b16 %v979
      %v1321 = vunpack.c.h.b16 %v979
      %v1322 = vunpack.c.l.b16 %v980
      %v1323 = vunpack.c.h.b16 %v980
      %v1324 = vunpack.c.l.b16 %v981
      %v1325 = vunpack.c.h.b16 %v981
      %v1326 = vunpack.c.l.b16 %v982
      %v1327 = vunpack.c.h.b16 %v982
      %v1328 = vunpack.c.l.b16 %v983
      %v1329 = vunpack.c.h.b16 %v983
      %v1330 = vunpack.c.l.b16 %v984
      %v1331 = vunpack.c.h.b16 %v984
      %v1332 = vunpack.c.l.b16 %v985
      %v1333 = vunpack.c.h.b16 %v985
      %v1334 = vunpack.c.l.b16 %v986
      %v1335 = vunpack.c.h.b16 %v986
      %v1336 = vunpack.c.l.b16 %v987
      %v1337 = vunpack.c.h.b16 %v987
      %v1338 = vunpack.c.l.b16 %v988
      %v1339 = vunpack.c.h.b16 %v988
      %v1340 = vunpack.c.l.b16 %v989
      %v1341 = vunpack.c.h.b16 %v989
      %v1342 = vunpack.c.l.b16 %v990
      %v1343 = vunpack.c.h.b16 %v990
      %v1344 = vunpack.c.l.b16 %v991
      %v1345 = vunpack.c.h.b16 %v991
      %v1346 = vunpack.c.l.b16 %v992
      %v1347 = vunpack.c.h.b16 %v992
      %v1348 = vunpack.c.l.b16 %v993
      %v1349 = vunpack.c.h.b16 %v993
      %v1350 = vunpack.c.l.b16 %v994
      %v1351 = vunpack.c.h.b16 %v994
      %v1352 = vunpack.c.l.b16 %v995
      %v1353 = vunpack.c.h.b16 %v995
      %v1354 = vunpack.c.l.b16 %v996
      %v1355 = vunpack.c.h.b16 %v996
      %v1356 = vunpack.c.l.b16 %v997
      %v1357 = vunpack.c.h.b16 %v997
      %v1358 = vunpack.c.l.b16 %v998
      %v1359 = vunpack.c.h.b16 %v998
      %v1360 = vunpack.c.l.b16 %v999
      %v1361 = vunpack.c.h.b16 %v999
      %v1362 = vunpack.c.l.b16 %v1000
      %v1363 = vunpack.c.h.b16 %v1000
      %v1364 = vunpack.c.l.b16 %v1001
      %v1365 = vunpack.c.h.b16 %v1001
      %v1366 = vunpack.c.l.b16 %v1002
      %v1367 = vunpack.c.h.b16 %v1002
      %v1368 = vunpack.c.l.b16 %v1003
      %v1369 = vunpack.c.h.b16 %v1003
      %v1370 = vunpack.c.l.b16 %v1004
      %v1371 = vunpack.c.h.b16 %v1004
      %v1372 = vunpack.c.l.b16 %v1005
      %v1373 = vunpack.c.h.b16 %v1005
      %v1374 = vunpack.c.l.b16 %v1006
      %v1375 = vunpack.c.h.b16 %v1006
      %v1376 = vunpack.c.l.b16 %v1007
      %v1377 = vunpack.c.h.b16 %v1007
      %v1378 = vunpack.c.l.b16 %v1008
      %v1379 = vunpack.c.h.b16 %v1008
      %v1380 = vunpack.c.l.b16 %v1009
      %v1381 = vunpack.c.h.b16 %v1009
      %v1382 = vunpack.c.l.b16 %v1010
      %v1383 = vunpack.c.h.b16 %v1010
      %v1384 = vunpack.c.l.b16 %v1011
      %v1385 = vunpack.c.h.b16 %v1011
      %v1386 = vunpack.c.l.b16 %v1012
      %v1387 = vunpack.c.h.b16 %v1012
      %v1388 = vunpack.c.l.b16 %v1013
      %v1389 = vunpack.c.h.b16 %v1013
      %v1390 = vunpack.c.l.b16 %v1014
      %v1391 = vunpack.c.h.b16 %v1014
      %v1392 = vunpack.c.l.b16 %v1015
      %v1393 = vunpack.c.h.b16 %v1015
      %v1394 = vunpack.c.l.b16 %v1016
      %v1395 = vunpack.c.h.b16 %v1016
      %v1396 = vunpack.c.l.b16 %v1017
      %v1397 = vunpack.c.h.b16 %v1017
      %v1398 = vunpack.c.l.b16 %v1018
      %v1399 = vunpack.c.h.b16 %v1018
      %v1400 = vunpack.c.l.b16 %v1019
      %v1401 = vunpack.c.h.b16 %v1019
      %v1402 = vunpack.c.l.b16 %v1020
      %v1403 = vunpack.c.h.b16 %v1020
      %v1404 = vunpack.c.l.b16 %v1021
      %v1405 = vunpack.c.h.b16 %v1021
      %v1406 = vpack.c.b16 %v1152, %v1150
      %v1407 = vpack.c.b16 %v1153, %v1151
      %v1408 = vpack.c.b16 %v1156, %v1154
      %v1409 = vpack.c.b16 %v1157, %v1155
      %v1410 = vpack.c.b16 %v1160, %v1158
      %v1411 = vpack.c.b16 %v1161, %v1159
      %v1412 = vpack.c.b16 %v1164, %v1162
      %v1413 = vpack.c.b16 %v1165, %v1163
      %v1414 = vpack.c.b16 %v1168, %v1166
      %v1415 = vpack.c.b16 %v1169, %v1167
      %v1416 = vpack.c.b16 %v1172, %v1170
      %v1417 = vpack.c.b16 %v1173, %v1171
      %v1418 = vpack.c.b16 %v1176, %v1174
      %v1419 = vpack.c.b16 %v1177, %v1175
      %v1420 = vpack.c.b16 %v1180, %v1178
      %v1421 = vpack.c.b16 %v1181, %v1179
      %v1422 = vpack.c.b16 %v1184, %v1182
      %v1423 = vpack.c.b16 %v1185, %v1183
      %v1424 = vpack.c.b16 %v1188, %v1186
      %v1425 = vpack.c.b16 %v1189, %v1187
      %v1426 = vpack.c.b16 %v1192, %v1190
      %v1427 = vpack.c.b16 %v1193, %v1191
      %v1428 = vpack.c.b16 %v1196, %v1194
      %v1429 = vpack.c.b16 %v1197, %v1195
      %v1430 = vpack.c.b16 %v1200, %v1198
      %v1431 = vpack.c.b16 %v1201, %v1199
      %v1432 = vpack.c.b16 %v1204, %v1202
      %v1433 = vpack.c.b16 %v1205, %v1203
      %v1434 = vpack.c.b16 %v1208, %v1206
      %v1435 = vpack.c.b16 %v1209, %v1207
      %v1436 = vpack.c.b16 %v1212, %v1210
      %v1437 = vpack.c.b16 %v1213, %v1211
      %v1438 = vpack.c.b16 %v1216, %v1214
      %v1439 = vpack.c.b16 %v1217, %v1215
      %v1440 = vpack.c.b16 %v1220, %v1218
      %v1441 = vpack.c.b16 %v1221, %v1219
      %v1442 = vpack.c.b16 %v1224, %v1222
      %v1443 = vpack.c.b16 %v1225, %v1223
      %v1444 = vpack.c.b16 %v1228, %v1226
      %v1445 = vpack.c.b16 %v1229, %v1227
      %v1446 = vpack.c.b16 %v1232, %v1230
      %v1447 = vpack.c.b16 %v1233, %v1231
      %v1448 = vpack.c.b16 %v1236, %v1234
      %v1449 = vpack.c.b16 %v1237, %v1235
      %v1450 = vpack.c.b16 %v1240, %v1238
      %v1451 = vpack.c.b16 %v1241, %v1239
      %v1452 = vpack.c.b16 %v1244, %v1242
      %v1453 = vpack.c.b16 %v1245, %v1243
      %v1454 = vpack.c.b16 %v1248, %v1246
      %v1455 = vpack.c.b16 %v1249, %v1247
      %v1456 = vpack.c.b16 %v1252, %v1250
      %v1457 = vpack.c.b16 %v1253, %v1251
      %v1458 = vpack.c.b16 %v1256, %v1254
      %v1459 = vpack.c.b16 %v1257, %v1255
      %v1460 = vpack.c.b16 %v1260, %v1258
      %v1461 = vpack.c.b16 %v1261, %v1259
      %v1462 = vpack.c.b16 %v1264, %v1262
      %v1463 = vpack.c.b16 %v1265, %v1263
      %v1464 = vpack.c.b16 %v1268, %v1266
      %v1465 = vpack.c.b16 %v1269, %v1267
      %v1466 = vpack.c.b16 %v1272, %v1270
      %v1467 = vpack.c.b16 %v1273, %v1271
      %v1468 = vpack.c.b16 %v1276, %v1274
      %v1469 = vpack.c.b16 %v1277, %v1275
      %v1470 = vpack.c.b16 %v1280, %v1278
      %v1471 = vpack.c.b16 %v1281, %v1279
      %v1472 = vpack.c.b16 %v1284, %v1282
      %v1473 = vpack.c.b16 %v1285, %v1283
      %v1474 = vpack.c.b16 %v1288, %v1286
      %v1475 = vpack.c.b16 %v1289, %v1287
      %v1476 = vpack.c.b16 %v1292, %v1290
      %v1477 = vpack.c.b16 %v1293, %v1291
      %v1478 = vpack.c.b16 %v1296, %v1294
      %v1479 = vpack.c.b16 %v1297, %v1295
      %v1480 = vpack.c.b16 %v1300, %v1298
      %v1481 = vpack.c.b16 %v1301, %v1299
      %v1482 = vpack.c.b16 %v1304, %v1302
      %v1483 = vpack.c.b16 %v1305, %v1303
      %v1484 = vpack.c.b16 %v1308, %v1306
      %v1485 = vpack.c.b16 %v1309, %v1307
      %v1486 = vpack.c.b16 %v1312, %v1310
      %v1487 = vpack.c.b16 %v1313, %v1311
      %v1488 = vpack.c.b16 %v1316, %v1314
      %v1489 = vpack.c.b16 %v1317, %v1315
      %v1490 = vpack.c.b16 %v1320, %v1318
      %v1491 = vpack.c.b16 %v1321, %v1319
      %v1492 = vpack.c.b16 %v1324, %v1322
      %v1493 = vpack.c.b16 %v1325, %v1323
      %v1494 = vpack.c.b16 %v1328, %v1326
      %v1495 = vpack.c.b16 %v1329, %v1327
      %v1496 = vpack.c.b16 %v1332, %v1330
      %v1497 = vpack.c.b16 %v1333, %v1331
      %v1498 = vpack.c.b16 %v1336, %v1334
      %v1499 = vpack.c.b16 %v1337, %v1335
      %v1500 = vpack.c.b16 %v1340, %v1338
      %v1501 = vpack.c.b16 %v1341, %v1339
      %v1502 = vpack.c.b16 %v1344, %v1342
      %v1503 = vpack.c.b16 %v1345, %v1343
      %v1504 = vpack.c.b16 %v1348, %v1346
      %v1505 = vpack.c.b16 %v1349, %v1347
      %v1506 = vpack.c.b16 %v1352, %v1350
      %v1507 = vpack.c.b16 %v1353, %v1351
      %v1508 = vpack.c.b16 %v1356, %v1354
      %v1509 = vpack.c.b16 %v1357, %v1355
      %v1510 = vpack.c.b16 %v1360, %v1358
      %v1511 = vpack.c.b16 %v1361, %v1359
      %v1512 = vpack.c.b16 %v1364, %v1362
      %v1513 = vpack.c.b16 %v1365, %v1363
      %v1514 = vpack.c.b16 %v1368, %v1366
      %v1515 = vpack.c.b16 %v1369, %v1367
      %v1516 = vpack.c.b16 %v1372, %v1370
      %v1517 = vpack.c.b16 %v1373, %v1371
      %v1518 = vpack.c.b16 %v1376, %v1374
      %v1519 = vpack.c.b16 %v1377, %v1375
      %v1520 = vpack.c.b16 %v1380, %v1378
      %v1521 = vpack.c.b16 %v1381, %v1379
      %v1522 = vpack.c.b16 %v1384, %v1382
      %v1523 = vpack.c.b16 %v1385, %v1383
      %v1524 = vpack.c.b16 %v1388, %v1386
      %v1525 = vpack.c.b16 %v1389, %v1387
      %v1526 = vpack.c.b16 %v1392, %v1390
      %v1527 = vpack.c.b16 %v1393, %v1391
      %v1528 = vpack.c.b16 %v1396, %v1394
      %v1529 = vpack.c.b16 %v1397, %v1395
      %v1530 = vpack.c.b16 %v1400, %v1398
      %v1531 = vpack.c.b16 %v1401, %v1399
      %v1532 = vpack.c.b16 %v1404, %v1402
      %v1533 = vpack.c.b16 %v1405, %v1403
      %1662 = vmatprep.subr.bf16.mxu0 0
      %1663 = vmatpush1.bf16.msra.mxu0 %v878
      %1664 = vmatprep.subr.bf16.mxu0 0
      %1665 = vmatpush1.bf16.msra.mxu0 %v879
      %1666 = vmatprep.subr.bf16.mxu0 0
      %1667 = vmatpush1.bf16.msra.mxu0 %v880
      %1668 = vmatprep.subr.bf16.mxu0 0
      %1669 = vmatpush1.bf16.msra.mxu0 %v881
      %1670 = vmatprep.subr.bf16.mxu0 0
      %1671 = vmatpush1.bf16.msra.mxu0 %v882
      %1672 = vmatprep.subr.bf16.mxu0 0
      %1673 = vmatpush1.bf16.msra.mxu0 %v883
      %1674 = vmatprep.subr.bf16.mxu0 0
      %1675 = vmatpush1.bf16.msra.mxu0 %v884
      %1676 = vmatprep.subr.bf16.mxu0 0
      %1677 = vmatpush1.bf16.msra.mxu0 %v885
      %1678 = vmatprep.subr.bf16.mxu0 0
      %1679 = vmatpush1.bf16.msra.mxu0 %v886
      %1680 = vmatprep.subr.bf16.mxu0 0
      %1681 = vmatpush1.bf16.msra.mxu0 %v887
      %1682 = vmatprep.subr.bf16.mxu0 0
      %1683 = vmatpush1.bf16.msra.mxu0 %v888
      %1684 = vmatprep.subr.bf16.mxu0 0
      %1685 = vmatpush1.bf16.msra.mxu0 %v889
      %1686 = vmatprep.subr.bf16.mxu0 0
      %1687 = vmatpush1.bf16.msra.mxu0 %v890
      %1688 = vmatprep.subr.bf16.mxu0 0
      %1689 = vmatpush1.bf16.msra.mxu0 %v891
      %1690 = vmatprep.subr.bf16.mxu0 0
      %1691 = vmatpush1.bf16.msra.mxu0 %v892
      %1692 = vmatprep.subr.bf16.mxu0 0
      %1693 = vmatpush1.bf16.msra.mxu0 %v893
      %1694 = vmatprep.mubr.bf16.mxu0 %v1407
      %1695 = vmatmul.mubr.bf16.gmra.mrb[0].mxu0 %v1406
      %v1696 = vpop.f32.mrb[0].mxu0
      %v1697 = vadd.f32 0.0, %v1696
      %v1698 = vpop.f32.mrb[0].mxu0
      %v1699 = vpop.f32.mrb[0].mxu0
      %v1700 = vadd.f32 0.0, %v1699
      %v1701 = vpop.f32.mrb[0].mxu0
      %1702 = vmatprep.mubr.bf16.mxu0 %v1409
      %1703 = vmatmul.mubr.bf16.gmra.mrb[0].mxu0 %v1408
      %v1704 = vpop.f32.mrb[0].mxu0
      %v1705 = vadd.f32 0.0, %v1704
      %v1706 = vpop.f32.mrb[0].mxu0
      %v1707 = vpop.f32.mrb[0].mxu0
      %v1708 = vadd.f32 0.0, %v1707
      %v1709 = vpop.f32.mrb[0].mxu0
      %1710 = vmatprep.mubr.bf16.mxu0 %v1411
      %1711 = vmatmul.mubr.bf16.gmra.mrb[0].mxu0 %v1410
      %v1712 = vpop.f32.mrb[0].mxu0
      %v1713 = vadd.f32 0.0, %v1712
      %v1714 = vpop.f32.mrb[0].mxu0
      %v1715 = vpop.f32.mrb[0].mxu0
      %v1716 = vadd.f32 0.0, %v1715
      %v1717 = vpop.f32.mrb[0].mxu0
      %1718 = vmatprep.mubr.bf16.mxu0 %v1413
      %1719 = vmatmul.mubr.bf16.gmra.mrb[0].mxu0 %v1412
      %v1720 = vpop.f32.mrb[0].mxu0
      %v1721 = vadd.f32 0.0, %v1720
      %v1722 = vpop.f32.mrb[0].mxu0
      %v1723 = vpop.f32.mrb[0].mxu0
      %v1724 = vadd.f32 0.0, %v1723
      %v1725 = vpop.f32.mrb[0].mxu0
      %1726 = vmatprep.mubr.bf16.mxu0 %v1415
      %1727 = vmatmul.mubr.bf16.gmra.mrb[0].mxu0 %v1414
      %v1728 = vpop.f32.mrb[0].mxu0
      %v1729 = vadd.f32 0.0, %v1728
      %v1730 = vpop.f32.mrb[0].mxu0
      %v1731 = vpop.f32.mrb[0].mxu0
      %v1732 = vadd.f32 0.0, %v1731
      %v1733 = vpop.f32.mrb[0].mxu0
      %1734 = vmatprep.mubr.bf16.mxu0 %v1417
      %1735 = vmatmul.mubr.bf16.gmra.mrb[0].mxu0 %v1416
      %v1736 = vpop.f32.mrb[0].mxu0
      %v1737 = vadd.f32 0.0, %v1736
      %v1738 = vpop.f32.mrb[0].mxu0
      %v1739 = vpop.f32.mrb[0].mxu0
      %v1740 = vadd.f32 0.0, %v1739
      %v1741 = vpop.f32.mrb[0].mxu0
      %1742 = vmatprep.mubr.bf16.mxu0 %v1419
      %1743 = vmatmul.mubr.bf16.gmra.mrb[0].mxu0 %v1418
      %v1744 = vpop.f32.mrb[0].mxu0
      %v1745 = vadd.f32 0.0, %v1744
      %v1746 = vpop.f32.mrb[0].mxu0
      %v1747 = vpop.f32.mrb[0].mxu0
      %v1748 = vadd.f32 0.0, %v1747
      %v1749 = vpop.f32.mrb[0].mxu0
      %1750 = vmatprep.mubr.bf16.mxu0 %v1421
      %1751 = vmatmul.mubr.bf16.gmra.mrb[0].mxu0 %v1420
      %v1752 = vpop.f32.mrb[0].mxu0
      %v1753 = vadd.f32 0.0, %v1752
      %v1754 = vpop.f32.mrb[0].mxu0
      %v1755 = vpop.f32.mrb[0].mxu0
      %v1756 = vadd.f32 0.0, %v1755
      %v1757 = vpop.f32.mrb[0].mxu0
      %1758 = vmatprep.mubr.bf16.mxu0 %v1423
      %1759 = vmatmul.mubr.bf16.gmra.mrb[0].mxu0 %v1422
      %v1760 = vpop.f32.mrb[0].mxu0
      %v1761 = vadd.f32 0.0, %v1760
      %v1762 = vpop.f32.mrb[0].mxu0
      %v1763 = vpop.f32.mrb[0].mxu0
      %v1764 = vadd.f32 0.0, %v1763
      %v1765 = vpop.f32.mrb[0].mxu0
      %1766 = vmatprep.mubr.bf16.mxu0 %v1425
      %1767 = vmatmul.mubr.bf16.gmra.mrb[0].mxu0 %v1424
      %v1768 = vpop.f32.mrb[0].mxu0
      %v1769 = vadd.f32 0.0, %v1768
      %v1770 = vpop.f32.mrb[0].mxu0
      %v1771 = vpop.f32.mrb[0].mxu0
      %v1772 = vadd.f32 0.0, %v1771
      %v1773 = vpop.f32.mrb[0].mxu0
      %1774 = vmatprep.mubr.bf16.mxu0 %v1427
      %1775 = vmatmul.mubr.bf16.gmra.mrb[0].mxu0 %v1426
      %v1776 = vpop.f32.mrb[0].mxu0
      %v1777 = vadd.f32 0.0, %v1776
      %v1778 = vpop.f32.mrb[0].mxu0
      %v1779 = vpop.f32.mrb[0].mxu0
      %v1780 = vadd.f32 0.0, %v1779
      %v1781 = vpop.f32.mrb[0].mxu0
      %1782 = vmatprep.mubr.bf16.mxu0 %v1429
      %1783 = vmatmul.mubr.bf16.gmra.mrb[0].mxu0 %v1428
      %v1784 = vpop.f32.mrb[0].mxu0
      %v1785 = vadd.f32 0.0, %v1784
      %v1786 = vpop.f32.mrb[0].mxu0
      %v1787 = vpop.f32.mrb[0].mxu0
      %v1788 = vadd.f32 0.0, %v1787
      %v1789 = vpop.f32.mrb[0].mxu0
      %1790 = vmatprep.mubr.bf16.mxu0 %v1431
      %1791 = vmatmul.mubr.bf16.gmra.mrb[0].mxu0 %v1430
      %v1792 = vpop.f32.mrb[0].mxu0
      %v1793 = vadd.f32 0.0, %v1792
      %v1794 = vpop.f32.mrb[0].mxu0
      %v1795 = vpop.f32.mrb[0].mxu0
      %v1796 = vadd.f32 0.0, %v1795
      %v1797 = vpop.f32.mrb[0].mxu0
      %1798 = vmatprep.mubr.bf16.mxu0 %v1433
      %1799 = vmatmul.mubr.bf16.gmra.mrb[0].mxu0 %v1432
      %v1800 = vpop.f32.mrb[0].mxu0
      %v1801 = vadd.f32 0.0, %v1800
      %v1802 = vpop.f32.mrb[0].mxu0
      %v1803 = vpop.f32.mrb[0].mxu0
      %v1804 = vadd.f32 0.0, %v1803
      %v1805 = vpop.f32.mrb[0].mxu0
      %1806 = vmatprep.mubr.bf16.mxu0 %v1435
      %1807 = vmatmul.mubr.bf16.gmra.mrb[0].mxu0 %v1434
      %v1808 = vpop.f32.mrb[0].mxu0
      %v1809 = vadd.f32 0.0, %v1808
      %v1810 = vpop.f32.mrb[0].mxu0
      %v1811 = vpop.f32.mrb[0].mxu0
      %v1812 = vadd.f32 0.0, %v1811
      %v1813 = vpop.f32.mrb[0].mxu0
      %1814 = vmatprep.mubr.bf16.mxu0 %v1437
      %1815 = vmatmul.mubr.bf16.gmra.mrb[0].mxu0 %v1436
      %v1816 = vpop.f32.mrb[0].mxu0
      %v1817 = vadd.f32 0.0, %v1816
      %v1818 = vpop.f32.mrb[0].mxu0
      %v1819 = vpop.f32.mrb[0].mxu0
      %v1820 = vadd.f32 0.0, %v1819
      %v1821 = vpop.f32.mrb[0].mxu0
      %1822 = vmatprep.mubr.bf16.mxu0 %v1439
      %1823 = vmatmul.mubr.bf16.gmra.mrb[0].mxu0 %v1438
      %v1824 = vpop.f32.mrb[0].mxu0
      %v1825 = vadd.f32 0.0, %v1824
      %v1826 = vpop.f32.mrb[0].mxu0
      %v1827 = vpop.f32.mrb[0].mxu0
      %v1828 = vadd.f32 0.0, %v1827
      %v1829 = vpop.f32.mrb[0].mxu0
      %1830 = vmatprep.mubr.bf16.mxu0 %v1441
      %1831 = vmatmul.mubr.bf16.gmra.mrb[0].mxu0 %v1440
      %v1832 = vpop.f32.mrb[0].mxu0
      %v1833 = vadd.f32 0.0, %v1832
      %v1834 = vpop.f32.mrb[0].mxu0
      %v1835 = vpop.f32.mrb[0].mxu0
      %v1836 = vadd.f32 0.0, %v1835
      %v1837 = vpop.f32.mrb[0].mxu0
      %1838 = vmatprep.mubr.bf16.mxu0 %v1443
      %1839 = vmatmul.mubr.bf16.gmra.mrb[0].mxu0 %v1442
      %v1840 = vpop.f32.mrb[0].mxu0
      %v1841 = vadd.f32 0.0, %v1840
      %v1842 = vpop.f32.mrb[0].mxu0
      %v1843 = vpop.f32.mrb[0].mxu0
      %v1844 = vadd.f32 0.0, %v1843
      %v1845 = vpop.f32.mrb[0].mxu0
      %1846 = vmatprep.mubr.bf16.mxu0 %v1445
      %1847 = vmatmul.mubr.bf16.gmra.mrb[0].mxu0 %v1444
      %v1848 = vpop.f32.mrb[0].mxu0
      %v1849 = vadd.f32 0.0, %v1848
      %v1850 = vpop.f32.mrb[0].mxu0
      %v1851 = vpop.f32.mrb[0].mxu0
      %v1852 = vadd.f32 0.0, %v1851
      %v1853 = vpop.f32.mrb[0].mxu0
      %1854 = vmatprep.mubr.bf16.mxu0 %v1447
      %1855 = vmatmul.mubr.bf16.gmra.mrb[0].mxu0 %v1446
      %v1856 = vpop.f32.mrb[0].mxu0
      %v1857 = vadd.f32 0.0, %v1856
      %v1858 = vpop.f32.mrb[0].mxu0
      %v1859 = vpop.f32.mrb[0].mxu0
      %v1860 = vadd.f32 0.0, %v1859
      %v1861 = vpop.f32.mrb[0].mxu0
      %1862 = vmatprep.mubr.bf16.mxu0 %v1449
      %1863 = vmatmul.mubr.bf16.gmra.mrb[0].mxu0 %v1448
      %v1864 = vpop.f32.mrb[0].mxu0
      %v1865 = vadd.f32 0.0, %v1864
      %v1866 = vpop.f32.mrb[0].mxu0
      %v1867 = vpop.f32.mrb[0].mxu0
      %v1868 = vadd.f32 0.0, %v1867
      %v1869 = vpop.f32.mrb[0].mxu0
      %1870 = vmatprep.mubr.bf16.mxu0 %v1451
      %1871 = vmatmul.mubr.bf16.gmra.mrb[0].mxu0 %v1450
      %v1872 = vpop.f32.mrb[0].mxu0
      %v1873 = vadd.f32 0.0, %v1872
      %v1874 = vpop.f32.mrb[0].mxu0
      %v1875 = vpop.f32.mrb[0].mxu0
      %v1876 = vadd.f32 0.0, %v1875
      %v1877 = vpop.f32.mrb[0].mxu0
      %1878 = vmatprep.mubr.bf16.mxu0 %v1453
      %1879 = vmatmul.mubr.bf16.gmra.mrb[0].mxu0 %v1452
      %v1880 = vpop.f32.mrb[0].mxu0
      %v1881 = vadd.f32 0.0, %v1880
      %v1882 = vpop.f32.mrb[0].mxu0
      %v1883 = vpop.f32.mrb[0].mxu0
      %v1884 = vadd.f32 0.0, %v1883
      %v1885 = vpop.f32.mrb[0].mxu0
      %1886 = vmatprep.mubr.bf16.mxu0 %v1455
      %1887 = vmatmul.mubr.bf16.gmra.mrb[0].mxu0 %v1454
      %v1888 = vpop.f32.mrb[0].mxu0
      %v1889 = vadd.f32 0.0, %v1888
      %v1890 = vpop.f32.mrb[0].mxu0
      %v1891 = vpop.f32.mrb[0].mxu0
      %v1892 = vadd.f32 0.0, %v1891
      %v1893 = vpop.f32.mrb[0].mxu0
      %1894 = vmatprep.mubr.bf16.mxu0 %v1457
      %1895 = vmatmul.mubr.bf16.gmra.mrb[0].mxu0 %v1456
      %v1896 = vpop.f32.mrb[0].mxu0
      %v1897 = vadd.f32 0.0, %v1896
      %v1898 = vpop.f32.mrb[0].mxu0
      %v1899 = vpop.f32.mrb[0].mxu0
      %v1900 = vadd.f32 0.0, %v1899
      %v1901 = vpop.f32.mrb[0].mxu0
      %1902 = vmatprep.mubr.bf16.mxu0 %v1459
      %1903 = vmatmul.mubr.bf16.gmra.mrb[0].mxu0 %v1458
      %v1904 = vpop.f32.mrb[0].mxu0
      %v1905 = vadd.f32 0.0, %v1904
      %v1906 = vpop.f32.mrb[0].mxu0
      %v1907 = vpop.f32.mrb[0].mxu0
      %v1908 = vadd.f32 0.0, %v1907
      %v1909 = vpop.f32.mrb[0].mxu0
      %1910 = vmatprep.mubr.bf16.mxu0 %v1461
      %1911 = vmatmul.mubr.bf16.gmra.mrb[0].mxu0 %v1460
      %v1912 = vpop.f32.mrb[0].mxu0
      %v1913 = vadd.f32 0.0, %v1912
      %v1914 = vpop.f32.mrb[0].mxu0
      %v1915 = vpop.f32.mrb[0].mxu0
      %v1916 = vadd.f32 0.0, %v1915
      %v1917 = vpop.f32.mrb[0].mxu0
      %1918 = vmatprep.mubr.bf16.mxu0 %v1463
      %1919 = vmatmul.mubr.bf16.gmra.mrb[0].mxu0 %v1462
      %v1920 = vpop.f32.mrb[0].mxu0
      %v1921 = vadd.f32 0.0, %v1920
      %v1922 = vpop.f32.mrb[0].mxu0
      %v1923 = vpop.f32.mrb[0].mxu0
      %v1924 = vadd.f32 0.0, %v1923
      %v1925 = vpop.f32.mrb[0].mxu0
      %1926 = vmatprep.mubr.bf16.mxu0 %v1465
      %1927 = vmatmul.mubr.bf16.gmra.mrb[0].mxu0 %v1464
      %v1928 = vpop.f32.mrb[0].mxu0
      %v1929 = vadd.f32 0.0, %v1928
      %v1930 = vpop.f32.mrb[0].mxu0
      %v1931 = vpop.f32.mrb[0].mxu0
      %v1932 = vadd.f32 0.0, %v1931
      %v1933 = vpop.f32.mrb[0].mxu0
      %1934 = vmatprep.mubr.bf16.mxu0 %v1467
      %1935 = vmatmul.mubr.bf16.gmra.mrb[0].mxu0 %v1466
      %v1936 = vpop.f32.mrb[0].mxu0
      %v1937 = vadd.f32 0.0, %v1936
      %v1938 = vpop.f32.mrb[0].mxu0
      %v1939 = vpop.f32.mrb[0].mxu0
      %v1940 = vadd.f32 0.0, %v1939
      %v1941 = vpop.f32.mrb[0].mxu0
      %1942 = vmatprep.mubr.bf16.mxu0 %v1469
      %1943 = vmatmul.mubr.bf16.gmra.mrb[0].mxu0 %v1468
      %v1944 = vpop.f32.mrb[0].mxu0
      %v1945 = vadd.f32 0.0, %v1944
      %v1946 = vpop.f32.mrb[0].mxu0
      %v1947 = vpop.f32.mrb[0].mxu0
      %v1948 = vadd.f32 0.0, %v1947
      %v1949 = vpop.f32.mrb[0].mxu0
      %1950 = vmatprep.mubr.bf16.mxu0 %v1471
      %1951 = vmatmul.mubr.bf16.gmra.mrb[0].mxu0 %v1470
      %v1952 = vpop.f32.mrb[0].mxu0
      %v1953 = vadd.f32 0.0, %v1952
      %v1954 = vpop.f32.mrb[0].mxu0
      %v1955 = vpop.f32.mrb[0].mxu0
      %v1956 = vadd.f32 0.0, %v1955
      %v1957 = vpop.f32.mrb[0].mxu0
      %1958 = vmatprep.mubr.bf16.mxu0 %v1473
      %1959 = vmatmul.mubr.bf16.gmra.mrb[0].mxu0 %v1472
      %v1960 = vpop.f32.mrb[0].mxu0
      %v1961 = vadd.f32 0.0, %v1960
      %v1962 = vpop.f32.mrb[0].mxu0
      %v1963 = vpop.f32.mrb[0].mxu0
      %v1964 = vadd.f32 0.0, %v1963
      %v1965 = vpop.f32.mrb[0].mxu0
      %1966 = vmatprep.mubr.bf16.mxu0 %v1475
      %1967 = vmatmul.mubr.bf16.gmra.mrb[0].mxu0 %v1474
      %v1968 = vpop.f32.mrb[0].mxu0
      %v1969 = vadd.f32 0.0, %v1968
      %v1970 = vpop.f32.mrb[0].mxu0
      %v1971 = vpop.f32.mrb[0].mxu0
      %v1972 = vadd.f32 0.0, %v1971
      %v1973 = vpop.f32.mrb[0].mxu0
      %1974 = vmatprep.mubr.bf16.mxu0 %v1477
      %1975 = vmatmul.mubr.bf16.gmra.mrb[0].mxu0 %v1476
      %v1976 = vpop.f32.mrb[0].mxu0
      %v1977 = vadd.f32 0.0, %v1976
      %v1978 = vpop.f32.mrb[0].mxu0
      %v1979 = vpop.f32.mrb[0].mxu0
      %v1980 = vadd.f32 0.0, %v1979
      %v1981 = vpop.f32.mrb[0].mxu0
      %1982 = vmatprep.mubr.bf16.mxu0 %v1479
      %1983 = vmatmul.mubr.bf16.gmra.mrb[0].mxu0 %v1478
      %v1984 = vpop.f32.mrb[0].mxu0
      %v1985 = vadd.f32 0.0, %v1984
      %v1986 = vpop.f32.mrb[0].mxu0
      %v1987 = vpop.f32.mrb[0].mxu0
      %v1988 = vadd.f32 0.0, %v1987
      %v1989 = vpop.f32.mrb[0].mxu0
      %1990 = vmatprep.mubr.bf16.mxu0 %v1481
      %1991 = vmatmul.mubr.bf16.gmra.mrb[0].mxu0 %v1480
      %v1992 = vpop.f32.mrb[0].mxu0
      %v1993 = vadd.f32 0.0, %v1992
      %v1994 = vpop.f32.mrb[0].mxu0
      %v1995 = vpop.f32.mrb[0].mxu0
      %v1996 = vadd.f32 0.0, %v1995
      %v1997 = vpop.f32.mrb[0].mxu0
      %1998 = vmatprep.mubr.bf16.mxu0 %v1483
      %1999 = vmatmul.mubr.bf16.gmra.mrb[0].mxu0 %v1482
      %v2000 = vpop.f32.mrb[0].mxu0
      %v2001 = vadd.f32 0.0, %v2000
      %v2002 = vpop.f32.mrb[0].mxu0
      %v2003 = vpop.f32.mrb[0].mxu0
      %v2004 = vadd.f32 0.0, %v2003
      %v2005 = vpop.f32.mrb[0].mxu0
      %2006 = vmatprep.mubr.bf16.mxu0 %v1485
      %2007 = vmatmul.mubr.bf16.gmra.mrb[0].mxu0 %v1484
      %v2008 = vpop.f32.mrb[0].mxu0
      %v2009 = vadd.f32 0.0, %v2008
      %v2010 = vpop.f32.mrb[0].mxu0
      %v2011 = vpop.f32.mrb[0].mxu0
      %v2012 = vadd.f32 0.0, %v2011
      %v2013 = vpop.f32.mrb[0].mxu0
      %2014 = vmatprep.mubr.bf16.mxu0 %v1487
      %2015 = vmatmul.mubr.bf16.gmra.mrb[0].mxu0 %v1486
      %v2016 = vpop.f32.mrb[0].mxu0
      %v2017 = vadd.f32 0.0, %v2016
      %v2018 = vpop.f32.mrb[0].mxu0
      %v2019 = vpop.f32.mrb[0].mxu0
      %v2020 = vadd.f32 0.0, %v2019
      %v2021 = vpop.f32.mrb[0].mxu0
      %2022 = vmatprep.mubr.bf16.mxu0 %v1489
      %2023 = vmatmul.mubr.bf16.gmra.mrb[0].mxu0 %v1488
      %v2024 = vpop.f32.mrb[0].mxu0
      %v2025 = vadd.f32 0.0, %v2024
      %v2026 = vpop.f32.mrb[0].mxu0
      %v2027 = vpop.f32.mrb[0].mxu0
      %v2028 = vadd.f32 0.0, %v2027
      %v2029 = vpop.f32.mrb[0].mxu0
      %2030 = vmatprep.mubr.bf16.mxu0 %v1491
      %2031 = vmatmul.mubr.bf16.gmra.mrb[0].mxu0 %v1490
      %v2032 = vpop.f32.mrb[0].mxu0
      %v2033 = vadd.f32 0.0, %v2032
      %v2034 = vpop.f32.mrb[0].mxu0
      %v2035 = vpop.f32.mrb[0].mxu0
      %v2036 = vadd.f32 0.0, %v2035
      %v2037 = vpop.f32.mrb[0].mxu0
      %2038 = vmatprep.mubr.bf16.mxu0 %v1493
      %2039 = vmatmul.mubr.bf16.gmra.mrb[0].mxu0 %v1492
      %v2040 = vpop.f32.mrb[0].mxu0
      %v2041 = vadd.f32 0.0, %v2040
      %v2042 = vpop.f32.mrb[0].mxu0
      %v2043 = vpop.f32.mrb[0].mxu0
      %v2044 = vadd.f32 0.0, %v2043
      %v2045 = vpop.f32.mrb[0].mxu0
      %2046 = vmatprep.mubr.bf16.mxu0 %v1495
      %2047 = vmatmul.mubr.bf16.gmra.mrb[0].mxu0 %v1494
      %v2048 = vpop.f32.mrb[0].mxu0
      %v2049 = vadd.f32 0.0, %v2048
      %v2050 = vpop.f32.mrb[0].mxu0
      %v2051 = vpop.f32.mrb[0].mxu0
      %v2052 = vadd.f32 0.0, %v2051
      %v2053 = vpop.f32.mrb[0].mxu0
      %2054 = vmatprep.mubr.bf16.mxu0 %v1497
      %2055 = vmatmul.mubr.bf16.gmra.mrb[0].mxu0 %v1496
      %v2056 = vpop.f32.mrb[0].mxu0
      %v2057 = vadd.f32 0.0, %v2056
      %v2058 = vpop.f32.mrb[0].mxu0
      %v2059 = vpop.f32.mrb[0].mxu0
      %v2060 = vadd.f32 0.0, %v2059
      %v2061 = vpop.f32.mrb[0].mxu0
      %2062 = vmatprep.mubr.bf16.mxu0 %v1499
      %2063 = vmatmul.mubr.bf16.gmra.mrb[0].mxu0 %v1498
      %v2064 = vpop.f32.mrb[0].mxu0
      %v2065 = vadd.f32 0.0, %v2064
      %v2066 = vpop.f32.mrb[0].mxu0
      %v2067 = vpop.f32.mrb[0].mxu0
      %v2068 = vadd.f32 0.0, %v2067
      %v2069 = vpop.f32.mrb[0].mxu0
      %2070 = vmatprep.mubr.bf16.mxu0 %v1501
      %2071 = vmatmul.mubr.bf16.gmra.mrb[0].mxu0 %v1500
      %v2072 = vpop.f32.mrb[0].mxu0
      %v2073 = vadd.f32 0.0, %v2072
      %v2074 = vpop.f32.mrb[0].mxu0
      %v2075 = vpop.f32.mrb[0].mxu0
      %v2076 = vadd.f32 0.0, %v2075
      %v2077 = vpop.f32.mrb[0].mxu0
      %2078 = vmatprep.mubr.bf16.mxu0 %v1503
      %2079 = vmatmul.mubr.bf16.gmra.mrb[0].mxu0 %v1502
      %v2080 = vpop.f32.mrb[0].mxu0
      %v2081 = vadd.f32 0.0, %v2080
      %v2082 = vpop.f32.mrb[0].mxu0
      %v2083 = vpop.f32.mrb[0].mxu0
      %v2084 = vadd.f32 0.0, %v2083
      %v2085 = vpop.f32.mrb[0].mxu0
      %2086 = vmatprep.mubr.bf16.mxu0 %v1505
      %2087 = vmatmul.mubr.bf16.gmra.mrb[0].mxu0 %v1504
      %v2088 = vpop.f32.mrb[0].mxu0
      %v2089 = vadd.f32 0.0, %v2088
      %v2090 = vpop.f32.mrb[0].mxu0
      %v2091 = vpop.f32.mrb[0].mxu0
      %v2092 = vadd.f32 0.0, %v2091
      %v2093 = vpop.f32.mrb[0].mxu0
      %2094 = vmatprep.mubr.bf16.mxu0 %v1507
      %2095 = vmatmul.mubr.bf16.gmra.mrb[0].mxu0 %v1506
      %v2096 = vpop.f32.mrb[0].mxu0
      %v2097 = vadd.f32 0.0, %v2096
      %v2098 = vpop.f32.mrb[0].mxu0
      %v2099 = vpop.f32.mrb[0].mxu0
      %v2100 = vadd.f32 0.0, %v2099
      %v2101 = vpop.f32.mrb[0].mxu0
      %2102 = vmatprep.mubr.bf16.mxu0 %v1509
      %2103 = vmatmul.mubr.bf16.gmra.mrb[0].mxu0 %v1508
      %v2104 = vpop.f32.mrb[0].mxu0
      %v2105 = vadd.f32 0.0, %v2104
      %v2106 = vpop.f32.mrb[0].mxu0
      %v2107 = vpop.f32.mrb[0].mxu0
      %v2108 = vadd.f32 0.0, %v2107
      %v2109 = vpop.f32.mrb[0].mxu0
      %2110 = vmatprep.mubr.bf16.mxu0 %v1511
      %2111 = vmatmul.mubr.bf16.gmra.mrb[0].mxu0 %v1510
      %v2112 = vpop.f32.mrb[0].mxu0
      %v2113 = vadd.f32 0.0, %v2112
      %v2114 = vpop.f32.mrb[0].mxu0
      %v2115 = vpop.f32.mrb[0].mxu0
      %v2116 = vadd.f32 0.0, %v2115
      %v2117 = vpop.f32.mrb[0].mxu0
      %2118 = vmatprep.mubr.bf16.mxu0 %v1513
      %2119 = vmatmul.mubr.bf16.gmra.mrb[0].mxu0 %v1512
      %v2120 = vpop.f32.mrb[0].mxu0
      %v2121 = vadd.f32 0.0, %v2120
      %v2122 = vpop.f32.mrb[0].mxu0
      %v2123 = vpop.f32.mrb[0].mxu0
      %v2124 = vadd.f32 0.0, %v2123
      %v2125 = vpop.f32.mrb[0].mxu0
      %2126 = vmatprep.mubr.bf16.mxu0 %v1515
      %2127 = vmatmul.mubr.bf16.gmra.mrb[0].mxu0 %v1514
      %v2128 = vpop.f32.mrb[0].mxu0
      %v2129 = vadd.f32 0.0, %v2128
      %v2130 = vpop.f32.mrb[0].mxu0
      %v2131 = vpop.f32.mrb[0].mxu0
      %v2132 = vadd.f32 0.0, %v2131
      %v2133 = vpop.f32.mrb[0].mxu0
      %2134 = vmatprep.mubr.bf16.mxu0 %v1517
      %2135 = vmatmul.mubr.bf16.gmra.mrb[0].mxu0 %v1516
      %v2136 = vpop.f32.mrb[0].mxu0
      %v2137 = vadd.f32 0.0, %v2136
      %v2138 = vpop.f32.mrb[0].mxu0
      %v2139 = vpop.f32.mrb[0].mxu0
      %v2140 = vadd.f32 0.0, %v2139
      %v2141 = vpop.f32.mrb[0].mxu0
      %2142 = vmatprep.mubr.bf16.mxu0 %v1519
      %2143 = vmatmul.mubr.bf16.gmra.mrb[0].mxu0 %v1518
      %v2144 = vpop.f32.mrb[0].mxu0
      %v2145 = vadd.f32 0.0, %v2144
      %v2146 = vpop.f32.mrb[0].mxu0
      %v2147 = vpop.f32.mrb[0].mxu0
      %v2148 = vadd.f32 0.0, %v2147
      %v2149 = vpop.f32.mrb[0].mxu0
      %2150 = vmatprep.mubr.bf16.mxu0 %v1521
      %2151 = vmatmul.mubr.bf16.gmra.mrb[0].mxu0 %v1520
      %v2152 = vpop.f32.mrb[0].mxu0
      %v2153 = vadd.f32 0.0, %v2152
      %v2154 = vpop.f32.mrb[0].mxu0
      %v2155 = vpop.f32.mrb[0].mxu0
      %v2156 = vadd.f32 0.0, %v2155
      %v2157 = vpop.f32.mrb[0].mxu0
      %2158 = vmatprep.mubr.bf16.mxu0 %v1523
      %2159 = vmatmul.mubr.bf16.gmra.mrb[0].mxu0 %v1522
      %v2160 = vpop.f32.mrb[0].mxu0
      %v2161 = vadd.f32 0.0, %v2160
      %v2162 = vpop.f32.mrb[0].mxu0
      %v2163 = vpop.f32.mrb[0].mxu0
      %v2164 = vadd.f32 0.0, %v2163
      %v2165 = vpop.f32.mrb[0].mxu0
      %2166 = vmatprep.mubr.bf16.mxu0 %v1525
      %2167 = vmatmul.mubr.bf16.gmra.mrb[0].mxu0 %v1524
      %v2168 = vpop.f32.mrb[0].mxu0
      %v2169 = vadd.f32 0.0, %v2168
      %v2170 = vpop.f32.mrb[0].mxu0
      %v2171 = vpop.f32.mrb[0].mxu0
      %v2172 = vadd.f32 0.0, %v2171
      %v2173 = vpop.f32.mrb[0].mxu0
      %2174 = vmatprep.mubr.bf16.mxu0 %v1527
      %2175 = vmatmul.mubr.bf16.gmra.mrb[0].mxu0 %v1526
      %v2176 = vpop.f32.mrb[0].mxu0
      %v2177 = vadd.f32 0.0, %v2176
      %v2178 = vpop.f32.mrb[0].mxu0
      %v2179 = vpop.f32.mrb[0].mxu0
      %v2180 = vadd.f32 0.0, %v2179
      %v2181 = vpop.f32.mrb[0].mxu0
      %2182 = vmatprep.mubr.bf16.mxu0 %v1529
      %2183 = vmatmul.mubr.bf16.gmra.mrb[0].mxu0 %v1528
      %v2184 = vpop.f32.mrb[0].mxu0
      %v2185 = vadd.f32 0.0, %v2184
      %v2186 = vpop.f32.mrb[0].mxu0
      %v2187 = vpop.f32.mrb[0].mxu0
      %v2188 = vadd.f32 0.0, %v2187
      %v2189 = vpop.f32.mrb[0].mxu0
      %2190 = vmatprep.mubr.bf16.mxu0 %v1531
      %2191 = vmatmul.mubr.bf16.gmra.mrb[0].mxu0 %v1530
      %v2192 = vpop.f32.mrb[0].mxu0
      %v2193 = vadd.f32 0.0, %v2192
      %v2194 = vpop.f32.mrb[0].mxu0
      %v2195 = vpop.f32.mrb[0].mxu0
      %v2196 = vadd.f32 0.0, %v2195
      %v2197 = vpop.f32.mrb[0].mxu0
      %2198 = vmatprep.mubr.bf16.mxu0 %v1533
      %2199 = vmatmul.mubr.bf16.gmra.mrb[0].mxu0 %v1532
      %v2200 = vpop.f32.mrb[0].mxu0
      %v2201 = vadd.f32 0.0, %v2200
      %v2202 = vpop.f32.mrb[0].mxu0
      %v2203 = vpop.f32.mrb[0].mxu0
      %v2204 = vadd.f32 0.0, %v2203
      %v2205 = vpop.f32.mrb[0].mxu0
      %2206 = vdwg.mxu0
      %v2207 = vpack.c.bf16 %v1700, %v1697
      %v2208 = vpack.c.bf16 %v1708, %v1705
      %v2209 = vpack.c.bf16 %v1716, %v1713
      %v2210 = vpack.c.bf16 %v1724, %v1721
      %v2211 = vld [vmem:[%s4] sm:$0xf]
      %v2212 = vld [vmem:[%s4 + $0x4] sm:$0xf]
      %v2213 = vld [vmem:[%s4 + $0x8] sm:$0xf]
      %v2214 = vld [vmem:[%s4 + $0xc] sm:$0xf]
      %v2215 = vld [vmem:[%s4 + $0x10] sm:$0xf]
      %v2216 = vld [vmem:[%s4 + $0x14] sm:$0xf]
      %v2217 = vld [vmem:[%s4 + $0x18] sm:$0xf]
      %v2218 = vld [vmem:[%s4 + $0x1c] sm:$0xf]
      %v2219 = vpack.c.bf16 %v1732, %v1729
      %v2220 = vpack.c.bf16 %v1740, %v1737
      %v2221 = vpack.c.bf16 %v1748, %v1745
      %v2222 = vpack.c.bf16 %v1756, %v1753
      %s2223 = scalar_lea.vmem %s4, 32
      %v2224 = vld [vmem:[%s2223] sm:$0xf]
      %v2225 = vld [vmem:[%s2223 + $0x4] sm:$0xf]
      %v2226 = vld [vmem:[%s2223 + $0x8] sm:$0xf]
      %v2227 = vld [vmem:[%s2223 + $0xc] sm:$0xf]
      %v2228 = vld [vmem:[%s2223 + $0x10] sm:$0xf]
      %v2229 = vld [vmem:[%s2223 + $0x14] sm:$0xf]
      %v2230 = vld [vmem:[%s2223 + $0x18] sm:$0xf]
      %v2231 = vld [vmem:[%s2223 + $0x1c] sm:$0xf]
      %v2240 = vunpack.c.l.b16 %v2224
      %v2241 = vunpack.c.l.b16 %v2225
      %v2242 = vunpack.c.l.b16 %v2226
      %v2243 = vunpack.c.l.b16 %v2227
      %v2244 = vunpack.c.l.b16 %v2228
      %v2245 = vunpack.c.l.b16 %v2229
      %v2246 = vunpack.c.l.b16 %v2230
      %v2247 = vunpack.c.l.b16 %v2231
      %v2248 = vpack.c.b16 %v2241, %v2240
      %v2249 = vpack.c.b16 %v2243, %v2242
      %v2250 = vpack.c.b16 %v2245, %v2244
      %v2251 = vpack.c.b16 %v2247, %v2246
      %vm2256 = vcmask 523264
      %v2258 = vsel %vm2256, %v2219, 0
      %v2261 = vsel %vm2256, %v2220, 0
      %v2264 = vsel %vm2256, %v2221, 0
      %v2267 = vsel %vm2256, %v2222, 0
      %2269 = vmatprep.subr.bf16.mxu0 0
      %2270 = vmatpush1.bf16.msra.mxu0 %v2248
      %2271 = vmatprep.subr.bf16.mxu0 0
      %2272 = vmatpush1.bf16.msra.mxu0 %v2249
      %2273 = vmatprep.subr.bf16.mxu0 0
      %2274 = vmatpush1.bf16.msra.mxu0 %v2250
      %2275 = vmatprep.subr.bf16.mxu0 0
      %2276 = vmatpush1.bf16.msra.mxu0 %v2251
      %2277 = vmatprep.subr.bf16.mxu0 0
      %2278 = vmatpush1.bf16.msra.mxu0 0
      %2279 = vmatprep.subr.bf16.mxu0 0
      %2280 = vmatpush1.bf16.msra.mxu0 0
      %2281 = vmatprep.subr.bf16.mxu0 0
      %2282 = vmatpush1.bf16.msra.mxu0 0
      %2283 = vmatprep.subr.bf16.mxu0 0
      %2284 = vmatpush1.bf16.msra.mxu0 0
      %2285 = vmatprep.subr.bf16.mxu0 0
      %2286 = vmatpush1.bf16.msra.mxu0 0
      %2287 = vmatprep.subr.bf16.mxu0 0
      %2288 = vmatpush1.bf16.msra.mxu0 0
      %2289 = vmatprep.subr.bf16.mxu0 0
      %2290 = vmatpush1.bf16.msra.mxu0 0
      %2291 = vmatprep.subr.bf16.mxu0 0
      %2292 = vmatpush1.bf16.msra.mxu0 0
      %2293 = vmatprep.subr.bf16.mxu0 0
      %2294 = vmatpush1.bf16.msra.mxu0 0
      %2295 = vmatprep.subr.bf16.mxu0 0
      %2296 = vmatpush1.bf16.msra.mxu0 0
      %2297 = vmatprep.subr.bf16.mxu0 0
      %2298 = vmatpush1.bf16.msra.mxu0 0
      %2299 = vmatprep.subr.bf16.mxu0 0
      %2300 = vmatpush1.bf16.msra.mxu0 0
      %2301 = vmatprep.mubr.bf16.mxu0 0
      %2302 = vmatmul.mubr.bf16.gmra.mrb[0].mxu0 %v2258
      %v2303 = vpop.f32.mrb[0].mxu0
      %v2304 = vadd.f32 0.0, %v2303
      %v2305 = vpop.f32.mrb[0].mxu0
      %v2306 = vpop.f32.mrb[0].mxu0
      %v2307 = vadd.f32 0.0, %v2306
      %v2308 = vpop.f32.mrb[0].mxu0
      %2309 = vmatprep.mubr.bf16.mxu0 0
      %2310 = vmatmul.mubr.bf16.gmra.mrb[0].mxu0 %v2261
      %v2311 = vpop.f32.mrb[0].mxu0
      %v2312 = vadd.f32 0.0, %v2311
      %v2313 = vpop.f32.mrb[0].mxu0
      %v2314 = vpop.f32.mrb[0].mxu0
      %v2315 = vadd.f32 0.0, %v2314
      %v2316 = vpop.f32.mrb[0].mxu0
      %2317 = vmatprep.mubr.bf16.mxu0 0
      %2318 = vmatmul.mubr.bf16.gmra.mrb[0].mxu0 %v2264
      %v2319 = vpop.f32.mrb[0].mxu0
      %v2320 = vadd.f32 0.0, %v2319
      %v2321 = vpop.f32.mrb[0].mxu0
      %v2322 = vpop.f32.mrb[0].mxu0
      %v2323 = vadd.f32 0.0, %v2322
      %v2324 = vpop.f32.mrb[0].mxu0
      %2325 = vmatprep.mubr.bf16.mxu0 0
      %2326 = vmatmul.mubr.bf16.gmra.mrb[0].mxu0 %v2267
      %v2327 = vpop.f32.mrb[0].mxu0
      %v2328 = vadd.f32 0.0, %v2327
      %v2329 = vpop.f32.mrb[0].mxu0
      %v2330 = vpop.f32.mrb[0].mxu0
      %v2331 = vadd.f32 0.0, %v2330
      %v2332 = vpop.f32.mrb[0].mxu0
      %2333 = vdwg.mxu0
      %v2342 = vunpack.c.l.b16 %v2211
      %v2343 = vunpack.c.l.b16 %v2212
      %v2344 = vunpack.c.l.b16 %v2213
      %v2345 = vunpack.c.l.b16 %v2214
      %v2346 = vunpack.c.l.b16 %v2215
      %v2347 = vunpack.c.l.b16 %v2216
      %v2348 = vunpack.c.l.b16 %v2217
      %v2349 = vunpack.c.l.b16 %v2218
      %v2350 = vpack.c.b16 %v2343, %v2342
      %v2351 = vpack.c.b16 %v2345, %v2344
      %v2352 = vpack.c.b16 %v2347, %v2346
      %v2353 = vpack.c.b16 %v2349, %v2348
      %v2359 = vsel %vm2256, %v2207, 0
      %v2362 = vsel %vm2256, %v2208, 0
      %v2365 = vsel %vm2256, %v2209, 0
      %v2368 = vsel %vm2256, %v2210, 0
      %2370 = vmatprep.subr.bf16.mxu0 0
      %2371 = vmatpush1.bf16.msra.mxu0 %v2350
      %2372 = vmatprep.subr.bf16.mxu0 0
      %2373 = vmatpush1.bf16.msra.mxu0 %v2351
      %2374 = vmatprep.subr.bf16.mxu0 0
      %2375 = vmatpush1.bf16.msra.mxu0 %v2352
      %2376 = vmatprep.subr.bf16.mxu0 0
      %2377 = vmatpush1.bf16.msra.mxu0 %v2353
      %2378 = vmatprep.subr.bf16.mxu0 0
      %2379 = vmatpush1.bf16.msra.mxu0 0
      %2380 = vmatprep.subr.bf16.mxu0 0
      %2381 = vmatpush1.bf16.msra.mxu0 0
      %2382 = vmatprep.subr.bf16.mxu0 0
      %2383 = vmatpush1.bf16.msra.mxu0 0
      %2384 = vmatprep.subr.bf16.mxu0 0
      %2385 = vmatpush1.bf16.msra.mxu0 0
      %2386 = vmatprep.subr.bf16.mxu0 0
      %2387 = vmatpush1.bf16.msra.mxu0 0
      %2388 = vmatprep.subr.bf16.mxu0 0
      %2389 = vmatpush1.bf16.msra.mxu0 0
      %2390 = vmatprep.subr.bf16.mxu0 0
      %2391 = vmatpush1.bf16.msra.mxu0 0
      %2392 = vmatprep.subr.bf16.mxu0 0
      %2393 = vmatpush1.bf16.msra.mxu0 0
      %2394 = vmatprep.subr.bf16.mxu0 0
      %2395 = vmatpush1.bf16.msra.mxu0 0
      %2396 = vmatprep.subr.bf16.mxu0 0
      %2397 = vmatpush1.bf16.msra.mxu0 0
      %2398 = vmatprep.subr.bf16.mxu0 0
      %2399 = vmatpush1.bf16.msra.mxu0 0
      %2400 = vmatprep.subr.bf16.mxu0 0
      %2401 = vmatpush1.bf16.msra.mxu0 0
      %2402 = vmatprep.mubr.bf16.mxu0 0
      %2403 = vmatmul.mubr.bf16.gmra.mrb[0].mxu0 %v2359
      %v2404 = vpop.f32.mrb[0].mxu0
      %v2405 = vadd.f32 %v2304, %v2404
      %v2406 = vpop.f32.mrb[0].mxu0
      %v2407 = vpop.f32.mrb[0].mxu0
      %v2408 = vadd.f32 %v2307, %v2407
      %v2409 = vpop.f32.mrb[0].mxu0
      %2410 = vmatprep.mubr.bf16.mxu0 0
      %2411 = vmatmul.mubr.bf16.gmra.mrb[0].mxu0 %v2362
      %v2412 = vpop.f32.mrb[0].mxu0
      %v2413 = vadd.f32 %v2312, %v2412
      %v2414 = vpop.f32.mrb[0].mxu0
      %v2415 = vpop.f32.mrb[0].mxu0
      %v2416 = vadd.f32 %v2315, %v2415
      %v2417 = vpop.f32.mrb[0].mxu0
      %2418 = vmatprep.mubr.bf16.mxu0 0
      %2419 = vmatmul.mubr.bf16.gmra.mrb[0].mxu0 %v2365
      %v2420 = vpop.f32.mrb[0].mxu0
      %v2421 = vadd.f32 %v2320, %v2420
      %v2422 = vpop.f32.mrb[0].mxu0
      %v2423 = vpop.f32.mrb[0].mxu0
      %v2424 = vadd.f32 %v2323, %v2423
      %v2425 = vpop.f32.mrb[0].mxu0
      %2426 = vmatprep.mubr.bf16.mxu0 0
      %2427 = vmatmul.mubr.bf16.gmra.mrb[0].mxu0 %v2368
      %v2428 = vpop.f32.mrb[0].mxu0
      %v2429 = vadd.f32 %v2328, %v2428
      %v2430 = vpop.f32.mrb[0].mxu0
      %v2431 = vpop.f32.mrb[0].mxu0
      %v2432 = vadd.f32 %v2331, %v2431
      %v2433 = vpop.f32.mrb[0].mxu0
      %2434 = vdwg.mxu0
      %v2435 = vpack.c.bf16 %v1764, %v1761
      %v2436 = vpack.c.bf16 %v1772, %v1769
      %v2437 = vpack.c.bf16 %v1780, %v1777
      %v2438 = vpack.c.bf16 %v1788, %v1785
      %s2439 = scalar_lea.vmem %s4, 64
      %v2440 = vld [vmem:[%s2439] sm:$0xf]
      %v2441 = vld [vmem:[%s2439 + $0x4] sm:$0xf]
      %v2442 = vld [vmem:[%s2439 + $0x8] sm:$0xf]
      %v2443 = vld [vmem:[%s2439 + $0xc] sm:$0xf]
      %v2444 = vld [vmem:[%s2439 + $0x10] sm:$0xf]
      %v2445 = vld [vmem:[%s2439 + $0x14] sm:$0xf]
      %v2446 = vld [vmem:[%s2439 + $0x18] sm:$0xf]
      %v2447 = vld [vmem:[%s2439 + $0x1c] sm:$0xf]
      %v2456 = vunpack.c.l.b16 %v2440
      %v2457 = vunpack.c.l.b16 %v2441
      %v2458 = vunpack.c.l.b16 %v2442
      %v2459 = vunpack.c.l.b16 %v2443
      %v2460 = vunpack.c.l.b16 %v2444
      %v2461 = vunpack.c.l.b16 %v2445
      %v2462 = vunpack.c.l.b16 %v2446
      %v2463 = vunpack.c.l.b16 %v2447
      %v2464 = vpack.c.b16 %v2457, %v2456
      %v2465 = vpack.c.b16 %v2459, %v2458
      %v2466 = vpack.c.b16 %v2461, %v2460
      %v2467 = vpack.c.b16 %v2463, %v2462
      %v2473 = vsel %vm2256, %v2435, 0
      %v2476 = vsel %vm2256, %v2436, 0
      %v2479 = vsel %vm2256, %v2437, 0
      %v2482 = vsel %vm2256, %v2438, 0
      %2484 = vmatprep.subr.bf16.mxu0 0
      %2485 = vmatpush1.bf16.msra.mxu0 %v2464
      %2486 = vmatprep.subr.bf16.mxu0 0
      %2487 = vmatpush1.bf16.msra.mxu0 %v2465
      %2488 = vmatprep.subr.bf16.mxu0 0
      %2489 = vmatpush1.bf16.msra.mxu0 %v2466
      %2490 = vmatprep.subr.bf16.mxu0 0
      %2491 = vmatpush1.bf16.msra.mxu0 %v2467
      %2492 = vmatprep.subr.bf16.mxu0 0
      %2493 = vmatpush1.bf16.msra.mxu0 0
      %2494 = vmatprep.subr.bf16.mxu0 0
      %2495 = vmatpush1.bf16.msra.mxu0 0
      %2496 = vmatprep.subr.bf16.mxu0 0
      %2497 = vmatpush1.bf16.msra.mxu0 0
      %2498 = vmatprep.subr.bf16.mxu0 0
      %2499 = vmatpush1.bf16.msra.mxu0 0
      %2500 = vmatprep.subr.bf16.mxu0 0
      %2501 = vmatpush1.bf16.msra.mxu0 0
      %2502 = vmatprep.subr.bf16.mxu0 0
      %2503 = vmatpush1.bf16.msra.mxu0 0
      %2504 = vmatprep.subr.bf16.mxu0 0
      %2505 = vmatpush1.bf16.msra.mxu0 0
      %2506 = vmatprep.subr.bf16.mxu0 0
      %2507 = vmatpush1.bf16.msra.mxu0 0
      %2508 = vmatprep.subr.bf16.mxu0 0
      %2509 = vmatpush1.bf16.msra.mxu0 0
      %2510 = vmatprep.subr.bf16.mxu0 0
      %2511 = vmatpush1.bf16.msra.mxu0 0
      %2512 = vmatprep.subr.bf16.mxu0 0
      %2513 = vmatpush1.bf16.msra.mxu0 0
      %2514 = vmatprep.subr.bf16.mxu0 0
      %2515 = vmatpush1.bf16.msra.mxu0 0
      %2516 = vmatprep.mubr.bf16.mxu0 0
      %2517 = vmatmul.mubr.bf16.gmra.mrb[0].mxu0 %v2473
      %v2518 = vpop.f32.mrb[0].mxu0
      %v2519 = vadd.f32 0.0, %v2518
      %v2520 = vpop.f32.mrb[0].mxu0
      %v2521 = vpop.f32.mrb[0].mxu0
      %v2522 = vadd.f32 0.0, %v2521
      %v2523 = vpop.f32.mrb[0].mxu0
      %2524 = vmatprep.mubr.bf16.mxu0 0
      %2525 = vmatmul.mubr.bf16.gmra.mrb[0].mxu0 %v2476
      %v2526 = vpop.f32.mrb[0].mxu0
      %v2527 = vadd.f32 0.0, %v2526
      %v2528 = vpop.f32.mrb[0].mxu0
      %v2529 = vpop.f32.mrb[0].mxu0
      %v2530 = vadd.f32 0.0, %v2529
      %v2531 = vpop.f32.mrb[0].mxu0
      %2532 = vmatprep.mubr.bf16.mxu0 0
      %2533 = vmatmul.mubr.bf16.gmra.mrb[0].mxu0 %v2479
      %v2534 = vpop.f32.mrb[0].mxu0
      %v2535 = vadd.f32 0.0, %v2534
      %v2536 = vpop.f32.mrb[0].mxu0
      %v2537 = vpop.f32.mrb[0].mxu0
      %v2538 = vadd.f32 0.0, %v2537
      %v2539 = vpop.f32.mrb[0].mxu0
      %2540 = vmatprep.mubr.bf16.mxu0 0
      %2541 = vmatmul.mubr.bf16.gmra.mrb[0].mxu0 %v2482
      %v2542 = vpop.f32.mrb[0].mxu0
      %v2543 = vadd.f32 0.0, %v2542
      %v2544 = vpop.f32.mrb[0].mxu0
      %v2545 = vpop.f32.mrb[0].mxu0
      %v2546 = vadd.f32 0.0, %v2545
      %v2547 = vpop.f32.mrb[0].mxu0
      %2548 = vdwg.mxu0
      %v2549 = vadd.f32 %v2405, %v2519
      %v2550 = vadd.f32 %v2408, %v2522
      %v2551 = vadd.f32 %v2413, %v2527
      %v2552 = vadd.f32 %v2416, %v2530
      %v2553 = vadd.f32 %v2421, %v2535
      %v2554 = vadd.f32 %v2424, %v2538
      %v2555 = vadd.f32 %v2429, %v2543
      %v2556 = vadd.f32 %v2432, %v2546
      %v2557 = vpack.c.bf16 %v1796, %v1793
      %v2558 = vpack.c.bf16 %v1804, %v1801
      %v2559 = vpack.c.bf16 %v1812, %v1809
      %v2560 = vpack.c.bf16 %v1820, %v1817
      %s2561 = scalar_lea.vmem %s4, 96
      %v2562 = vld [vmem:[%s2561] sm:$0xf]
      %v2563 = vld [vmem:[%s2561 + $0x4] sm:$0xf]
      %v2564 = vld [vmem:[%s2561 + $0x8] sm:$0xf]
      %v2565 = vld [vmem:[%s2561 + $0xc] sm:$0xf]
      %v2566 = vld [vmem:[%s2561 + $0x10] sm:$0xf]
      %v2567 = vld [vmem:[%s2561 + $0x14] sm:$0xf]
      %v2568 = vld [vmem:[%s2561 + $0x18] sm:$0xf]
      %v2569 = vld [vmem:[%s2561 + $0x1c] sm:$0xf]
      %v2578 = vunpack.c.l.b16 %v2562
      %v2579 = vunpack.c.l.b16 %v2563
      %v2580 = vunpack.c.l.b16 %v2564
      %v2581 = vunpack.c.l.b16 %v2565
      %v2582 = vunpack.c.l.b16 %v2566
      %v2583 = vunpack.c.l.b16 %v2567
      %v2584 = vunpack.c.l.b16 %v2568
      %v2585 = vunpack.c.l.b16 %v2569
      %v2586 = vpack.c.b16 %v2579, %v2578
      %v2587 = vpack.c.b16 %v2581, %v2580
      %v2588 = vpack.c.b16 %v2583, %v2582
      %v2589 = vpack.c.b16 %v2585, %v2584
      %v2595 = vsel %vm2256, %v2557, 0
      %v2598 = vsel %vm2256, %v2558, 0
      %v2601 = vsel %vm2256, %v2559, 0
      %v2604 = vsel %vm2256, %v2560, 0
      %2606 = vmatprep.subr.bf16.mxu0 0
      %2607 = vmatpush1.bf16.msra.mxu0 %v2586
      %2608 = vmatprep.subr.bf16.mxu0 0
      %2609 = vmatpush1.bf16.msra.mxu0 %v2587
      %2610 = vmatprep.subr.bf16.mxu0 0
      %2611 = vmatpush1.bf16.msra.mxu0 %v2588
      %2612 = vmatprep.subr.bf16.mxu0 0
      %2613 = vmatpush1.bf16.msra.mxu0 %v2589
      %2614 = vmatprep.subr.bf16.mxu0 0
      %2615 = vmatpush1.bf16.msra.mxu0 0
      %2616 = vmatprep.subr.bf16.mxu0 0
      %2617 = vmatpush1.bf16.msra.mxu0 0
      %2618 = vmatprep.subr.bf16.mxu0 0
      %2619 = vmatpush1.bf16.msra.mxu0 0
      %2620 = vmatprep.subr.bf16.mxu0 0
      %2621 = vmatpush1.bf16.msra.mxu0 0
      %2622 = vmatprep.subr.bf16.mxu0 0
      %2623 = vmatpush1.bf16.msra.mxu0 0
      %2624 = vmatprep.subr.bf16.mxu0 0
      %2625 = vmatpush1.bf16.msra.mxu0 0
      %2626 = vmatprep.subr.bf16.mxu0 0
      %2627 = vmatpush1.bf16.msra.mxu0 0
      %2628 = vmatprep.subr.bf16.mxu0 0
      %2629 = vmatpush1.bf16.msra.mxu0 0
      %2630 = vmatprep.subr.bf16.mxu0 0
      %2631 = vmatpush1.bf16.msra.mxu0 0
      %2632 = vmatprep.subr.bf16.mxu0 0
      %2633 = vmatpush1.bf16.msra.mxu0 0
      %2634 = vmatprep.subr.bf16.mxu0 0
      %2635 = vmatpush1.bf16.msra.mxu0 0
      %2636 = vmatprep.subr.bf16.mxu0 0
      %2637 = vmatpush1.bf16.msra.mxu0 0
      %2638 = vmatprep.mubr.bf16.mxu0 0
      %2639 = vmatmul.mubr.bf16.gmra.mrb[0].mxu0 %v2595
      %v2640 = vpop.f32.mrb[0].mxu0
      %v2641 = vadd.f32 0.0, %v2640
      %v2642 = vpop.f32.mrb[0].mxu0
      %v2643 = vpop.f32.mrb[0].mxu0
      %v2644 = vadd.f32 0.0, %v2643
      %v2645 = vpop.f32.mrb[0].mxu0
      %2646 = vmatprep.mubr.bf16.mxu0 0
      %2647 = vmatmul.mubr.bf16.gmra.mrb[0].mxu0 %v2598
      %v2648 = vpop.f32.mrb[0].mxu0
      %v2649 = vadd.f32 0.0, %v2648
      %v2650 = vpop.f32.mrb[0].mxu0
      %v2651 = vpop.f32.mrb[0].mxu0
      %v2652 = vadd.f32 0.0, %v2651
      %v2653 = vpop.f32.mrb[0].mxu0
      %2654 = vmatprep.mubr.bf16.mxu0 0
      %2655 = vmatmul.mubr.bf16.gmra.mrb[0].mxu0 %v2601
      %v2656 = vpop.f32.mrb[0].mxu0
      %v2657 = vadd.f32 0.0, %v2656
      %v2658 = vpop.f32.mrb[0].mxu0
      %v2659 = vpop.f32.mrb[0].mxu0
      %v2660 = vadd.f32 0.0, %v2659
      %v2661 = vpop.f32.mrb[0].mxu0
      %2662 = vmatprep.mubr.bf16.mxu0 0
      %2663 = vmatmul.mubr.bf16.gmra.mrb[0].mxu0 %v2604
      %v2664 = vpop.f32.mrb[0].mxu0
      %v2665 = vadd.f32 0.0, %v2664
      %v2666 = vpop.f32.mrb[0].mxu0
      %v2667 = vpop.f32.mrb[0].mxu0
      %v2668 = vadd.f32 0.0, %v2667
      %v2669 = vpop.f32.mrb[0].mxu0
      %2670 = vdwg.mxu0
      %v2671 = vadd.f32 %v2549, %v2641
      %v2672 = vadd.f32 %v2550, %v2644
      %v2673 = vadd.f32 %v2551, %v2649
      %v2674 = vadd.f32 %v2552, %v2652
      %v2675 = vadd.f32 %v2553, %v2657
      %v2676 = vadd.f32 %v2554, %v2660
      %v2677 = vadd.f32 %v2555, %v2665
      %v2678 = vadd.f32 %v2556, %v2668
      %v2679 = vpack.c.bf16 %v1828, %v1825
      %v2680 = vpack.c.bf16 %v1836, %v1833
      %v2681 = vpack.c.bf16 %v1844, %v1841
      %v2682 = vpack.c.bf16 %v1852, %v1849
      %s2683 = scalar_lea.vmem %s4, 128
      %v2684 = vld [vmem:[%s2683] sm:$0xf]
      %v2685 = vld [vmem:[%s2683 + $0x4] sm:$0xf]
      %v2686 = vld [vmem:[%s2683 + $0x8] sm:$0xf]
      %v2687 = vld [vmem:[%s2683 + $0xc] sm:$0xf]
      %v2688 = vld [vmem:[%s2683 + $0x10] sm:$0xf]
      %v2689 = vld [vmem:[%s2683 + $0x14] sm:$0xf]
      %v2690 = vld [vmem:[%s2683 + $0x18] sm:$0xf]
      %v2691 = vld [vmem:[%s2683 + $0x1c] sm:$0xf]
      %v2700 = vunpack.c.l.b16 %v2684
      %v2701 = vunpack.c.l.b16 %v2685
      %v2702 = vunpack.c.l.b16 %v2686
      %v2703 = vunpack.c.l.b16 %v2687
      %v2704 = vunpack.c.l.b16 %v2688
      %v2705 = vunpack.c.l.b16 %v2689
      %v2706 = vunpack.c.l.b16 %v2690
      %v2707 = vunpack.c.l.b16 %v2691
      %v2708 = vpack.c.b16 %v2701, %v2700
      %v2709 = vpack.c.b16 %v2703, %v2702
      %v2710 = vpack.c.b16 %v2705, %v2704
      %v2711 = vpack.c.b16 %v2707, %v2706
      %v2717 = vsel %vm2256, %v2679, 0
      %v2720 = vsel %vm2256, %v2680, 0
      %v2723 = vsel %vm2256, %v2681, 0
      %v2726 = vsel %vm2256, %v2682, 0
      %2728 = vmatprep.subr.bf16.mxu0 0
      %2729 = vmatpush1.bf16.msra.mxu0 %v2708
      %2730 = vmatprep.subr.bf16.mxu0 0
      %2731 = vmatpush1.bf16.msra.mxu0 %v2709
      %2732 = vmatprep.subr.bf16.mxu0 0
      %2733 = vmatpush1.bf16.msra.mxu0 %v2710
      %2734 = vmatprep.subr.bf16.mxu0 0
      %2735 = vmatpush1.bf16.msra.mxu0 %v2711
      %2736 = vmatprep.subr.bf16.mxu0 0
      %2737 = vmatpush1.bf16.msra.mxu0 0
      %2738 = vmatprep.subr.bf16.mxu0 0
      %2739 = vmatpush1.bf16.msra.mxu0 0
      %2740 = vmatprep.subr.bf16.mxu0 0
      %2741 = vmatpush1.bf16.msra.mxu0 0
      %2742 = vmatprep.subr.bf16.mxu0 0
      %2743 = vmatpush1.bf16.msra.mxu0 0
      %2744 = vmatprep.subr.bf16.mxu0 0
      %2745 = vmatpush1.bf16.msra.mxu0 0
      %2746 = vmatprep.subr.bf16.mxu0 0
      %2747 = vmatpush1.bf16.msra.mxu0 0
      %2748 = vmatprep.subr.bf16.mxu0 0
      %2749 = vmatpush1.bf16.msra.mxu0 0
      %2750 = vmatprep.subr.bf16.mxu0 0
      %2751 = vmatpush1.bf16.msra.mxu0 0
      %2752 = vmatprep.subr.bf16.mxu0 0
      %2753 = vmatpush1.bf16.msra.mxu0 0
      %2754 = vmatprep.subr.bf16.mxu0 0
      %2755 = vmatpush1.bf16.msra.mxu0 0
      %2756 = vmatprep.subr.bf16.mxu0 0
      %2757 = vmatpush1.bf16.msra.mxu0 0
      %2758 = vmatprep.subr.bf16.mxu0 0
      %2759 = vmatpush1.bf16.msra.mxu0 0
      %2760 = vmatprep.mubr.bf16.mxu0 0
      %2761 = vmatmul.mubr.bf16.gmra.mrb[0].mxu0 %v2717
      %v2762 = vpop.f32.mrb[0].mxu0
      %v2763 = vadd.f32 0.0, %v2762
      %v2764 = vpop.f32.mrb[0].mxu0
      %v2765 = vpop.f32.mrb[0].mxu0
      %v2766 = vadd.f32 0.0, %v2765
      %v2767 = vpop.f32.mrb[0].mxu0
      %2768 = vmatprep.mubr.bf16.mxu0 0
      %2769 = vmatmul.mubr.bf16.gmra.mrb[0].mxu0 %v2720
      %v2770 = vpop.f32.mrb[0].mxu0
      %v2771 = vadd.f32 0.0, %v2770
      %v2772 = vpop.f32.mrb[0].mxu0
      %v2773 = vpop.f32.mrb[0].mxu0
      %v2774 = vadd.f32 0.0, %v2773
      %v2775 = vpop.f32.mrb[0].mxu0
      %2776 = vmatprep.mubr.bf16.mxu0 0
      %2777 = vmatmul.mubr.bf16.gmra.mrb[0].mxu0 %v2723
      %v2778 = vpop.f32.mrb[0].mxu0
      %v2779 = vadd.f32 0.0, %v2778
      %v2780 = vpop.f32.mrb[0].mxu0
      %v2781 = vpop.f32.mrb[0].mxu0
      %v2782 = vadd.f32 0.0, %v2781
      %v2783 = vpop.f32.mrb[0].mxu0
      %2784 = vmatprep.mubr.bf16.mxu0 0
      %2785 = vmatmul.mubr.bf16.gmra.mrb[0].mxu0 %v2726
      %v2786 = vpop.f32.mrb[0].mxu0
      %v2787 = vadd.f32 0.0, %v2786
      %v2788 = vpop.f32.mrb[0].mxu0
      %v2789 = vpop.f32.mrb[0].mxu0
      %v2790 = vadd.f32 0.0, %v2789
      %v2791 = vpop.f32.mrb[0].mxu0
      %2792 = vdwg.mxu0
      %v2793 = vadd.f32 %v2671, %v2763
      %v2794 = vadd.f32 %v2672, %v2766
      %v2795 = vadd.f32 %v2673, %v2771
      %v2796 = vadd.f32 %v2674, %v2774
      %v2797 = vadd.f32 %v2675, %v2779
      %v2798 = vadd.f32 %v2676, %v2782
      %v2799 = vadd.f32 %v2677, %v2787
      %v2800 = vadd.f32 %v2678, %v2790
      %v2801 = vpack.c.bf16 %v1860, %v1857
      %v2802 = vpack.c.bf16 %v1868, %v1865
      %v2803 = vpack.c.bf16 %v1876, %v1873
      %v2804 = vpack.c.bf16 %v1884, %v1881
      %s2805 = scalar_lea.vmem %s4, 160
      %v2806 = vld [vmem:[%s2805] sm:$0xf]
      %v2807 = vld [vmem:[%s2805 + $0x4] sm:$0xf]
      %v2808 = vld [vmem:[%s2805 + $0x8] sm:$0xf]
      %v2809 = vld [vmem:[%s2805 + $0xc] sm:$0xf]
      %v2810 = vld [vmem:[%s2805 + $0x10] sm:$0xf]
      %v2811 = vld [vmem:[%s2805 + $0x14] sm:$0xf]
      %v2812 = vld [vmem:[%s2805 + $0x18] sm:$0xf]
      %v2813 = vld [vmem:[%s2805 + $0x1c] sm:$0xf]
      %v2822 = vunpack.c.l.b16 %v2806
      %v2823 = vunpack.c.l.b16 %v2807
      %v2824 = vunpack.c.l.b16 %v2808
      %v2825 = vunpack.c.l.b16 %v2809
      %v2826 = vunpack.c.l.b16 %v2810
      %v2827 = vunpack.c.l.b16 %v2811
      %v2828 = vunpack.c.l.b16 %v2812
      %v2829 = vunpack.c.l.b16 %v2813
      %v2830 = vpack.c.b16 %v2823, %v2822
      %v2831 = vpack.c.b16 %v2825, %v2824
      %v2832 = vpack.c.b16 %v2827, %v2826
      %v2833 = vpack.c.b16 %v2829, %v2828
      %v2839 = vsel %vm2256, %v2801, 0
      %v2842 = vsel %vm2256, %v2802, 0
      %v2845 = vsel %vm2256, %v2803, 0
      %v2848 = vsel %vm2256, %v2804, 0
      %2850 = vmatprep.subr.bf16.mxu0 0
      %2851 = vmatpush1.bf16.msra.mxu0 %v2830
      %2852 = vmatprep.subr.bf16.mxu0 0
      %2853 = vmatpush1.bf16.msra.mxu0 %v2831
      %2854 = vmatprep.subr.bf16.mxu0 0
      %2855 = vmatpush1.bf16.msra.mxu0 %v2832
      %2856 = vmatprep.subr.bf16.mxu0 0
      %2857 = vmatpush1.bf16.msra.mxu0 %v2833
      %2858 = vmatprep.subr.bf16.mxu0 0
      %2859 = vmatpush1.bf16.msra.mxu0 0
      %2860 = vmatprep.subr.bf16.mxu0 0
      %2861 = vmatpush1.bf16.msra.mxu0 0
      %2862 = vmatprep.subr.bf16.mxu0 0
      %2863 = vmatpush1.bf16.msra.mxu0 0
      %2864 = vmatprep.subr.bf16.mxu0 0
      %2865 = vmatpush1.bf16.msra.mxu0 0
      %2866 = vmatprep.subr.bf16.mxu0 0
      %2867 = vmatpush1.bf16.msra.mxu0 0
      %2868 = vmatprep.subr.bf16.mxu0 0
      %2869 = vmatpush1.bf16.msra.mxu0 0
      %2870 = vmatprep.subr.bf16.mxu0 0
      %2871 = vmatpush1.bf16.msra.mxu0 0
      %2872 = vmatprep.subr.bf16.mxu0 0
      %2873 = vmatpush1.bf16.msra.mxu0 0
      %2874 = vmatprep.subr.bf16.mxu0 0
      %2875 = vmatpush1.bf16.msra.mxu0 0
      %2876 = vmatprep.subr.bf16.mxu0 0
      %2877 = vmatpush1.bf16.msra.mxu0 0
      %2878 = vmatprep.subr.bf16.mxu0 0
      %2879 = vmatpush1.bf16.msra.mxu0 0
      %2880 = vmatprep.subr.bf16.mxu0 0
      %2881 = vmatpush1.bf16.msra.mxu0 0
      %2882 = vmatprep.mubr.bf16.mxu0 0
      %2883 = vmatmul.mubr.bf16.gmra.mrb[0].mxu0 %v2839
      %v2884 = vpop.f32.mrb[0].mxu0
      %v2885 = vadd.f32 0.0, %v2884
      %v2886 = vpop.f32.mrb[0].mxu0
      %v2887 = vpop.f32.mrb[0].mxu0
      %v2888 = vadd.f32 0.0, %v2887
      %v2889 = vpop.f32.mrb[0].mxu0
      %2890 = vmatprep.mubr.bf16.mxu0 0
      %2891 = vmatmul.mubr.bf16.gmra.mrb[0].mxu0 %v2842
      %v2892 = vpop.f32.mrb[0].mxu0
      %v2893 = vadd.f32 0.0, %v2892
      %v2894 = vpop.f32.mrb[0].mxu0
      %v2895 = vpop.f32.mrb[0].mxu0
      %v2896 = vadd.f32 0.0, %v2895
      %v2897 = vpop.f32.mrb[0].mxu0
      %2898 = vmatprep.mubr.bf16.mxu0 0
      %2899 = vmatmul.mubr.bf16.gmra.mrb[0].mxu0 %v2845
      %v2900 = vpop.f32.mrb[0].mxu0
      %v2901 = vadd.f32 0.0, %v2900
      %v2902 = vpop.f32.mrb[0].mxu0
      %v2903 = vpop.f32.mrb[0].mxu0
      %v2904 = vadd.f32 0.0, %v2903
      %v2905 = vpop.f32.mrb[0].mxu0
      %2906 = vmatprep.mubr.bf16.mxu0 0
      %2907 = vmatmul.mubr.bf16.gmra.mrb[0].mxu0 %v2848
      %v2908 = vpop.f32.mrb[0].mxu0
      %v2909 = vadd.f32 0.0, %v2908
      %v2910 = vpop.f32.mrb[0].mxu0
      %v2911 = vpop.f32.mrb[0].mxu0
      %v2912 = vadd.f32 0.0, %v2911
      %v2913 = vpop.f32.mrb[0].mxu0
      %2914 = vdwg.mxu0
      %v2915 = vadd.f32 %v2793, %v2885
      %v2916 = vadd.f32 %v2794, %v2888
      %v2917 = vadd.f32 %v2795, %v2893
      %v2918 = vadd.f32 %v2796, %v2896
      %v2919 = vadd.f32 %v2797, %v2901
      %v2920 = vadd.f32 %v2798, %v2904
      %v2921 = vadd.f32 %v2799, %v2909
      %v2922 = vadd.f32 %v2800, %v2912
      %v2923 = vpack.c.bf16 %v1892, %v1889
      %v2924 = vpack.c.bf16 %v1900, %v1897
      %v2925 = vpack.c.bf16 %v1908, %v1905
      %v2926 = vpack.c.bf16 %v1916, %v1913
      %s2927 = scalar_lea.vmem %s4, 192
      %v2928 = vld [vmem:[%s2927] sm:$0xf]
      %v2929 = vld [vmem:[%s2927 + $0x4] sm:$0xf]
      %v2930 = vld [vmem:[%s2927 + $0x8] sm:$0xf]
      %v2931 = vld [vmem:[%s2927 + $0xc] sm:$0xf]
      %v2932 = vld [vmem:[%s2927 + $0x10] sm:$0xf]
      %v2933 = vld [vmem:[%s2927 + $0x14] sm:$0xf]
      %v2934 = vld [vmem:[%s2927 + $0x18] sm:$0xf]
      %v2935 = vld [vmem:[%s2927 + $0x1c] sm:$0xf]
      %v2944 = vunpack.c.l.b16 %v2928
      %v2945 = vunpack.c.l.b16 %v2929
      %v2946 = vunpack.c.l.b16 %v2930
      %v2947 = vunpack.c.l.b16 %v2931
      %v2948 = vunpack.c.l.b16 %v2932
      %v2949 = vunpack.c.l.b16 %v2933
      %v2950 = vunpack.c.l.b16 %v2934
      %v2951 = vunpack.c.l.b16 %v2935
      %v2952 = vpack.c.b16 %v2945, %v2944
      %v2953 = vpack.c.b16 %v2947, %v2946
      %v2954 = vpack.c.b16 %v2949, %v2948
      %v2955 = vpack.c.b16 %v2951, %v2950
      %v2961 = vsel %vm2256, %v2923, 0
      %v2964 = vsel %vm2256, %v2924, 0
      %v2967 = vsel %vm2256, %v2925, 0
      %v2970 = vsel %vm2256, %v2926, 0
      %2972 = vmatprep.subr.bf16.mxu0 0
      %2973 = vmatpush1.bf16.msra.mxu0 %v2952
      %2974 = vmatprep.subr.bf16.mxu0 0
      %2975 = vmatpush1.bf16.msra.mxu0 %v2953
      %2976 = vmatprep.subr.bf16.mxu0 0
      %2977 = vmatpush1.bf16.msra.mxu0 %v2954
      %2978 = vmatprep.subr.bf16.mxu0 0
      %2979 = vmatpush1.bf16.msra.mxu0 %v2955
      %2980 = vmatprep.subr.bf16.mxu0 0
      %2981 = vmatpush1.bf16.msra.mxu0 0
      %2982 = vmatprep.subr.bf16.mxu0 0
      %2983 = vmatpush1.bf16.msra.mxu0 0
      %2984 = vmatprep.subr.bf16.mxu0 0
      %2985 = vmatpush1.bf16.msra.mxu0 0
      %2986 = vmatprep.subr.bf16.mxu0 0
      %2987 = vmatpush1.bf16.msra.mxu0 0
      %2988 = vmatprep.subr.bf16.mxu0 0
      %2989 = vmatpush1.bf16.msra.mxu0 0
      %2990 = vmatprep.subr.bf16.mxu0 0
      %2991 = vmatpush1.bf16.msra.mxu0 0
      %2992 = vmatprep.subr.bf16.mxu0 0
      %2993 = vmatpush1.bf16.msra.mxu0 0
      %2994 = vmatprep.subr.bf16.mxu0 0
      %2995 = vmatpush1.bf16.msra.mxu0 0
      %2996 = vmatprep.subr.bf16.mxu0 0
      %2997 = vmatpush1.bf16.msra.mxu0 0
      %2998 = vmatprep.subr.bf16.mxu0 0
      %2999 = vmatpush1.bf16.msra.mxu0 0
      %3000 = vmatprep.subr.bf16.mxu0 0
      %3001 = vmatpush1.bf16.msra.mxu0 0
      %3002 = vmatprep.subr.bf16.mxu0 0
      %3003 = vmatpush1.bf16.msra.mxu0 0
      %3004 = vmatprep.mubr.bf16.mxu0 0
      %3005 = vmatmul.mubr.bf16.gmra.mrb[0].mxu0 %v2961
      %v3006 = vpop.f32.mrb[0].mxu0
      %v3007 = vadd.f32 0.0, %v3006
      %v3008 = vpop.f32.mrb[0].mxu0
      %v3009 = vpop.f32.mrb[0].mxu0
      %v3010 = vadd.f32 0.0, %v3009
      %v3011 = vpop.f32.mrb[0].mxu0
      %3012 = vmatprep.mubr.bf16.mxu0 0
      %3013 = vmatmul.mubr.bf16.gmra.mrb[0].mxu0 %v2964
      %v3014 = vpop.f32.mrb[0].mxu0
      %v3015 = vadd.f32 0.0, %v3014
      %v3016 = vpop.f32.mrb[0].mxu0
      %v3017 = vpop.f32.mrb[0].mxu0
      %v3018 = vadd.f32 0.0, %v3017
      %v3019 = vpop.f32.mrb[0].mxu0
      %3020 = vmatprep.mubr.bf16.mxu0 0
      %3021 = vmatmul.mubr.bf16.gmra.mrb[0].mxu0 %v2967
      %v3022 = vpop.f32.mrb[0].mxu0
      %v3023 = vadd.f32 0.0, %v3022
      %v3024 = vpop.f32.mrb[0].mxu0
      %v3025 = vpop.f32.mrb[0].mxu0
      %v3026 = vadd.f32 0.0, %v3025
      %v3027 = vpop.f32.mrb[0].mxu0
      %3028 = vmatprep.mubr.bf16.mxu0 0
      %3029 = vmatmul.mubr.bf16.gmra.mrb[0].mxu0 %v2970
      %v3030 = vpop.f32.mrb[0].mxu0
      %v3031 = vadd.f32 0.0, %v3030
      %v3032 = vpop.f32.mrb[0].mxu0
      %v3033 = vpop.f32.mrb[0].mxu0
      %v3034 = vadd.f32 0.0, %v3033
      %v3035 = vpop.f32.mrb[0].mxu0
      %3036 = vdwg.mxu0
      %v3037 = vadd.f32 %v2915, %v3007
      %v3038 = vadd.f32 %v2916, %v3010
      %v3039 = vadd.f32 %v2917, %v3015
      %v3040 = vadd.f32 %v2918, %v3018
      %v3041 = vadd.f32 %v2919, %v3023
      %v3042 = vadd.f32 %v2920, %v3026
      %v3043 = vadd.f32 %v2921, %v3031
      %v3044 = vadd.f32 %v2922, %v3034
      %v3045 = vpack.c.bf16 %v1924, %v1921
      %v3046 = vpack.c.bf16 %v1932, %v1929
      %v3047 = vpack.c.bf16 %v1940, %v1937
      %v3048 = vpack.c.bf16 %v1948, %v1945
      %s3049 = scalar_lea.vmem %s4, 224
      %v3050 = vld [vmem:[%s3049] sm:$0xf]
      %v3051 = vld [vmem:[%s3049 + $0x4] sm:$0xf]
      %v3052 = vld [vmem:[%s3049 + $0x8] sm:$0xf]
      %v3053 = vld [vmem:[%s3049 + $0xc] sm:$0xf]
      %v3054 = vld [vmem:[%s3049 + $0x10] sm:$0xf]
      %v3055 = vld [vmem:[%s3049 + $0x14] sm:$0xf]
      %v3056 = vld [vmem:[%s3049 + $0x18] sm:$0xf]
      %v3057 = vld [vmem:[%s3049 + $0x1c] sm:$0xf]
      %v3066 = vunpack.c.l.b16 %v3050
      %v3067 = vunpack.c.l.b16 %v3051
      %v3068 = vunpack.c.l.b16 %v3052
      %v3069 = vunpack.c.l.b16 %v3053
      %v3070 = vunpack.c.l.b16 %v3054
      %v3071 = vunpack.c.l.b16 %v3055
      %v3072 = vunpack.c.l.b16 %v3056
      %v3073 = vunpack.c.l.b16 %v3057
      %v3074 = vpack.c.b16 %v3067, %v3066
      %v3075 = vpack.c.b16 %v3069, %v3068
      %v3076 = vpack.c.b16 %v3071, %v3070
      %v3077 = vpack.c.b16 %v3073, %v3072
      %v3083 = vsel %vm2256, %v3045, 0
      %v3086 = vsel %vm2256, %v3046, 0
      %v3089 = vsel %vm2256, %v3047, 0
      %v3092 = vsel %vm2256, %v3048, 0
      %3094 = vmatprep.subr.bf16.mxu0 0
      %3095 = vmatpush1.bf16.msra.mxu0 %v3074
      %3096 = vmatprep.subr.bf16.mxu0 0
      %3097 = vmatpush1.bf16.msra.mxu0 %v3075
      %3098 = vmatprep.subr.bf16.mxu0 0
      %3099 = vmatpush1.bf16.msra.mxu0 %v3076
      %3100 = vmatprep.subr.bf16.mxu0 0
      %3101 = vmatpush1.bf16.msra.mxu0 %v3077
      %3102 = vmatprep.subr.bf16.mxu0 0
      %3103 = vmatpush1.bf16.msra.mxu0 0
      %3104 = vmatprep.subr.bf16.mxu0 0
      %3105 = vmatpush1.bf16.msra.mxu0 0
      %3106 = vmatprep.subr.bf16.mxu0 0
      %3107 = vmatpush1.bf16.msra.mxu0 0
      %3108 = vmatprep.subr.bf16.mxu0 0
      %3109 = vmatpush1.bf16.msra.mxu0 0
      %3110 = vmatprep.subr.bf16.mxu0 0
      %3111 = vmatpush1.bf16.msra.mxu0 0
      %3112 = vmatprep.subr.bf16.mxu0 0
      %3113 = vmatpush1.bf16.msra.mxu0 0
      %3114 = vmatprep.subr.bf16.mxu0 0
      %3115 = vmatpush1.bf16.msra.mxu0 0
      %3116 = vmatprep.subr.bf16.mxu0 0
      %3117 = vmatpush1.bf16.msra.mxu0 0
      %3118 = vmatprep.subr.bf16.mxu0 0
      %3119 = vmatpush1.bf16.msra.mxu0 0
      %3120 = vmatprep.subr.bf16.mxu0 0
      %3121 = vmatpush1.bf16.msra.mxu0 0
      %3122 = vmatprep.subr.bf16.mxu0 0
      %3123 = vmatpush1.bf16.msra.mxu0 0
      %3124 = vmatprep.subr.bf16.mxu0 0
      %3125 = vmatpush1.bf16.msra.mxu0 0
      %3126 = vmatprep.mubr.bf16.mxu0 0
      %3127 = vmatmul.mubr.bf16.gmra.mrb[0].mxu0 %v3083
      %v3128 = vpop.f32.mrb[0].mxu0
      %v3129 = vadd.f32 0.0, %v3128
      %v3130 = vpop.f32.mrb[0].mxu0
      %v3131 = vpop.f32.mrb[0].mxu0
      %v3132 = vadd.f32 0.0, %v3131
      %v3133 = vpop.f32.mrb[0].mxu0
      %3134 = vmatprep.mubr.bf16.mxu0 0
      %3135 = vmatmul.mubr.bf16.gmra.mrb[0].mxu0 %v3086
      %v3136 = vpop.f32.mrb[0].mxu0
      %v3137 = vadd.f32 0.0, %v3136
      %v3138 = vpop.f32.mrb[0].mxu0
      %v3139 = vpop.f32.mrb[0].mxu0
      %v3140 = vadd.f32 0.0, %v3139
      %v3141 = vpop.f32.mrb[0].mxu0
      %3142 = vmatprep.mubr.bf16.mxu0 0
      %3143 = vmatmul.mubr.bf16.gmra.mrb[0].mxu0 %v3089
      %v3144 = vpop.f32.mrb[0].mxu0
      %v3145 = vadd.f32 0.0, %v3144
      %v3146 = vpop.f32.mrb[0].mxu0
      %v3147 = vpop.f32.mrb[0].mxu0
      %v3148 = vadd.f32 0.0, %v3147
      %v3149 = vpop.f32.mrb[0].mxu0
      %3150 = vmatprep.mubr.bf16.mxu0 0
      %3151 = vmatmul.mubr.bf16.gmra.mrb[0].mxu0 %v3092
      %v3152 = vpop.f32.mrb[0].mxu0
      %v3153 = vadd.f32 0.0, %v3152
      %v3154 = vpop.f32.mrb[0].mxu0
      %v3155 = vpop.f32.mrb[0].mxu0
      %v3156 = vadd.f32 0.0, %v3155
      %v3157 = vpop.f32.mrb[0].mxu0
      %3158 = vdwg.mxu0
      %v3159 = vadd.f32 %v3037, %v3129
      %v3160 = vadd.f32 %v3038, %v3132
      %v3161 = vadd.f32 %v3039, %v3137
      %v3162 = vadd.f32 %v3040, %v3140
      %v3163 = vadd.f32 %v3041, %v3145
      %v3164 = vadd.f32 %v3042, %v3148
      %v3165 = vadd.f32 %v3043, %v3153
      %v3166 = vadd.f32 %v3044, %v3156
      %v3167 = vpack.c.bf16 %v1956, %v1953
      %v3168 = vpack.c.bf16 %v1964, %v1961
      %v3169 = vpack.c.bf16 %v1972, %v1969
      %v3170 = vpack.c.bf16 %v1980, %v1977
      %s3171 = scalar_lea.vmem %s4, 256
      %v3172 = vld [vmem:[%s3171] sm:$0xf]
      %v3173 = vld [vmem:[%s3171 + $0x4] sm:$0xf]
      %v3174 = vld [vmem:[%s3171 + $0x8] sm:$0xf]
      %v3175 = vld [vmem:[%s3171 + $0xc] sm:$0xf]
      %v3176 = vld [vmem:[%s3171 + $0x10] sm:$0xf]
      %v3177 = vld [vmem:[%s3171 + $0x14] sm:$0xf]
      %v3178 = vld [vmem:[%s3171 + $0x18] sm:$0xf]
      %v3179 = vld [vmem:[%s3171 + $0x1c] sm:$0xf]
      %v3188 = vunpack.c.l.b16 %v3172
      %v3189 = vunpack.c.l.b16 %v3173
      %v3190 = vunpack.c.l.b16 %v3174
      %v3191 = vunpack.c.l.b16 %v3175
      %v3192 = vunpack.c.l.b16 %v3176
      %v3193 = vunpack.c.l.b16 %v3177
      %v3194 = vunpack.c.l.b16 %v3178
      %v3195 = vunpack.c.l.b16 %v3179
      %v3196 = vpack.c.b16 %v3189, %v3188
      %v3197 = vpack.c.b16 %v3191, %v3190
      %v3198 = vpack.c.b16 %v3193, %v3192
      %v3199 = vpack.c.b16 %v3195, %v3194
      %v3205 = vsel %vm2256, %v3167, 0
      %v3208 = vsel %vm2256, %v3168, 0
      %v3211 = vsel %vm2256, %v3169, 0
      %v3214 = vsel %vm2256, %v3170, 0
      %3216 = vmatprep.subr.bf16.mxu0 0
      %3217 = vmatpush1.bf16.msra.mxu0 %v3196
      %3218 = vmatprep.subr.bf16.mxu0 0
      %3219 = vmatpush1.bf16.msra.mxu0 %v3197
      %3220 = vmatprep.subr.bf16.mxu0 0
      %3221 = vmatpush1.bf16.msra.mxu0 %v3198
      %3222 = vmatprep.subr.bf16.mxu0 0
      %3223 = vmatpush1.bf16.msra.mxu0 %v3199
      %3224 = vmatprep.subr.bf16.mxu0 0
      %3225 = vmatpush1.bf16.msra.mxu0 0
      %3226 = vmatprep.subr.bf16.mxu0 0
      %3227 = vmatpush1.bf16.msra.mxu0 0
      %3228 = vmatprep.subr.bf16.mxu0 0
      %3229 = vmatpush1.bf16.msra.mxu0 0
      %3230 = vmatprep.subr.bf16.mxu0 0
      %3231 = vmatpush1.bf16.msra.mxu0 0
      %3232 = vmatprep.subr.bf16.mxu0 0
      %3233 = vmatpush1.bf16.msra.mxu0 0
      %3234 = vmatprep.subr.bf16.mxu0 0
      %3235 = vmatpush1.bf16.msra.mxu0 0
      %3236 = vmatprep.subr.bf16.mxu0 0
      %3237 = vmatpush1.bf16.msra.mxu0 0
      %3238 = vmatprep.subr.bf16.mxu0 0
      %3239 = vmatpush1.bf16.msra.mxu0 0
      %3240 = vmatprep.subr.bf16.mxu0 0
      %3241 = vmatpush1.bf16.msra.mxu0 0
      %3242 = vmatprep.subr.bf16.mxu0 0
      %3243 = vmatpush1.bf16.msra.mxu0 0
      %3244 = vmatprep.subr.bf16.mxu0 0
      %3245 = vmatpush1.bf16.msra.mxu0 0
      %3246 = vmatprep.subr.bf16.mxu0 0
      %3247 = vmatpush1.bf16.msra.mxu0 0
      %3248 = vmatprep.mubr.bf16.mxu0 0
      %3249 = vmatmul.mubr.bf16.gmra.mrb[0].mxu0 %v3205
      %v3250 = vpop.f32.mrb[0].mxu0
      %v3251 = vadd.f32 0.0, %v3250
      %v3252 = vpop.f32.mrb[0].mxu0
      %v3253 = vpop.f32.mrb[0].mxu0
      %v3254 = vadd.f32 0.0, %v3253
      %v3255 = vpop.f32.mrb[0].mxu0
      %3256 = vmatprep.mubr.bf16.mxu0 0
      %3257 = vmatmul.mubr.bf16.gmra.mrb[0].mxu0 %v3208
      %v3258 = vpop.f32.mrb[0].mxu0
      %v3259 = vadd.f32 0.0, %v3258
      %v3260 = vpop.f32.mrb[0].mxu0
      %v3261 = vpop.f32.mrb[0].mxu0
      %v3262 = vadd.f32 0.0, %v3261
      %v3263 = vpop.f32.mrb[0].mxu0
      %3264 = vmatprep.mubr.bf16.mxu0 0
      %3265 = vmatmul.mubr.bf16.gmra.mrb[0].mxu0 %v3211
      %v3266 = vpop.f32.mrb[0].mxu0
      %v3267 = vadd.f32 0.0, %v3266
      %v3268 = vpop.f32.mrb[0].mxu0
      %v3269 = vpop.f32.mrb[0].mxu0
      %v3270 = vadd.f32 0.0, %v3269
      %v3271 = vpop.f32.mrb[0].mxu0
      %3272 = vmatprep.mubr.bf16.mxu0 0
      %3273 = vmatmul.mubr.bf16.gmra.mrb[0].mxu0 %v3214
      %v3274 = vpop.f32.mrb[0].mxu0
      %v3275 = vadd.f32 0.0, %v3274
      %v3276 = vpop.f32.mrb[0].mxu0
      %v3277 = vpop.f32.mrb[0].mxu0
      %v3278 = vadd.f32 0.0, %v3277
      %v3279 = vpop.f32.mrb[0].mxu0
      %3280 = vdwg.mxu0
      %v3281 = vadd.f32 %v3159, %v3251
      %v3282 = vadd.f32 %v3160, %v3254
      %v3283 = vadd.f32 %v3161, %v3259
      %v3284 = vadd.f32 %v3162, %v3262
      %v3285 = vadd.f32 %v3163, %v3267
      %v3286 = vadd.f32 %v3164, %v3270
      %v3287 = vadd.f32 %v3165, %v3275
      %v3288 = vadd.f32 %v3166, %v3278
      %v3289 = vpack.c.bf16 %v1988, %v1985
      %v3290 = vpack.c.bf16 %v1996, %v1993
      %v3291 = vpack.c.bf16 %v2004, %v2001
      %v3292 = vpack.c.bf16 %v2012, %v2009
      %s3293 = scalar_lea.vmem %s4, 288
      %v3294 = vld [vmem:[%s3293] sm:$0xf]
      %v3295 = vld [vmem:[%s3293 + $0x4] sm:$0xf]
      %v3296 = vld [vmem:[%s3293 + $0x8] sm:$0xf]
      %v3297 = vld [vmem:[%s3293 + $0xc] sm:$0xf]
      %v3298 = vld [vmem:[%s3293 + $0x10] sm:$0xf]
      %v3299 = vld [vmem:[%s3293 + $0x14] sm:$0xf]
      %v3300 = vld [vmem:[%s3293 + $0x18] sm:$0xf]
      %v3301 = vld [vmem:[%s3293 + $0x1c] sm:$0xf]
      %v3310 = vunpack.c.l.b16 %v3294
      %v3311 = vunpack.c.l.b16 %v3295
      %v3312 = vunpack.c.l.b16 %v3296
      %v3313 = vunpack.c.l.b16 %v3297
      %v3314 = vunpack.c.l.b16 %v3298
      %v3315 = vunpack.c.l.b16 %v3299
      %v3316 = vunpack.c.l.b16 %v3300
      %v3317 = vunpack.c.l.b16 %v3301
      %v3318 = vpack.c.b16 %v3311, %v3310
      %v3319 = vpack.c.b16 %v3313, %v3312
      %v3320 = vpack.c.b16 %v3315, %v3314
      %v3321 = vpack.c.b16 %v3317, %v3316
      %v3327 = vsel %vm2256, %v3289, 0
      %v3330 = vsel %vm2256, %v3290, 0
      %v3333 = vsel %vm2256, %v3291, 0
      %v3336 = vsel %vm2256, %v3292, 0
      %3338 = vmatprep.subr.bf16.mxu0 0
      %3339 = vmatpush1.bf16.msra.mxu0 %v3318
      %3340 = vmatprep.subr.bf16.mxu0 0
      %3341 = vmatpush1.bf16.msra.mxu0 %v3319
      %3342 = vmatprep.subr.bf16.mxu0 0
      %3343 = vmatpush1.bf16.msra.mxu0 %v3320
      %3344 = vmatprep.subr.bf16.mxu0 0
      %3345 = vmatpush1.bf16.msra.mxu0 %v3321
      %3346 = vmatprep.subr.bf16.mxu0 0
      %3347 = vmatpush1.bf16.msra.mxu0 0
      %3348 = vmatprep.subr.bf16.mxu0 0
      %3349 = vmatpush1.bf16.msra.mxu0 0
      %3350 = vmatprep.subr.bf16.mxu0 0
      %3351 = vmatpush1.bf16.msra.mxu0 0
      %3352 = vmatprep.subr.bf16.mxu0 0
      %3353 = vmatpush1.bf16.msra.mxu0 0
      %3354 = vmatprep.subr.bf16.mxu0 0
      %3355 = vmatpush1.bf16.msra.mxu0 0
      %3356 = vmatprep.subr.bf16.mxu0 0
      %3357 = vmatpush1.bf16.msra.mxu0 0
      %3358 = vmatprep.subr.bf16.mxu0 0
      %3359 = vmatpush1.bf16.msra.mxu0 0
      %3360 = vmatprep.subr.bf16.mxu0 0
      %3361 = vmatpush1.bf16.msra.mxu0 0
      %3362 = vmatprep.subr.bf16.mxu0 0
      %3363 = vmatpush1.bf16.msra.mxu0 0
      %3364 = vmatprep.subr.bf16.mxu0 0
      %3365 = vmatpush1.bf16.msra.mxu0 0
      %3366 = vmatprep.subr.bf16.mxu0 0
      %3367 = vmatpush1.bf16.msra.mxu0 0
      %3368 = vmatprep.subr.bf16.mxu0 0
      %3369 = vmatpush1.bf16.msra.mxu0 0
      %3370 = vmatprep.mubr.bf16.mxu0 0
      %3371 = vmatmul.mubr.bf16.gmra.mrb[0].mxu0 %v3327
      %v3372 = vpop.f32.mrb[0].mxu0
      %v3373 = vadd.f32 0.0, %v3372
      %v3374 = vpop.f32.mrb[0].mxu0
      %v3375 = vpop.f32.mrb[0].mxu0
      %v3376 = vadd.f32 0.0, %v3375
      %v3377 = vpop.f32.mrb[0].mxu0
      %3378 = vmatprep.mubr.bf16.mxu0 0
      %3379 = vmatmul.mubr.bf16.gmra.mrb[0].mxu0 %v3330
      %v3380 = vpop.f32.mrb[0].mxu0
      %v3381 = vadd.f32 0.0, %v3380
      %v3382 = vpop.f32.mrb[0].mxu0
      %v3383 = vpop.f32.mrb[0].mxu0
      %v3384 = vadd.f32 0.0, %v3383
      %v3385 = vpop.f32.mrb[0].mxu0
      %3386 = vmatprep.mubr.bf16.mxu0 0
      %3387 = vmatmul.mubr.bf16.gmra.mrb[0].mxu0 %v3333
      %v3388 = vpop.f32.mrb[0].mxu0
      %v3389 = vadd.f32 0.0, %v3388
      %v3390 = vpop.f32.mrb[0].mxu0
      %v3391 = vpop.f32.mrb[0].mxu0
      %v3392 = vadd.f32 0.0, %v3391
      %v3393 = vpop.f32.mrb[0].mxu0
      %3394 = vmatprep.mubr.bf16.mxu0 0
      %3395 = vmatmul.mubr.bf16.gmra.mrb[0].mxu0 %v3336
      %v3396 = vpop.f32.mrb[0].mxu0
      %v3397 = vadd.f32 0.0, %v3396
      %v3398 = vpop.f32.mrb[0].mxu0
      %v3399 = vpop.f32.mrb[0].mxu0
      %v3400 = vadd.f32 0.0, %v3399
      %v3401 = vpop.f32.mrb[0].mxu0
      %3402 = vdwg.mxu0
      %v3403 = vadd.f32 %v3281, %v3373
      %v3404 = vadd.f32 %v3282, %v3376
      %v3405 = vadd.f32 %v3283, %v3381
      %v3406 = vadd.f32 %v3284, %v3384
      %v3407 = vadd.f32 %v3285, %v3389
      %v3408 = vadd.f32 %v3286, %v3392
      %v3409 = vadd.f32 %v3287, %v3397
      %v3410 = vadd.f32 %v3288, %v3400
      %v3411 = vpack.c.bf16 %v2020, %v2017
      %v3412 = vpack.c.bf16 %v2028, %v2025
      %v3413 = vpack.c.bf16 %v2036, %v2033
      %v3414 = vpack.c.bf16 %v2044, %v2041
      %s3415 = scalar_lea.vmem %s4, 320
      %v3416 = vld [vmem:[%s3415] sm:$0xf]
      %v3417 = vld [vmem:[%s3415 + $0x4] sm:$0xf]
      %v3418 = vld [vmem:[%s3415 + $0x8] sm:$0xf]
      %v3419 = vld [vmem:[%s3415 + $0xc] sm:$0xf]
      %v3420 = vld [vmem:[%s3415 + $0x10] sm:$0xf]
      %v3421 = vld [vmem:[%s3415 + $0x14] sm:$0xf]
      %v3422 = vld [vmem:[%s3415 + $0x18] sm:$0xf]
      %v3423 = vld [vmem:[%s3415 + $0x1c] sm:$0xf]
      %v3432 = vunpack.c.l.b16 %v3416
      %v3433 = vunpack.c.l.b16 %v3417
      %v3434 = vunpack.c.l.b16 %v3418
      %v3435 = vunpack.c.l.b16 %v3419
      %v3436 = vunpack.c.l.b16 %v3420
      %v3437 = vunpack.c.l.b16 %v3421
      %v3438 = vunpack.c.l.b16 %v3422
      %v3439 = vunpack.c.l.b16 %v3423
      %v3440 = vpack.c.b16 %v3433, %v3432
      %v3441 = vpack.c.b16 %v3435, %v3434
      %v3442 = vpack.c.b16 %v3437, %v3436
      %v3443 = vpack.c.b16 %v3439, %v3438
      %v3449 = vsel %vm2256, %v3411, 0
      %v3452 = vsel %vm2256, %v3412, 0
      %v3455 = vsel %vm2256, %v3413, 0
      %v3458 = vsel %vm2256, %v3414, 0
      %3460 = vmatprep.subr.bf16.mxu0 0
      %3461 = vmatpush1.bf16.msra.mxu0 %v3440
      %3462 = vmatprep.subr.bf16.mxu0 0
      %3463 = vmatpush1.bf16.msra.mxu0 %v3441
      %3464 = vmatprep.subr.bf16.mxu0 0
      %3465 = vmatpush1.bf16.msra.mxu0 %v3442
      %3466 = vmatprep.subr.bf16.mxu0 0
      %3467 = vmatpush1.bf16.msra.mxu0 %v3443
      %3468 = vmatprep.subr.bf16.mxu0 0
      %3469 = vmatpush1.bf16.msra.mxu0 0
      %3470 = vmatprep.subr.bf16.mxu0 0
      %3471 = vmatpush1.bf16.msra.mxu0 0
      %3472 = vmatprep.subr.bf16.mxu0 0
      %3473 = vmatpush1.bf16.msra.mxu0 0
      %3474 = vmatprep.subr.bf16.mxu0 0
      %3475 = vmatpush1.bf16.msra.mxu0 0
      %3476 = vmatprep.subr.bf16.mxu0 0
      %3477 = vmatpush1.bf16.msra.mxu0 0
      %3478 = vmatprep.subr.bf16.mxu0 0
      %3479 = vmatpush1.bf16.msra.mxu0 0
      %3480 = vmatprep.subr.bf16.mxu0 0
      %3481 = vmatpush1.bf16.msra.mxu0 0
      %3482 = vmatprep.subr.bf16.mxu0 0
      %3483 = vmatpush1.bf16.msra.mxu0 0
      %3484 = vmatprep.subr.bf16.mxu0 0
      %3485 = vmatpush1.bf16.msra.mxu0 0
      %3486 = vmatprep.subr.bf16.mxu0 0
      %3487 = vmatpush1.bf16.msra.mxu0 0
      %3488 = vmatprep.subr.bf16.mxu0 0
      %3489 = vmatpush1.bf16.msra.mxu0 0
      %3490 = vmatprep.subr.bf16.mxu0 0
      %3491 = vmatpush1.bf16.msra.mxu0 0
      %3492 = vmatprep.mubr.bf16.mxu0 0
      %3493 = vmatmul.mubr.bf16.gmra.mrb[0].mxu0 %v3449
      %v3494 = vpop.f32.mrb[0].mxu0
      %v3495 = vadd.f32 0.0, %v3494
      %v3496 = vpop.f32.mrb[0].mxu0
      %v3497 = vpop.f32.mrb[0].mxu0
      %v3498 = vadd.f32 0.0, %v3497
      %v3499 = vpop.f32.mrb[0].mxu0
      %3500 = vmatprep.mubr.bf16.mxu0 0
      %3501 = vmatmul.mubr.bf16.gmra.mrb[0].mxu0 %v3452
      %v3502 = vpop.f32.mrb[0].mxu0
      %v3503 = vadd.f32 0.0, %v3502
      %v3504 = vpop.f32.mrb[0].mxu0
      %v3505 = vpop.f32.mrb[0].mxu0
      %v3506 = vadd.f32 0.0, %v3505
      %v3507 = vpop.f32.mrb[0].mxu0
      %3508 = vmatprep.mubr.bf16.mxu0 0
      %3509 = vmatmul.mubr.bf16.gmra.mrb[0].mxu0 %v3455
      %v3510 = vpop.f32.mrb[0].mxu0
      %v3511 = vadd.f32 0.0, %v3510
      %v3512 = vpop.f32.mrb[0].mxu0
      %v3513 = vpop.f32.mrb[0].mxu0
      %v3514 = vadd.f32 0.0, %v3513
      %v3515 = vpop.f32.mrb[0].mxu0
      %3516 = vmatprep.mubr.bf16.mxu0 0
      %3517 = vmatmul.mubr.bf16.gmra.mrb[0].mxu0 %v3458
      %v3518 = vpop.f32.mrb[0].mxu0
      %v3519 = vadd.f32 0.0, %v3518
      %v3520 = vpop.f32.mrb[0].mxu0
      %v3521 = vpop.f32.mrb[0].mxu0
      %v3522 = vadd.f32 0.0, %v3521
      %v3523 = vpop.f32.mrb[0].mxu0
      %3524 = vdwg.mxu0
      %v3525 = vadd.f32 %v3403, %v3495
      %v3526 = vadd.f32 %v3404, %v3498
      %v3527 = vadd.f32 %v3405, %v3503
      %v3528 = vadd.f32 %v3406, %v3506
      %v3529 = vadd.f32 %v3407, %v3511
      %v3530 = vadd.f32 %v3408, %v3514
      %v3531 = vadd.f32 %v3409, %v3519
      %v3532 = vadd.f32 %v3410, %v3522
      %v3533 = vpack.c.bf16 %v2052, %v2049
      %v3534 = vpack.c.bf16 %v2060, %v2057
      %v3535 = vpack.c.bf16 %v2068, %v2065
      %v3536 = vpack.c.bf16 %v2076, %v2073
      %s3537 = scalar_lea.vmem %s4, 352
      %v3538 = vld [vmem:[%s3537] sm:$0xf]
      %v3539 = vld [vmem:[%s3537 + $0x4] sm:$0xf]
      %v3540 = vld [vmem:[%s3537 + $0x8] sm:$0xf]
      %v3541 = vld [vmem:[%s3537 + $0xc] sm:$0xf]
      %v3542 = vld [vmem:[%s3537 + $0x10] sm:$0xf]
      %v3543 = vld [vmem:[%s3537 + $0x14] sm:$0xf]
      %v3544 = vld [vmem:[%s3537 + $0x18] sm:$0xf]
      %v3545 = vld [vmem:[%s3537 + $0x1c] sm:$0xf]
      %v3554 = vunpack.c.l.b16 %v3538
      %v3555 = vunpack.c.l.b16 %v3539
      %v3556 = vunpack.c.l.b16 %v3540
      %v3557 = vunpack.c.l.b16 %v3541
      %v3558 = vunpack.c.l.b16 %v3542
      %v3559 = vunpack.c.l.b16 %v3543
      %v3560 = vunpack.c.l.b16 %v3544
      %v3561 = vunpack.c.l.b16 %v3545
      %v3562 = vpack.c.b16 %v3555, %v3554
      %v3563 = vpack.c.b16 %v3557, %v3556
      %v3564 = vpack.c.b16 %v3559, %v3558
      %v3565 = vpack.c.b16 %v3561, %v3560
      %v3571 = vsel %vm2256, %v3533, 0
      %v3574 = vsel %vm2256, %v3534, 0
      %v3577 = vsel %vm2256, %v3535, 0
      %v3580 = vsel %vm2256, %v3536, 0
      %3582 = vmatprep.subr.bf16.mxu0 0
      %3583 = vmatpush1.bf16.msra.mxu0 %v3562
      %3584 = vmatprep.subr.bf16.mxu0 0
      %3585 = vmatpush1.bf16.msra.mxu0 %v3563
      %3586 = vmatprep.subr.bf16.mxu0 0
      %3587 = vmatpush1.bf16.msra.mxu0 %v3564
      %3588 = vmatprep.subr.bf16.mxu0 0
      %3589 = vmatpush1.bf16.msra.mxu0 %v3565
      %3590 = vmatprep.subr.bf16.mxu0 0
      %3591 = vmatpush1.bf16.msra.mxu0 0
      %3592 = vmatprep.subr.bf16.mxu0 0
      %3593 = vmatpush1.bf16.msra.mxu0 0
      %3594 = vmatprep.subr.bf16.mxu0 0
      %3595 = vmatpush1.bf16.msra.mxu0 0
      %3596 = vmatprep.subr.bf16.mxu0 0
      %3597 = vmatpush1.bf16.msra.mxu0 0
      %3598 = vmatprep.subr.bf16.mxu0 0
      %3599 = vmatpush1.bf16.msra.mxu0 0
      %3600 = vmatprep.subr.bf16.mxu0 0
      %3601 = vmatpush1.bf16.msra.mxu0 0
      %3602 = vmatprep.subr.bf16.mxu0 0
      %3603 = vmatpush1.bf16.msra.mxu0 0
      %3604 = vmatprep.subr.bf16.mxu0 0
      %3605 = vmatpush1.bf16.msra.mxu0 0
      %3606 = vmatprep.subr.bf16.mxu0 0
      %3607 = vmatpush1.bf16.msra.mxu0 0
      %3608 = vmatprep.subr.bf16.mxu0 0
      %3609 = vmatpush1.bf16.msra.mxu0 0
      %3610 = vmatprep.subr.bf16.mxu0 0
      %3611 = vmatpush1.bf16.msra.mxu0 0
      %3612 = vmatprep.subr.bf16.mxu0 0
      %3613 = vmatpush1.bf16.msra.mxu0 0
      %3614 = vmatprep.mubr.bf16.mxu0 0
      %3615 = vmatmul.mubr.bf16.gmra.mrb[0].mxu0 %v3571
      %v3616 = vpop.f32.mrb[0].mxu0
      %v3617 = vadd.f32 0.0, %v3616
      %v3618 = vpop.f32.mrb[0].mxu0
      %v3619 = vpop.f32.mrb[0].mxu0
      %v3620 = vadd.f32 0.0, %v3619
      %v3621 = vpop.f32.mrb[0].mxu0
      %3622 = vmatprep.mubr.bf16.mxu0 0
      %3623 = vmatmul.mubr.bf16.gmra.mrb[0].mxu0 %v3574
      %v3624 = vpop.f32.mrb[0].mxu0
      %v3625 = vadd.f32 0.0, %v3624
      %v3626 = vpop.f32.mrb[0].mxu0
      %v3627 = vpop.f32.mrb[0].mxu0
      %v3628 = vadd.f32 0.0, %v3627
      %v3629 = vpop.f32.mrb[0].mxu0
      %3630 = vmatprep.mubr.bf16.mxu0 0
      %3631 = vmatmul.mubr.bf16.gmra.mrb[0].mxu0 %v3577
      %v3632 = vpop.f32.mrb[0].mxu0
      %v3633 = vadd.f32 0.0, %v3632
      %v3634 = vpop.f32.mrb[0].mxu0
      %v3635 = vpop.f32.mrb[0].mxu0
      %v3636 = vadd.f32 0.0, %v3635
      %v3637 = vpop.f32.mrb[0].mxu0
      %3638 = vmatprep.mubr.bf16.mxu0 0
      %3639 = vmatmul.mubr.bf16.gmra.mrb[0].mxu0 %v3580
      %v3640 = vpop.f32.mrb[0].mxu0
      %v3641 = vadd.f32 0.0, %v3640
      %v3642 = vpop.f32.mrb[0].mxu0
      %v3643 = vpop.f32.mrb[0].mxu0
      %v3644 = vadd.f32 0.0, %v3643
      %v3645 = vpop.f32.mrb[0].mxu0
      %3646 = vdwg.mxu0
      %v3647 = vadd.f32 %v3525, %v3617
      %v3648 = vadd.f32 %v3526, %v3620
      %v3649 = vadd.f32 %v3527, %v3625
      %v3650 = vadd.f32 %v3528, %v3628
      %v3651 = vadd.f32 %v3529, %v3633
      %v3652 = vadd.f32 %v3530, %v3636
      %v3653 = vadd.f32 %v3531, %v3641
      %v3654 = vadd.f32 %v3532, %v3644
      %v3655 = vpack.c.bf16 %v2084, %v2081
      %v3656 = vpack.c.bf16 %v2092, %v2089
      %v3657 = vpack.c.bf16 %v2100, %v2097
      %v3658 = vpack.c.bf16 %v2108, %v2105
      %s3659 = scalar_lea.vmem %s4, 384
      %v3660 = vld [vmem:[%s3659] sm:$0xf]
      %v3661 = vld [vmem:[%s3659 + $0x4] sm:$0xf]
      %v3662 = vld [vmem:[%s3659 + $0x8] sm:$0xf]
      %v3663 = vld [vmem:[%s3659 + $0xc] sm:$0xf]
      %v3664 = vld [vmem:[%s3659 + $0x10] sm:$0xf]
      %v3665 = vld [vmem:[%s3659 + $0x14] sm:$0xf]
      %v3666 = vld [vmem:[%s3659 + $0x18] sm:$0xf]
      %v3667 = vld [vmem:[%s3659 + $0x1c] sm:$0xf]
      %v3676 = vunpack.c.l.b16 %v3660
      %v3677 = vunpack.c.l.b16 %v3661
      %v3678 = vunpack.c.l.b16 %v3662
      %v3679 = vunpack.c.l.b16 %v3663
      %v3680 = vunpack.c.l.b16 %v3664
      %v3681 = vunpack.c.l.b16 %v3665
      %v3682 = vunpack.c.l.b16 %v3666
      %v3683 = vunpack.c.l.b16 %v3667
      %v3684 = vpack.c.b16 %v3677, %v3676
      %v3685 = vpack.c.b16 %v3679, %v3678
      %v3686 = vpack.c.b16 %v3681, %v3680
      %v3687 = vpack.c.b16 %v3683, %v3682
      %v3693 = vsel %vm2256, %v3655, 0
      %v3696 = vsel %vm2256, %v3656, 0
      %v3699 = vsel %vm2256, %v3657, 0
      %v3702 = vsel %vm2256, %v3658, 0
      %3704 = vmatprep.subr.bf16.mxu0 0
      %3705 = vmatpush1.bf16.msra.mxu0 %v3684
      %3706 = vmatprep.subr.bf16.mxu0 0
      %3707 = vmatpush1.bf16.msra.mxu0 %v3685
      %3708 = vmatprep.subr.bf16.mxu0 0
      %3709 = vmatpush1.bf16.msra.mxu0 %v3686
      %3710 = vmatprep.subr.bf16.mxu0 0
      %3711 = vmatpush1.bf16.msra.mxu0 %v3687
      %3712 = vmatprep.subr.bf16.mxu0 0
      %3713 = vmatpush1.bf16.msra.mxu0 0
      %3714 = vmatprep.subr.bf16.mxu0 0
      %3715 = vmatpush1.bf16.msra.mxu0 0
      %3716 = vmatprep.subr.bf16.mxu0 0
      %3717 = vmatpush1.bf16.msra.mxu0 0
      %3718 = vmatprep.subr.bf16.mxu0 0
      %3719 = vmatpush1.bf16.msra.mxu0 0
      %3720 = vmatprep.subr.bf16.mxu0 0
      %3721 = vmatpush1.bf16.msra.mxu0 0
      %3722 = vmatprep.subr.bf16.mxu0 0
      %3723 = vmatpush1.bf16.msra.mxu0 0
      %3724 = vmatprep.subr.bf16.mxu0 0
      %3725 = vmatpush1.bf16.msra.mxu0 0
      %3726 = vmatprep.subr.bf16.mxu0 0
      %3727 = vmatpush1.bf16.msra.mxu0 0
      %3728 = vmatprep.subr.bf16.mxu0 0
      %3729 = vmatpush1.bf16.msra.mxu0 0
      %3730 = vmatprep.subr.bf16.mxu0 0
      %3731 = vmatpush1.bf16.msra.mxu0 0
      %3732 = vmatprep.subr.bf16.mxu0 0
      %3733 = vmatpush1.bf16.msra.mxu0 0
      %3734 = vmatprep.subr.bf16.mxu0 0
      %3735 = vmatpush1.bf16.msra.mxu0 0
      %3736 = vmatprep.mubr.bf16.mxu0 0
      %3737 = vmatmul.mubr.bf16.gmra.mrb[0].mxu0 %v3693
      %v3738 = vpop.f32.mrb[0].mxu0
      %v3739 = vadd.f32 0.0, %v3738
      %v3740 = vpop.f32.mrb[0].mxu0
      %v3741 = vpop.f32.mrb[0].mxu0
      %v3742 = vadd.f32 0.0, %v3741
      %v3743 = vpop.f32.mrb[0].mxu0
      %3744 = vmatprep.mubr.bf16.mxu0 0
      %3745 = vmatmul.mubr.bf16.gmra.mrb[0].mxu0 %v3696
      %v3746 = vpop.f32.mrb[0].mxu0
      %v3747 = vadd.f32 0.0, %v3746
      %v3748 = vpop.f32.mrb[0].mxu0
      %v3749 = vpop.f32.mrb[0].mxu0
      %v3750 = vadd.f32 0.0, %v3749
      %v3751 = vpop.f32.mrb[0].mxu0
      %3752 = vmatprep.mubr.bf16.mxu0 0
      %3753 = vmatmul.mubr.bf16.gmra.mrb[0].mxu0 %v3699
      %v3754 = vpop.f32.mrb[0].mxu0
      %v3755 = vadd.f32 0.0, %v3754
      %v3756 = vpop.f32.mrb[0].mxu0
      %v3757 = vpop.f32.mrb[0].mxu0
      %v3758 = vadd.f32 0.0, %v3757
      %v3759 = vpop.f32.mrb[0].mxu0
      %3760 = vmatprep.mubr.bf16.mxu0 0
      %3761 = vmatmul.mubr.bf16.gmra.mrb[0].mxu0 %v3702
      %v3762 = vpop.f32.mrb[0].mxu0
      %v3763 = vadd.f32 0.0, %v3762
      %v3764 = vpop.f32.mrb[0].mxu0
      %v3765 = vpop.f32.mrb[0].mxu0
      %v3766 = vadd.f32 0.0, %v3765
      %v3767 = vpop.f32.mrb[0].mxu0
      %3768 = vdwg.mxu0
      %v3769 = vadd.f32 %v3647, %v3739
      %v3770 = vadd.f32 %v3648, %v3742
      %v3771 = vadd.f32 %v3649, %v3747
      %v3772 = vadd.f32 %v3650, %v3750
      %v3773 = vadd.f32 %v3651, %v3755
      %v3774 = vadd.f32 %v3652, %v3758
      %v3775 = vadd.f32 %v3653, %v3763
      %v3776 = vadd.f32 %v3654, %v3766
      %v3777 = vpack.c.bf16 %v2116, %v2113
      %v3778 = vpack.c.bf16 %v2124, %v2121
      %v3779 = vpack.c.bf16 %v2132, %v2129
      %v3780 = vpack.c.bf16 %v2140, %v2137
      %s3781 = scalar_lea.vmem %s4, 416
      %v3782 = vld [vmem:[%s3781] sm:$0xf]
      %v3783 = vld [vmem:[%s3781 + $0x4] sm:$0xf]
      %v3784 = vld [vmem:[%s3781 + $0x8] sm:$0xf]
      %v3785 = vld [vmem:[%s3781 + $0xc] sm:$0xf]
      %v3786 = vld [vmem:[%s3781 + $0x10] sm:$0xf]
      %v3787 = vld [vmem:[%s3781 + $0x14] sm:$0xf]
      %v3788 = vld [vmem:[%s3781 + $0x18] sm:$0xf]
      %v3789 = vld [vmem:[%s3781 + $0x1c] sm:$0xf]
      %v3798 = vunpack.c.l.b16 %v3782
      %v3799 = vunpack.c.l.b16 %v3783
      %v3800 = vunpack.c.l.b16 %v3784
      %v3801 = vunpack.c.l.b16 %v3785
      %v3802 = vunpack.c.l.b16 %v3786
      %v3803 = vunpack.c.l.b16 %v3787
      %v3804 = vunpack.c.l.b16 %v3788
      %v3805 = vunpack.c.l.b16 %v3789
      %v3806 = vpack.c.b16 %v3799, %v3798
      %v3807 = vpack.c.b16 %v3801, %v3800
      %v3808 = vpack.c.b16 %v3803, %v3802
      %v3809 = vpack.c.b16 %v3805, %v3804
      %v3815 = vsel %vm2256, %v3777, 0
      %v3818 = vsel %vm2256, %v3778, 0
      %v3821 = vsel %vm2256, %v3779, 0
      %v3824 = vsel %vm2256, %v3780, 0
      %3826 = vmatprep.subr.bf16.mxu0 0
      %3827 = vmatpush1.bf16.msra.mxu0 %v3806
      %3828 = vmatprep.subr.bf16.mxu0 0
      %3829 = vmatpush1.bf16.msra.mxu0 %v3807
      %3830 = vmatprep.subr.bf16.mxu0 0
      %3831 = vmatpush1.bf16.msra.mxu0 %v3808
      %3832 = vmatprep.subr.bf16.mxu0 0
      %3833 = vmatpush1.bf16.msra.mxu0 %v3809
      %3834 = vmatprep.subr.bf16.mxu0 0
      %3835 = vmatpush1.bf16.msra.mxu0 0
      %3836 = vmatprep.subr.bf16.mxu0 0
      %3837 = vmatpush1.bf16.msra.mxu0 0
      %3838 = vmatprep.subr.bf16.mxu0 0
      %3839 = vmatpush1.bf16.msra.mxu0 0
      %3840 = vmatprep.subr.bf16.mxu0 0
      %3841 = vmatpush1.bf16.msra.mxu0 0
      %3842 = vmatprep.subr.bf16.mxu0 0
      %3843 = vmatpush1.bf16.msra.mxu0 0
      %3844 = vmatprep.subr.bf16.mxu0 0
      %3845 = vmatpush1.bf16.msra.mxu0 0
      %3846 = vmatprep.subr.bf16.mxu0 0
      %3847 = vmatpush1.bf16.msra.mxu0 0
      %3848 = vmatprep.subr.bf16.mxu0 0
      %3849 = vmatpush1.bf16.msra.mxu0 0
      %3850 = vmatprep.subr.bf16.mxu0 0
      %3851 = vmatpush1.bf16.msra.mxu0 0
      %3852 = vmatprep.subr.bf16.mxu0 0
      %3853 = vmatpush1.bf16.msra.mxu0 0
      %3854 = vmatprep.subr.bf16.mxu0 0
      %3855 = vmatpush1.bf16.msra.mxu0 0
      %3856 = vmatprep.subr.bf16.mxu0 0
      %3857 = vmatpush1.bf16.msra.mxu0 0
      %3858 = vmatprep.mubr.bf16.mxu0 0
      %3859 = vmatmul.mubr.bf16.gmra.mrb[0].mxu0 %v3815
      %v3860 = vpop.f32.mrb[0].mxu0
      %v3861 = vadd.f32 0.0, %v3860
      %v3862 = vpop.f32.mrb[0].mxu0
      %v3863 = vpop.f32.mrb[0].mxu0
      %v3864 = vadd.f32 0.0, %v3863
      %v3865 = vpop.f32.mrb[0].mxu0
      %3866 = vmatprep.mubr.bf16.mxu0 0
      %3867 = vmatmul.mubr.bf16.gmra.mrb[0].mxu0 %v3818
      %v3868 = vpop.f32.mrb[0].mxu0
      %v3869 = vadd.f32 0.0, %v3868
      %v3870 = vpop.f32.mrb[0].mxu0
      %v3871 = vpop.f32.mrb[0].mxu0
      %v3872 = vadd.f32 0.0, %v3871
      %v3873 = vpop.f32.mrb[0].mxu0
      %3874 = vmatprep.mubr.bf16.mxu0 0
      %3875 = vmatmul.mubr.bf16.gmra.mrb[0].mxu0 %v3821
      %v3876 = vpop.f32.mrb[0].mxu0
      %v3877 = vadd.f32 0.0, %v3876
      %v3878 = vpop.f32.mrb[0].mxu0
      %v3879 = vpop.f32.mrb[0].mxu0
      %v3880 = vadd.f32 0.0, %v3879
      %v3881 = vpop.f32.mrb[0].mxu0
      %3882 = vmatprep.mubr.bf16.mxu0 0
      %3883 = vmatmul.mubr.bf16.gmra.mrb[0].mxu0 %v3824
      %v3884 = vpop.f32.mrb[0].mxu0
      %v3885 = vadd.f32 0.0, %v3884
      %v3886 = vpop.f32.mrb[0].mxu0
      %v3887 = vpop.f32.mrb[0].mxu0
      %v3888 = vadd.f32 0.0, %v3887
      %v3889 = vpop.f32.mrb[0].mxu0
      %3890 = vdwg.mxu0
      %v3891 = vadd.f32 %v3769, %v3861
      %v3892 = vadd.f32 %v3770, %v3864
      %v3893 = vadd.f32 %v3771, %v3869
      %v3894 = vadd.f32 %v3772, %v3872
      %v3895 = vadd.f32 %v3773, %v3877
      %v3896 = vadd.f32 %v3774, %v3880
      %v3897 = vadd.f32 %v3775, %v3885
      %v3898 = vadd.f32 %v3776, %v3888
      %v3899 = vpack.c.bf16 %v2148, %v2145
      %v3900 = vpack.c.bf16 %v2156, %v2153
      %v3901 = vpack.c.bf16 %v2164, %v2161
      %v3902 = vpack.c.bf16 %v2172, %v2169
      %s3903 = scalar_lea.vmem %s4, 448
      %v3904 = vld [vmem:[%s3903] sm:$0xf]
      %v3905 = vld [vmem:[%s3903 + $0x4] sm:$0xf]
      %v3906 = vld [vmem:[%s3903 + $0x8] sm:$0xf]
      %v3907 = vld [vmem:[%s3903 + $0xc] sm:$0xf]
      %v3908 = vld [vmem:[%s3903 + $0x10] sm:$0xf]
      %v3909 = vld [vmem:[%s3903 + $0x14] sm:$0xf]
      %v3910 = vld [vmem:[%s3903 + $0x18] sm:$0xf]
      %v3911 = vld [vmem:[%s3903 + $0x1c] sm:$0xf]
      %v3920 = vunpack.c.l.b16 %v3904
      %v3921 = vunpack.c.l.b16 %v3905
      %v3922 = vunpack.c.l.b16 %v3906
      %v3923 = vunpack.c.l.b16 %v3907
      %v3924 = vunpack.c.l.b16 %v3908
      %v3925 = vunpack.c.l.b16 %v3909
      %v3926 = vunpack.c.l.b16 %v3910
      %v3927 = vunpack.c.l.b16 %v3911
      %v3928 = vpack.c.b16 %v3921, %v3920
      %v3929 = vpack.c.b16 %v3923, %v3922
      %v3930 = vpack.c.b16 %v3925, %v3924
      %v3931 = vpack.c.b16 %v3927, %v3926
      %v3937 = vsel %vm2256, %v3899, 0
      %v3940 = vsel %vm2256, %v3900, 0
      %v3943 = vsel %vm2256, %v3901, 0
      %v3946 = vsel %vm2256, %v3902, 0
      %3948 = vmatprep.subr.bf16.mxu0 0
      %3949 = vmatpush1.bf16.msra.mxu0 %v3928
      %3950 = vmatprep.subr.bf16.mxu0 0
      %3951 = vmatpush1.bf16.msra.mxu0 %v3929
      %3952 = vmatprep.subr.bf16.mxu0 0
      %3953 = vmatpush1.bf16.msra.mxu0 %v3930
      %3954 = vmatprep.subr.bf16.mxu0 0
      %3955 = vmatpush1.bf16.msra.mxu0 %v3931
      %3956 = vmatprep.subr.bf16.mxu0 0
      %3957 = vmatpush1.bf16.msra.mxu0 0
      %3958 = vmatprep.subr.bf16.mxu0 0
      %3959 = vmatpush1.bf16.msra.mxu0 0
      %3960 = vmatprep.subr.bf16.mxu0 0
      %3961 = vmatpush1.bf16.msra.mxu0 0
      %3962 = vmatprep.subr.bf16.mxu0 0
      %3963 = vmatpush1.bf16.msra.mxu0 0
      %3964 = vmatprep.subr.bf16.mxu0 0
      %3965 = vmatpush1.bf16.msra.mxu0 0
      %3966 = vmatprep.subr.bf16.mxu0 0
      %3967 = vmatpush1.bf16.msra.mxu0 0
      %3968 = vmatprep.subr.bf16.mxu0 0
      %3969 = vmatpush1.bf16.msra.mxu0 0
      %3970 = vmatprep.subr.bf16.mxu0 0
      %3971 = vmatpush1.bf16.msra.mxu0 0
      %3972 = vmatprep.subr.bf16.mxu0 0
      %3973 = vmatpush1.bf16.msra.mxu0 0
      %3974 = vmatprep.subr.bf16.mxu0 0
      %3975 = vmatpush1.bf16.msra.mxu0 0
      %3976 = vmatprep.subr.bf16.mxu0 0
      %3977 = vmatpush1.bf16.msra.mxu0 0
      %3978 = vmatprep.subr.bf16.mxu0 0
      %3979 = vmatpush1.bf16.msra.mxu0 0
      %3980 = vmatprep.mubr.bf16.mxu0 0
      %3981 = vmatmul.mubr.bf16.gmra.mrb[0].mxu0 %v3937
      %v3982 = vpop.f32.mrb[0].mxu0
      %v3983 = vadd.f32 0.0, %v3982
      %v3984 = vpop.f32.mrb[0].mxu0
      %v3985 = vpop.f32.mrb[0].mxu0
      %v3986 = vadd.f32 0.0, %v3985
      %v3987 = vpop.f32.mrb[0].mxu0
      %3988 = vmatprep.mubr.bf16.mxu0 0
      %3989 = vmatmul.mubr.bf16.gmra.mrb[0].mxu0 %v3940
      %v3990 = vpop.f32.mrb[0].mxu0
      %v3991 = vadd.f32 0.0, %v3990
      %v3992 = vpop.f32.mrb[0].mxu0
      %v3993 = vpop.f32.mrb[0].mxu0
      %v3994 = vadd.f32 0.0, %v3993
      %v3995 = vpop.f32.mrb[0].mxu0
      %3996 = vmatprep.mubr.bf16.mxu0 0
      %3997 = vmatmul.mubr.bf16.gmra.mrb[0].mxu0 %v3943
      %v3998 = vpop.f32.mrb[0].mxu0
      %v3999 = vadd.f32 0.0, %v3998
      %v4000 = vpop.f32.mrb[0].mxu0
      %v4001 = vpop.f32.mrb[0].mxu0
      %v4002 = vadd.f32 0.0, %v4001
      %v4003 = vpop.f32.mrb[0].mxu0
      %4004 = vmatprep.mubr.bf16.mxu0 0
      %4005 = vmatmul.mubr.bf16.gmra.mrb[0].mxu0 %v3946
      %v4006 = vpop.f32.mrb[0].mxu0
      %v4007 = vadd.f32 0.0, %v4006
      %v4008 = vpop.f32.mrb[0].mxu0
      %v4009 = vpop.f32.mrb[0].mxu0
      %v4010 = vadd.f32 0.0, %v4009
      %v4011 = vpop.f32.mrb[0].mxu0
      %4012 = vdwg.mxu0
      %v4013 = vadd.f32 %v3891, %v3983
      %v4014 = vadd.f32 %v3892, %v3986
      %v4015 = vadd.f32 %v3893, %v3991
      %v4016 = vadd.f32 %v3894, %v3994
      %v4017 = vadd.f32 %v3895, %v3999
      %v4018 = vadd.f32 %v3896, %v4002
      %v4019 = vadd.f32 %v3897, %v4007
      %v4020 = vadd.f32 %v3898, %v4010
      %v4021 = vpack.c.bf16 %v2180, %v2177
      %v4022 = vpack.c.bf16 %v2188, %v2185
      %v4023 = vpack.c.bf16 %v2196, %v2193
      %v4024 = vpack.c.bf16 %v2204, %v2201
      %s4025 = scalar_lea.vmem %s4, 480
      %v4026 = vld [vmem:[%s4025] sm:$0xf]
      %v4027 = vld [vmem:[%s4025 + $0x4] sm:$0xf]
      %v4028 = vld [vmem:[%s4025 + $0x8] sm:$0xf]
      %v4029 = vld [vmem:[%s4025 + $0xc] sm:$0xf]
      %v4030 = vld [vmem:[%s4025 + $0x10] sm:$0xf]
      %v4031 = vld [vmem:[%s4025 + $0x14] sm:$0xf]
      %v4032 = vld [vmem:[%s4025 + $0x18] sm:$0xf]
      %v4033 = vld [vmem:[%s4025 + $0x1c] sm:$0xf]
      %v4042 = vunpack.c.l.b16 %v4026
      %v4043 = vunpack.c.l.b16 %v4027
      %v4044 = vunpack.c.l.b16 %v4028
      %v4045 = vunpack.c.l.b16 %v4029
      %v4046 = vunpack.c.l.b16 %v4030
      %v4047 = vunpack.c.l.b16 %v4031
      %v4048 = vunpack.c.l.b16 %v4032
      %v4049 = vunpack.c.l.b16 %v4033
      %v4050 = vpack.c.b16 %v4043, %v4042
      %v4051 = vpack.c.b16 %v4045, %v4044
      %v4052 = vpack.c.b16 %v4047, %v4046
      %v4053 = vpack.c.b16 %v4049, %v4048
      %v4059 = vsel %vm2256, %v4021, 0
      %v4062 = vsel %vm2256, %v4022, 0
      %v4065 = vsel %vm2256, %v4023, 0
      %v4068 = vsel %vm2256, %v4024, 0
      %4070 = vmatprep.subr.bf16.mxu0 0
      %4071 = vmatpush1.bf16.msra.mxu0 %v4050
      %4072 = vmatprep.subr.bf16.mxu0 0
      %4073 = vmatpush1.bf16.msra.mxu0 %v4051
      %4074 = vmatprep.subr.bf16.mxu0 0
      %4075 = vmatpush1.bf16.msra.mxu0 %v4052
      %4076 = vmatprep.subr.bf16.mxu0 0
      %4077 = vmatpush1.bf16.msra.mxu0 %v4053
      %4078 = vmatprep.subr.bf16.mxu0 0
      %4079 = vmatpush1.bf16.msra.mxu0 0
      %4080 = vmatprep.subr.bf16.mxu0 0
      %4081 = vmatpush1.bf16.msra.mxu0 0
      %4082 = vmatprep.subr.bf16.mxu0 0
      %4083 = vmatpush1.bf16.msra.mxu0 0
      %4084 = vmatprep.subr.bf16.mxu0 0
      %4085 = vmatpush1.bf16.msra.mxu0 0
      %4086 = vmatprep.subr.bf16.mxu0 0
      %4087 = vmatpush1.bf16.msra.mxu0 0
      %4088 = vmatprep.subr.bf16.mxu0 0
      %4089 = vmatpush1.bf16.msra.mxu0 0
      %4090 = vmatprep.subr.bf16.mxu0 0
      %4091 = vmatpush1.bf16.msra.mxu0 0
      %4092 = vmatprep.subr.bf16.mxu0 0
      %4093 = vmatpush1.bf16.msra.mxu0 0
      %4094 = vmatprep.subr.bf16.mxu0 0
      %4095 = vmatpush1.bf16.msra.mxu0 0
      %4096 = vmatprep.subr.bf16.mxu0 0
      %4097 = vmatpush1.bf16.msra.mxu0 0
      %4098 = vmatprep.subr.bf16.mxu0 0
      %4099 = vmatpush1.bf16.msra.mxu0 0
      %4100 = vmatprep.subr.bf16.mxu0 0
      %4101 = vmatpush1.bf16.msra.mxu0 0
      %4102 = vmatprep.mubr.bf16.mxu0 0
      %4103 = vmatmul.mubr.bf16.gmra.mrb[0].mxu0 %v4059
      %v4104 = vpop.f32.mrb[0].mxu0
      %v4105 = vadd.f32 0.0, %v4104
      %v4106 = vpop.f32.mrb[0].mxu0
      %v4107 = vpop.f32.mrb[0].mxu0
      %v4108 = vadd.f32 0.0, %v4107
      %v4109 = vpop.f32.mrb[0].mxu0
      %4110 = vmatprep.mubr.bf16.mxu0 0
      %4111 = vmatmul.mubr.bf16.gmra.mrb[0].mxu0 %v4062
      %v4112 = vpop.f32.mrb[0].mxu0
      %v4113 = vadd.f32 0.0, %v4112
      %v4114 = vpop.f32.mrb[0].mxu0
      %v4115 = vpop.f32.mrb[0].mxu0
      %v4116 = vadd.f32 0.0, %v4115
      %v4117 = vpop.f32.mrb[0].mxu0
      %4118 = vmatprep.mubr.bf16.mxu0 0
      %4119 = vmatmul.mubr.bf16.gmra.mrb[0].mxu0 %v4065
      %v4120 = vpop.f32.mrb[0].mxu0
      %v4121 = vadd.f32 0.0, %v4120
      %v4122 = vpop.f32.mrb[0].mxu0
      %v4123 = vpop.f32.mrb[0].mxu0
      %v4124 = vadd.f32 0.0, %v4123
      %v4125 = vpop.f32.mrb[0].mxu0
      %4126 = vmatprep.mubr.bf16.mxu0 0
      %4127 = vmatmul.mubr.bf16.gmra.mrb[0].mxu0 %v4068
      %v4128 = vpop.f32.mrb[0].mxu0
      %v4129 = vadd.f32 0.0, %v4128
      %v4130 = vpop.f32.mrb[0].mxu0
      %v4131 = vpop.f32.mrb[0].mxu0
      %v4132 = vadd.f32 0.0, %v4131
      %v4133 = vpop.f32.mrb[0].mxu0
      %4134 = vdwg.mxu0
      %v4135 = vadd.f32 %v4013, %v4105
      %v4136 = vadd.f32 %v4014, %v4108
      %v4137 = vadd.f32 %v4015, %v4113
      %v4138 = vadd.f32 %v4016, %v4116
      %v4139 = vadd.f32 %v4017, %v4121
      %v4140 = vadd.f32 %v4018, %v4124
      %v4141 = vadd.f32 %v4019, %v4129
      %v4142 = vadd.f32 %v4020, %v4132
      %v4143 = vld [vmem:[%s5] sm:$0x1]
      %v4145 = vlaneseq
      %v4146 = vshrl.u32 %v4145, 7
      %v4147 = vsub.s32 0, %v4146
      %v4148 = vrot.slane %v4143, %v4147
      %v4150 = vadd.f32 %v4135, %v4148
      %v4151 = vadd.f32 %v4136, %v4148
      %v4152 = vadd.f32 %v4137, %v4148
      %v4153 = vadd.f32 %v4138, %v4148
      %v4154 = vadd.f32 %v4139, %v4148
      %v4155 = vadd.f32 %v4140, %v4148
      %v4156 = vadd.f32 %v4141, %v4148
      %v4157 = vadd.f32 %v4142, %v4148
      %v4158 = vadd.f32 %v4150, %v4151
      %v4159 = vadd.f32 %v4158, %v4152
      %v4160 = vadd.f32 %v4159, %v4153
      %v4161 = vadd.f32 %v4160, %v4154
      %v4162 = vadd.f32 %v4161, %v4155
      %v4163 = vadd.f32 %v4162, %v4156
      %v4164 = vadd.f32 %v4163, %v4157
      %v4165 = vrot.slane %v4164, 4
      %v4166 = vadd.f32 %v4164, %v4165
      %v4167 = vrot.slane %v4166, 2
      %v4168 = vadd.f32 %v4166, %v4167
      %v4169 = vrot.slane %v4168, 1
      %v4170 = vadd.f32 %v4168, %v4169
      %v4171 = vrcp.pop 64.0
      %v4172 = vmul.f32 %v4170, %v4171
      %v4173 = vsub.f32 %v4150, %v4172
      %v4174 = vsub.f32 %v4151, %v4172
      %v4175 = vsub.f32 %v4152, %v4172
      %v4176 = vsub.f32 %v4153, %v4172
      %v4177 = vsub.f32 %v4154, %v4172
      %v4178 = vsub.f32 %v4155, %v4172
      %v4179 = vsub.f32 %v4156, %v4172
      %v4180 = vsub.f32 %v4157, %v4172
      %v4181 = vmul.f32 %v4173, %v4173
      %v4182 = vmul.f32 %v4174, %v4174
      %v4183 = vmul.f32 %v4175, %v4175
      %v4184 = vmul.f32 %v4176, %v4176
      %v4185 = vmul.f32 %v4177, %v4177
      %v4186 = vmul.f32 %v4178, %v4178
      %v4187 = vmul.f32 %v4179, %v4179
      %v4188 = vmul.f32 %v4180, %v4180
      %v4189 = vadd.f32 %v4181, %v4182
      %v4190 = vadd.f32 %v4189, %v4183
      %v4191 = vadd.f32 %v4190, %v4184
      %v4192 = vadd.f32 %v4191, %v4185
      %v4193 = vadd.f32 %v4192, %v4186
      %v4194 = vadd.f32 %v4193, %v4187
      %v4195 = vadd.f32 %v4194, %v4188
      %v4196 = vrot.slane %v4195, 4
      %v4197 = vadd.f32 %v4195, %v4196
      %v4198 = vrot.slane %v4197, 2
      %v4199 = vadd.f32 %v4197, %v4198
      %v4200 = vrot.slane %v4199, 1
      %v4201 = vadd.f32 %v4199, %v4200
      %v4202 = vmul.f32 %v4201, %v4171
      %v4203 = vadd.f32 %v4202, 1e-05
      %v4204 = vrsqrt.pop %v4203
      %v4205 = vmul.f32 %v4173, %v4204
      %v4206 = vmul.f32 %v4174, %v4204
      %v4207 = vmul.f32 %v4175, %v4204
      %v4208 = vmul.f32 %v4176, %v4204
      %v4209 = vmul.f32 %v4177, %v4204
      %v4210 = vmul.f32 %v4178, %v4204
      %v4211 = vmul.f32 %v4179, %v4204
      %v4212 = vmul.f32 %v4180, %v4204
      %vm4213 = vcmp.ge.f32.partialorder %v4205, 0.0
      %vm4214 = vcmp.ge.f32.partialorder %v4206, 0.0
      %vm4215 = vcmp.ge.f32.partialorder %v4207, 0.0
      %vm4216 = vcmp.ge.f32.partialorder %v4208, 0.0
      %vm4217 = vcmp.ge.f32.partialorder %v4209, 0.0
      %vm4218 = vcmp.ge.f32.partialorder %v4210, 0.0
      %vm4219 = vcmp.ge.f32.partialorder %v4211, 0.0
      %vm4220 = vcmp.ge.f32.partialorder %v4212, 0.0
      %v4221 = vmul.f32 %v4205, 0.2
      %v4222 = vmul.f32 %v4206, 0.2
      %v4223 = vmul.f32 %v4207, 0.2
      %v4224 = vmul.f32 %v4208, 0.2
      %v4225 = vmul.f32 %v4209, 0.2
      %v4226 = vmul.f32 %v4210, 0.2
      %v4227 = vmul.f32 %v4211, 0.2
      %v4228 = vmul.f32 %v4212, 0.2
      %v4229 = vsel %vm4213, %v4205, %v4221
      %v4230 = vsel %vm4214, %v4206, %v4222
      %v4231 = vsel %vm4215, %v4207, %v4223
      %v4232 = vsel %vm4216, %v4208, %v4224
      %v4233 = vsel %vm4217, %v4209, %v4225
      %v4234 = vsel %vm4218, %v4210, %v4226
      %v4235 = vsel %vm4219, %v4211, %v4227
      %v4236 = vsel %vm4220, %v4212, %v4228
      %v4237 = vpack.c.bf16 %v4230, %v4229
      %v4238 = vpack.c.bf16 %v4232, %v4231
      %v4239 = vpack.c.bf16 %v4234, %v4233
      %v4240 = vpack.c.bf16 %v4236, %v4235
      %v4241 = vld [vmem:[%s6] sm:$0xf]
      %v4242 = vld [vmem:[%s6 + $0x4] sm:$0xf]
      %v4243 = vld [vmem:[%s6 + $0x8] sm:$0xf]
      %v4244 = vld [vmem:[%s6 + $0xc] sm:$0xf]
      %v4245 = vld [vmem:[%s6 + $0x10] sm:$0xf]
      %v4246 = vld [vmem:[%s6 + $0x14] sm:$0xf]
      %v4247 = vld [vmem:[%s6 + $0x18] sm:$0xf]
      %v4248 = vld [vmem:[%s6 + $0x1c] sm:$0xf]
      %v4249 = vld [vmem:[%s6 + $0x20] sm:$0xf]
      %v4250 = vld [vmem:[%s6 + $0x24] sm:$0xf]
      %v4251 = vld [vmem:[%s6 + $0x28] sm:$0xf]
      %v4252 = vld [vmem:[%s6 + $0x2c] sm:$0xf]
      %v4253 = vld [vmem:[%s6 + $0x30] sm:$0xf]
      %v4254 = vld [vmem:[%s6 + $0x34] sm:$0xf]
      %v4255 = vld [vmem:[%s6 + $0x38] sm:$0xf]
      %v4256 = vld [vmem:[%s6 + $0x3c] sm:$0xf]
      %v4257 = vld [vmem:[%s6 + $0x40] sm:$0xf]
      %v4258 = vld [vmem:[%s6 + $0x44] sm:$0xf]
      %v4259 = vld [vmem:[%s6 + $0x48] sm:$0xf]
      %v4260 = vld [vmem:[%s6 + $0x4c] sm:$0xf]
      %v4261 = vld [vmem:[%s6 + $0x50] sm:$0xf]
      %v4262 = vld [vmem:[%s6 + $0x54] sm:$0xf]
      %v4263 = vld [vmem:[%s6 + $0x58] sm:$0xf]
      %v4264 = vld [vmem:[%s6 + $0x5c] sm:$0xf]
      %v4265 = vld [vmem:[%s6 + $0x60] sm:$0xf]
      %v4266 = vld [vmem:[%s6 + $0x64] sm:$0xf]
      %v4267 = vld [vmem:[%s6 + $0x68] sm:$0xf]
      %v4268 = vld [vmem:[%s6 + $0x6c] sm:$0xf]
      %v4269 = vld [vmem:[%s6 + $0x70] sm:$0xf]
      %v4270 = vld [vmem:[%s6 + $0x74] sm:$0xf]
      %v4271 = vld [vmem:[%s6 + $0x78] sm:$0xf]
      %v4272 = vld [vmem:[%s6 + $0x7c] sm:$0xf]
      %v4305 = vunpack.c.l.b16 %v4241
      %v4306 = vunpack.c.l.b16 %v4242
      %v4307 = vunpack.c.l.b16 %v4243
      %v4308 = vunpack.c.l.b16 %v4244
      %v4309 = vunpack.c.l.b16 %v4245
      %v4310 = vunpack.c.l.b16 %v4246
      %v4311 = vunpack.c.l.b16 %v4247
      %v4312 = vunpack.c.l.b16 %v4248
      %v4313 = vunpack.c.l.b16 %v4249
      %v4314 = vunpack.c.l.b16 %v4250
      %v4315 = vunpack.c.l.b16 %v4251
      %v4316 = vunpack.c.l.b16 %v4252
      %v4317 = vunpack.c.l.b16 %v4253
      %v4318 = vunpack.c.l.b16 %v4254
      %v4319 = vunpack.c.l.b16 %v4255
      %v4320 = vunpack.c.l.b16 %v4256
      %v4321 = vunpack.c.l.b16 %v4257
      %v4322 = vunpack.c.l.b16 %v4258
      %v4323 = vunpack.c.l.b16 %v4259
      %v4324 = vunpack.c.l.b16 %v4260
      %v4325 = vunpack.c.l.b16 %v4261
      %v4326 = vunpack.c.l.b16 %v4262
      %v4327 = vunpack.c.l.b16 %v4263
      %v4328 = vunpack.c.l.b16 %v4264
      %v4329 = vunpack.c.l.b16 %v4265
      %v4330 = vunpack.c.l.b16 %v4266
      %v4331 = vunpack.c.l.b16 %v4267
      %v4332 = vunpack.c.l.b16 %v4268
      %v4333 = vunpack.c.l.b16 %v4269
      %v4334 = vunpack.c.l.b16 %v4270
      %v4335 = vunpack.c.l.b16 %v4271
      %v4336 = vunpack.c.l.b16 %v4272
      %v4337 = vpack.c.b16 %v4306, %v4305
      %v4338 = vpack.c.b16 %v4308, %v4307
      %v4339 = vpack.c.b16 %v4310, %v4309
      %v4340 = vpack.c.b16 %v4312, %v4311
      %v4341 = vpack.c.b16 %v4314, %v4313
      %v4342 = vpack.c.b16 %v4316, %v4315
      %v4343 = vpack.c.b16 %v4318, %v4317
      %v4344 = vpack.c.b16 %v4320, %v4319
      %v4345 = vpack.c.b16 %v4322, %v4321
      %v4346 = vpack.c.b16 %v4324, %v4323
      %v4347 = vpack.c.b16 %v4326, %v4325
      %v4348 = vpack.c.b16 %v4328, %v4327
      %v4349 = vpack.c.b16 %v4330, %v4329
      %v4350 = vpack.c.b16 %v4332, %v4331
      %v4351 = vpack.c.b16 %v4334, %v4333
      %v4352 = vpack.c.b16 %v4336, %v4335
      %v4354 = vsel %vm2256, %v4337, 0
      %v4357 = vsel %vm2256, %v4338, 0
      %v4360 = vsel %vm2256, %v4339, 0
      %v4363 = vsel %vm2256, %v4340, 0
      %v4366 = vsel %vm2256, %v4341, 0
      %v4369 = vsel %vm2256, %v4342, 0
      %v4372 = vsel %vm2256, %v4343, 0
      %v4375 = vsel %vm2256, %v4344, 0
      %v4378 = vsel %vm2256, %v4345, 0
      %v4381 = vsel %vm2256, %v4346, 0
      %v4384 = vsel %vm2256, %v4347, 0
      %v4387 = vsel %vm2256, %v4348, 0
      %v4390 = vsel %vm2256, %v4349, 0
      %v4393 = vsel %vm2256, %v4350, 0
      %v4396 = vsel %vm2256, %v4351, 0
      %v4399 = vsel %vm2256, %v4352, 0
      %4401 = vmatprep.subr.bf16.mxu0 0
      %4402 = vmatpush1.bf16.msra.mxu0 %v4237
      %4403 = vmatprep.subr.bf16.mxu0 0
      %4404 = vmatpush1.bf16.msra.mxu0 %v4238
      %4405 = vmatprep.subr.bf16.mxu0 0
      %4406 = vmatpush1.bf16.msra.mxu0 %v4239
      %4407 = vmatprep.subr.bf16.mxu0 0
      %4408 = vmatpush1.bf16.msra.mxu0 %v4240
      %4409 = vmatprep.subr.bf16.mxu0 0
      %4410 = vmatpush1.bf16.msra.mxu0 0
      %4411 = vmatprep.subr.bf16.mxu0 0
      %4412 = vmatpush1.bf16.msra.mxu0 0
      %4413 = vmatprep.subr.bf16.mxu0 0
      %4414 = vmatpush1.bf16.msra.mxu0 0
      %4415 = vmatprep.subr.bf16.mxu0 0
      %4416 = vmatpush1.bf16.msra.mxu0 0
      %4417 = vmatprep.subr.bf16.mxu0 0
      %4418 = vmatpush1.bf16.msra.mxu0 0
      %4419 = vmatprep.subr.bf16.mxu0 0
      %4420 = vmatpush1.bf16.msra.mxu0 0
      %4421 = vmatprep.subr.bf16.mxu0 0
      %4422 = vmatpush1.bf16.msra.mxu0 0
      %4423 = vmatprep.subr.bf16.mxu0 0
      %4424 = vmatpush1.bf16.msra.mxu0 0
      %4425 = vmatprep.subr.bf16.mxu0 0
      %4426 = vmatpush1.bf16.msra.mxu0 0
      %4427 = vmatprep.subr.bf16.mxu0 0
      %4428 = vmatpush1.bf16.msra.mxu0 0
      %4429 = vmatprep.subr.bf16.mxu0 0
      %4430 = vmatpush1.bf16.msra.mxu0 0
      %4431 = vmatprep.subr.bf16.mxu0 0
      %4432 = vmatpush1.bf16.msra.mxu0 0
      %4433 = vmatprep.mubr.bf16.mxu0 0
      %4434 = vmatmul.mubr.bf16.gmra.mrb[0].mxu0 %v4354
      %v4435 = vpop.f32.mrb[0].mxu0
      %v4436 = vadd.f32 0.0, %v4435
      %v4437 = vpop.f32.mrb[0].mxu0
      %v4438 = vpop.f32.mrb[0].mxu0
      %v4439 = vadd.f32 0.0, %v4438
      %v4440 = vpop.f32.mrb[0].mxu0
      %4441 = vmatprep.mubr.bf16.mxu0 0
      %4442 = vmatmul.mubr.bf16.gmra.mrb[0].mxu0 %v4357
      %v4443 = vpop.f32.mrb[0].mxu0
      %v4444 = vadd.f32 0.0, %v4443
      %v4445 = vpop.f32.mrb[0].mxu0
      %v4446 = vpop.f32.mrb[0].mxu0
      %v4447 = vadd.f32 0.0, %v4446
      %v4448 = vpop.f32.mrb[0].mxu0
      %4449 = vmatprep.mubr.bf16.mxu0 0
      %4450 = vmatmul.mubr.bf16.gmra.mrb[0].mxu0 %v4360
      %v4451 = vpop.f32.mrb[0].mxu0
      %v4452 = vadd.f32 0.0, %v4451
      %v4453 = vpop.f32.mrb[0].mxu0
      %v4454 = vpop.f32.mrb[0].mxu0
      %v4455 = vadd.f32 0.0, %v4454
      %v4456 = vpop.f32.mrb[0].mxu0
      %4457 = vmatprep.mubr.bf16.mxu0 0
      %4458 = vmatmul.mubr.bf16.gmra.mrb[0].mxu0 %v4363
      %v4459 = vpop.f32.mrb[0].mxu0
      %v4460 = vadd.f32 0.0, %v4459
      %v4461 = vpop.f32.mrb[0].mxu0
      %v4462 = vpop.f32.mrb[0].mxu0
      %v4463 = vadd.f32 0.0, %v4462
      %v4464 = vpop.f32.mrb[0].mxu0
      %4465 = vmatprep.mubr.bf16.mxu0 0
      %4466 = vmatmul.mubr.bf16.gmra.mrb[0].mxu0 %v4366
      %v4467 = vpop.f32.mrb[0].mxu0
      %v4468 = vadd.f32 0.0, %v4467
      %v4469 = vpop.f32.mrb[0].mxu0
      %v4470 = vpop.f32.mrb[0].mxu0
      %v4471 = vadd.f32 0.0, %v4470
      %v4472 = vpop.f32.mrb[0].mxu0
      %4473 = vmatprep.mubr.bf16.mxu0 0
      %4474 = vmatmul.mubr.bf16.gmra.mrb[0].mxu0 %v4369
      %v4475 = vpop.f32.mrb[0].mxu0
      %v4476 = vadd.f32 0.0, %v4475
      %v4477 = vpop.f32.mrb[0].mxu0
      %v4478 = vpop.f32.mrb[0].mxu0
      %v4479 = vadd.f32 0.0, %v4478
      %v4480 = vpop.f32.mrb[0].mxu0
      %4481 = vmatprep.mubr.bf16.mxu0 0
      %4482 = vmatmul.mubr.bf16.gmra.mrb[0].mxu0 %v4372
      %v4483 = vpop.f32.mrb[0].mxu0
      %v4484 = vadd.f32 0.0, %v4483
      %v4485 = vpop.f32.mrb[0].mxu0
      %v4486 = vpop.f32.mrb[0].mxu0
      %v4487 = vadd.f32 0.0, %v4486
      %v4488 = vpop.f32.mrb[0].mxu0
      %4489 = vmatprep.mubr.bf16.mxu0 0
      %4490 = vmatmul.mubr.bf16.gmra.mrb[0].mxu0 %v4375
      %v4491 = vpop.f32.mrb[0].mxu0
      %v4492 = vadd.f32 0.0, %v4491
      %v4493 = vpop.f32.mrb[0].mxu0
      %v4494 = vpop.f32.mrb[0].mxu0
      %v4495 = vadd.f32 0.0, %v4494
      %v4496 = vpop.f32.mrb[0].mxu0
      %4497 = vmatprep.mubr.bf16.mxu0 0
      %4498 = vmatmul.mubr.bf16.gmra.mrb[0].mxu0 %v4378
      %v4499 = vpop.f32.mrb[0].mxu0
      %v4500 = vadd.f32 0.0, %v4499
      %v4501 = vpop.f32.mrb[0].mxu0
      %v4502 = vpop.f32.mrb[0].mxu0
      %v4503 = vadd.f32 0.0, %v4502
      %v4504 = vpop.f32.mrb[0].mxu0
      %4505 = vmatprep.mubr.bf16.mxu0 0
      %4506 = vmatmul.mubr.bf16.gmra.mrb[0].mxu0 %v4381
      %v4507 = vpop.f32.mrb[0].mxu0
      %v4508 = vadd.f32 0.0, %v4507
      %v4509 = vpop.f32.mrb[0].mxu0
      %v4510 = vpop.f32.mrb[0].mxu0
      %v4511 = vadd.f32 0.0, %v4510
      %v4512 = vpop.f32.mrb[0].mxu0
      %4513 = vmatprep.mubr.bf16.mxu0 0
      %4514 = vmatmul.mubr.bf16.gmra.mrb[0].mxu0 %v4384
      %v4515 = vpop.f32.mrb[0].mxu0
      %v4516 = vadd.f32 0.0, %v4515
      %v4517 = vpop.f32.mrb[0].mxu0
      %v4518 = vpop.f32.mrb[0].mxu0
      %v4519 = vadd.f32 0.0, %v4518
      %v4520 = vpop.f32.mrb[0].mxu0
      %4521 = vmatprep.mubr.bf16.mxu0 0
      %4522 = vmatmul.mubr.bf16.gmra.mrb[0].mxu0 %v4387
      %v4523 = vpop.f32.mrb[0].mxu0
      %v4524 = vadd.f32 0.0, %v4523
      %v4525 = vpop.f32.mrb[0].mxu0
      %v4526 = vpop.f32.mrb[0].mxu0
      %v4527 = vadd.f32 0.0, %v4526
      %v4528 = vpop.f32.mrb[0].mxu0
      %4529 = vmatprep.mubr.bf16.mxu0 0
      %4530 = vmatmul.mubr.bf16.gmra.mrb[0].mxu0 %v4390
      %v4531 = vpop.f32.mrb[0].mxu0
      %v4532 = vadd.f32 0.0, %v4531
      %v4533 = vpop.f32.mrb[0].mxu0
      %v4534 = vpop.f32.mrb[0].mxu0
      %v4535 = vadd.f32 0.0, %v4534
      %v4536 = vpop.f32.mrb[0].mxu0
      %4537 = vmatprep.mubr.bf16.mxu0 0
      %4538 = vmatmul.mubr.bf16.gmra.mrb[0].mxu0 %v4393
      %v4539 = vpop.f32.mrb[0].mxu0
      %v4540 = vadd.f32 0.0, %v4539
      %v4541 = vpop.f32.mrb[0].mxu0
      %v4542 = vpop.f32.mrb[0].mxu0
      %v4543 = vadd.f32 0.0, %v4542
      %v4544 = vpop.f32.mrb[0].mxu0
      %4545 = vmatprep.mubr.bf16.mxu0 0
      %4546 = vmatmul.mubr.bf16.gmra.mrb[0].mxu0 %v4396
      %v4547 = vpop.f32.mrb[0].mxu0
      %v4548 = vadd.f32 0.0, %v4547
      %v4549 = vpop.f32.mrb[0].mxu0
      %v4550 = vpop.f32.mrb[0].mxu0
      %v4551 = vadd.f32 0.0, %v4550
      %v4552 = vpop.f32.mrb[0].mxu0
      %4553 = vmatprep.mubr.bf16.mxu0 0
      %4554 = vmatmul.mubr.bf16.gmra.mrb[0].mxu0 %v4399
      %v4555 = vpop.f32.mrb[0].mxu0
      %v4556 = vadd.f32 0.0, %v4555
      %v4557 = vpop.f32.mrb[0].mxu0
      %v4558 = vpop.f32.mrb[0].mxu0
      %v4559 = vadd.f32 0.0, %v4558
      %v4560 = vpop.f32.mrb[0].mxu0
      %4561 = vdwg.mxu0
      %v4562 = vpack.c.bf16 %v4439, %v4436
      %v4563 = vld [vmem:[%s7] sm:$0xff]
      %v4564 = vld [vmem:[%s7 + $0x8] sm:$0xff]
      %v4565 = vld [vmem:[%s7 + $0x10] sm:$0xff]
      %v4566 = vld [vmem:[%s7 + $0x18] sm:$0xff]
      %v4567 = vld [vmem:[%s7 + $0x20] sm:$0xff]
      %v4568 = vld [vmem:[%s7 + $0x28] sm:$0xff]
      %v4569 = vld [vmem:[%s7 + $0x30] sm:$0xff]
      %v4570 = vld [vmem:[%s7 + $0x38] sm:$0xff]
      %v4571 = vld [vmem:[%s7 + $0x40] sm:$0xff]
      %v4572 = vld [vmem:[%s7 + $0x48] sm:$0xff]
      %v4573 = vld [vmem:[%s7 + $0x50] sm:$0xff]
      %v4574 = vld [vmem:[%s7 + $0x58] sm:$0xff]
      %v4575 = vld [vmem:[%s7 + $0x60] sm:$0xff]
      %v4576 = vld [vmem:[%s7 + $0x68] sm:$0xff]
      %v4577 = vld [vmem:[%s7 + $0x70] sm:$0xff]
      %v4578 = vld [vmem:[%s7 + $0x78] sm:$0xff]
      %v4579 = vpack.c.bf16 %v4447, %v4444
      %s4580 = scalar_lea.vmem %s7, 128
      %v4581 = vld [vmem:[%s4580] sm:$0xff]
      %v4582 = vld [vmem:[%s4580 + $0x8] sm:$0xff]
      %v4583 = vld [vmem:[%s4580 + $0x10] sm:$0xff]
      %v4584 = vld [vmem:[%s4580 + $0x18] sm:$0xff]
      %v4585 = vld [vmem:[%s4580 + $0x20] sm:$0xff]
      %v4586 = vld [vmem:[%s4580 + $0x28] sm:$0xff]
      %v4587 = vld [vmem:[%s4580 + $0x30] sm:$0xff]
      %v4588 = vld [vmem:[%s4580 + $0x38] sm:$0xff]
      %v4589 = vld [vmem:[%s4580 + $0x40] sm:$0xff]
      %v4590 = vld [vmem:[%s4580 + $0x48] sm:$0xff]
      %v4591 = vld [vmem:[%s4580 + $0x50] sm:$0xff]
      %v4592 = vld [vmem:[%s4580 + $0x58] sm:$0xff]
      %v4593 = vld [vmem:[%s4580 + $0x60] sm:$0xff]
      %v4594 = vld [vmem:[%s4580 + $0x68] sm:$0xff]
      %v4595 = vld [vmem:[%s4580 + $0x70] sm:$0xff]
      %v4596 = vld [vmem:[%s4580 + $0x78] sm:$0xff]
      %v4613 = vunpack.c.l.b16 %v4581
      %v4614 = vunpack.c.h.b16 %v4581
      %v4615 = vunpack.c.l.b16 %v4582
      %v4616 = vunpack.c.h.b16 %v4582
      %v4617 = vunpack.c.l.b16 %v4583
      %v4618 = vunpack.c.h.b16 %v4583
      %v4619 = vunpack.c.l.b16 %v4584
      %v4620 = vunpack.c.h.b16 %v4584
      %v4621 = vunpack.c.l.b16 %v4585
      %v4622 = vunpack.c.h.b16 %v4585
      %v4623 = vunpack.c.l.b16 %v4586
      %v4624 = vunpack.c.h.b16 %v4586
      %v4625 = vunpack.c.l.b16 %v4587
      %v4626 = vunpack.c.h.b16 %v4587
      %v4627 = vunpack.c.l.b16 %v4588
      %v4628 = vunpack.c.h.b16 %v4588
      %v4629 = vunpack.c.l.b16 %v4589
      %v4630 = vunpack.c.h.b16 %v4589
      %v4631 = vunpack.c.l.b16 %v4590
      %v4632 = vunpack.c.h.b16 %v4590
      %v4633 = vunpack.c.l.b16 %v4591
      %v4634 = vunpack.c.h.b16 %v4591
      %v4635 = vunpack.c.l.b16 %v4592
      %v4636 = vunpack.c.h.b16 %v4592
      %v4637 = vunpack.c.l.b16 %v4593
      %v4638 = vunpack.c.h.b16 %v4593
      %v4639 = vunpack.c.l.b16 %v4594
      %v4640 = vunpack.c.h.b16 %v4594
      %v4641 = vunpack.c.l.b16 %v4595
      %v4642 = vunpack.c.h.b16 %v4595
      %v4643 = vunpack.c.l.b16 %v4596
      %v4644 = vunpack.c.h.b16 %v4596
      %v4645 = vpack.c.b16 %v4615, %v4613
      %v4646 = vpack.c.b16 %v4616, %v4614
      %v4647 = vpack.c.b16 %v4619, %v4617
      %v4648 = vpack.c.b16 %v4620, %v4618
      %v4649 = vpack.c.b16 %v4623, %v4621
      %v4650 = vpack.c.b16 %v4624, %v4622
      %v4651 = vpack.c.b16 %v4627, %v4625
      %v4652 = vpack.c.b16 %v4628, %v4626
      %v4653 = vpack.c.b16 %v4631, %v4629
      %v4654 = vpack.c.b16 %v4632, %v4630
      %v4655 = vpack.c.b16 %v4635, %v4633
      %v4656 = vpack.c.b16 %v4636, %v4634
      %v4657 = vpack.c.b16 %v4639, %v4637
      %v4658 = vpack.c.b16 %v4640, %v4638
      %v4659 = vpack.c.b16 %v4643, %v4641
      %v4660 = vpack.c.b16 %v4644, %v4642
      %4677 = vmatprep.subr.bf16.mxu0 %v4646
      %4678 = vmatpush1.bf16.msra.mxu0 %v4645
      %4679 = vmatprep.subr.bf16.mxu0 %v4648
      %4680 = vmatpush1.bf16.msra.mxu0 %v4647
      %4681 = vmatprep.subr.bf16.mxu0 %v4650
      %4682 = vmatpush1.bf16.msra.mxu0 %v4649
      %4683 = vmatprep.subr.bf16.mxu0 %v4652
      %4684 = vmatpush1.bf16.msra.mxu0 %v4651
      %4685 = vmatprep.subr.bf16.mxu0 %v4654
      %4686 = vmatpush1.bf16.msra.mxu0 %v4653
      %4687 = vmatprep.subr.bf16.mxu0 %v4656
      %4688 = vmatpush1.bf16.msra.mxu0 %v4655
      %4689 = vmatprep.subr.bf16.mxu0 %v4658
      %4690 = vmatpush1.bf16.msra.mxu0 %v4657
      %4691 = vmatprep.subr.bf16.mxu0 %v4660
      %4692 = vmatpush1.bf16.msra.mxu0 %v4659
      %4693 = vmatprep.subr.bf16.mxu0 0
      %4694 = vmatpush1.bf16.msra.mxu0 0
      %4695 = vmatprep.subr.bf16.mxu0 0
      %4696 = vmatpush1.bf16.msra.mxu0 0
      %4697 = vmatprep.subr.bf16.mxu0 0
      %4698 = vmatpush1.bf16.msra.mxu0 0
      %4699 = vmatprep.subr.bf16.mxu0 0
      %4700 = vmatpush1.bf16.msra.mxu0 0
      %4701 = vmatprep.subr.bf16.mxu0 0
      %4702 = vmatpush1.bf16.msra.mxu0 0
      %4703 = vmatprep.subr.bf16.mxu0 0
      %4704 = vmatpush1.bf16.msra.mxu0 0
      %4705 = vmatprep.subr.bf16.mxu0 0
      %4706 = vmatpush1.bf16.msra.mxu0 0
      %4707 = vmatprep.subr.bf16.mxu0 0
      %4708 = vmatpush1.bf16.msra.mxu0 0
      %4709 = vmatprep.mubr.bf16.mxu0 0
      %4710 = vmatmul.mubr.bf16.gmra.mrb[0].mxu0 %v4579
      %v4711 = vpop.f32.mrb[0].mxu0
      %v4712 = vadd.f32 0.0, %v4711
      %v4713 = vpop.f32.mrb[0].mxu0
      %v4714 = vadd.f32 0.0, %v4713
      %v4715 = vpop.f32.mrb[0].mxu0
      %v4716 = vadd.f32 0.0, %v4715
      %v4717 = vpop.f32.mrb[0].mxu0
      %v4718 = vadd.f32 0.0, %v4717
      %4719 = vdwg.mxu0
      %v4736 = vunpack.c.l.b16 %v4563
      %v4737 = vunpack.c.h.b16 %v4563
      %v4738 = vunpack.c.l.b16 %v4564
      %v4739 = vunpack.c.h.b16 %v4564
      %v4740 = vunpack.c.l.b16 %v4565
      %v4741 = vunpack.c.h.b16 %v4565
      %v4742 = vunpack.c.l.b16 %v4566
      %v4743 = vunpack.c.h.b16 %v4566
      %v4744 = vunpack.c.l.b16 %v4567
      %v4745 = vunpack.c.h.b16 %v4567
      %v4746 = vunpack.c.l.b16 %v4568
      %v4747 = vunpack.c.h.b16 %v4568
      %v4748 = vunpack.c.l.b16 %v4569
      %v4749 = vunpack.c.h.b16 %v4569
      %v4750 = vunpack.c.l.b16 %v4570
      %v4751 = vunpack.c.h.b16 %v4570
      %v4752 = vunpack.c.l.b16 %v4571
      %v4753 = vunpack.c.h.b16 %v4571
      %v4754 = vunpack.c.l.b16 %v4572
      %v4755 = vunpack.c.h.b16 %v4572
      %v4756 = vunpack.c.l.b16 %v4573
      %v4757 = vunpack.c.h.b16 %v4573
      %v4758 = vunpack.c.l.b16 %v4574
      %v4759 = vunpack.c.h.b16 %v4574
      %v4760 = vunpack.c.l.b16 %v4575
      %v4761 = vunpack.c.h.b16 %v4575
      %v4762 = vunpack.c.l.b16 %v4576
      %v4763 = vunpack.c.h.b16 %v4576
      %v4764 = vunpack.c.l.b16 %v4577
      %v4765 = vunpack.c.h.b16 %v4577
      %v4766 = vunpack.c.l.b16 %v4578
      %v4767 = vunpack.c.h.b16 %v4578
      %v4768 = vpack.c.b16 %v4738, %v4736
      %v4769 = vpack.c.b16 %v4739, %v4737
      %v4770 = vpack.c.b16 %v4742, %v4740
      %v4771 = vpack.c.b16 %v4743, %v4741
      %v4772 = vpack.c.b16 %v4746, %v4744
      %v4773 = vpack.c.b16 %v4747, %v4745
      %v4774 = vpack.c.b16 %v4750, %v4748
      %v4775 = vpack.c.b16 %v4751, %v4749
      %v4776 = vpack.c.b16 %v4754, %v4752
      %v4777 = vpack.c.b16 %v4755, %v4753
      %v4778 = vpack.c.b16 %v4758, %v4756
      %v4779 = vpack.c.b16 %v4759, %v4757
      %v4780 = vpack.c.b16 %v4762, %v4760
      %v4781 = vpack.c.b16 %v4763, %v4761
      %v4782 = vpack.c.b16 %v4766, %v4764
      %v4783 = vpack.c.b16 %v4767, %v4765
      %4800 = vmatprep.subr.bf16.mxu0 %v4769
      %4801 = vmatpush1.bf16.msra.mxu0 %v4768
      %4802 = vmatprep.subr.bf16.mxu0 %v4771
      %4803 = vmatpush1.bf16.msra.mxu0 %v4770
      %4804 = vmatprep.subr.bf16.mxu0 %v4773
      %4805 = vmatpush1.bf16.msra.mxu0 %v4772
      %4806 = vmatprep.subr.bf16.mxu0 %v4775
      %4807 = vmatpush1.bf16.msra.mxu0 %v4774
      %4808 = vmatprep.subr.bf16.mxu0 %v4777
      %4809 = vmatpush1.bf16.msra.mxu0 %v4776
      %4810 = vmatprep.subr.bf16.mxu0 %v4779
      %4811 = vmatpush1.bf16.msra.mxu0 %v4778
      %4812 = vmatprep.subr.bf16.mxu0 %v4781
      %4813 = vmatpush1.bf16.msra.mxu0 %v4780
      %4814 = vmatprep.subr.bf16.mxu0 %v4783
      %4815 = vmatpush1.bf16.msra.mxu0 %v4782
      %4816 = vmatprep.subr.bf16.mxu0 0
      %4817 = vmatpush1.bf16.msra.mxu0 0
      %4818 = vmatprep.subr.bf16.mxu0 0
      %4819 = vmatpush1.bf16.msra.mxu0 0
      %4820 = vmatprep.subr.bf16.mxu0 0
      %4821 = vmatpush1.bf16.msra.mxu0 0
      %4822 = vmatprep.subr.bf16.mxu0 0
      %4823 = vmatpush1.bf16.msra.mxu0 0
      %4824 = vmatprep.subr.bf16.mxu0 0
      %4825 = vmatpush1.bf16.msra.mxu0 0
      %4826 = vmatprep.subr.bf16.mxu0 0
      %4827 = vmatpush1.bf16.msra.mxu0 0
      %4828 = vmatprep.subr.bf16.mxu0 0
      %4829 = vmatpush1.bf16.msra.mxu0 0
      %4830 = vmatprep.subr.bf16.mxu0 0
      %4831 = vmatpush1.bf16.msra.mxu0 0
      %4832 = vmatprep.mubr.bf16.mxu0 0
      %4833 = vmatmul.mubr.bf16.gmra.mrb[0].mxu0 %v4562
      %v4834 = vpop.f32.mrb[0].mxu0
      %v4835 = vadd.f32 %v4712, %v4834
      %v4836 = vpop.f32.mrb[0].mxu0
      %v4837 = vadd.f32 %v4714, %v4836
      %v4838 = vpop.f32.mrb[0].mxu0
      %v4839 = vadd.f32 %v4716, %v4838
      %v4840 = vpop.f32.mrb[0].mxu0
      %v4841 = vadd.f32 %v4718, %v4840
      %4842 = vdwg.mxu0
      %v4843 = vpack.c.bf16 %v4455, %v4452
      %s4844 = scalar_lea.vmem %s7, 256
      %v4845 = vld [vmem:[%s4844] sm:$0xff]
      %v4846 = vld [vmem:[%s4844 + $0x8] sm:$0xff]
      %v4847 = vld [vmem:[%s4844 + $0x10] sm:$0xff]
      %v4848 = vld [vmem:[%s4844 + $0x18] sm:$0xff]
      %v4849 = vld [vmem:[%s4844 + $0x20] sm:$0xff]
      %v4850 = vld [vmem:[%s4844 + $0x28] sm:$0xff]
      %v4851 = vld [vmem:[%s4844 + $0x30] sm:$0xff]
      %v4852 = vld [vmem:[%s4844 + $0x38] sm:$0xff]
      %v4853 = vld [vmem:[%s4844 + $0x40] sm:$0xff]
      %v4854 = vld [vmem:[%s4844 + $0x48] sm:$0xff]
      %v4855 = vld [vmem:[%s4844 + $0x50] sm:$0xff]
      %v4856 = vld [vmem:[%s4844 + $0x58] sm:$0xff]
      %v4857 = vld [vmem:[%s4844 + $0x60] sm:$0xff]
      %v4858 = vld [vmem:[%s4844 + $0x68] sm:$0xff]
      %v4859 = vld [vmem:[%s4844 + $0x70] sm:$0xff]
      %v4860 = vld [vmem:[%s4844 + $0x78] sm:$0xff]
      %v4877 = vunpack.c.l.b16 %v4845
      %v4878 = vunpack.c.h.b16 %v4845
      %v4879 = vunpack.c.l.b16 %v4846
      %v4880 = vunpack.c.h.b16 %v4846
      %v4881 = vunpack.c.l.b16 %v4847
      %v4882 = vunpack.c.h.b16 %v4847
      %v4883 = vunpack.c.l.b16 %v4848
      %v4884 = vunpack.c.h.b16 %v4848
      %v4885 = vunpack.c.l.b16 %v4849
      %v4886 = vunpack.c.h.b16 %v4849
      %v4887 = vunpack.c.l.b16 %v4850
      %v4888 = vunpack.c.h.b16 %v4850
      %v4889 = vunpack.c.l.b16 %v4851
      %v4890 = vunpack.c.h.b16 %v4851
      %v4891 = vunpack.c.l.b16 %v4852
      %v4892 = vunpack.c.h.b16 %v4852
      %v4893 = vunpack.c.l.b16 %v4853
      %v4894 = vunpack.c.h.b16 %v4853
      %v4895 = vunpack.c.l.b16 %v4854
      %v4896 = vunpack.c.h.b16 %v4854
      %v4897 = vunpack.c.l.b16 %v4855
      %v4898 = vunpack.c.h.b16 %v4855
      %v4899 = vunpack.c.l.b16 %v4856
      %v4900 = vunpack.c.h.b16 %v4856
      %v4901 = vunpack.c.l.b16 %v4857
      %v4902 = vunpack.c.h.b16 %v4857
      %v4903 = vunpack.c.l.b16 %v4858
      %v4904 = vunpack.c.h.b16 %v4858
      %v4905 = vunpack.c.l.b16 %v4859
      %v4906 = vunpack.c.h.b16 %v4859
      %v4907 = vunpack.c.l.b16 %v4860
      %v4908 = vunpack.c.h.b16 %v4860
      %v4909 = vpack.c.b16 %v4879, %v4877
      %v4910 = vpack.c.b16 %v4880, %v4878
      %v4911 = vpack.c.b16 %v4883, %v4881
      %v4912 = vpack.c.b16 %v4884, %v4882
      %v4913 = vpack.c.b16 %v4887, %v4885
      %v4914 = vpack.c.b16 %v4888, %v4886
      %v4915 = vpack.c.b16 %v4891, %v4889
      %v4916 = vpack.c.b16 %v4892, %v4890
      %v4917 = vpack.c.b16 %v4895, %v4893
      %v4918 = vpack.c.b16 %v4896, %v4894
      %v4919 = vpack.c.b16 %v4899, %v4897
      %v4920 = vpack.c.b16 %v4900, %v4898
      %v4921 = vpack.c.b16 %v4903, %v4901
      %v4922 = vpack.c.b16 %v4904, %v4902
      %v4923 = vpack.c.b16 %v4907, %v4905
      %v4924 = vpack.c.b16 %v4908, %v4906
      %4941 = vmatprep.subr.bf16.mxu0 %v4910
      %4942 = vmatpush1.bf16.msra.mxu0 %v4909
      %4943 = vmatprep.subr.bf16.mxu0 %v4912
      %4944 = vmatpush1.bf16.msra.mxu0 %v4911
      %4945 = vmatprep.subr.bf16.mxu0 %v4914
      %4946 = vmatpush1.bf16.msra.mxu0 %v4913
      %4947 = vmatprep.subr.bf16.mxu0 %v4916
      %4948 = vmatpush1.bf16.msra.mxu0 %v4915
      %4949 = vmatprep.subr.bf16.mxu0 %v4918
      %4950 = vmatpush1.bf16.msra.mxu0 %v4917
      %4951 = vmatprep.subr.bf16.mxu0 %v4920
      %4952 = vmatpush1.bf16.msra.mxu0 %v4919
      %4953 = vmatprep.subr.bf16.mxu0 %v4922
      %4954 = vmatpush1.bf16.msra.mxu0 %v4921
      %4955 = vmatprep.subr.bf16.mxu0 %v4924
      %4956 = vmatpush1.bf16.msra.mxu0 %v4923
      %4957 = vmatprep.subr.bf16.mxu0 0
      %4958 = vmatpush1.bf16.msra.mxu0 0
      %4959 = vmatprep.subr.bf16.mxu0 0
      %4960 = vmatpush1.bf16.msra.mxu0 0
      %4961 = vmatprep.subr.bf16.mxu0 0
      %4962 = vmatpush1.bf16.msra.mxu0 0
      %4963 = vmatprep.subr.bf16.mxu0 0
      %4964 = vmatpush1.bf16.msra.mxu0 0
      %4965 = vmatprep.subr.bf16.mxu0 0
      %4966 = vmatpush1.bf16.msra.mxu0 0
      %4967 = vmatprep.subr.bf16.mxu0 0
      %4968 = vmatpush1.bf16.msra.mxu0 0
      %4969 = vmatprep.subr.bf16.mxu0 0
      %4970 = vmatpush1.bf16.msra.mxu0 0
      %4971 = vmatprep.subr.bf16.mxu0 0
      %4972 = vmatpush1.bf16.msra.mxu0 0
      %4973 = vmatprep.mubr.bf16.mxu0 0
      %4974 = vmatmul.mubr.bf16.gmra.mrb[0].mxu0 %v4843
      %v4975 = vpop.f32.mrb[0].mxu0
      %v4976 = vadd.f32 0.0, %v4975
      %v4977 = vpop.f32.mrb[0].mxu0
      %v4978 = vadd.f32 0.0, %v4977
      %v4979 = vpop.f32.mrb[0].mxu0
      %v4980 = vadd.f32 0.0, %v4979
      %v4981 = vpop.f32.mrb[0].mxu0
      %v4982 = vadd.f32 0.0, %v4981
      %4983 = vdwg.mxu0
      %v4984 = vadd.f32 %v4835, %v4976
      %v4985 = vadd.f32 %v4837, %v4978
      %v4986 = vadd.f32 %v4839, %v4980
      %v4987 = vadd.f32 %v4841, %v4982
      %v4988 = vpack.c.bf16 %v4463, %v4460
      %s4989 = scalar_lea.vmem %s7, 384
      %v4990 = vld [vmem:[%s4989] sm:$0xff]
      %v4991 = vld [vmem:[%s4989 + $0x8] sm:$0xff]
      %v4992 = vld [vmem:[%s4989 + $0x10] sm:$0xff]
      %v4993 = vld [vmem:[%s4989 + $0x18] sm:$0xff]
      %v4994 = vld [vmem:[%s4989 + $0x20] sm:$0xff]
      %v4995 = vld [vmem:[%s4989 + $0x28] sm:$0xff]
      %v4996 = vld [vmem:[%s4989 + $0x30] sm:$0xff]
      %v4997 = vld [vmem:[%s4989 + $0x38] sm:$0xff]
      %v4998 = vld [vmem:[%s4989 + $0x40] sm:$0xff]
      %v4999 = vld [vmem:[%s4989 + $0x48] sm:$0xff]
      %v5000 = vld [vmem:[%s4989 + $0x50] sm:$0xff]
      %v5001 = vld [vmem:[%s4989 + $0x58] sm:$0xff]
      %v5002 = vld [vmem:[%s4989 + $0x60] sm:$0xff]
      %v5003 = vld [vmem:[%s4989 + $0x68] sm:$0xff]
      %v5004 = vld [vmem:[%s4989 + $0x70] sm:$0xff]
      %v5005 = vld [vmem:[%s4989 + $0x78] sm:$0xff]
      %v5022 = vunpack.c.l.b16 %v4990
      %v5023 = vunpack.c.h.b16 %v4990
      %v5024 = vunpack.c.l.b16 %v4991
      %v5025 = vunpack.c.h.b16 %v4991
      %v5026 = vunpack.c.l.b16 %v4992
      %v5027 = vunpack.c.h.b16 %v4992
      %v5028 = vunpack.c.l.b16 %v4993
      %v5029 = vunpack.c.h.b16 %v4993
      %v5030 = vunpack.c.l.b16 %v4994
      %v5031 = vunpack.c.h.b16 %v4994
      %v5032 = vunpack.c.l.b16 %v4995
      %v5033 = vunpack.c.h.b16 %v4995
      %v5034 = vunpack.c.l.b16 %v4996
      %v5035 = vunpack.c.h.b16 %v4996
      %v5036 = vunpack.c.l.b16 %v4997
      %v5037 = vunpack.c.h.b16 %v4997
      %v5038 = vunpack.c.l.b16 %v4998
      %v5039 = vunpack.c.h.b16 %v4998
      %v5040 = vunpack.c.l.b16 %v4999
      %v5041 = vunpack.c.h.b16 %v4999
      %v5042 = vunpack.c.l.b16 %v5000
      %v5043 = vunpack.c.h.b16 %v5000
      %v5044 = vunpack.c.l.b16 %v5001
      %v5045 = vunpack.c.h.b16 %v5001
      %v5046 = vunpack.c.l.b16 %v5002
      %v5047 = vunpack.c.h.b16 %v5002
      %v5048 = vunpack.c.l.b16 %v5003
      %v5049 = vunpack.c.h.b16 %v5003
      %v5050 = vunpack.c.l.b16 %v5004
      %v5051 = vunpack.c.h.b16 %v5004
      %v5052 = vunpack.c.l.b16 %v5005
      %v5053 = vunpack.c.h.b16 %v5005
      %v5054 = vpack.c.b16 %v5024, %v5022
      %v5055 = vpack.c.b16 %v5025, %v5023
      %v5056 = vpack.c.b16 %v5028, %v5026
      %v5057 = vpack.c.b16 %v5029, %v5027
      %v5058 = vpack.c.b16 %v5032, %v5030
      %v5059 = vpack.c.b16 %v5033, %v5031
      %v5060 = vpack.c.b16 %v5036, %v5034
      %v5061 = vpack.c.b16 %v5037, %v5035
      %v5062 = vpack.c.b16 %v5040, %v5038
      %v5063 = vpack.c.b16 %v5041, %v5039
      %v5064 = vpack.c.b16 %v5044, %v5042
      %v5065 = vpack.c.b16 %v5045, %v5043
      %v5066 = vpack.c.b16 %v5048, %v5046
      %v5067 = vpack.c.b16 %v5049, %v5047
      %v5068 = vpack.c.b16 %v5052, %v5050
      %v5069 = vpack.c.b16 %v5053, %v5051
      %5086 = vmatprep.subr.bf16.mxu0 %v5055
      %5087 = vmatpush1.bf16.msra.mxu0 %v5054
      %5088 = vmatprep.subr.bf16.mxu0 %v5057
      %5089 = vmatpush1.bf16.msra.mxu0 %v5056
      %5090 = vmatprep.subr.bf16.mxu0 %v5059
      %5091 = vmatpush1.bf16.msra.mxu0 %v5058
      %5092 = vmatprep.subr.bf16.mxu0 %v5061
      %5093 = vmatpush1.bf16.msra.mxu0 %v5060
      %5094 = vmatprep.subr.bf16.mxu0 %v5063
      %5095 = vmatpush1.bf16.msra.mxu0 %v5062
      %5096 = vmatprep.subr.bf16.mxu0 %v5065
      %5097 = vmatpush1.bf16.msra.mxu0 %v5064
      %5098 = vmatprep.subr.bf16.mxu0 %v5067
      %5099 = vmatpush1.bf16.msra.mxu0 %v5066
      %5100 = vmatprep.subr.bf16.mxu0 %v5069
      %5101 = vmatpush1.bf16.msra.mxu0 %v5068
      %5102 = vmatprep.subr.bf16.mxu0 0
      %5103 = vmatpush1.bf16.msra.mxu0 0
      %5104 = vmatprep.subr.bf16.mxu0 0
      %5105 = vmatpush1.bf16.msra.mxu0 0
      %5106 = vmatprep.subr.bf16.mxu0 0
      %5107 = vmatpush1.bf16.msra.mxu0 0
      %5108 = vmatprep.subr.bf16.mxu0 0
      %5109 = vmatpush1.bf16.msra.mxu0 0
      %5110 = vmatprep.subr.bf16.mxu0 0
      %5111 = vmatpush1.bf16.msra.mxu0 0
      %5112 = vmatprep.subr.bf16.mxu0 0
      %5113 = vmatpush1.bf16.msra.mxu0 0
      %5114 = vmatprep.subr.bf16.mxu0 0
      %5115 = vmatpush1.bf16.msra.mxu0 0
      %5116 = vmatprep.subr.bf16.mxu0 0
      %5117 = vmatpush1.bf16.msra.mxu0 0
      %5118 = vmatprep.mubr.bf16.mxu0 0
      %5119 = vmatmul.mubr.bf16.gmra.mrb[0].mxu0 %v4988
      %v5120 = vpop.f32.mrb[0].mxu0
      %v5121 = vadd.f32 0.0, %v5120
      %v5122 = vpop.f32.mrb[0].mxu0
      %v5123 = vadd.f32 0.0, %v5122
      %v5124 = vpop.f32.mrb[0].mxu0
      %v5125 = vadd.f32 0.0, %v5124
      %v5126 = vpop.f32.mrb[0].mxu0
      %v5127 = vadd.f32 0.0, %v5126
      %5128 = vdwg.mxu0
      %v5129 = vadd.f32 %v4984, %v5121
      %v5130 = vadd.f32 %v4985, %v5123
      %v5131 = vadd.f32 %v4986, %v5125
      %v5132 = vadd.f32 %v4987, %v5127
      %v5133 = vpack.c.bf16 %v4471, %v4468
      %s5134 = scalar_lea.vmem %s7, 512
      %v5135 = vld [vmem:[%s5134] sm:$0xff]
      %v5136 = vld [vmem:[%s5134 + $0x8] sm:$0xff]
      %v5137 = vld [vmem:[%s5134 + $0x10] sm:$0xff]
      %v5138 = vld [vmem:[%s5134 + $0x18] sm:$0xff]
      %v5139 = vld [vmem:[%s5134 + $0x20] sm:$0xff]
      %v5140 = vld [vmem:[%s5134 + $0x28] sm:$0xff]
      %v5141 = vld [vmem:[%s5134 + $0x30] sm:$0xff]
      %v5142 = vld [vmem:[%s5134 + $0x38] sm:$0xff]
      %v5143 = vld [vmem:[%s5134 + $0x40] sm:$0xff]
      %v5144 = vld [vmem:[%s5134 + $0x48] sm:$0xff]
      %v5145 = vld [vmem:[%s5134 + $0x50] sm:$0xff]
      %v5146 = vld [vmem:[%s5134 + $0x58] sm:$0xff]
      %v5147 = vld [vmem:[%s5134 + $0x60] sm:$0xff]
      %v5148 = vld [vmem:[%s5134 + $0x68] sm:$0xff]
      %v5149 = vld [vmem:[%s5134 + $0x70] sm:$0xff]
      %v5150 = vld [vmem:[%s5134 + $0x78] sm:$0xff]
      %v5167 = vunpack.c.l.b16 %v5135
      %v5168 = vunpack.c.h.b16 %v5135
      %v5169 = vunpack.c.l.b16 %v5136
      %v5170 = vunpack.c.h.b16 %v5136
      %v5171 = vunpack.c.l.b16 %v5137
      %v5172 = vunpack.c.h.b16 %v5137
      %v5173 = vunpack.c.l.b16 %v5138
      %v5174 = vunpack.c.h.b16 %v5138
      %v5175 = vunpack.c.l.b16 %v5139
      %v5176 = vunpack.c.h.b16 %v5139
      %v5177 = vunpack.c.l.b16 %v5140
      %v5178 = vunpack.c.h.b16 %v5140
      %v5179 = vunpack.c.l.b16 %v5141
      %v5180 = vunpack.c.h.b16 %v5141
      %v5181 = vunpack.c.l.b16 %v5142
      %v5182 = vunpack.c.h.b16 %v5142
      %v5183 = vunpack.c.l.b16 %v5143
      %v5184 = vunpack.c.h.b16 %v5143
      %v5185 = vunpack.c.l.b16 %v5144
      %v5186 = vunpack.c.h.b16 %v5144
      %v5187 = vunpack.c.l.b16 %v5145
      %v5188 = vunpack.c.h.b16 %v5145
      %v5189 = vunpack.c.l.b16 %v5146
      %v5190 = vunpack.c.h.b16 %v5146
      %v5191 = vunpack.c.l.b16 %v5147
      %v5192 = vunpack.c.h.b16 %v5147
      %v5193 = vunpack.c.l.b16 %v5148
      %v5194 = vunpack.c.h.b16 %v5148
      %v5195 = vunpack.c.l.b16 %v5149
      %v5196 = vunpack.c.h.b16 %v5149
      %v5197 = vunpack.c.l.b16 %v5150
      %v5198 = vunpack.c.h.b16 %v5150
      %v5199 = vpack.c.b16 %v5169, %v5167
      %v5200 = vpack.c.b16 %v5170, %v5168
      %v5201 = vpack.c.b16 %v5173, %v5171
      %v5202 = vpack.c.b16 %v5174, %v5172
      %v5203 = vpack.c.b16 %v5177, %v5175
      %v5204 = vpack.c.b16 %v5178, %v5176
      %v5205 = vpack.c.b16 %v5181, %v5179
      %v5206 = vpack.c.b16 %v5182, %v5180
      %v5207 = vpack.c.b16 %v5185, %v5183
      %v5208 = vpack.c.b16 %v5186, %v5184
      %v5209 = vpack.c.b16 %v5189, %v5187
      %v5210 = vpack.c.b16 %v5190, %v5188
      %v5211 = vpack.c.b16 %v5193, %v5191
      %v5212 = vpack.c.b16 %v5194, %v5192
      %v5213 = vpack.c.b16 %v5197, %v5195
      %v5214 = vpack.c.b16 %v5198, %v5196
      %5231 = vmatprep.subr.bf16.mxu0 %v5200
      %5232 = vmatpush1.bf16.msra.mxu0 %v5199
      %5233 = vmatprep.subr.bf16.mxu0 %v5202
      %5234 = vmatpush1.bf16.msra.mxu0 %v5201
      %5235 = vmatprep.subr.bf16.mxu0 %v5204
      %5236 = vmatpush1.bf16.msra.mxu0 %v5203
      %5237 = vmatprep.subr.bf16.mxu0 %v5206
      %5238 = vmatpush1.bf16.msra.mxu0 %v5205
      %5239 = vmatprep.subr.bf16.mxu0 %v5208
      %5240 = vmatpush1.bf16.msra.mxu0 %v5207
      %5241 = vmatprep.subr.bf16.mxu0 %v5210
      %5242 = vmatpush1.bf16.msra.mxu0 %v5209
      %5243 = vmatprep.subr.bf16.mxu0 %v5212
      %5244 = vmatpush1.bf16.msra.mxu0 %v5211
      %5245 = vmatprep.subr.bf16.mxu0 %v5214
      %5246 = vmatpush1.bf16.msra.mxu0 %v5213
      %5247 = vmatprep.subr.bf16.mxu0 0
      %5248 = vmatpush1.bf16.msra.mxu0 0
      %5249 = vmatprep.subr.bf16.mxu0 0
      %5250 = vmatpush1.bf16.msra.mxu0 0
      %5251 = vmatprep.subr.bf16.mxu0 0
      %5252 = vmatpush1.bf16.msra.mxu0 0
      %5253 = vmatprep.subr.bf16.mxu0 0
      %5254 = vmatpush1.bf16.msra.mxu0 0
      %5255 = vmatprep.subr.bf16.mxu0 0
      %5256 = vmatpush1.bf16.msra.mxu0 0
      %5257 = vmatprep.subr.bf16.mxu0 0
      %5258 = vmatpush1.bf16.msra.mxu0 0
      %5259 = vmatprep.subr.bf16.mxu0 0
      %5260 = vmatpush1.bf16.msra.mxu0 0
      %5261 = vmatprep.subr.bf16.mxu0 0
      %5262 = vmatpush1.bf16.msra.mxu0 0
      %5263 = vmatprep.mubr.bf16.mxu0 0
      %5264 = vmatmul.mubr.bf16.gmra.mrb[0].mxu0 %v5133
      %v5265 = vpop.f32.mrb[0].mxu0
      %v5266 = vadd.f32 0.0, %v5265
      %v5267 = vpop.f32.mrb[0].mxu0
      %v5268 = vadd.f32 0.0, %v5267
      %v5269 = vpop.f32.mrb[0].mxu0
      %v5270 = vadd.f32 0.0, %v5269
      %v5271 = vpop.f32.mrb[0].mxu0
      %v5272 = vadd.f32 0.0, %v5271
      %5273 = vdwg.mxu0
      %v5274 = vadd.f32 %v5129, %v5266
      %v5275 = vadd.f32 %v5130, %v5268
      %v5276 = vadd.f32 %v5131, %v5270
      %v5277 = vadd.f32 %v5132, %v5272
      %v5278 = vpack.c.bf16 %v4479, %v4476
      %s5279 = scalar_lea.vmem %s7, 640
      %v5280 = vld [vmem:[%s5279] sm:$0xff]
      %v5281 = vld [vmem:[%s5279 + $0x8] sm:$0xff]
      %v5282 = vld [vmem:[%s5279 + $0x10] sm:$0xff]
      %v5283 = vld [vmem:[%s5279 + $0x18] sm:$0xff]
      %v5284 = vld [vmem:[%s5279 + $0x20] sm:$0xff]
      %v5285 = vld [vmem:[%s5279 + $0x28] sm:$0xff]
      %v5286 = vld [vmem:[%s5279 + $0x30] sm:$0xff]
      %v5287 = vld [vmem:[%s5279 + $0x38] sm:$0xff]
      %v5288 = vld [vmem:[%s5279 + $0x40] sm:$0xff]
      %v5289 = vld [vmem:[%s5279 + $0x48] sm:$0xff]
      %v5290 = vld [vmem:[%s5279 + $0x50] sm:$0xff]
      %v5291 = vld [vmem:[%s5279 + $0x58] sm:$0xff]
      %v5292 = vld [vmem:[%s5279 + $0x60] sm:$0xff]
      %v5293 = vld [vmem:[%s5279 + $0x68] sm:$0xff]
      %v5294 = vld [vmem:[%s5279 + $0x70] sm:$0xff]
      %v5295 = vld [vmem:[%s5279 + $0x78] sm:$0xff]
      %v5312 = vunpack.c.l.b16 %v5280
      %v5313 = vunpack.c.h.b16 %v5280
      %v5314 = vunpack.c.l.b16 %v5281
      %v5315 = vunpack.c.h.b16 %v5281
      %v5316 = vunpack.c.l.b16 %v5282
      %v5317 = vunpack.c.h.b16 %v5282
      %v5318 = vunpack.c.l.b16 %v5283
      %v5319 = vunpack.c.h.b16 %v5283
      %v5320 = vunpack.c.l.b16 %v5284
      %v5321 = vunpack.c.h.b16 %v5284
      %v5322 = vunpack.c.l.b16 %v5285
      %v5323 = vunpack.c.h.b16 %v5285
      %v5324 = vunpack.c.l.b16 %v5286
      %v5325 = vunpack.c.h.b16 %v5286
      %v5326 = vunpack.c.l.b16 %v5287
      %v5327 = vunpack.c.h.b16 %v5287
      %v5328 = vunpack.c.l.b16 %v5288
      %v5329 = vunpack.c.h.b16 %v5288
      %v5330 = vunpack.c.l.b16 %v5289
      %v5331 = vunpack.c.h.b16 %v5289
      %v5332 = vunpack.c.l.b16 %v5290
      %v5333 = vunpack.c.h.b16 %v5290
      %v5334 = vunpack.c.l.b16 %v5291
      %v5335 = vunpack.c.h.b16 %v5291
      %v5336 = vunpack.c.l.b16 %v5292
      %v5337 = vunpack.c.h.b16 %v5292
      %v5338 = vunpack.c.l.b16 %v5293
      %v5339 = vunpack.c.h.b16 %v5293
      %v5340 = vunpack.c.l.b16 %v5294
      %v5341 = vunpack.c.h.b16 %v5294
      %v5342 = vunpack.c.l.b16 %v5295
      %v5343 = vunpack.c.h.b16 %v5295
      %v5344 = vpack.c.b16 %v5314, %v5312
      %v5345 = vpack.c.b16 %v5315, %v5313
      %v5346 = vpack.c.b16 %v5318, %v5316
      %v5347 = vpack.c.b16 %v5319, %v5317
      %v5348 = vpack.c.b16 %v5322, %v5320
      %v5349 = vpack.c.b16 %v5323, %v5321
      %v5350 = vpack.c.b16 %v5326, %v5324
      %v5351 = vpack.c.b16 %v5327, %v5325
      %v5352 = vpack.c.b16 %v5330, %v5328
      %v5353 = vpack.c.b16 %v5331, %v5329
      %v5354 = vpack.c.b16 %v5334, %v5332
      %v5355 = vpack.c.b16 %v5335, %v5333
      %v5356 = vpack.c.b16 %v5338, %v5336
      %v5357 = vpack.c.b16 %v5339, %v5337
      %v5358 = vpack.c.b16 %v5342, %v5340
      %v5359 = vpack.c.b16 %v5343, %v5341
      %5376 = vmatprep.subr.bf16.mxu0 %v5345
      %5377 = vmatpush1.bf16.msra.mxu0 %v5344
      %5378 = vmatprep.subr.bf16.mxu0 %v5347
      %5379 = vmatpush1.bf16.msra.mxu0 %v5346
      %5380 = vmatprep.subr.bf16.mxu0 %v5349
      %5381 = vmatpush1.bf16.msra.mxu0 %v5348
      %5382 = vmatprep.subr.bf16.mxu0 %v5351
      %5383 = vmatpush1.bf16.msra.mxu0 %v5350
      %5384 = vmatprep.subr.bf16.mxu0 %v5353
      %5385 = vmatpush1.bf16.msra.mxu0 %v5352
      %5386 = vmatprep.subr.bf16.mxu0 %v5355
      %5387 = vmatpush1.bf16.msra.mxu0 %v5354
      %5388 = vmatprep.subr.bf16.mxu0 %v5357
      %5389 = vmatpush1.bf16.msra.mxu0 %v5356
      %5390 = vmatprep.subr.bf16.mxu0 %v5359
      %5391 = vmatpush1.bf16.msra.mxu0 %v5358
      %5392 = vmatprep.subr.bf16.mxu0 0
      %5393 = vmatpush1.bf16.msra.mxu0 0
      %5394 = vmatprep.subr.bf16.mxu0 0
      %5395 = vmatpush1.bf16.msra.mxu0 0
      %5396 = vmatprep.subr.bf16.mxu0 0
      %5397 = vmatpush1.bf16.msra.mxu0 0
      %5398 = vmatprep.subr.bf16.mxu0 0
      %5399 = vmatpush1.bf16.msra.mxu0 0
      %5400 = vmatprep.subr.bf16.mxu0 0
      %5401 = vmatpush1.bf16.msra.mxu0 0
      %5402 = vmatprep.subr.bf16.mxu0 0
      %5403 = vmatpush1.bf16.msra.mxu0 0
      %5404 = vmatprep.subr.bf16.mxu0 0
      %5405 = vmatpush1.bf16.msra.mxu0 0
      %5406 = vmatprep.subr.bf16.mxu0 0
      %5407 = vmatpush1.bf16.msra.mxu0 0
      %5408 = vmatprep.mubr.bf16.mxu0 0
      %5409 = vmatmul.mubr.bf16.gmra.mrb[0].mxu0 %v5278
      %v5410 = vpop.f32.mrb[0].mxu0
      %v5411 = vadd.f32 0.0, %v5410
      %v5412 = vpop.f32.mrb[0].mxu0
      %v5413 = vadd.f32 0.0, %v5412
      %v5414 = vpop.f32.mrb[0].mxu0
      %v5415 = vadd.f32 0.0, %v5414
      %v5416 = vpop.f32.mrb[0].mxu0
      %v5417 = vadd.f32 0.0, %v5416
      %5418 = vdwg.mxu0
      %v5419 = vadd.f32 %v5274, %v5411
      %v5420 = vadd.f32 %v5275, %v5413
      %v5421 = vadd.f32 %v5276, %v5415
      %v5422 = vadd.f32 %v5277, %v5417
      %v5423 = vpack.c.bf16 %v4487, %v4484
      %s5424 = scalar_lea.vmem %s7, 768
      %v5425 = vld [vmem:[%s5424] sm:$0xff]
      %v5426 = vld [vmem:[%s5424 + $0x8] sm:$0xff]
      %v5427 = vld [vmem:[%s5424 + $0x10] sm:$0xff]
      %v5428 = vld [vmem:[%s5424 + $0x18] sm:$0xff]
      %v5429 = vld [vmem:[%s5424 + $0x20] sm:$0xff]
      %v5430 = vld [vmem:[%s5424 + $0x28] sm:$0xff]
      %v5431 = vld [vmem:[%s5424 + $0x30] sm:$0xff]
      %v5432 = vld [vmem:[%s5424 + $0x38] sm:$0xff]
      %v5433 = vld [vmem:[%s5424 + $0x40] sm:$0xff]
      %v5434 = vld [vmem:[%s5424 + $0x48] sm:$0xff]
      %v5435 = vld [vmem:[%s5424 + $0x50] sm:$0xff]
      %v5436 = vld [vmem:[%s5424 + $0x58] sm:$0xff]
      %v5437 = vld [vmem:[%s5424 + $0x60] sm:$0xff]
      %v5438 = vld [vmem:[%s5424 + $0x68] sm:$0xff]
      %v5439 = vld [vmem:[%s5424 + $0x70] sm:$0xff]
      %v5440 = vld [vmem:[%s5424 + $0x78] sm:$0xff]
      %v5457 = vunpack.c.l.b16 %v5425
      %v5458 = vunpack.c.h.b16 %v5425
      %v5459 = vunpack.c.l.b16 %v5426
      %v5460 = vunpack.c.h.b16 %v5426
      %v5461 = vunpack.c.l.b16 %v5427
      %v5462 = vunpack.c.h.b16 %v5427
      %v5463 = vunpack.c.l.b16 %v5428
      %v5464 = vunpack.c.h.b16 %v5428
      %v5465 = vunpack.c.l.b16 %v5429
      %v5466 = vunpack.c.h.b16 %v5429
      %v5467 = vunpack.c.l.b16 %v5430
      %v5468 = vunpack.c.h.b16 %v5430
      %v5469 = vunpack.c.l.b16 %v5431
      %v5470 = vunpack.c.h.b16 %v5431
      %v5471 = vunpack.c.l.b16 %v5432
      %v5472 = vunpack.c.h.b16 %v5432
      %v5473 = vunpack.c.l.b16 %v5433
      %v5474 = vunpack.c.h.b16 %v5433
      %v5475 = vunpack.c.l.b16 %v5434
      %v5476 = vunpack.c.h.b16 %v5434
      %v5477 = vunpack.c.l.b16 %v5435
      %v5478 = vunpack.c.h.b16 %v5435
      %v5479 = vunpack.c.l.b16 %v5436
      %v5480 = vunpack.c.h.b16 %v5436
      %v5481 = vunpack.c.l.b16 %v5437
      %v5482 = vunpack.c.h.b16 %v5437
      %v5483 = vunpack.c.l.b16 %v5438
      %v5484 = vunpack.c.h.b16 %v5438
      %v5485 = vunpack.c.l.b16 %v5439
      %v5486 = vunpack.c.h.b16 %v5439
      %v5487 = vunpack.c.l.b16 %v5440
      %v5488 = vunpack.c.h.b16 %v5440
      %v5489 = vpack.c.b16 %v5459, %v5457
      %v5490 = vpack.c.b16 %v5460, %v5458
      %v5491 = vpack.c.b16 %v5463, %v5461
      %v5492 = vpack.c.b16 %v5464, %v5462
      %v5493 = vpack.c.b16 %v5467, %v5465
      %v5494 = vpack.c.b16 %v5468, %v5466
      %v5495 = vpack.c.b16 %v5471, %v5469
      %v5496 = vpack.c.b16 %v5472, %v5470
      %v5497 = vpack.c.b16 %v5475, %v5473
      %v5498 = vpack.c.b16 %v5476, %v5474
      %v5499 = vpack.c.b16 %v5479, %v5477
      %v5500 = vpack.c.b16 %v5480, %v5478
      %v5501 = vpack.c.b16 %v5483, %v5481
      %v5502 = vpack.c.b16 %v5484, %v5482
      %v5503 = vpack.c.b16 %v5487, %v5485
      %v5504 = vpack.c.b16 %v5488, %v5486
      %5521 = vmatprep.subr.bf16.mxu0 %v5490
      %5522 = vmatpush1.bf16.msra.mxu0 %v5489
      %5523 = vmatprep.subr.bf16.mxu0 %v5492
      %5524 = vmatpush1.bf16.msra.mxu0 %v5491
      %5525 = vmatprep.subr.bf16.mxu0 %v5494
      %5526 = vmatpush1.bf16.msra.mxu0 %v5493
      %5527 = vmatprep.subr.bf16.mxu0 %v5496
      %5528 = vmatpush1.bf16.msra.mxu0 %v5495
      %5529 = vmatprep.subr.bf16.mxu0 %v5498
      %5530 = vmatpush1.bf16.msra.mxu0 %v5497
      %5531 = vmatprep.subr.bf16.mxu0 %v5500
      %5532 = vmatpush1.bf16.msra.mxu0 %v5499
      %5533 = vmatprep.subr.bf16.mxu0 %v5502
      %5534 = vmatpush1.bf16.msra.mxu0 %v5501
      %5535 = vmatprep.subr.bf16.mxu0 %v5504
      %5536 = vmatpush1.bf16.msra.mxu0 %v5503
      %5537 = vmatprep.subr.bf16.mxu0 0
      %5538 = vmatpush1.bf16.msra.mxu0 0
      %5539 = vmatprep.subr.bf16.mxu0 0
      %5540 = vmatpush1.bf16.msra.mxu0 0
      %5541 = vmatprep.subr.bf16.mxu0 0
      %5542 = vmatpush1.bf16.msra.mxu0 0
      %5543 = vmatprep.subr.bf16.mxu0 0
      %5544 = vmatpush1.bf16.msra.mxu0 0
      %5545 = vmatprep.subr.bf16.mxu0 0
      %5546 = vmatpush1.bf16.msra.mxu0 0
      %5547 = vmatprep.subr.bf16.mxu0 0
      %5548 = vmatpush1.bf16.msra.mxu0 0
      %5549 = vmatprep.subr.bf16.mxu0 0
      %5550 = vmatpush1.bf16.msra.mxu0 0
      %5551 = vmatprep.subr.bf16.mxu0 0
      %5552 = vmatpush1.bf16.msra.mxu0 0
      %5553 = vmatprep.mubr.bf16.mxu0 0
      %5554 = vmatmul.mubr.bf16.gmra.mrb[0].mxu0 %v5423
      %v5555 = vpop.f32.mrb[0].mxu0
      %v5556 = vadd.f32 0.0, %v5555
      %v5557 = vpop.f32.mrb[0].mxu0
      %v5558 = vadd.f32 0.0, %v5557
      %v5559 = vpop.f32.mrb[0].mxu0
      %v5560 = vadd.f32 0.0, %v5559
      %v5561 = vpop.f32.mrb[0].mxu0
      %v5562 = vadd.f32 0.0, %v5561
      %5563 = vdwg.mxu0
      %v5564 = vadd.f32 %v5419, %v5556
      %v5565 = vadd.f32 %v5420, %v5558
      %v5566 = vadd.f32 %v5421, %v5560
      %v5567 = vadd.f32 %v5422, %v5562
      %v5568 = vpack.c.bf16 %v4495, %v4492
      %s5569 = scalar_lea.vmem %s7, 896
      %v5570 = vld [vmem:[%s5569] sm:$0xff]
      %v5571 = vld [vmem:[%s5569 + $0x8] sm:$0xff]
      %v5572 = vld [vmem:[%s5569 + $0x10] sm:$0xff]
      %v5573 = vld [vmem:[%s5569 + $0x18] sm:$0xff]
      %v5574 = vld [vmem:[%s5569 + $0x20] sm:$0xff]
      %v5575 = vld [vmem:[%s5569 + $0x28] sm:$0xff]
      %v5576 = vld [vmem:[%s5569 + $0x30] sm:$0xff]
      %v5577 = vld [vmem:[%s5569 + $0x38] sm:$0xff]
      %v5578 = vld [vmem:[%s5569 + $0x40] sm:$0xff]
      %v5579 = vld [vmem:[%s5569 + $0x48] sm:$0xff]
      %v5580 = vld [vmem:[%s5569 + $0x50] sm:$0xff]
      %v5581 = vld [vmem:[%s5569 + $0x58] sm:$0xff]
      %v5582 = vld [vmem:[%s5569 + $0x60] sm:$0xff]
      %v5583 = vld [vmem:[%s5569 + $0x68] sm:$0xff]
      %v5584 = vld [vmem:[%s5569 + $0x70] sm:$0xff]
      %v5585 = vld [vmem:[%s5569 + $0x78] sm:$0xff]
      %v5602 = vunpack.c.l.b16 %v5570
      %v5603 = vunpack.c.h.b16 %v5570
      %v5604 = vunpack.c.l.b16 %v5571
      %v5605 = vunpack.c.h.b16 %v5571
      %v5606 = vunpack.c.l.b16 %v5572
      %v5607 = vunpack.c.h.b16 %v5572
      %v5608 = vunpack.c.l.b16 %v5573
      %v5609 = vunpack.c.h.b16 %v5573
      %v5610 = vunpack.c.l.b16 %v5574
      %v5611 = vunpack.c.h.b16 %v5574
      %v5612 = vunpack.c.l.b16 %v5575
      %v5613 = vunpack.c.h.b16 %v5575
      %v5614 = vunpack.c.l.b16 %v5576
      %v5615 = vunpack.c.h.b16 %v5576
      %v5616 = vunpack.c.l.b16 %v5577
      %v5617 = vunpack.c.h.b16 %v5577
      %v5618 = vunpack.c.l.b16 %v5578
      %v5619 = vunpack.c.h.b16 %v5578
      %v5620 = vunpack.c.l.b16 %v5579
      %v5621 = vunpack.c.h.b16 %v5579
      %v5622 = vunpack.c.l.b16 %v5580
      %v5623 = vunpack.c.h.b16 %v5580
      %v5624 = vunpack.c.l.b16 %v5581
      %v5625 = vunpack.c.h.b16 %v5581
      %v5626 = vunpack.c.l.b16 %v5582
      %v5627 = vunpack.c.h.b16 %v5582
      %v5628 = vunpack.c.l.b16 %v5583
      %v5629 = vunpack.c.h.b16 %v5583
      %v5630 = vunpack.c.l.b16 %v5584
      %v5631 = vunpack.c.h.b16 %v5584
      %v5632 = vunpack.c.l.b16 %v5585
      %v5633 = vunpack.c.h.b16 %v5585
      %v5634 = vpack.c.b16 %v5604, %v5602
      %v5635 = vpack.c.b16 %v5605, %v5603
      %v5636 = vpack.c.b16 %v5608, %v5606
      %v5637 = vpack.c.b16 %v5609, %v5607
      %v5638 = vpack.c.b16 %v5612, %v5610
      %v5639 = vpack.c.b16 %v5613, %v5611
      %v5640 = vpack.c.b16 %v5616, %v5614
      %v5641 = vpack.c.b16 %v5617, %v5615
      %v5642 = vpack.c.b16 %v5620, %v5618
      %v5643 = vpack.c.b16 %v5621, %v5619
      %v5644 = vpack.c.b16 %v5624, %v5622
      %v5645 = vpack.c.b16 %v5625, %v5623
      %v5646 = vpack.c.b16 %v5628, %v5626
      %v5647 = vpack.c.b16 %v5629, %v5627
      %v5648 = vpack.c.b16 %v5632, %v5630
      %v5649 = vpack.c.b16 %v5633, %v5631
      %5666 = vmatprep.subr.bf16.mxu0 %v5635
      %5667 = vmatpush1.bf16.msra.mxu0 %v5634
      %5668 = vmatprep.subr.bf16.mxu0 %v5637
      %5669 = vmatpush1.bf16.msra.mxu0 %v5636
      %5670 = vmatprep.subr.bf16.mxu0 %v5639
      %5671 = vmatpush1.bf16.msra.mxu0 %v5638
      %5672 = vmatprep.subr.bf16.mxu0 %v5641
      %5673 = vmatpush1.bf16.msra.mxu0 %v5640
      %5674 = vmatprep.subr.bf16.mxu0 %v5643
      %5675 = vmatpush1.bf16.msra.mxu0 %v5642
      %5676 = vmatprep.subr.bf16.mxu0 %v5645
      %5677 = vmatpush1.bf16.msra.mxu0 %v5644
      %5678 = vmatprep.subr.bf16.mxu0 %v5647
      %5679 = vmatpush1.bf16.msra.mxu0 %v5646
      %5680 = vmatprep.subr.bf16.mxu0 %v5649
      %5681 = vmatpush1.bf16.msra.mxu0 %v5648
      %5682 = vmatprep.subr.bf16.mxu0 0
      %5683 = vmatpush1.bf16.msra.mxu0 0
      %5684 = vmatprep.subr.bf16.mxu0 0
      %5685 = vmatpush1.bf16.msra.mxu0 0
      %5686 = vmatprep.subr.bf16.mxu0 0
      %5687 = vmatpush1.bf16.msra.mxu0 0
      %5688 = vmatprep.subr.bf16.mxu0 0
      %5689 = vmatpush1.bf16.msra.mxu0 0
      %5690 = vmatprep.subr.bf16.mxu0 0
      %5691 = vmatpush1.bf16.msra.mxu0 0
      %5692 = vmatprep.subr.bf16.mxu0 0
      %5693 = vmatpush1.bf16.msra.mxu0 0
      %5694 = vmatprep.subr.bf16.mxu0 0
      %5695 = vmatpush1.bf16.msra.mxu0 0
      %5696 = vmatprep.subr.bf16.mxu0 0
      %5697 = vmatpush1.bf16.msra.mxu0 0
      %5698 = vmatprep.mubr.bf16.mxu0 0
      %5699 = vmatmul.mubr.bf16.gmra.mrb[0].mxu0 %v5568
      %v5700 = vpop.f32.mrb[0].mxu0
      %v5701 = vadd.f32 0.0, %v5700
      %v5702 = vpop.f32.mrb[0].mxu0
      %v5703 = vadd.f32 0.0, %v5702
      %v5704 = vpop.f32.mrb[0].mxu0
      %v5705 = vadd.f32 0.0, %v5704
      %v5706 = vpop.f32.mrb[0].mxu0
      %v5707 = vadd.f32 0.0, %v5706
      %5708 = vdwg.mxu0
      %v5709 = vadd.f32 %v5564, %v5701
      %v5710 = vadd.f32 %v5565, %v5703
      %v5711 = vadd.f32 %v5566, %v5705
      %v5712 = vadd.f32 %v5567, %v5707
      %v5713 = vpack.c.bf16 %v4503, %v4500
      %s5714 = scalar_lea.vmem %s7, 1024
      %v5715 = vld [vmem:[%s5714] sm:$0xff]
      %v5716 = vld [vmem:[%s5714 + $0x8] sm:$0xff]
      %v5717 = vld [vmem:[%s5714 + $0x10] sm:$0xff]
      %v5718 = vld [vmem:[%s5714 + $0x18] sm:$0xff]
      %v5719 = vld [vmem:[%s5714 + $0x20] sm:$0xff]
      %v5720 = vld [vmem:[%s5714 + $0x28] sm:$0xff]
      %v5721 = vld [vmem:[%s5714 + $0x30] sm:$0xff]
      %v5722 = vld [vmem:[%s5714 + $0x38] sm:$0xff]
      %v5723 = vld [vmem:[%s5714 + $0x40] sm:$0xff]
      %v5724 = vld [vmem:[%s5714 + $0x48] sm:$0xff]
      %v5725 = vld [vmem:[%s5714 + $0x50] sm:$0xff]
      %v5726 = vld [vmem:[%s5714 + $0x58] sm:$0xff]
      %v5727 = vld [vmem:[%s5714 + $0x60] sm:$0xff]
      %v5728 = vld [vmem:[%s5714 + $0x68] sm:$0xff]
      %v5729 = vld [vmem:[%s5714 + $0x70] sm:$0xff]
      %v5730 = vld [vmem:[%s5714 + $0x78] sm:$0xff]
      %v5747 = vunpack.c.l.b16 %v5715
      %v5748 = vunpack.c.h.b16 %v5715
      %v5749 = vunpack.c.l.b16 %v5716
      %v5750 = vunpack.c.h.b16 %v5716
      %v5751 = vunpack.c.l.b16 %v5717
      %v5752 = vunpack.c.h.b16 %v5717
      %v5753 = vunpack.c.l.b16 %v5718
      %v5754 = vunpack.c.h.b16 %v5718
      %v5755 = vunpack.c.l.b16 %v5719
      %v5756 = vunpack.c.h.b16 %v5719
      %v5757 = vunpack.c.l.b16 %v5720
      %v5758 = vunpack.c.h.b16 %v5720
      %v5759 = vunpack.c.l.b16 %v5721
      %v5760 = vunpack.c.h.b16 %v5721
      %v5761 = vunpack.c.l.b16 %v5722
      %v5762 = vunpack.c.h.b16 %v5722
      %v5763 = vunpack.c.l.b16 %v5723
      %v5764 = vunpack.c.h.b16 %v5723
      %v5765 = vunpack.c.l.b16 %v5724
      %v5766 = vunpack.c.h.b16 %v5724
      %v5767 = vunpack.c.l.b16 %v5725
      %v5768 = vunpack.c.h.b16 %v5725
      %v5769 = vunpack.c.l.b16 %v5726
      %v5770 = vunpack.c.h.b16 %v5726
      %v5771 = vunpack.c.l.b16 %v5727
      %v5772 = vunpack.c.h.b16 %v5727
      %v5773 = vunpack.c.l.b16 %v5728
      %v5774 = vunpack.c.h.b16 %v5728
      %v5775 = vunpack.c.l.b16 %v5729
      %v5776 = vunpack.c.h.b16 %v5729
      %v5777 = vunpack.c.l.b16 %v5730
      %v5778 = vunpack.c.h.b16 %v5730
      %v5779 = vpack.c.b16 %v5749, %v5747
      %v5780 = vpack.c.b16 %v5750, %v5748
      %v5781 = vpack.c.b16 %v5753, %v5751
      %v5782 = vpack.c.b16 %v5754, %v5752
      %v5783 = vpack.c.b16 %v5757, %v5755
      %v5784 = vpack.c.b16 %v5758, %v5756
      %v5785 = vpack.c.b16 %v5761, %v5759
      %v5786 = vpack.c.b16 %v5762, %v5760
      %v5787 = vpack.c.b16 %v5765, %v5763
      %v5788 = vpack.c.b16 %v5766, %v5764
      %v5789 = vpack.c.b16 %v5769, %v5767
      %v5790 = vpack.c.b16 %v5770, %v5768
      %v5791 = vpack.c.b16 %v5773, %v5771
      %v5792 = vpack.c.b16 %v5774, %v5772
      %v5793 = vpack.c.b16 %v5777, %v5775
      %v5794 = vpack.c.b16 %v5778, %v5776
      %5811 = vmatprep.subr.bf16.mxu0 %v5780
      %5812 = vmatpush1.bf16.msra.mxu0 %v5779
      %5813 = vmatprep.subr.bf16.mxu0 %v5782
      %5814 = vmatpush1.bf16.msra.mxu0 %v5781
      %5815 = vmatprep.subr.bf16.mxu0 %v5784
      %5816 = vmatpush1.bf16.msra.mxu0 %v5783
      %5817 = vmatprep.subr.bf16.mxu0 %v5786
      %5818 = vmatpush1.bf16.msra.mxu0 %v5785
      %5819 = vmatprep.subr.bf16.mxu0 %v5788
      %5820 = vmatpush1.bf16.msra.mxu0 %v5787
      %5821 = vmatprep.subr.bf16.mxu0 %v5790
      %5822 = vmatpush1.bf16.msra.mxu0 %v5789
      %5823 = vmatprep.subr.bf16.mxu0 %v5792
      %5824 = vmatpush1.bf16.msra.mxu0 %v5791
      %5825 = vmatprep.subr.bf16.mxu0 %v5794
      %5826 = vmatpush1.bf16.msra.mxu0 %v5793
      %5827 = vmatprep.subr.bf16.mxu0 0
      %5828 = vmatpush1.bf16.msra.mxu0 0
      %5829 = vmatprep.subr.bf16.mxu0 0
      %5830 = vmatpush1.bf16.msra.mxu0 0
      %5831 = vmatprep.subr.bf16.mxu0 0
      %5832 = vmatpush1.bf16.msra.mxu0 0
      %5833 = vmatprep.subr.bf16.mxu0 0
      %5834 = vmatpush1.bf16.msra.mxu0 0
      %5835 = vmatprep.subr.bf16.mxu0 0
      %5836 = vmatpush1.bf16.msra.mxu0 0
      %5837 = vmatprep.subr.bf16.mxu0 0
      %5838 = vmatpush1.bf16.msra.mxu0 0
      %5839 = vmatprep.subr.bf16.mxu0 0
      %5840 = vmatpush1.bf16.msra.mxu0 0
      %5841 = vmatprep.subr.bf16.mxu0 0
      %5842 = vmatpush1.bf16.msra.mxu0 0
      %5843 = vmatprep.mubr.bf16.mxu0 0
      %5844 = vmatmul.mubr.bf16.gmra.mrb[0].mxu0 %v5713
      %v5845 = vpop.f32.mrb[0].mxu0
      %v5846 = vadd.f32 0.0, %v5845
      %v5847 = vpop.f32.mrb[0].mxu0
      %v5848 = vadd.f32 0.0, %v5847
      %v5849 = vpop.f32.mrb[0].mxu0
      %v5850 = vadd.f32 0.0, %v5849
      %v5851 = vpop.f32.mrb[0].mxu0
      %v5852 = vadd.f32 0.0, %v5851
      %5853 = vdwg.mxu0
      %v5854 = vadd.f32 %v5709, %v5846
      %v5855 = vadd.f32 %v5710, %v5848
      %v5856 = vadd.f32 %v5711, %v5850
      %v5857 = vadd.f32 %v5712, %v5852
      %v5858 = vpack.c.bf16 %v4511, %v4508
      %s5859 = scalar_lea.vmem %s7, 1152
      %v5860 = vld [vmem:[%s5859] sm:$0xff]
      %v5861 = vld [vmem:[%s5859 + $0x8] sm:$0xff]
      %v5862 = vld [vmem:[%s5859 + $0x10] sm:$0xff]
      %v5863 = vld [vmem:[%s5859 + $0x18] sm:$0xff]
      %v5864 = vld [vmem:[%s5859 + $0x20] sm:$0xff]
      %v5865 = vld [vmem:[%s5859 + $0x28] sm:$0xff]
      %v5866 = vld [vmem:[%s5859 + $0x30] sm:$0xff]
      %v5867 = vld [vmem:[%s5859 + $0x38] sm:$0xff]
      %v5868 = vld [vmem:[%s5859 + $0x40] sm:$0xff]
      %v5869 = vld [vmem:[%s5859 + $0x48] sm:$0xff]
      %v5870 = vld [vmem:[%s5859 + $0x50] sm:$0xff]
      %v5871 = vld [vmem:[%s5859 + $0x58] sm:$0xff]
      %v5872 = vld [vmem:[%s5859 + $0x60] sm:$0xff]
      %v5873 = vld [vmem:[%s5859 + $0x68] sm:$0xff]
      %v5874 = vld [vmem:[%s5859 + $0x70] sm:$0xff]
      %v5875 = vld [vmem:[%s5859 + $0x78] sm:$0xff]
      %v5892 = vunpack.c.l.b16 %v5860
      %v5893 = vunpack.c.h.b16 %v5860
      %v5894 = vunpack.c.l.b16 %v5861
      %v5895 = vunpack.c.h.b16 %v5861
      %v5896 = vunpack.c.l.b16 %v5862
      %v5897 = vunpack.c.h.b16 %v5862
      %v5898 = vunpack.c.l.b16 %v5863
      %v5899 = vunpack.c.h.b16 %v5863
      %v5900 = vunpack.c.l.b16 %v5864
      %v5901 = vunpack.c.h.b16 %v5864
      %v5902 = vunpack.c.l.b16 %v5865
      %v5903 = vunpack.c.h.b16 %v5865
      %v5904 = vunpack.c.l.b16 %v5866
      %v5905 = vunpack.c.h.b16 %v5866
      %v5906 = vunpack.c.l.b16 %v5867
      %v5907 = vunpack.c.h.b16 %v5867
      %v5908 = vunpack.c.l.b16 %v5868
      %v5909 = vunpack.c.h.b16 %v5868
      %v5910 = vunpack.c.l.b16 %v5869
      %v5911 = vunpack.c.h.b16 %v5869
      %v5912 = vunpack.c.l.b16 %v5870
      %v5913 = vunpack.c.h.b16 %v5870
      %v5914 = vunpack.c.l.b16 %v5871
      %v5915 = vunpack.c.h.b16 %v5871
      %v5916 = vunpack.c.l.b16 %v5872
      %v5917 = vunpack.c.h.b16 %v5872
      %v5918 = vunpack.c.l.b16 %v5873
      %v5919 = vunpack.c.h.b16 %v5873
      %v5920 = vunpack.c.l.b16 %v5874
      %v5921 = vunpack.c.h.b16 %v5874
      %v5922 = vunpack.c.l.b16 %v5875
      %v5923 = vunpack.c.h.b16 %v5875
      %v5924 = vpack.c.b16 %v5894, %v5892
      %v5925 = vpack.c.b16 %v5895, %v5893
      %v5926 = vpack.c.b16 %v5898, %v5896
      %v5927 = vpack.c.b16 %v5899, %v5897
      %v5928 = vpack.c.b16 %v5902, %v5900
      %v5929 = vpack.c.b16 %v5903, %v5901
      %v5930 = vpack.c.b16 %v5906, %v5904
      %v5931 = vpack.c.b16 %v5907, %v5905
      %v5932 = vpack.c.b16 %v5910, %v5908
      %v5933 = vpack.c.b16 %v5911, %v5909
      %v5934 = vpack.c.b16 %v5914, %v5912
      %v5935 = vpack.c.b16 %v5915, %v5913
      %v5936 = vpack.c.b16 %v5918, %v5916
      %v5937 = vpack.c.b16 %v5919, %v5917
      %v5938 = vpack.c.b16 %v5922, %v5920
      %v5939 = vpack.c.b16 %v5923, %v5921
      %5956 = vmatprep.subr.bf16.mxu0 %v5925
      %5957 = vmatpush1.bf16.msra.mxu0 %v5924
      %5958 = vmatprep.subr.bf16.mxu0 %v5927
      %5959 = vmatpush1.bf16.msra.mxu0 %v5926
      %5960 = vmatprep.subr.bf16.mxu0 %v5929
      %5961 = vmatpush1.bf16.msra.mxu0 %v5928
      %5962 = vmatprep.subr.bf16.mxu0 %v5931
      %5963 = vmatpush1.bf16.msra.mxu0 %v5930
      %5964 = vmatprep.subr.bf16.mxu0 %v5933
      %5965 = vmatpush1.bf16.msra.mxu0 %v5932
      %5966 = vmatprep.subr.bf16.mxu0 %v5935
      %5967 = vmatpush1.bf16.msra.mxu0 %v5934
      %5968 = vmatprep.subr.bf16.mxu0 %v5937
      %5969 = vmatpush1.bf16.msra.mxu0 %v5936
      %5970 = vmatprep.subr.bf16.mxu0 %v5939
      %5971 = vmatpush1.bf16.msra.mxu0 %v5938
      %5972 = vmatprep.subr.bf16.mxu0 0
      %5973 = vmatpush1.bf16.msra.mxu0 0
      %5974 = vmatprep.subr.bf16.mxu0 0
      %5975 = vmatpush1.bf16.msra.mxu0 0
      %5976 = vmatprep.subr.bf16.mxu0 0
      %5977 = vmatpush1.bf16.msra.mxu0 0
      %5978 = vmatprep.subr.bf16.mxu0 0
      %5979 = vmatpush1.bf16.msra.mxu0 0
      %5980 = vmatprep.subr.bf16.mxu0 0
      %5981 = vmatpush1.bf16.msra.mxu0 0
      %5982 = vmatprep.subr.bf16.mxu0 0
      %5983 = vmatpush1.bf16.msra.mxu0 0
      %5984 = vmatprep.subr.bf16.mxu0 0
      %5985 = vmatpush1.bf16.msra.mxu0 0
      %5986 = vmatprep.subr.bf16.mxu0 0
      %5987 = vmatpush1.bf16.msra.mxu0 0
      %5988 = vmatprep.mubr.bf16.mxu0 0
      %5989 = vmatmul.mubr.bf16.gmra.mrb[0].mxu0 %v5858
      %v5990 = vpop.f32.mrb[0].mxu0
      %v5991 = vadd.f32 0.0, %v5990
      %v5992 = vpop.f32.mrb[0].mxu0
      %v5993 = vadd.f32 0.0, %v5992
      %v5994 = vpop.f32.mrb[0].mxu0
      %v5995 = vadd.f32 0.0, %v5994
      %v5996 = vpop.f32.mrb[0].mxu0
      %v5997 = vadd.f32 0.0, %v5996
      %5998 = vdwg.mxu0
      %v5999 = vadd.f32 %v5854, %v5991
      %v6000 = vadd.f32 %v5855, %v5993
      %v6001 = vadd.f32 %v5856, %v5995
      %v6002 = vadd.f32 %v5857, %v5997
      %v6003 = vpack.c.bf16 %v4519, %v4516
      %s6004 = scalar_lea.vmem %s7, 1280
      %v6005 = vld [vmem:[%s6004] sm:$0xff]
      %v6006 = vld [vmem:[%s6004 + $0x8] sm:$0xff]
      %v6007 = vld [vmem:[%s6004 + $0x10] sm:$0xff]
      %v6008 = vld [vmem:[%s6004 + $0x18] sm:$0xff]
      %v6009 = vld [vmem:[%s6004 + $0x20] sm:$0xff]
      %v6010 = vld [vmem:[%s6004 + $0x28] sm:$0xff]
      %v6011 = vld [vmem:[%s6004 + $0x30] sm:$0xff]
      %v6012 = vld [vmem:[%s6004 + $0x38] sm:$0xff]
      %v6013 = vld [vmem:[%s6004 + $0x40] sm:$0xff]
      %v6014 = vld [vmem:[%s6004 + $0x48] sm:$0xff]
      %v6015 = vld [vmem:[%s6004 + $0x50] sm:$0xff]
      %v6016 = vld [vmem:[%s6004 + $0x58] sm:$0xff]
      %v6017 = vld [vmem:[%s6004 + $0x60] sm:$0xff]
      %v6018 = vld [vmem:[%s6004 + $0x68] sm:$0xff]
      %v6019 = vld [vmem:[%s6004 + $0x70] sm:$0xff]
      %v6020 = vld [vmem:[%s6004 + $0x78] sm:$0xff]
      %v6037 = vunpack.c.l.b16 %v6005
      %v6038 = vunpack.c.h.b16 %v6005
      %v6039 = vunpack.c.l.b16 %v6006
      %v6040 = vunpack.c.h.b16 %v6006
      %v6041 = vunpack.c.l.b16 %v6007
      %v6042 = vunpack.c.h.b16 %v6007
      %v6043 = vunpack.c.l.b16 %v6008
      %v6044 = vunpack.c.h.b16 %v6008
      %v6045 = vunpack.c.l.b16 %v6009
      %v6046 = vunpack.c.h.b16 %v6009
      %v6047 = vunpack.c.l.b16 %v6010
      %v6048 = vunpack.c.h.b16 %v6010
      %v6049 = vunpack.c.l.b16 %v6011
      %v6050 = vunpack.c.h.b16 %v6011
      %v6051 = vunpack.c.l.b16 %v6012
      %v6052 = vunpack.c.h.b16 %v6012
      %v6053 = vunpack.c.l.b16 %v6013
      %v6054 = vunpack.c.h.b16 %v6013
      %v6055 = vunpack.c.l.b16 %v6014
      %v6056 = vunpack.c.h.b16 %v6014
      %v6057 = vunpack.c.l.b16 %v6015
      %v6058 = vunpack.c.h.b16 %v6015
      %v6059 = vunpack.c.l.b16 %v6016
      %v6060 = vunpack.c.h.b16 %v6016
      %v6061 = vunpack.c.l.b16 %v6017
      %v6062 = vunpack.c.h.b16 %v6017
      %v6063 = vunpack.c.l.b16 %v6018
      %v6064 = vunpack.c.h.b16 %v6018
      %v6065 = vunpack.c.l.b16 %v6019
      %v6066 = vunpack.c.h.b16 %v6019
      %v6067 = vunpack.c.l.b16 %v6020
      %v6068 = vunpack.c.h.b16 %v6020
      %v6069 = vpack.c.b16 %v6039, %v6037
      %v6070 = vpack.c.b16 %v6040, %v6038
      %v6071 = vpack.c.b16 %v6043, %v6041
      %v6072 = vpack.c.b16 %v6044, %v6042
      %v6073 = vpack.c.b16 %v6047, %v6045
      %v6074 = vpack.c.b16 %v6048, %v6046
      %v6075 = vpack.c.b16 %v6051, %v6049
      %v6076 = vpack.c.b16 %v6052, %v6050
      %v6077 = vpack.c.b16 %v6055, %v6053
      %v6078 = vpack.c.b16 %v6056, %v6054
      %v6079 = vpack.c.b16 %v6059, %v6057
      %v6080 = vpack.c.b16 %v6060, %v6058
      %v6081 = vpack.c.b16 %v6063, %v6061
      %v6082 = vpack.c.b16 %v6064, %v6062
      %v6083 = vpack.c.b16 %v6067, %v6065
      %v6084 = vpack.c.b16 %v6068, %v6066
      %6101 = vmatprep.subr.bf16.mxu0 %v6070
      %6102 = vmatpush1.bf16.msra.mxu0 %v6069
      %6103 = vmatprep.subr.bf16.mxu0 %v6072
      %6104 = vmatpush1.bf16.msra.mxu0 %v6071
      %6105 = vmatprep.subr.bf16.mxu0 %v6074
      %6106 = vmatpush1.bf16.msra.mxu0 %v6073
      %6107 = vmatprep.subr.bf16.mxu0 %v6076
      %6108 = vmatpush1.bf16.msra.mxu0 %v6075
      %6109 = vmatprep.subr.bf16.mxu0 %v6078
      %6110 = vmatpush1.bf16.msra.mxu0 %v6077
      %6111 = vmatprep.subr.bf16.mxu0 %v6080
      %6112 = vmatpush1.bf16.msra.mxu0 %v6079
      %6113 = vmatprep.subr.bf16.mxu0 %v6082
      %6114 = vmatpush1.bf16.msra.mxu0 %v6081
      %6115 = vmatprep.subr.bf16.mxu0 %v6084
      %6116 = vmatpush1.bf16.msra.mxu0 %v6083
      %6117 = vmatprep.subr.bf16.mxu0 0
      %6118 = vmatpush1.bf16.msra.mxu0 0
      %6119 = vmatprep.subr.bf16.mxu0 0
      %6120 = vmatpush1.bf16.msra.mxu0 0
      %6121 = vmatprep.subr.bf16.mxu0 0
      %6122 = vmatpush1.bf16.msra.mxu0 0
      %6123 = vmatprep.subr.bf16.mxu0 0
      %6124 = vmatpush1.bf16.msra.mxu0 0
      %6125 = vmatprep.subr.bf16.mxu0 0
      %6126 = vmatpush1.bf16.msra.mxu0 0
      %6127 = vmatprep.subr.bf16.mxu0 0
      %6128 = vmatpush1.bf16.msra.mxu0 0
      %6129 = vmatprep.subr.bf16.mxu0 0
      %6130 = vmatpush1.bf16.msra.mxu0 0
      %6131 = vmatprep.subr.bf16.mxu0 0
      %6132 = vmatpush1.bf16.msra.mxu0 0
      %6133 = vmatprep.mubr.bf16.mxu0 0
      %6134 = vmatmul.mubr.bf16.gmra.mrb[0].mxu0 %v6003
      %v6135 = vpop.f32.mrb[0].mxu0
      %v6136 = vadd.f32 0.0, %v6135
      %v6137 = vpop.f32.mrb[0].mxu0
      %v6138 = vadd.f32 0.0, %v6137
      %v6139 = vpop.f32.mrb[0].mxu0
      %v6140 = vadd.f32 0.0, %v6139
      %v6141 = vpop.f32.mrb[0].mxu0
      %v6142 = vadd.f32 0.0, %v6141
      %6143 = vdwg.mxu0
      %v6144 = vadd.f32 %v5999, %v6136
      %v6145 = vadd.f32 %v6000, %v6138
      %v6146 = vadd.f32 %v6001, %v6140
      %v6147 = vadd.f32 %v6002, %v6142
      %v6148 = vpack.c.bf16 %v4527, %v4524
      %s6149 = scalar_lea.vmem %s7, 1408
      %v6150 = vld [vmem:[%s6149] sm:$0xff]
      %v6151 = vld [vmem:[%s6149 + $0x8] sm:$0xff]
      %v6152 = vld [vmem:[%s6149 + $0x10] sm:$0xff]
      %v6153 = vld [vmem:[%s6149 + $0x18] sm:$0xff]
      %v6154 = vld [vmem:[%s6149 + $0x20] sm:$0xff]
      %v6155 = vld [vmem:[%s6149 + $0x28] sm:$0xff]
      %v6156 = vld [vmem:[%s6149 + $0x30] sm:$0xff]
      %v6157 = vld [vmem:[%s6149 + $0x38] sm:$0xff]
      %v6158 = vld [vmem:[%s6149 + $0x40] sm:$0xff]
      %v6159 = vld [vmem:[%s6149 + $0x48] sm:$0xff]
      %v6160 = vld [vmem:[%s6149 + $0x50] sm:$0xff]
      %v6161 = vld [vmem:[%s6149 + $0x58] sm:$0xff]
      %v6162 = vld [vmem:[%s6149 + $0x60] sm:$0xff]
      %v6163 = vld [vmem:[%s6149 + $0x68] sm:$0xff]
      %v6164 = vld [vmem:[%s6149 + $0x70] sm:$0xff]
      %v6165 = vld [vmem:[%s6149 + $0x78] sm:$0xff]
      %v6182 = vunpack.c.l.b16 %v6150
      %v6183 = vunpack.c.h.b16 %v6150
      %v6184 = vunpack.c.l.b16 %v6151
      %v6185 = vunpack.c.h.b16 %v6151
      %v6186 = vunpack.c.l.b16 %v6152
      %v6187 = vunpack.c.h.b16 %v6152
      %v6188 = vunpack.c.l.b16 %v6153
      %v6189 = vunpack.c.h.b16 %v6153
      %v6190 = vunpack.c.l.b16 %v6154
      %v6191 = vunpack.c.h.b16 %v6154
      %v6192 = vunpack.c.l.b16 %v6155
      %v6193 = vunpack.c.h.b16 %v6155
      %v6194 = vunpack.c.l.b16 %v6156
      %v6195 = vunpack.c.h.b16 %v6156
      %v6196 = vunpack.c.l.b16 %v6157
      %v6197 = vunpack.c.h.b16 %v6157
      %v6198 = vunpack.c.l.b16 %v6158
      %v6199 = vunpack.c.h.b16 %v6158
      %v6200 = vunpack.c.l.b16 %v6159
      %v6201 = vunpack.c.h.b16 %v6159
      %v6202 = vunpack.c.l.b16 %v6160
      %v6203 = vunpack.c.h.b16 %v6160
      %v6204 = vunpack.c.l.b16 %v6161
      %v6205 = vunpack.c.h.b16 %v6161
      %v6206 = vunpack.c.l.b16 %v6162
      %v6207 = vunpack.c.h.b16 %v6162
      %v6208 = vunpack.c.l.b16 %v6163
      %v6209 = vunpack.c.h.b16 %v6163
      %v6210 = vunpack.c.l.b16 %v6164
      %v6211 = vunpack.c.h.b16 %v6164
      %v6212 = vunpack.c.l.b16 %v6165
      %v6213 = vunpack.c.h.b16 %v6165
      %v6214 = vpack.c.b16 %v6184, %v6182
      %v6215 = vpack.c.b16 %v6185, %v6183
      %v6216 = vpack.c.b16 %v6188, %v6186
      %v6217 = vpack.c.b16 %v6189, %v6187
      %v6218 = vpack.c.b16 %v6192, %v6190
      %v6219 = vpack.c.b16 %v6193, %v6191
      %v6220 = vpack.c.b16 %v6196, %v6194
      %v6221 = vpack.c.b16 %v6197, %v6195
      %v6222 = vpack.c.b16 %v6200, %v6198
      %v6223 = vpack.c.b16 %v6201, %v6199
      %v6224 = vpack.c.b16 %v6204, %v6202
      %v6225 = vpack.c.b16 %v6205, %v6203
      %v6226 = vpack.c.b16 %v6208, %v6206
      %v6227 = vpack.c.b16 %v6209, %v6207
      %v6228 = vpack.c.b16 %v6212, %v6210
      %v6229 = vpack.c.b16 %v6213, %v6211
      %6246 = vmatprep.subr.bf16.mxu0 %v6215
      %6247 = vmatpush1.bf16.msra.mxu0 %v6214
      %6248 = vmatprep.subr.bf16.mxu0 %v6217
      %6249 = vmatpush1.bf16.msra.mxu0 %v6216
      %6250 = vmatprep.subr.bf16.mxu0 %v6219
      %6251 = vmatpush1.bf16.msra.mxu0 %v6218
      %6252 = vmatprep.subr.bf16.mxu0 %v6221
      %6253 = vmatpush1.bf16.msra.mxu0 %v6220
      %6254 = vmatprep.subr.bf16.mxu0 %v6223
      %6255 = vmatpush1.bf16.msra.mxu0 %v6222
      %6256 = vmatprep.subr.bf16.mxu0 %v6225
      %6257 = vmatpush1.bf16.msra.mxu0 %v6224
      %6258 = vmatprep.subr.bf16.mxu0 %v6227
      %6259 = vmatpush1.bf16.msra.mxu0 %v6226
      %6260 = vmatprep.subr.bf16.mxu0 %v6229
      %6261 = vmatpush1.bf16.msra.mxu0 %v6228
      %6262 = vmatprep.subr.bf16.mxu0 0
      %6263 = vmatpush1.bf16.msra.mxu0 0
      %6264 = vmatprep.subr.bf16.mxu0 0
      %6265 = vmatpush1.bf16.msra.mxu0 0
      %6266 = vmatprep.subr.bf16.mxu0 0
      %6267 = vmatpush1.bf16.msra.mxu0 0
      %6268 = vmatprep.subr.bf16.mxu0 0
      %6269 = vmatpush1.bf16.msra.mxu0 0
      %6270 = vmatprep.subr.bf16.mxu0 0
      %6271 = vmatpush1.bf16.msra.mxu0 0
      %6272 = vmatprep.subr.bf16.mxu0 0
      %6273 = vmatpush1.bf16.msra.mxu0 0
      %6274 = vmatprep.subr.bf16.mxu0 0
      %6275 = vmatpush1.bf16.msra.mxu0 0
      %6276 = vmatprep.subr.bf16.mxu0 0
      %6277 = vmatpush1.bf16.msra.mxu0 0
      %6278 = vmatprep.mubr.bf16.mxu0 0
      %6279 = vmatmul.mubr.bf16.gmra.mrb[0].mxu0 %v6148
      %v6280 = vpop.f32.mrb[0].mxu0
      %v6281 = vadd.f32 0.0, %v6280
      %v6282 = vpop.f32.mrb[0].mxu0
      %v6283 = vadd.f32 0.0, %v6282
      %v6284 = vpop.f32.mrb[0].mxu0
      %v6285 = vadd.f32 0.0, %v6284
      %v6286 = vpop.f32.mrb[0].mxu0
      %v6287 = vadd.f32 0.0, %v6286
      %6288 = vdwg.mxu0
      %v6289 = vadd.f32 %v6144, %v6281
      %v6290 = vadd.f32 %v6145, %v6283
      %v6291 = vadd.f32 %v6146, %v6285
      %v6292 = vadd.f32 %v6147, %v6287
      %v6293 = vpack.c.bf16 %v4535, %v4532
      %s6294 = scalar_lea.vmem %s7, 1536
      %v6295 = vld [vmem:[%s6294] sm:$0xff]
      %v6296 = vld [vmem:[%s6294 + $0x8] sm:$0xff]
      %v6297 = vld [vmem:[%s6294 + $0x10] sm:$0xff]
      %v6298 = vld [vmem:[%s6294 + $0x18] sm:$0xff]
      %v6299 = vld [vmem:[%s6294 + $0x20] sm:$0xff]
      %v6300 = vld [vmem:[%s6294 + $0x28] sm:$0xff]
      %v6301 = vld [vmem:[%s6294 + $0x30] sm:$0xff]
      %v6302 = vld [vmem:[%s6294 + $0x38] sm:$0xff]
      %v6303 = vld [vmem:[%s6294 + $0x40] sm:$0xff]
      %v6304 = vld [vmem:[%s6294 + $0x48] sm:$0xff]
      %v6305 = vld [vmem:[%s6294 + $0x50] sm:$0xff]
      %v6306 = vld [vmem:[%s6294 + $0x58] sm:$0xff]
      %v6307 = vld [vmem:[%s6294 + $0x60] sm:$0xff]
      %v6308 = vld [vmem:[%s6294 + $0x68] sm:$0xff]
      %v6309 = vld [vmem:[%s6294 + $0x70] sm:$0xff]
      %v6310 = vld [vmem:[%s6294 + $0x78] sm:$0xff]
      %v6327 = vunpack.c.l.b16 %v6295
      %v6328 = vunpack.c.h.b16 %v6295
      %v6329 = vunpack.c.l.b16 %v6296
      %v6330 = vunpack.c.h.b16 %v6296
      %v6331 = vunpack.c.l.b16 %v6297
      %v6332 = vunpack.c.h.b16 %v6297
      %v6333 = vunpack.c.l.b16 %v6298
      %v6334 = vunpack.c.h.b16 %v6298
      %v6335 = vunpack.c.l.b16 %v6299
      %v6336 = vunpack.c.h.b16 %v6299
      %v6337 = vunpack.c.l.b16 %v6300
      %v6338 = vunpack.c.h.b16 %v6300
      %v6339 = vunpack.c.l.b16 %v6301
      %v6340 = vunpack.c.h.b16 %v6301
      %v6341 = vunpack.c.l.b16 %v6302
      %v6342 = vunpack.c.h.b16 %v6302
      %v6343 = vunpack.c.l.b16 %v6303
      %v6344 = vunpack.c.h.b16 %v6303
      %v6345 = vunpack.c.l.b16 %v6304
      %v6346 = vunpack.c.h.b16 %v6304
      %v6347 = vunpack.c.l.b16 %v6305
      %v6348 = vunpack.c.h.b16 %v6305
      %v6349 = vunpack.c.l.b16 %v6306
      %v6350 = vunpack.c.h.b16 %v6306
      %v6351 = vunpack.c.l.b16 %v6307
      %v6352 = vunpack.c.h.b16 %v6307
      %v6353 = vunpack.c.l.b16 %v6308
      %v6354 = vunpack.c.h.b16 %v6308
      %v6355 = vunpack.c.l.b16 %v6309
      %v6356 = vunpack.c.h.b16 %v6309
      %v6357 = vunpack.c.l.b16 %v6310
      %v6358 = vunpack.c.h.b16 %v6310
      %v6359 = vpack.c.b16 %v6329, %v6327
      %v6360 = vpack.c.b16 %v6330, %v6328
      %v6361 = vpack.c.b16 %v6333, %v6331
      %v6362 = vpack.c.b16 %v6334, %v6332
      %v6363 = vpack.c.b16 %v6337, %v6335
      %v6364 = vpack.c.b16 %v6338, %v6336
      %v6365 = vpack.c.b16 %v6341, %v6339
      %v6366 = vpack.c.b16 %v6342, %v6340
      %v6367 = vpack.c.b16 %v6345, %v6343
      %v6368 = vpack.c.b16 %v6346, %v6344
      %v6369 = vpack.c.b16 %v6349, %v6347
      %v6370 = vpack.c.b16 %v6350, %v6348
      %v6371 = vpack.c.b16 %v6353, %v6351
      %v6372 = vpack.c.b16 %v6354, %v6352
      %v6373 = vpack.c.b16 %v6357, %v6355
      %v6374 = vpack.c.b16 %v6358, %v6356
      %6391 = vmatprep.subr.bf16.mxu0 %v6360
      %6392 = vmatpush1.bf16.msra.mxu0 %v6359
      %6393 = vmatprep.subr.bf16.mxu0 %v6362
      %6394 = vmatpush1.bf16.msra.mxu0 %v6361
      %6395 = vmatprep.subr.bf16.mxu0 %v6364
      %6396 = vmatpush1.bf16.msra.mxu0 %v6363
      %6397 = vmatprep.subr.bf16.mxu0 %v6366
      %6398 = vmatpush1.bf16.msra.mxu0 %v6365
      %6399 = vmatprep.subr.bf16.mxu0 %v6368
      %6400 = vmatpush1.bf16.msra.mxu0 %v6367
      %6401 = vmatprep.subr.bf16.mxu0 %v6370
      %6402 = vmatpush1.bf16.msra.mxu0 %v6369
      %6403 = vmatprep.subr.bf16.mxu0 %v6372
      %6404 = vmatpush1.bf16.msra.mxu0 %v6371
      %6405 = vmatprep.subr.bf16.mxu0 %v6374
      %6406 = vmatpush1.bf16.msra.mxu0 %v6373
      %6407 = vmatprep.subr.bf16.mxu0 0
      %6408 = vmatpush1.bf16.msra.mxu0 0
      %6409 = vmatprep.subr.bf16.mxu0 0
      %6410 = vmatpush1.bf16.msra.mxu0 0
      %6411 = vmatprep.subr.bf16.mxu0 0
      %6412 = vmatpush1.bf16.msra.mxu0 0
      %6413 = vmatprep.subr.bf16.mxu0 0
      %6414 = vmatpush1.bf16.msra.mxu0 0
      %6415 = vmatprep.subr.bf16.mxu0 0
      %6416 = vmatpush1.bf16.msra.mxu0 0
      %6417 = vmatprep.subr.bf16.mxu0 0
      %6418 = vmatpush1.bf16.msra.mxu0 0
      %6419 = vmatprep.subr.bf16.mxu0 0
      %6420 = vmatpush1.bf16.msra.mxu0 0
      %6421 = vmatprep.subr.bf16.mxu0 0
      %6422 = vmatpush1.bf16.msra.mxu0 0
      %6423 = vmatprep.mubr.bf16.mxu0 0
      %6424 = vmatmul.mubr.bf16.gmra.mrb[0].mxu0 %v6293
      %v6425 = vpop.f32.mrb[0].mxu0
      %v6426 = vadd.f32 0.0, %v6425
      %v6427 = vpop.f32.mrb[0].mxu0
      %v6428 = vadd.f32 0.0, %v6427
      %v6429 = vpop.f32.mrb[0].mxu0
      %v6430 = vadd.f32 0.0, %v6429
      %v6431 = vpop.f32.mrb[0].mxu0
      %v6432 = vadd.f32 0.0, %v6431
      %6433 = vdwg.mxu0
      %v6434 = vadd.f32 %v6289, %v6426
      %v6435 = vadd.f32 %v6290, %v6428
      %v6436 = vadd.f32 %v6291, %v6430
      %v6437 = vadd.f32 %v6292, %v6432
      %v6438 = vpack.c.bf16 %v4543, %v4540
      %s6439 = scalar_lea.vmem %s7, 1664
      %v6440 = vld [vmem:[%s6439] sm:$0xff]
      %v6441 = vld [vmem:[%s6439 + $0x8] sm:$0xff]
      %v6442 = vld [vmem:[%s6439 + $0x10] sm:$0xff]
      %v6443 = vld [vmem:[%s6439 + $0x18] sm:$0xff]
      %v6444 = vld [vmem:[%s6439 + $0x20] sm:$0xff]
      %v6445 = vld [vmem:[%s6439 + $0x28] sm:$0xff]
      %v6446 = vld [vmem:[%s6439 + $0x30] sm:$0xff]
      %v6447 = vld [vmem:[%s6439 + $0x38] sm:$0xff]
      %v6448 = vld [vmem:[%s6439 + $0x40] sm:$0xff]
      %v6449 = vld [vmem:[%s6439 + $0x48] sm:$0xff]
      %v6450 = vld [vmem:[%s6439 + $0x50] sm:$0xff]
      %v6451 = vld [vmem:[%s6439 + $0x58] sm:$0xff]
      %v6452 = vld [vmem:[%s6439 + $0x60] sm:$0xff]
      %v6453 = vld [vmem:[%s6439 + $0x68] sm:$0xff]
      %v6454 = vld [vmem:[%s6439 + $0x70] sm:$0xff]
      %v6455 = vld [vmem:[%s6439 + $0x78] sm:$0xff]
      %v6472 = vunpack.c.l.b16 %v6440
      %v6473 = vunpack.c.h.b16 %v6440
      %v6474 = vunpack.c.l.b16 %v6441
      %v6475 = vunpack.c.h.b16 %v6441
      %v6476 = vunpack.c.l.b16 %v6442
      %v6477 = vunpack.c.h.b16 %v6442
      %v6478 = vunpack.c.l.b16 %v6443
      %v6479 = vunpack.c.h.b16 %v6443
      %v6480 = vunpack.c.l.b16 %v6444
      %v6481 = vunpack.c.h.b16 %v6444
      %v6482 = vunpack.c.l.b16 %v6445
      %v6483 = vunpack.c.h.b16 %v6445
      %v6484 = vunpack.c.l.b16 %v6446
      %v6485 = vunpack.c.h.b16 %v6446
      %v6486 = vunpack.c.l.b16 %v6447
      %v6487 = vunpack.c.h.b16 %v6447
      %v6488 = vunpack.c.l.b16 %v6448
      %v6489 = vunpack.c.h.b16 %v6448
      %v6490 = vunpack.c.l.b16 %v6449
      %v6491 = vunpack.c.h.b16 %v6449
      %v6492 = vunpack.c.l.b16 %v6450
      %v6493 = vunpack.c.h.b16 %v6450
      %v6494 = vunpack.c.l.b16 %v6451
      %v6495 = vunpack.c.h.b16 %v6451
      %v6496 = vunpack.c.l.b16 %v6452
      %v6497 = vunpack.c.h.b16 %v6452
      %v6498 = vunpack.c.l.b16 %v6453
      %v6499 = vunpack.c.h.b16 %v6453
      %v6500 = vunpack.c.l.b16 %v6454
      %v6501 = vunpack.c.h.b16 %v6454
      %v6502 = vunpack.c.l.b16 %v6455
      %v6503 = vunpack.c.h.b16 %v6455
      %v6504 = vpack.c.b16 %v6474, %v6472
      %v6505 = vpack.c.b16 %v6475, %v6473
      %v6506 = vpack.c.b16 %v6478, %v6476
      %v6507 = vpack.c.b16 %v6479, %v6477
      %v6508 = vpack.c.b16 %v6482, %v6480
      %v6509 = vpack.c.b16 %v6483, %v6481
      %v6510 = vpack.c.b16 %v6486, %v6484
      %v6511 = vpack.c.b16 %v6487, %v6485
      %v6512 = vpack.c.b16 %v6490, %v6488
      %v6513 = vpack.c.b16 %v6491, %v6489
      %v6514 = vpack.c.b16 %v6494, %v6492
      %v6515 = vpack.c.b16 %v6495, %v6493
      %v6516 = vpack.c.b16 %v6498, %v6496
      %v6517 = vpack.c.b16 %v6499, %v6497
      %v6518 = vpack.c.b16 %v6502, %v6500
      %v6519 = vpack.c.b16 %v6503, %v6501
      %6536 = vmatprep.subr.bf16.mxu0 %v6505
      %6537 = vmatpush1.bf16.msra.mxu0 %v6504
      %6538 = vmatprep.subr.bf16.mxu0 %v6507
      %6539 = vmatpush1.bf16.msra.mxu0 %v6506
      %6540 = vmatprep.subr.bf16.mxu0 %v6509
      %6541 = vmatpush1.bf16.msra.mxu0 %v6508
      %6542 = vmatprep.subr.bf16.mxu0 %v6511
      %6543 = vmatpush1.bf16.msra.mxu0 %v6510
      %6544 = vmatprep.subr.bf16.mxu0 %v6513
      %6545 = vmatpush1.bf16.msra.mxu0 %v6512
      %6546 = vmatprep.subr.bf16.mxu0 %v6515
      %6547 = vmatpush1.bf16.msra.mxu0 %v6514
      %6548 = vmatprep.subr.bf16.mxu0 %v6517
      %6549 = vmatpush1.bf16.msra.mxu0 %v6516
      %6550 = vmatprep.subr.bf16.mxu0 %v6519
      %6551 = vmatpush1.bf16.msra.mxu0 %v6518
      %6552 = vmatprep.subr.bf16.mxu0 0
      %6553 = vmatpush1.bf16.msra.mxu0 0
      %6554 = vmatprep.subr.bf16.mxu0 0
      %6555 = vmatpush1.bf16.msra.mxu0 0
      %6556 = vmatprep.subr.bf16.mxu0 0
      %6557 = vmatpush1.bf16.msra.mxu0 0
      %6558 = vmatprep.subr.bf16.mxu0 0
      %6559 = vmatpush1.bf16.msra.mxu0 0
      %6560 = vmatprep.subr.bf16.mxu0 0
      %6561 = vmatpush1.bf16.msra.mxu0 0
      %6562 = vmatprep.subr.bf16.mxu0 0
      %6563 = vmatpush1.bf16.msra.mxu0 0
      %6564 = vmatprep.subr.bf16.mxu0 0
      %6565 = vmatpush1.bf16.msra.mxu0 0
      %6566 = vmatprep.subr.bf16.mxu0 0
      %6567 = vmatpush1.bf16.msra.mxu0 0
      %6568 = vmatprep.mubr.bf16.mxu0 0
      %6569 = vmatmul.mubr.bf16.gmra.mrb[0].mxu0 %v6438
      %v6570 = vpop.f32.mrb[0].mxu0
      %v6571 = vadd.f32 0.0, %v6570
      %v6572 = vpop.f32.mrb[0].mxu0
      %v6573 = vadd.f32 0.0, %v6572
      %v6574 = vpop.f32.mrb[0].mxu0
      %v6575 = vadd.f32 0.0, %v6574
      %v6576 = vpop.f32.mrb[0].mxu0
      %v6577 = vadd.f32 0.0, %v6576
      %6578 = vdwg.mxu0
      %v6579 = vadd.f32 %v6434, %v6571
      %v6580 = vadd.f32 %v6435, %v6573
      %v6581 = vadd.f32 %v6436, %v6575
      %v6582 = vadd.f32 %v6437, %v6577
      %v6583 = vpack.c.bf16 %v4551, %v4548
      %s6584 = scalar_lea.vmem %s7, 1792
      %v6585 = vld [vmem:[%s6584] sm:$0xff]
      %v6586 = vld [vmem:[%s6584 + $0x8] sm:$0xff]
      %v6587 = vld [vmem:[%s6584 + $0x10] sm:$0xff]
      %v6588 = vld [vmem:[%s6584 + $0x18] sm:$0xff]
      %v6589 = vld [vmem:[%s6584 + $0x20] sm:$0xff]
      %v6590 = vld [vmem:[%s6584 + $0x28] sm:$0xff]
      %v6591 = vld [vmem:[%s6584 + $0x30] sm:$0xff]
      %v6592 = vld [vmem:[%s6584 + $0x38] sm:$0xff]
      %v6593 = vld [vmem:[%s6584 + $0x40] sm:$0xff]
      %v6594 = vld [vmem:[%s6584 + $0x48] sm:$0xff]
      %v6595 = vld [vmem:[%s6584 + $0x50] sm:$0xff]
      %v6596 = vld [vmem:[%s6584 + $0x58] sm:$0xff]
      %v6597 = vld [vmem:[%s6584 + $0x60] sm:$0xff]
      %v6598 = vld [vmem:[%s6584 + $0x68] sm:$0xff]
      %v6599 = vld [vmem:[%s6584 + $0x70] sm:$0xff]
      %v6600 = vld [vmem:[%s6584 + $0x78] sm:$0xff]
      %v6617 = vunpack.c.l.b16 %v6585
      %v6618 = vunpack.c.h.b16 %v6585
      %v6619 = vunpack.c.l.b16 %v6586
      %v6620 = vunpack.c.h.b16 %v6586
      %v6621 = vunpack.c.l.b16 %v6587
      %v6622 = vunpack.c.h.b16 %v6587
      %v6623 = vunpack.c.l.b16 %v6588
      %v6624 = vunpack.c.h.b16 %v6588
      %v6625 = vunpack.c.l.b16 %v6589
      %v6626 = vunpack.c.h.b16 %v6589
      %v6627 = vunpack.c.l.b16 %v6590
      %v6628 = vunpack.c.h.b16 %v6590
      %v6629 = vunpack.c.l.b16 %v6591
      %v6630 = vunpack.c.h.b16 %v6591
      %v6631 = vunpack.c.l.b16 %v6592
      %v6632 = vunpack.c.h.b16 %v6592
      %v6633 = vunpack.c.l.b16 %v6593
      %v6634 = vunpack.c.h.b16 %v6593
      %v6635 = vunpack.c.l.b16 %v6594
      %v6636 = vunpack.c.h.b16 %v6594
      %v6637 = vunpack.c.l.b16 %v6595
      %v6638 = vunpack.c.h.b16 %v6595
      %v6639 = vunpack.c.l.b16 %v6596
      %v6640 = vunpack.c.h.b16 %v6596
      %v6641 = vunpack.c.l.b16 %v6597
      %v6642 = vunpack.c.h.b16 %v6597
      %v6643 = vunpack.c.l.b16 %v6598
      %v6644 = vunpack.c.h.b16 %v6598
      %v6645 = vunpack.c.l.b16 %v6599
      %v6646 = vunpack.c.h.b16 %v6599
      %v6647 = vunpack.c.l.b16 %v6600
      %v6648 = vunpack.c.h.b16 %v6600
      %v6649 = vpack.c.b16 %v6619, %v6617
      %v6650 = vpack.c.b16 %v6620, %v6618
      %v6651 = vpack.c.b16 %v6623, %v6621
      %v6652 = vpack.c.b16 %v6624, %v6622
      %v6653 = vpack.c.b16 %v6627, %v6625
      %v6654 = vpack.c.b16 %v6628, %v6626
      %v6655 = vpack.c.b16 %v6631, %v6629
      %v6656 = vpack.c.b16 %v6632, %v6630
      %v6657 = vpack.c.b16 %v6635, %v6633
      %v6658 = vpack.c.b16 %v6636, %v6634
      %v6659 = vpack.c.b16 %v6639, %v6637
      %v6660 = vpack.c.b16 %v6640, %v6638
      %v6661 = vpack.c.b16 %v6643, %v6641
      %v6662 = vpack.c.b16 %v6644, %v6642
      %v6663 = vpack.c.b16 %v6647, %v6645
      %v6664 = vpack.c.b16 %v6648, %v6646
      %6681 = vmatprep.subr.bf16.mxu0 %v6650
      %6682 = vmatpush1.bf16.msra.mxu0 %v6649
      %6683 = vmatprep.subr.bf16.mxu0 %v6652
      %6684 = vmatpush1.bf16.msra.mxu0 %v6651
      %6685 = vmatprep.subr.bf16.mxu0 %v6654
      %6686 = vmatpush1.bf16.msra.mxu0 %v6653
      %6687 = vmatprep.subr.bf16.mxu0 %v6656
      %6688 = vmatpush1.bf16.msra.mxu0 %v6655
      %6689 = vmatprep.subr.bf16.mxu0 %v6658
      %6690 = vmatpush1.bf16.msra.mxu0 %v6657
      %6691 = vmatprep.subr.bf16.mxu0 %v6660
      %6692 = vmatpush1.bf16.msra.mxu0 %v6659
      %6693 = vmatprep.subr.bf16.mxu0 %v6662
      %6694 = vmatpush1.bf16.msra.mxu0 %v6661
      %6695 = vmatprep.subr.bf16.mxu0 %v6664
      %6696 = vmatpush1.bf16.msra.mxu0 %v6663
      %6697 = vmatprep.subr.bf16.mxu0 0
      %6698 = vmatpush1.bf16.msra.mxu0 0
      %6699 = vmatprep.subr.bf16.mxu0 0
      %6700 = vmatpush1.bf16.msra.mxu0 0
      %6701 = vmatprep.subr.bf16.mxu0 0
      %6702 = vmatpush1.bf16.msra.mxu0 0
      %6703 = vmatprep.subr.bf16.mxu0 0
      %6704 = vmatpush1.bf16.msra.mxu0 0
      %6705 = vmatprep.subr.bf16.mxu0 0
      %6706 = vmatpush1.bf16.msra.mxu0 0
      %6707 = vmatprep.subr.bf16.mxu0 0
      %6708 = vmatpush1.bf16.msra.mxu0 0
      %6709 = vmatprep.subr.bf16.mxu0 0
      %6710 = vmatpush1.bf16.msra.mxu0 0
      %6711 = vmatprep.subr.bf16.mxu0 0
      %6712 = vmatpush1.bf16.msra.mxu0 0
      %6713 = vmatprep.mubr.bf16.mxu0 0
      %6714 = vmatmul.mubr.bf16.gmra.mrb[0].mxu0 %v6583
      %v6715 = vpop.f32.mrb[0].mxu0
      %v6716 = vadd.f32 0.0, %v6715
      %v6717 = vpop.f32.mrb[0].mxu0
      %v6718 = vadd.f32 0.0, %v6717
      %v6719 = vpop.f32.mrb[0].mxu0
      %v6720 = vadd.f32 0.0, %v6719
      %v6721 = vpop.f32.mrb[0].mxu0
      %v6722 = vadd.f32 0.0, %v6721
      %6723 = vdwg.mxu0
      %v6724 = vadd.f32 %v6579, %v6716
      %v6725 = vadd.f32 %v6580, %v6718
      %v6726 = vadd.f32 %v6581, %v6720
      %v6727 = vadd.f32 %v6582, %v6722
      %v6728 = vpack.c.bf16 %v4559, %v4556
      %s6729 = scalar_lea.vmem %s7, 1920
      %v6730 = vld [vmem:[%s6729] sm:$0xff]
      %v6731 = vld [vmem:[%s6729 + $0x8] sm:$0xff]
      %v6732 = vld [vmem:[%s6729 + $0x10] sm:$0xff]
      %v6733 = vld [vmem:[%s6729 + $0x18] sm:$0xff]
      %v6734 = vld [vmem:[%s6729 + $0x20] sm:$0xff]
      %v6735 = vld [vmem:[%s6729 + $0x28] sm:$0xff]
      %v6736 = vld [vmem:[%s6729 + $0x30] sm:$0xff]
      %v6737 = vld [vmem:[%s6729 + $0x38] sm:$0xff]
      %v6738 = vld [vmem:[%s6729 + $0x40] sm:$0xff]
      %v6739 = vld [vmem:[%s6729 + $0x48] sm:$0xff]
      %v6740 = vld [vmem:[%s6729 + $0x50] sm:$0xff]
      %v6741 = vld [vmem:[%s6729 + $0x58] sm:$0xff]
      %v6742 = vld [vmem:[%s6729 + $0x60] sm:$0xff]
      %v6743 = vld [vmem:[%s6729 + $0x68] sm:$0xff]
      %v6744 = vld [vmem:[%s6729 + $0x70] sm:$0xff]
      %v6745 = vld [vmem:[%s6729 + $0x78] sm:$0xff]
      %v6762 = vunpack.c.l.b16 %v6730
      %v6763 = vunpack.c.h.b16 %v6730
      %v6764 = vunpack.c.l.b16 %v6731
      %v6765 = vunpack.c.h.b16 %v6731
      %v6766 = vunpack.c.l.b16 %v6732
      %v6767 = vunpack.c.h.b16 %v6732
      %v6768 = vunpack.c.l.b16 %v6733
      %v6769 = vunpack.c.h.b16 %v6733
      %v6770 = vunpack.c.l.b16 %v6734
      %v6771 = vunpack.c.h.b16 %v6734
      %v6772 = vunpack.c.l.b16 %v6735
      %v6773 = vunpack.c.h.b16 %v6735
      %v6774 = vunpack.c.l.b16 %v6736
      %v6775 = vunpack.c.h.b16 %v6736
      %v6776 = vunpack.c.l.b16 %v6737
      %v6777 = vunpack.c.h.b16 %v6737
      %v6778 = vunpack.c.l.b16 %v6738
      %v6779 = vunpack.c.h.b16 %v6738
      %v6780 = vunpack.c.l.b16 %v6739
      %v6781 = vunpack.c.h.b16 %v6739
      %v6782 = vunpack.c.l.b16 %v6740
      %v6783 = vunpack.c.h.b16 %v6740
      %v6784 = vunpack.c.l.b16 %v6741
      %v6785 = vunpack.c.h.b16 %v6741
      %v6786 = vunpack.c.l.b16 %v6742
      %v6787 = vunpack.c.h.b16 %v6742
      %v6788 = vunpack.c.l.b16 %v6743
      %v6789 = vunpack.c.h.b16 %v6743
      %v6790 = vunpack.c.l.b16 %v6744
      %v6791 = vunpack.c.h.b16 %v6744
      %v6792 = vunpack.c.l.b16 %v6745
      %v6793 = vunpack.c.h.b16 %v6745
      %v6794 = vpack.c.b16 %v6764, %v6762
      %v6795 = vpack.c.b16 %v6765, %v6763
      %v6796 = vpack.c.b16 %v6768, %v6766
      %v6797 = vpack.c.b16 %v6769, %v6767
      %v6798 = vpack.c.b16 %v6772, %v6770
      %v6799 = vpack.c.b16 %v6773, %v6771
      %v6800 = vpack.c.b16 %v6776, %v6774
      %v6801 = vpack.c.b16 %v6777, %v6775
      %v6802 = vpack.c.b16 %v6780, %v6778
      %v6803 = vpack.c.b16 %v6781, %v6779
      %v6804 = vpack.c.b16 %v6784, %v6782
      %v6805 = vpack.c.b16 %v6785, %v6783
      %v6806 = vpack.c.b16 %v6788, %v6786
      %v6807 = vpack.c.b16 %v6789, %v6787
      %v6808 = vpack.c.b16 %v6792, %v6790
      %v6809 = vpack.c.b16 %v6793, %v6791
      %6826 = vmatprep.subr.bf16.mxu0 %v6795
      %6827 = vmatpush1.bf16.msra.mxu0 %v6794
      %6828 = vmatprep.subr.bf16.mxu0 %v6797
      %6829 = vmatpush1.bf16.msra.mxu0 %v6796
      %6830 = vmatprep.subr.bf16.mxu0 %v6799
      %6831 = vmatpush1.bf16.msra.mxu0 %v6798
      %6832 = vmatprep.subr.bf16.mxu0 %v6801
      %6833 = vmatpush1.bf16.msra.mxu0 %v6800
      %6834 = vmatprep.subr.bf16.mxu0 %v6803
      %6835 = vmatpush1.bf16.msra.mxu0 %v6802
      %6836 = vmatprep.subr.bf16.mxu0 %v6805
      %6837 = vmatpush1.bf16.msra.mxu0 %v6804
      %6838 = vmatprep.subr.bf16.mxu0 %v6807
      %6839 = vmatpush1.bf16.msra.mxu0 %v6806
      %6840 = vmatprep.subr.bf16.mxu0 %v6809
      %6841 = vmatpush1.bf16.msra.mxu0 %v6808
      %6842 = vmatprep.subr.bf16.mxu0 0
      %6843 = vmatpush1.bf16.msra.mxu0 0
      %6844 = vmatprep.subr.bf16.mxu0 0
      %6845 = vmatpush1.bf16.msra.mxu0 0
      %6846 = vmatprep.subr.bf16.mxu0 0
      %6847 = vmatpush1.bf16.msra.mxu0 0
      %6848 = vmatprep.subr.bf16.mxu0 0
      %6849 = vmatpush1.bf16.msra.mxu0 0
      %6850 = vmatprep.subr.bf16.mxu0 0
      %6851 = vmatpush1.bf16.msra.mxu0 0
      %6852 = vmatprep.subr.bf16.mxu0 0
      %6853 = vmatpush1.bf16.msra.mxu0 0
      %6854 = vmatprep.subr.bf16.mxu0 0
      %6855 = vmatpush1.bf16.msra.mxu0 0
      %6856 = vmatprep.subr.bf16.mxu0 0
      %6857 = vmatpush1.bf16.msra.mxu0 0
      %6858 = vmatprep.mubr.bf16.mxu0 0
      %6859 = vmatmul.mubr.bf16.gmra.mrb[0].mxu0 %v6728
      %v6860 = vpop.f32.mrb[0].mxu0
      %v6861 = vadd.f32 0.0, %v6860
      %v6862 = vpop.f32.mrb[0].mxu0
      %v6863 = vadd.f32 0.0, %v6862
      %v6864 = vpop.f32.mrb[0].mxu0
      %v6865 = vadd.f32 0.0, %v6864
      %v6866 = vpop.f32.mrb[0].mxu0
      %v6867 = vadd.f32 0.0, %v6866
      %6868 = vdwg.mxu0
      %v6869 = vadd.f32 %v6724, %v6861
      %v6870 = vadd.f32 %v6725, %v6863
      %v6871 = vadd.f32 %v6726, %v6865
      %v6872 = vadd.f32 %v6727, %v6867
      %v6873 = vld [vmem:[%s8] sm:$0x3]
      %v6875 = vlaneseq
      %v6876 = vshrl.u32 %v6875, 7
      %v6877 = vsub.s32 0, %v6876
      %v6878 = vrot.slane %v6873, %v6877
      %v6879 = vlaneseq
      %v6880 = vshrl.u32 %v6879, 7
      %v6881 = vsub.s32 1, %v6880
      %v6882 = vrot.slane %v6873, %v6881
      %v6885 = vadd.f32 %v6869, %v6878
      %v6886 = vadd.f32 %v6870, %v6882
      %v6887 = vadd.f32 %v6871, %v6878
      %v6888 = vadd.f32 %v6872, %v6882
      %v6889 = vadd.f32 %v6885, %v6887
      %v6890 = vrot.slane %v6889, 4
      %v6891 = vadd.f32 %v6889, %v6890
      %v6892 = vrot.slane %v6891, 2
      %v6893 = vadd.f32 %v6891, %v6892
      %v6894 = vrot.slane %v6893, 1
      %v6895 = vadd.f32 %v6893, %v6894
      %v6896 = vadd.f32 %v6886, %v6888
      %v6897 = vrot.slane %v6896, 4
      %v6898 = vadd.f32 %v6896, %v6897
      %v6899 = vrot.slane %v6898, 2
      %v6900 = vadd.f32 %v6898, %v6899
      %v6901 = vrot.slane %v6900, 1
      %v6902 = vadd.f32 %v6900, %v6901
      %v6903 = vrcp.pop 16.0
      %v6904 = vmul.f32 %v6895, %v6903
      %v6905 = vmul.f32 %v6902, %v6903
      %v6906 = vsub.f32 %v6885, %v6904
      %v6907 = vsub.f32 %v6886, %v6905
      %v6908 = vsub.f32 %v6887, %v6904
      %v6909 = vsub.f32 %v6888, %v6905
      %v6910 = vmul.f32 %v6906, %v6906
      %v6911 = vmul.f32 %v6907, %v6907
      %v6912 = vmul.f32 %v6908, %v6908
      %v6913 = vmul.f32 %v6909, %v6909
      %v6914 = vadd.f32 %v6910, %v6912
      %v6915 = vrot.slane %v6914, 4
      %v6916 = vadd.f32 %v6914, %v6915
      %v6917 = vrot.slane %v6916, 2
      %v6918 = vadd.f32 %v6916, %v6917
      %v6919 = vrot.slane %v6918, 1
      %v6920 = vadd.f32 %v6918, %v6919
      %v6921 = vadd.f32 %v6911, %v6913
      %v6922 = vrot.slane %v6921, 4
      %v6923 = vadd.f32 %v6921, %v6922
      %v6924 = vrot.slane %v6923, 2
      %v6925 = vadd.f32 %v6923, %v6924
      %v6926 = vrot.slane %v6925, 1
      %v6927 = vadd.f32 %v6925, %v6926
      %v6928 = vmul.f32 %v6920, %v6903
      %v6929 = vmul.f32 %v6927, %v6903
      %v6930 = vadd.f32 %v6928, 1e-05
      %v6931 = vadd.f32 %v6929, 1e-05
      %v6932 = vrsqrt.pop %v6930
      %v6933 = vrsqrt.pop %v6931
      %v6934 = vmul.f32 %v6906, %v6932
      %v6935 = vmul.f32 %v6907, %v6933
      %v6936 = vmul.f32 %v6908, %v6932
      %v6937 = vmul.f32 %v6909, %v6933
      %6938 = vst [vmem:[%s392] sm:$0xff] %v6934
      %6939 = vst [vmem:[%s392 + $0x8] sm:$0xff] %v6935
      %6940 = vst [vmem:[%s392 + $0x10] sm:$0xff] %v6936
      %6941 = vst [vmem:[%s392 + $0x18] sm:$0xff] %v6937
      %v6942 = vld [vmem:[%s9] sm:$0xff]
      %v6943 = vld [vmem:[%s9 + $0x8] sm:$0xff]
      %v6944 = vld [vmem:[%s9 + $0x10] sm:$0xff]
      %v6945 = vld [vmem:[%s9 + $0x18] sm:$0xff]
      %v6946 = vmul.f32 %v6934, %v6942
      %v6947 = vmul.f32 %v6935, %v6943
      %v6948 = vmul.f32 %v6936, %v6944
      %v6949 = vmul.f32 %v6937, %v6945
      %v6950 = vadd.f32 %v6946, %v6947
      %6951 = vadd.xlane.f32.xlu0 %v6950
      %v6952 = vpop.xlane.xlu0 %6951
      %v6953 = vadd.f32 %v6948, %v6949
      %6954 = vadd.xlane.f32.xlu0 %v6953
      %v6955 = vpop.xlane.xlu0 %6954
      %v6956 = vadd.f32 %v6952, %v6955
      %v6957 = vrot.slane %v6956, 4
      %v6958 = vadd.f32 %v6956, %v6957
      %v6959 = vrot.slane %v6958, 2
      %v6960 = vadd.f32 %v6958, %v6959
      %v6961 = vrot.slane %v6960, 1
      %v6962 = vadd.f32 %v6960, %v6961
      %v6963 = vsub.f32 0.0, %v6962
      %v6964 = vmul.f32 %v6963, 1.442695
      %v6965 = vpow.pop %v6964
      %v6966 = vadd.f32 %v6965, 1.0
      %v6967 = vrcp.pop %v6966
      %v6968 = vmul.f32 1.0, %v6967
      %vm6969 = vcmask 0
      %6970 = vst.msk [vmem:[%s395] sm:$0x1] %vm6969, %v6968
      %p6971 = scmp.lt.s32.totalorder %s23, 1
      %s6972 = scalar_select %p6971, %s23, 1
      %s6973 = smul.addr %s6972, 4
      %s6974 = smul.addr %s6973, 8
      %s6975 = scalar_lea.vmem %s10, %s6974
      %p6976 = scmp.lt.s32.totalorder %s23, 1
      %s6977 = scalar_select %p6976, %s23, 1
      %s6978 = scalar_lea.vmem %s11, %s6977
      // Predicated region
      $region61: #{ssanet_d_forward.1} parent=59 // pred_check
        %p6979 = pneg %p256
      $region62: #{ssanet_d_forward.1} parent=59 // pred_check_branch
        %6981 = sbr.rel (%p6979) target = $region64
      $region63: #{ssanet_d_forward.1} parent=59 // pred_region
        _
      $region64: #{ssanet_d_forward.1} parent=59 // pred_fallthru
        _
      // Predicated region
      $region65: #{ssanet_d_forward.1} parent=59 // pred_check
        %p6982 = pneg %p282
      $region66: #{ssanet_d_forward.1} parent=59 // pred_check_branch
        %6984 = sbr.rel (%p6982) target = $region68
      $region67: #{ssanet_d_forward.1} parent=59 // pred_region
        _
      $region68: #{ssanet_d_forward.1} parent=59 // pred_fallthru
        _
    $region60: #{ssanet_d_forward.1} parent=5 // pred_fallthru
      _
    %p6985 = scmp.le.s32.totalorder 2, %s18
    // Predicated region
    $region69: #{ssanet_d_forward.1} parent=5 // pred_check
      %p6986 = pneg %p6985
    $region70: #{ssanet_d_forward.1} parent=5 // pred_check_branch
      %6988 = sbr.rel (%p6986) target = $region72
    $region71: #{ssanet_d_forward.1} parent=5 // pred_region
      %s6989 = ssub.s32 %s18, 2
      // Predicated region
      $region73: #{ssanet_d_forward.1} parent=71 // pred_check
        %p6990 = pneg %p262
      $region74: #{ssanet_d_forward.1} parent=71 // pred_check_branch
        %6992 = sbr.rel (%p6990) target = $region76
      $region75: #{ssanet_d_forward.1} parent=71 // pred_region
        %p6993 = scmp.lt.s32.totalorder %s24, 1
        %s6994 = scalar_select %p6993, %s24, 1
        %s6995 = smul.addr %s6994, 4
        %s6996 = smul.addr %s6995, 8
        %s6997 = scalar_lea.vmem %s10, %s6996
      $region76: #{ssanet_d_forward.1} parent=71 // pred_fallthru
        _
      // Predicated region
      $region77: #{ssanet_d_forward.1} parent=71 // pred_check
        %p6998 = pneg %p288
      $region78: #{ssanet_d_forward.1} parent=71 // pred_check_branch
        %7000 = sbr.rel (%p6998) target = $region80
      $region79: #{ssanet_d_forward.1} parent=71 // pred_region
        %p7001 = scmp.lt.s32.totalorder %s24, 1
        %s7002 = scalar_select %p7001, %s24, 1
        %s7003 = scalar_lea.vmem %s11, %s7002
      $region80: #{ssanet_d_forward.1} parent=71 // pred_fallthru
        _
    $region72: #{ssanet_d_forward.1} parent=5 // pred_fallthru
      _
  $region6: #{ssanet_d_forward.1} parent=0 // loop_footer
    %s22 = sadd.s32 1, %s18
  $region7: #{ssanet_d_forward.1} parent=0 // loop_footer_branch
    %17 = sbr.rel target = $region3
  $region8: #{ssanet_d_forward.1} parent=0 // loop_exit
    _

</llo_original>
